<compile_context>
chip_gen: v7x
topology: tpu7x:2x2x1
jax: 0.10.0
libtpu: 0.0.40
codegen_flags: <defaults>
</compile_context>

<pallas_src>
import math
import jax
import jax.numpy as jnp
from jax.experimental import pallas as pl
from jax.experimental.pallas import tpu as pltpu

# ----------------------------- config (scaled-down ViT-B/32-style CLIP) ------
IMAGE_RES = 224          # preprocess resize target (as in the module)
PATCH = 32               # ViT-B/32 patch size
VISION_WIDTH = 64
VISION_LAYERS = 2
VISION_HEADS = 4
TEXT_WIDTH = 32
TEXT_LAYERS = 2
TEXT_HEADS = 4
EMBED_DIM = 32
VOCAB = 100
CONTEXT = 8

CLIP_MEAN = jnp.array([0.48145466, 0.4578275, 0.40821073], jnp.float32)
CLIP_STD = jnp.array([0.26862954, 0.26130258, 0.27577711], jnp.float32)


# ----------------------------- in-kernel helpers -----------------------------
def _mm(a, b):
    """a @ b on the MXU: bf16 operands, f32 accumulation."""
    return jnp.dot(a.astype(jnp.bfloat16), b.astype(jnp.bfloat16),
                   preferred_element_type=jnp.float32)


def _mm_t(a, b):
    """a @ b.T without materializing a transpose (contract last dims)."""
    return jax.lax.dot_general(
        a.astype(jnp.bfloat16), b.astype(jnp.bfloat16),
        (((1,), (1,)), ((), ())), preferred_element_type=jnp.float32)


def _ln_nogb(x, eps=1e-5):
    """LayerNorm without the affine (gamma/beta are folded into next matmul)."""
    mu = jnp.mean(x, axis=-1, keepdims=True)
    xc = x - mu
    var = jnp.mean(xc * xc, axis=-1, keepdims=True)
    return xc * jax.lax.rsqrt(var + eps)


def _res_block(x, l, heads, causal,
               wqkv_ref, bqkv_ref, wout_ref, bout_ref,
               w1_ref, b1_ref, w2_ref, b2_ref):
    """CLIP ResidualAttentionBlock, fully resident in VMEM.

    LN1/LN2 affines are pre-folded into the QKV / MLP-up weights; heads are
    sliced (statically) from the (S, 3W) QKV slab; per-head outputs are
    accumulated directly into the out-projection (no concat); the residual
    adds stay in-register.
    """
    S, W = x.shape
    hd = W // heads
    scale = 1.0 / math.sqrt(hd)

    qkv = _mm(_ln_nogb(x), wqkv_ref[l]) + bqkv_ref[l]            # (S, 3W) f32
    wo = wout_ref[l]                                             # (W, W)

    if causal:
        rows = jax.lax.broadcasted_iota(jnp.int32, (S, S), 0)
        cols = jax.lax.broadcasted_iota(jnp.int32, (S, S), 1)
        keep = cols <= rows

    attn = jnp.zeros((S, W), jnp.float32)
    for h in range(heads):                                       # unrolled
        lo = h * hd
        q = qkv[:, lo:lo + hd]
        k = qkv[:, W + lo:W + lo + hd]
        v = qkv[:, 2 * W + lo:2 * W + lo + hd]
        s = _mm_t(q, k) * scale                                  # (S, S) f32
        if causal:                                               # vision: skipped
            s = jnp.where(keep, s, -1e9)
        s = s - jnp.max(s, axis=-1, keepdims=True)
        p = jnp.exp(s)
        p = p * pl.reciprocal(jnp.sum(p, axis=-1, keepdims=True), approx=True)
        attn = attn + _mm(_mm(p, v), wo[lo:lo + hd, :])          # fused out-proj
    x = x + attn + bout_ref[l]

    h1 = _mm(_ln_nogb(x), w1_ref[l]) + b1_ref[l]                 # LN2 folded in
    h1 = h1 * jax.nn.sigmoid(1.702 * h1)                         # QuickGELU (f32)
    x = x + _mm(h1, w2_ref[l]) + b2_ref[l]
    return x


def _fixed_spec(a):
    """Full-array block, same for every grid step (weights)."""
    zeros = (0,) * a.ndim
    return pl.BlockSpec(a.shape, lambda b: zeros)


# ----------------------------- fused encoder kernels -------------------------
def encode_image_pallas(patches, vp):
    """Fused ViT image encoder: patch embed (with CLIP mean/std folded in),
    class token + positional embedding, ln_pre, transformer blocks, ln_post
    (folded) and output projection — one pallas_call gridded over batch."""
    B, S, PD = patches.shape                     # (B, 50, 3*32*32); row 0 = cls
    L = vp["wqkv"].shape[0]
    E = vp["projw"].shape[1]

    def kernel(p_ref, pw_ref, posf_ref, g_ref, b_ref,
               wqkv_ref, bqkv_ref, wout_ref, bout_ref,
               w1_ref, b1_ref, w2_ref, b2_ref,
               projw_ref, projb_ref, o_ref):
        # patch embedding; pos_full already carries class_emb / pos / patch bias
        x = _mm(p_ref[0], pw_ref[...]) + posf_ref[...]           # (S, W)
        x = _ln_nogb(x) * g_ref[...] + b_ref[...]                # ln_pre
        for l in range(L):
            x = _res_block(x, l, VISION_HEADS, False,
                           wqkv_ref, bqkv_ref, wout_ref, bout_ref,
                           w1_ref, b1_ref, w2_ref, b2_ref)
        # ln_post (affine folded into projection) on the class token + proj
        o_ref[0] = _mm(_ln_nogb(x[0:1, :]), projw_ref[...]) + projb_ref[...]

    args = (patches, vp["pw"], vp["pos_full"], vp["ln_pre_g"], vp["ln_pre_b"],
            vp["wqkv"], vp["bqkv"], vp["wout"], vp["bout"],
            vp["w1"], vp["b1"], vp["w2"], vp["b2"],
            vp["projw"], vp["projb"])
    in_specs = ([pl.BlockSpec((1, S, PD), lambda b: (b, 0, 0))]
                + [_fixed_spec(a) for a in args[1:]])

    out = pl.pallas_call(
        kernel,
        out_shape=jax.ShapeDtypeStruct((B, 1, E), jnp.float32),
        grid=(B,),
        in_specs=in_specs,
        out_specs=pl.BlockSpec((1, 1, E), lambda b: (b, 0, 0)),
        compiler_params=pltpu.CompilerParams(dimension_semantics=("parallel",)),
    )(*args)
    return out.reshape(B, E)


def encode_text_pallas(x_tok, eot, tp):
    """Fused causal text encoder: transformer blocks, EOT gather, ln_final
    (folded) and text projection — one pallas_call gridded over batch."""
    N, S, W = x_tok.shape
    L = tp["wqkv"].shape[0]
    E = tp["projw"].shape[1]

    def kernel(eot_ref, x_ref, wqkv_ref, bqkv_ref, wout_ref, bout_ref,
               w1_ref, b1_ref, w2_ref, b2_ref, projw_ref, projb_ref, o_ref):
        x = x_ref[0]                                             # (S, W)
        for l in range(L):
            x = _res_block(x, l, TEXT_HEADS, True,
                           wqkv_ref, bqkv_ref, wout_ref, bout_ref,
                           w1_ref, b1_ref, w2_ref, b2_ref)
        # EOT gather via row mask (LN is per-row, so gather-then-LN == LN-then-gather)
        e = eot_ref[pl.program_id(0)]
        rows = jax.lax.broadcasted_iota(jnp.int32, (S, 1), 0)
        x_eot = jnp.sum(jnp.where(rows == e, x, 0.0), axis=0, keepdims=True)
        o_ref[0] = _mm(_ln_nogb(x_eot), projw_ref[...]) + projb_ref[...]

    args = (x_tok, tp["wqkv"], tp["bqkv"], tp["wout"], tp["bout"],
            tp["w1"], tp["b1"], tp["w2"], tp["b2"], tp["projw"], tp["projb"])
    in_specs = ([pl.BlockSpec(memory_space=pltpu.MemorySpace.SMEM),
                 pl.BlockSpec((1, S, W), lambda b: (b, 0, 0))]
                + [_fixed_spec(a) for a in args[1:]])

    out = pl.pallas_call(
        kernel,
        out_shape=jax.ShapeDtypeStruct((N, 1, E), jnp.float32),
        grid=(N,),
        in_specs=in_specs,
        out_specs=pl.BlockSpec((1, 1, E), lambda b: (b, 0, 0)),
        compiler_params=pltpu.CompilerParams(dimension_semantics=("parallel",)),
    )(eot, *args)
    return out.reshape(N, E)


def clip_similarity_pallas(img_feat, txt_feat, logit_scale_exp):
    """L2-normalize features, logits = scale * img @ txt.T, return 1 - logits/100."""
    Bi, D = img_feat.shape
    Bt, _ = txt_feat.shape

    def kernel(s_ref, i_ref, t_ref, o_ref):
        im = i_ref[...]
        tx = t_ref[...]
        im = im * jax.lax.rsqrt(jnp.sum(im * im, axis=-1, keepdims=True))
        tx = tx * jax.lax.rsqrt(jnp.sum(tx * tx, axis=-1, keepdims=True))
        logits = s_ref[0] * jax.lax.dot_general(
            im, tx, (((1,), (1,)), ((), ())), preferred_element_type=jnp.float32)
        o_ref[...] = 1.0 - logits * 0.01

    return pl.pallas_call(
        kernel,
        out_shape=jax.ShapeDtypeStruct((Bi, Bt), jnp.float32),
        grid=(1,),
        in_specs=[
            pl.BlockSpec(memory_space=pltpu.MemorySpace.SMEM),
            pl.BlockSpec((Bi, D), lambda i: (0, 0)),
            pl.BlockSpec((Bt, D), lambda i: (0, 0)),
        ],
        out_specs=pl.BlockSpec((Bi, Bt), lambda i: (0, 0)),
    )(jnp.reshape(logit_scale_exp, (1,)).astype(jnp.float32), img_feat, txt_feat)


# ----------------------------- host-side weight folding ----------------------
def _prep_blocks(blocks):
    """Stack per-layer weights; fold LN1/LN2 affines into the following matmuls."""
    def fold(p):
        wqkv = p["ln1_g"][:, None] * p["attn_in_w"]
        bqkv = p["ln1_b"] @ p["attn_in_w"] + p["attn_in_b"]
        w1 = p["ln2_g"][:, None] * p["mlp_w1"]
        b1 = p["ln2_b"] @ p["mlp_w1"] + p["mlp_b1"]
        return (wqkv, bqkv, p["attn_out_w"], p["attn_out_b"],
                w1, b1, p["mlp_w2"], p["mlp_b2"])

    cols = list(zip(*[fold(p) for p in blocks]))
    stk = lambda i: jnp.stack(cols[i]).astype(jnp.float32)
    return dict(
        wqkv=stk(0), bqkv=stk(1)[:, None, :],
        wout=stk(2), bout=stk(3)[:, None, :],
        w1=stk(4), b1=stk(5)[:, None, :],
        w2=stk(6), b2=stk(7)[:, None, :],
    )


def prep_vision(vp):
    P2 = PATCH * PATCH
    inv_std = jnp.repeat(1.0 / CLIP_STD, P2)                 # (3*P*P,)
    mean_over_std = jnp.repeat(CLIP_MEAN / CLIP_STD, P2)
    # fold CLIP normalize (x - mean)/std into the patch-embed matmul
    pw = vp["patch_w"] * inv_std[:, None]
    pb = -(mean_over_std @ vp["patch_w"])                    # (W,)
    # row 0 (fed a zero patch row) becomes the class token; rows 1.. are patches
    pos_full = jnp.concatenate(
        [(vp["class_emb"] + vp["pos_emb"][0])[None, :],
         vp["pos_emb"][1:] + pb[None, :]], axis=0)
    return dict(
        pw=pw, pos_full=pos_full,
        ln_pre_g=vp["ln_pre_g"][None, :], ln_pre_b=vp["ln_pre_b"][None, :],
        projw=vp["ln_post_g"][:, None] * vp["proj"],
        projb=(vp["ln_post_b"] @ vp["proj"])[None, :],
        **_prep_blocks(vp["blocks"]))


def prep_text(tp):
    return dict(
        tok_emb=tp["tok_emb"], pos_emb=tp["pos_emb"],
        projw=tp["ln_final_g"][:, None] * tp["text_proj"],
        projb=(tp["ln_final_b"] @ tp["text_proj"])[None, :],
        **_prep_blocks(tp["blocks"]))


# ----------------------------- forward ---------------------------------------
def clip_loss_forward(image, text, params):
    """CLIPLoss.forward(image, text) -> 1 - logits_per_image / 100."""
    B = image.shape[0]
    # preprocess_tensor: bicubic resize to 224; CLIP mean/std normalization is
    # folded into the patch-embedding matmul (no separate normalize pass).
    # TODO(synk): torchvision/PIL bicubic and jax.image bicubic differ by small numerics.
    img = jax.image.resize(image.astype(jnp.float32),
                           (B, 3, IMAGE_RES, IMAGE_RES), method="bicubic")
    G = IMAGE_RES // PATCH
    # patchify (conv with kernel=stride=PATCH as a matmul); flatten order (C,ph,pw)
    # TODO(synk): the patchify transpose stays in XLA; could be expressed as the
    # patch-embed kernel's BlockSpec gather instead.
    patches = img.reshape(B, 3, G, PATCH, G, PATCH)
    patches = patches.transpose(0, 2, 4, 1, 3, 5).reshape(B, G * G, 3 * PATCH * PATCH)
    patches = jnp.pad(patches, ((0, 0), (1, 0), (0, 0)))     # row 0 -> class token

    vp = prep_vision(params["visual"])
    tp = prep_text(params["text"])

    img_feat = encode_image_pallas(patches, vp)

    # token-embedding gather + positional embedding stays in XLA (tiny)
    x_txt = (jnp.take(tp["tok_emb"], text, axis=0) + tp["pos_emb"][None]).astype(jnp.float32)
    eot = jnp.argmax(text, axis=-1).astype(jnp.int32)        # CLIP: EOT = max token id
    txt_feat = encode_text_pallas(x_txt, eot, tp)

    logit_scale = jnp.exp(params["logit_scale"])             # CLIP forward: no clamp
    return clip_similarity_pallas(img_feat, txt_feat, logit_scale)


# ----------------------------- deterministic synthetic params ----------------
def init_params(key):
    keys = iter(jax.random.split(key, 256))

    def nrm(shape, scale=0.02):
        return scale * jax.random.normal(next(keys), shape, jnp.float32)

    def block(width):
        return dict(
            ln1_g=jnp.ones((width,), jnp.float32), ln1_b=jnp.zeros((width,), jnp.float32),
            attn_in_w=nrm((width, 3 * width)), attn_in_b=jnp.zeros((3 * width,), jnp.float32),
            attn_out_w=nrm((width, width)), attn_out_b=jnp.zeros((width,), jnp.float32),
            ln2_g=jnp.ones((width,), jnp.float32), ln2_b=jnp.zeros((width,), jnp.float32),
            mlp_w1=nrm((width, 4 * width)), mlp_b1=jnp.zeros((4 * width,), jnp.float32),
            mlp_w2=nrm((4 * width, width)), mlp_b2=jnp.zeros((width,), jnp.float32),
        )

    n_tok = (IMAGE_RES // PATCH) ** 2 + 1
    visual = dict(
        patch_w=nrm((3 * PATCH * PATCH, VISION_WIDTH)),
        class_emb=nrm((VISION_WIDTH,)),
        pos_emb=nrm((n_tok, VISION_WIDTH)),
        ln_pre_g=jnp.ones((VISION_WIDTH,), jnp.float32),
        ln_pre_b=jnp.zeros((VISION_WIDTH,), jnp.float32),
        blocks=[block(VISION_WIDTH) for _ in range(VISION_LAYERS)],
        ln_post_g=jnp.ones((VISION_WIDTH,), jnp.float32),
        ln_post_b=jnp.zeros((VISION_WIDTH,), jnp.float32),
        proj=nrm((VISION_WIDTH, EMBED_DIM)),
    )
    textp = dict(
        tok_emb=nrm((VOCAB, TEXT_WIDTH)),
        pos_emb=nrm((CONTEXT, TEXT_WIDTH)),
        blocks=[block(TEXT_WIDTH) for _ in range(TEXT_LAYERS)],
        ln_final_g=jnp.ones((TEXT_WIDTH,), jnp.float32),
        ln_final_b=jnp.zeros((TEXT_WIDTH,), jnp.float32),
        text_proj=nrm((TEXT_WIDTH, EMBED_DIM)),
    )
    return dict(visual=visual, text=textp,
                logit_scale=jnp.array(math.log(1.0 / 0.07), jnp.float32))


# ----------------------------- main -------------------------------------------
if __name__ == "__main__":
    key = jax.random.PRNGKey(0)
    k_img, k_txt, k_par = jax.random.split(key, 3)

    # image: NCHW (as the PyTorch module expects), values in [0, 1]
    image = jax.random.uniform(k_img, (2, 3, 64, 64), jnp.float32)
    # text: integer token ids (argmax position acts as the EOT gather index)
    text = jax.random.randint(k_txt, (2, CONTEXT), 1, VOCAB, jnp.int32)

    params = init_params(k_par)

    forward = jax.jit(clip_loss_forward)
    similarity = forward(image, text, params)
    similarity = jax.block_until_ready(similarity)
    assert similarity.shape == (2, 2) and similarity.dtype == jnp.float32
    assert bool(jnp.all(jnp.isfinite(similarity)))
    print("KERNEL_OK")
</pallas_src>

<mosaic_0001>
module attributes {stable_mosaic.version = 11 : i64} {
  func.func @kernel(%arg0: i32, %arg1: memref<1x50x3072xf32, #tpu.memory_space<vmem>>, %arg2: memref<3072x64xf32, #tpu.memory_space<vmem>>, %arg3: memref<50x64xf32, #tpu.memory_space<vmem>>, %arg4: memref<1x64xf32, #tpu.memory_space<vmem>>, %arg5: memref<1x64xf32, #tpu.memory_space<vmem>>, %arg6: memref<2x64x192xf32, #tpu.memory_space<vmem>>, %arg7: memref<2x1x192xf32, #tpu.memory_space<vmem>>, %arg8: memref<2x64x64xf32, #tpu.memory_space<vmem>>, %arg9: memref<2x1x64xf32, #tpu.memory_space<vmem>>, %arg10: memref<2x64x256xf32, #tpu.memory_space<vmem>>, %arg11: memref<2x1x256xf32, #tpu.memory_space<vmem>>, %arg12: memref<2x256x64xf32, #tpu.memory_space<vmem>>, %arg13: memref<2x1x64xf32, #tpu.memory_space<vmem>>, %arg14: memref<64x32xf32, #tpu.memory_space<vmem>>, %arg15: memref<1x32xf32, #tpu.memory_space<vmem>>, %arg16: memref<1x1x32xf32, #tpu.memory_space<vmem>>) attributes {dimension_semantics = [#tpu.dimension_semantics<parallel>], iteration_bounds = array<i64: 2>, scalar_prefetch = 0 : i64, scratch_operands = 0 : i64, tpu.core_type = #tpu.core_type<tc>, window_params = [{transform_indices = @transform_0, window_bounds = array<i64: 1, 50, 3072>}, {pipeline_mode = #tpu.pipeline_mode<synchronous>, transform_indices = @transform_1, window_bounds = array<i64: 3072, 64>}, {pipeline_mode = #tpu.pipeline_mode<synchronous>, transform_indices = @transform_2, window_bounds = array<i64: 50, 64>}, {pipeline_mode = #tpu.pipeline_mode<synchronous>, transform_indices = @transform_3, window_bounds = array<i64: 1, 64>}, {pipeline_mode = #tpu.pipeline_mode<synchronous>, transform_indices = @transform_4, window_bounds = array<i64: 1, 64>}, {pipeline_mode = #tpu.pipeline_mode<synchronous>, transform_indices = @transform_5, window_bounds = array<i64: 2, 64, 192>}, {pipeline_mode = #tpu.pipeline_mode<synchronous>, transform_indices = @transform_6, window_bounds = array<i64: 2, 1, 192>}, {pipeline_mode = #tpu.pipeline_mode<synchronous>, transform_indices = @transform_7, window_bounds = array<i64: 2, 64, 64>}, {pipeline_mode = #tpu.pipeline_mode<synchronous>, transform_indices = @transform_8, window_bounds = array<i64: 2, 1, 64>}, {pipeline_mode = #tpu.pipeline_mode<synchronous>, transform_indices = @transform_9, window_bounds = array<i64: 2, 64, 256>}, {pipeline_mode = #tpu.pipeline_mode<synchronous>, transform_indices = @transform_10, window_bounds = array<i64: 2, 1, 256>}, {pipeline_mode = #tpu.pipeline_mode<synchronous>, transform_indices = @transform_11, window_bounds = array<i64: 2, 256, 64>}, {pipeline_mode = #tpu.pipeline_mode<synchronous>, transform_indices = @transform_12, window_bounds = array<i64: 2, 1, 64>}, {pipeline_mode = #tpu.pipeline_mode<synchronous>, transform_indices = @transform_13, window_bounds = array<i64: 64, 32>}, {pipeline_mode = #tpu.pipeline_mode<synchronous>, transform_indices = @transform_14, window_bounds = array<i64: 1, 32>}, {transform_indices = @transform_15, window_bounds = array<i64: 1, 1, 32>}]} {
    %c0 = arith.constant 0 : index
    %c0_0 = arith.constant 0 : index
    %c0_1 = arith.constant 0 : index
    %0 = vector.load %arg1[%c0, %c0_0, %c0_1] : memref<1x50x3072xf32, #tpu.memory_space<vmem>>, vector<1x50x3072xf32>
    %1 = vector.shape_cast %0 : vector<1x50x3072xf32> to vector<50x3072xf32>
    %c0_2 = arith.constant 0 : index
    %c0_3 = arith.constant 0 : index
    %2 = vector.load %arg2[%c0_2, %c0_3] : memref<3072x64xf32, #tpu.memory_space<vmem>>, vector<3072x64xf32>
    %3 = arith.truncf %1 : vector<50x3072xf32> to vector<50x3072xbf16>
    %4 = arith.truncf %2 : vector<3072x64xf32> to vector<3072x64xbf16>
    %cst = arith.constant dense<0.000000e+00> : vector<50x64xf32>
    %5 = tpu.matmul %3, %4, %cst {dimension_numbers = #tpu.dot_dimension_numbers<[1], [0], [0], [1], [0, 0, 1, 1], [], []>} : vector<50x3072xbf16>, vector<3072x64xbf16>, vector<50x64xf32> -> vector<50x64xf32>
    %c0_4 = arith.constant 0 : index
    %c0_5 = arith.constant 0 : index
    %6 = vector.load %arg3[%c0_4, %c0_5] : memref<50x64xf32, #tpu.memory_space<vmem>>, vector<50x64xf32>
    %7 = arith.addf %5, %6 : vector<50x64xf32>
    %cst_6 = arith.constant dense<0.000000e+00> : vector<50xf32>
    %8 = vector.multi_reduction <add>, %7, %cst_6 [1] : vector<50x64xf32> to vector<50xf32>
    %9 = vector.shape_cast %8 : vector<50xf32> to vector<50x1xf32>
    %cst_7 = arith.constant 6.400000e+01 : f32
    %10 = vector.broadcast %cst_7 : f32 to vector<50x1xf32>
    %11 = arith.divf %9, %10 : vector<50x1xf32>
    %12 = vector.broadcast %11 : vector<50x1xf32> to vector<50x64xf32>
    %13 = arith.subf %7, %12 : vector<50x64xf32>
    %14 = arith.mulf %13, %13 : vector<50x64xf32>
    %cst_8 = arith.constant dense<0.000000e+00> : vector<50xf32>
    %15 = vector.multi_reduction <add>, %14, %cst_8 [1] : vector<50x64xf32> to vector<50xf32>
    %16 = vector.shape_cast %15 : vector<50xf32> to vector<50x1xf32>
    %cst_9 = arith.constant 6.400000e+01 : f32
    %17 = vector.broadcast %cst_9 : f32 to vector<50x1xf32>
    %18 = arith.divf %16, %17 : vector<50x1xf32>
    %cst_10 = arith.constant 9.99999974E-6 : f32
    %19 = vector.broadcast %cst_10 : f32 to vector<50x1xf32>
    %20 = arith.addf %18, %19 : vector<50x1xf32>
    %21 = math.rsqrt %20 : vector<50x1xf32>
    %22 = vector.broadcast %21 : vector<50x1xf32> to vector<50x64xf32>
    %23 = arith.mulf %13, %22 : vector<50x64xf32>
    %c0_11 = arith.constant 0 : index
    %c0_12 = arith.constant 0 : index
    %24 = vector.load %arg4[%c0_11, %c0_12] : memref<1x64xf32, #tpu.memory_space<vmem>>, vector<1x64xf32>
    %25 = vector.broadcast %24 : vector<1x64xf32> to vector<50x64xf32>
    %26 = arith.mulf %23, %25 : vector<50x64xf32>
    %c0_13 = arith.constant 0 : index
    %c0_14 = arith.constant 0 : index
    %27 = vector.load %arg5[%c0_13, %c0_14] : memref<1x64xf32, #tpu.memory_space<vmem>>, vector<1x64xf32>
    %28 = vector.broadcast %27 : vector<1x64xf32> to vector<50x64xf32>
    %29 = arith.addf %26, %28 : vector<50x64xf32>
    %cst_15 = arith.constant dense<0.000000e+00> : vector<50xf32>
    %30 = vector.multi_reduction <add>, %29, %cst_15 [1] : vector<50x64xf32> to vector<50xf32>
    %31 = vector.shape_cast %30 : vector<50xf32> to vector<50x1xf32>
    %cst_16 = arith.constant 6.400000e+01 : f32
    %32 = vector.broadcast %cst_16 : f32 to vector<50x1xf32>
    %33 = arith.divf %31, %32 : vector<50x1xf32>
    %34 = vector.broadcast %33 : vector<50x1xf32> to vector<50x64xf32>
    %35 = arith.subf %29, %34 : vector<50x64xf32>
    %36 = arith.mulf %35, %35 : vector<50x64xf32>
    %cst_17 = arith.constant dense<0.000000e+00> : vector<50xf32>
    %37 = vector.multi_reduction <add>, %36, %cst_17 [1] : vector<50x64xf32> to vector<50xf32>
    %38 = vector.shape_cast %37 : vector<50xf32> to vector<50x1xf32>
    %cst_18 = arith.constant 6.400000e+01 : f32
    %39 = vector.broadcast %cst_18 : f32 to vector<50x1xf32>
    %40 = arith.divf %38, %39 : vector<50x1xf32>
    %cst_19 = arith.constant 9.99999974E-6 : f32
    %41 = vector.broadcast %cst_19 : f32 to vector<50x1xf32>
    %42 = arith.addf %40, %41 : vector<50x1xf32>
    %43 = math.rsqrt %42 : vector<50x1xf32>
    %44 = vector.broadcast %43 : vector<50x1xf32> to vector<50x64xf32>
    %45 = arith.mulf %35, %44 : vector<50x64xf32>
    %c0_20 = arith.constant 0 : index
    %c0_21 = arith.constant 0 : index
    %c0_22 = arith.constant 0 : index
    %46 = vector.load %arg6[%c0_20, %c0_21, %c0_22] : memref<2x64x192xf32, #tpu.memory_space<vmem>>, vector<1x64x192xf32>
    %47 = vector.shape_cast %46 : vector<1x64x192xf32> to vector<64x192xf32>
    %48 = arith.truncf %45 : vector<50x64xf32> to vector<50x64xbf16>
    %49 = arith.truncf %47 : vector<64x192xf32> to vector<64x192xbf16>
    %cst_23 = arith.constant dense<0.000000e+00> : vector<50x192xf32>
    %50 = tpu.matmul %48, %49, %cst_23 {dimension_numbers = #tpu.dot_dimension_numbers<[1], [0], [0], [1], [0, 0, 1, 1], [], []>} : vector<50x64xbf16>, vector<64x192xbf16>, vector<50x192xf32> -> vector<50x192xf32>
    %c0_24 = arith.constant 0 : index
    %c0_25 = arith.constant 0 : index
    %c0_26 = arith.constant 0 : index
    %51 = vector.load %arg7[%c0_24, %c0_25, %c0_26] : memref<2x1x192xf32, #tpu.memory_space<vmem>>, vector<1x1x192xf32>
    %52 = vector.shape_cast %51 : vector<1x1x192xf32> to vector<1x192xf32>
    %53 = vector.broadcast %52 : vector<1x192xf32> to vector<50x192xf32>
    %54 = arith.addf %50, %53 : vector<50x192xf32>
    %c0_27 = arith.constant 0 : index
    %c0_28 = arith.constant 0 : index
    %c0_29 = arith.constant 0 : index
    %55 = vector.load %arg8[%c0_27, %c0_28, %c0_29] : memref<2x64x64xf32, #tpu.memory_space<vmem>>, vector<1x64x64xf32>
    %56 = vector.shape_cast %55 : vector<1x64x64xf32> to vector<64x64xf32>
    %cst_30 = arith.constant 0.000000e+00 : f32
    %57 = vector.broadcast %cst_30 : f32 to vector<50x64xf32>
    %58 = vector.extract_strided_slice %54 {offsets = [0, 0], sizes = [50, 16], strides = [1, 1]} : vector<50x192xf32> to vector<50x16xf32>
    %59 = vector.extract_strided_slice %54 {offsets = [0, 64], sizes = [50, 16], strides = [1, 1]} : vector<50x192xf32> to vector<50x16xf32>
    %60 = vector.extract_strided_slice %54 {offsets = [0, 128], sizes = [50, 16], strides = [1, 1]} : vector<50x192xf32> to vector<50x16xf32>
    %61 = arith.truncf %58 : vector<50x16xf32> to vector<50x16xbf16>
    %62 = arith.truncf %59 : vector<50x16xf32> to vector<50x16xbf16>
    %cst_31 = arith.constant dense<0.000000e+00> : vector<50x50xf32>
    %63 = tpu.matmul %61, %62, %cst_31 {dimension_numbers = #tpu.dot_dimension_numbers<[1], [1], [0], [0], [0, 0, 1, 0], [], []>} : vector<50x16xbf16>, vector<50x16xbf16>, vector<50x50xf32> -> vector<50x50xf32>
    %cst_32 = arith.constant 2.500000e-01 : f32
    %64 = vector.broadcast %cst_32 : f32 to vector<50x50xf32>
    %65 = arith.mulf %63, %64 : vector<50x50xf32>
    %cst_33 = arith.constant dense<0xFF800000> : vector<50xf32>
    %66 = vector.multi_reduction <maximumf>, %65, %cst_33 [1] : vector<50x50xf32> to vector<50xf32>
    %67 = vector.shape_cast %66 : vector<50xf32> to vector<50x1xf32>
    %68 = vector.broadcast %67 : vector<50x1xf32> to vector<50x50xf32>
    %69 = arith.subf %65, %68 : vector<50x50xf32>
    %70 = math.exp %69 : vector<50x50xf32>
    %cst_34 = arith.constant dense<0.000000e+00> : vector<50xf32>
    %71 = vector.multi_reduction <add>, %70, %cst_34 [1] : vector<50x50xf32> to vector<50xf32>
    %72 = vector.shape_cast %71 : vector<50xf32> to vector<50x1xf32>
    %73 = tpu.reciprocal %72 {approx = true} : vector<50x1xf32> -> vector<50x1xf32>
    %74 = vector.broadcast %73 : vector<50x1xf32> to vector<50x50xf32>
    %75 = arith.mulf %70, %74 : vector<50x50xf32>
    %76 = arith.truncf %75 : vector<50x50xf32> to vector<50x50xbf16>
    %77 = arith.truncf %60 : vector<50x16xf32> to vector<50x16xbf16>
    %cst_35 = arith.constant dense<0.000000e+00> : vector<50x16xf32>
    %78 = tpu.matmul %76, %77, %cst_35 {dimension_numbers = #tpu.dot_dimension_numbers<[1], [0], [0], [1], [0, 0, 1, 1], [], []>} : vector<50x50xbf16>, vector<50x16xbf16>, vector<50x16xf32> -> vector<50x16xf32>
    %79 = vector.extract_strided_slice %56 {offsets = [0, 0], sizes = [16, 64], strides = [1, 1]} : vector<64x64xf32> to vector<16x64xf32>
    %80 = arith.truncf %78 : vector<50x16xf32> to vector<50x16xbf16>
    %81 = arith.truncf %79 : vector<16x64xf32> to vector<16x64xbf16>
    %cst_36 = arith.constant dense<0.000000e+00> : vector<50x64xf32>
    %82 = tpu.matmul %80, %81, %cst_36 {dimension_numbers = #tpu.dot_dimension_numbers<[1], [0], [0], [1], [0, 0, 1, 1], [], []>} : vector<50x16xbf16>, vector<16x64xbf16>, vector<50x64xf32> -> vector<50x64xf32>
    %83 = arith.addf %57, %82 : vector<50x64xf32>
    %84 = vector.extract_strided_slice %54 {offsets = [0, 16], sizes = [50, 16], strides = [1, 1]} : vector<50x192xf32> to vector<50x16xf32>
    %85 = vector.extract_strided_slice %54 {offsets = [0, 80], sizes = [50, 16], strides = [1, 1]} : vector<50x192xf32> to vector<50x16xf32>
    %86 = vector.extract_strided_slice %54 {offsets = [0, 144], sizes = [50, 16], strides = [1, 1]} : vector<50x192xf32> to vector<50x16xf32>
    %87 = arith.truncf %84 : vector<50x16xf32> to vector<50x16xbf16>
    %88 = arith.truncf %85 : vector<50x16xf32> to vector<50x16xbf16>
    %cst_37 = arith.constant dense<0.000000e+00> : vector<50x50xf32>
    %89 = tpu.matmul %87, %88, %cst_37 {dimension_numbers = #tpu.dot_dimension_numbers<[1], [1], [0], [0], [0, 0, 1, 0], [], []>} : vector<50x16xbf16>, vector<50x16xbf16>, vector<50x50xf32> -> vector<50x50xf32>
    %cst_38 = arith.constant 2.500000e-01 : f32
    %90 = vector.broadcast %cst_38 : f32 to vector<50x50xf32>
    %91 = arith.mulf %89, %90 : vector<50x50xf32>
    %cst_39 = arith.constant dense<0xFF800000> : vector<50xf32>
    %92 = vector.multi_reduction <maximumf>, %91, %cst_39 [1] : vector<50x50xf32> to vector<50xf32>
    %93 = vector.shape_cast %92 : vector<50xf32> to vector<50x1xf32>
    %94 = vector.broadcast %93 : vector<50x1xf32> to vector<50x50xf32>
    %95 = arith.subf %91, %94 : vector<50x50xf32>
    %96 = math.exp %95 : vector<50x50xf32>
    %cst_40 = arith.constant dense<0.000000e+00> : vector<50xf32>
    %97 = vector.multi_reduction <add>, %96, %cst_40 [1] : vector<50x50xf32> to vector<50xf32>
    %98 = vector.shape_cast %97 : vector<50xf32> to vector<50x1xf32>
    %99 = tpu.reciprocal %98 {approx = true} : vector<50x1xf32> -> vector<50x1xf32>
    %100 = vector.broadcast %99 : vector<50x1xf32> to vector<50x50xf32>
    %101 = arith.mulf %96, %100 : vector<50x50xf32>
    %102 = arith.truncf %101 : vector<50x50xf32> to vector<50x50xbf16>
    %103 = arith.truncf %86 : vector<50x16xf32> to vector<50x16xbf16>
    %cst_41 = arith.constant dense<0.000000e+00> : vector<50x16xf32>
    %104 = tpu.matmul %102, %103, %cst_41 {dimension_numbers = #tpu.dot_dimension_numbers<[1], [0], [0], [1], [0, 0, 1, 1], [], []>} : vector<50x50xbf16>, vector<50x16xbf16>, vector<50x16xf32> -> vector<50x16xf32>
    %105 = vector.extract_strided_slice %56 {offsets = [16, 0], sizes = [16, 64], strides = [1, 1]} : vector<64x64xf32> to vector<16x64xf32>
    %106 = arith.truncf %104 : vector<50x16xf32> to vector<50x16xbf16>
    %107 = arith.truncf %105 : vector<16x64xf32> to vector<16x64xbf16>
    %cst_42 = arith.constant dense<0.000000e+00> : vector<50x64xf32>
    %108 = tpu.matmul %106, %107, %cst_42 {dimension_numbers = #tpu.dot_dimension_numbers<[1], [0], [0], [1], [0, 0, 1, 1], [], []>} : vector<50x16xbf16>, vector<16x64xbf16>, vector<50x64xf32> -> vector<50x64xf32>
    %109 = arith.addf %83, %108 : vector<50x64xf32>
    %110 = vector.extract_strided_slice %54 {offsets = [0, 32], sizes = [50, 16], strides = [1, 1]} : vector<50x192xf32> to vector<50x16xf32>
    %111 = vector.extract_strided_slice %54 {offsets = [0, 96], sizes = [50, 16], strides = [1, 1]} : vector<50x192xf32> to vector<50x16xf32>
    %112 = vector.extract_strided_slice %54 {offsets = [0, 160], sizes = [50, 16], strides = [1, 1]} : vector<50x192xf32> to vector<50x16xf32>
    %113 = arith.truncf %110 : vector<50x16xf32> to vector<50x16xbf16>
    %114 = arith.truncf %111 : vector<50x16xf32> to vector<50x16xbf16>
    %cst_43 = arith.constant dense<0.000000e+00> : vector<50x50xf32>
    %115 = tpu.matmul %113, %114, %cst_43 {dimension_numbers = #tpu.dot_dimension_numbers<[1], [1], [0], [0], [0, 0, 1, 0], [], []>} : vector<50x16xbf16>, vector<50x16xbf16>, vector<50x50xf32> -> vector<50x50xf32>
    %cst_44 = arith.constant 2.500000e-01 : f32
    %116 = vector.broadcast %cst_44 : f32 to vector<50x50xf32>
    %117 = arith.mulf %115, %116 : vector<50x50xf32>
    %cst_45 = arith.constant dense<0xFF800000> : vector<50xf32>
    %118 = vector.multi_reduction <maximumf>, %117, %cst_45 [1] : vector<50x50xf32> to vector<50xf32>
    %119 = vector.shape_cast %118 : vector<50xf32> to vector<50x1xf32>
    %120 = vector.broadcast %119 : vector<50x1xf32> to vector<50x50xf32>
    %121 = arith.subf %117, %120 : vector<50x50xf32>
    %122 = math.exp %121 : vector<50x50xf32>
    %cst_46 = arith.constant dense<0.000000e+00> : vector<50xf32>
    %123 = vector.multi_reduction <add>, %122, %cst_46 [1] : vector<50x50xf32> to vector<50xf32>
    %124 = vector.shape_cast %123 : vector<50xf32> to vector<50x1xf32>
    %125 = tpu.reciprocal %124 {approx = true} : vector<50x1xf32> -> vector<50x1xf32>
    %126 = vector.broadcast %125 : vector<50x1xf32> to vector<50x50xf32>
    %127 = arith.mulf %122, %126 : vector<50x50xf32>
    %128 = arith.truncf %127 : vector<50x50xf32> to vector<50x50xbf16>
    %129 = arith.truncf %112 : vector<50x16xf32> to vector<50x16xbf16>
    %cst_47 = arith.constant dense<0.000000e+00> : vector<50x16xf32>
    %130 = tpu.matmul %128, %129, %cst_47 {dimension_numbers = #tpu.dot_dimension_numbers<[1], [0], [0], [1], [0, 0, 1, 1], [], []>} : vector<50x50xbf16>, vector<50x16xbf16>, vector<50x16xf32> -> vector<50x16xf32>
    %131 = vector.extract_strided_slice %56 {offsets = [32, 0], sizes = [16, 64], strides = [1, 1]} : vector<64x64xf32> to vector<16x64xf32>
    %132 = arith.truncf %130 : vector<50x16xf32> to vector<50x16xbf16>
    %133 = arith.truncf %131 : vector<16x64xf32> to vector<16x64xbf16>
    %cst_48 = arith.constant dense<0.000000e+00> : vector<50x64xf32>
    %134 = tpu.matmul %132, %133, %cst_48 {dimension_numbers = #tpu.dot_dimension_numbers<[1], [0], [0], [1], [0, 0, 1, 1], [], []>} : vector<50x16xbf16>, vector<16x64xbf16>, vector<50x64xf32> -> vector<50x64xf32>
    %135 = arith.addf %109, %134 : vector<50x64xf32>
    %136 = vector.extract_strided_slice %54 {offsets = [0, 48], sizes = [50, 16], strides = [1, 1]} : vector<50x192xf32> to vector<50x16xf32>
    %137 = vector.extract_strided_slice %54 {offsets = [0, 112], sizes = [50, 16], strides = [1, 1]} : vector<50x192xf32> to vector<50x16xf32>
    %138 = vector.extract_strided_slice %54 {offsets = [0, 176], sizes = [50, 16], strides = [1, 1]} : vector<50x192xf32> to vector<50x16xf32>
    %139 = arith.truncf %136 : vector<50x16xf32> to vector<50x16xbf16>
    %140 = arith.truncf %137 : vector<50x16xf32> to vector<50x16xbf16>
    %cst_49 = arith.constant dense<0.000000e+00> : vector<50x50xf32>
    %141 = tpu.matmul %139, %140, %cst_49 {dimension_numbers = #tpu.dot_dimension_numbers<[1], [1], [0], [0], [0, 0, 1, 0], [], []>} : vector<50x16xbf16>, vector<50x16xbf16>, vector<50x50xf32> -> vector<50x50xf32>
    %cst_50 = arith.constant 2.500000e-01 : f32
    %142 = vector.broadcast %cst_50 : f32 to vector<50x50xf32>
    %143 = arith.mulf %141, %142 : vector<50x50xf32>
    %cst_51 = arith.constant dense<0xFF800000> : vector<50xf32>
    %144 = vector.multi_reduction <maximumf>, %143, %cst_51 [1] : vector<50x50xf32> to vector<50xf32>
    %145 = vector.shape_cast %144 : vector<50xf32> to vector<50x1xf32>
    %146 = vector.broadcast %145 : vector<50x1xf32> to vector<50x50xf32>
    %147 = arith.subf %143, %146 : vector<50x50xf32>
    %148 = math.exp %147 : vector<50x50xf32>
    %cst_52 = arith.constant dense<0.000000e+00> : vector<50xf32>
    %149 = vector.multi_reduction <add>, %148, %cst_52 [1] : vector<50x50xf32> to vector<50xf32>
    %150 = vector.shape_cast %149 : vector<50xf32> to vector<50x1xf32>
    %151 = tpu.reciprocal %150 {approx = true} : vector<50x1xf32> -> vector<50x1xf32>
    %152 = vector.broadcast %151 : vector<50x1xf32> to vector<50x50xf32>
    %153 = arith.mulf %148, %152 : vector<50x50xf32>
    %154 = arith.truncf %153 : vector<50x50xf32> to vector<50x50xbf16>
    %155 = arith.truncf %138 : vector<50x16xf32> to vector<50x16xbf16>
    %cst_53 = arith.constant dense<0.000000e+00> : vector<50x16xf32>
    %156 = tpu.matmul %154, %155, %cst_53 {dimension_numbers = #tpu.dot_dimension_numbers<[1], [0], [0], [1], [0, 0, 1, 1], [], []>} : vector<50x50xbf16>, vector<50x16xbf16>, vector<50x16xf32> -> vector<50x16xf32>
    %157 = vector.extract_strided_slice %56 {offsets = [48, 0], sizes = [16, 64], strides = [1, 1]} : vector<64x64xf32> to vector<16x64xf32>
    %158 = arith.truncf %156 : vector<50x16xf32> to vector<50x16xbf16>
    %159 = arith.truncf %157 : vector<16x64xf32> to vector<16x64xbf16>
    %cst_54 = arith.constant dense<0.000000e+00> : vector<50x64xf32>
    %160 = tpu.matmul %158, %159, %cst_54 {dimension_numbers = #tpu.dot_dimension_numbers<[1], [0], [0], [1], [0, 0, 1, 1], [], []>} : vector<50x16xbf16>, vector<16x64xbf16>, vector<50x64xf32> -> vector<50x64xf32>
    %161 = arith.addf %135, %160 : vector<50x64xf32>
    %162 = arith.addf %29, %161 : vector<50x64xf32>
    %c0_55 = arith.constant 0 : index
    %c0_56 = arith.constant 0 : index
    %c0_57 = arith.constant 0 : index
    %163 = vector.load %arg9[%c0_55, %c0_56, %c0_57] : memref<2x1x64xf32, #tpu.memory_space<vmem>>, vector<1x1x64xf32>
    %164 = vector.shape_cast %163 : vector<1x1x64xf32> to vector<1x64xf32>
    %165 = vector.broadcast %164 : vector<1x64xf32> to vector<50x64xf32>
    %166 = arith.addf %162, %165 : vector<50x64xf32>
    %cst_58 = arith.constant dense<0.000000e+00> : vector<50xf32>
    %167 = vector.multi_reduction <add>, %166, %cst_58 [1] : vector<50x64xf32> to vector<50xf32>
    %168 = vector.shape_cast %167 : vector<50xf32> to vector<50x1xf32>
    %cst_59 = arith.constant 6.400000e+01 : f32
    %169 = vector.broadcast %cst_59 : f32 to vector<50x1xf32>
    %170 = arith.divf %168, %169 : vector<50x1xf32>
    %171 = vector.broadcast %170 : vector<50x1xf32> to vector<50x64xf32>
    %172 = arith.subf %166, %171 : vector<50x64xf32>
    %173 = arith.mulf %172, %172 : vector<50x64xf32>
    %cst_60 = arith.constant dense<0.000000e+00> : vector<50xf32>
    %174 = vector.multi_reduction <add>, %173, %cst_60 [1] : vector<50x64xf32> to vector<50xf32>
    %175 = vector.shape_cast %174 : vector<50xf32> to vector<50x1xf32>
    %cst_61 = arith.constant 6.400000e+01 : f32
    %176 = vector.broadcast %cst_61 : f32 to vector<50x1xf32>
    %177 = arith.divf %175, %176 : vector<50x1xf32>
    %cst_62 = arith.constant 9.99999974E-6 : f32
    %178 = vector.broadcast %cst_62 : f32 to vector<50x1xf32>
    %179 = arith.addf %177, %178 : vector<50x1xf32>
    %180 = math.rsqrt %179 : vector<50x1xf32>
    %181 = vector.broadcast %180 : vector<50x1xf32> to vector<50x64xf32>
    %182 = arith.mulf %172, %181 : vector<50x64xf32>
    %c0_63 = arith.constant 0 : index
    %c0_64 = arith.constant 0 : index
    %c0_65 = arith.constant 0 : index
    %183 = vector.load %arg10[%c0_63, %c0_64, %c0_65] : memref<2x64x256xf32, #tpu.memory_space<vmem>>, vector<1x64x256xf32>
    %184 = vector.shape_cast %183 : vector<1x64x256xf32> to vector<64x256xf32>
    %185 = arith.truncf %182 : vector<50x64xf32> to vector<50x64xbf16>
    %186 = arith.truncf %184 : vector<64x256xf32> to vector<64x256xbf16>
    %cst_66 = arith.constant dense<0.000000e+00> : vector<50x256xf32>
    %187 = tpu.matmul %185, %186, %cst_66 {dimension_numbers = #tpu.dot_dimension_numbers<[1], [0], [0], [1], [0, 0, 1, 1], [], []>} : vector<50x64xbf16>, vector<64x256xbf16>, vector<50x256xf32> -> vector<50x256xf32>
    %c0_67 = arith.constant 0 : index
    %c0_68 = arith.constant 0 : index
    %c0_69 = arith.constant 0 : index
    %188 = vector.load %arg11[%c0_67, %c0_68, %c0_69] : memref<2x1x256xf32, #tpu.memory_space<vmem>>, vector<1x1x256xf32>
    %189 = vector.shape_cast %188 : vector<1x1x256xf32> to vector<1x256xf32>
    %190 = vector.broadcast %189 : vector<1x256xf32> to vector<50x256xf32>
    %191 = arith.addf %187, %190 : vector<50x256xf32>
    %cst_70 = arith.constant 1.702000e+00 : f32
    %192 = vector.broadcast %cst_70 : f32 to vector<50x256xf32>
    %193 = arith.mulf %192, %191 : vector<50x256xf32>
    %194 = arith.negf %193 : vector<50x256xf32>
    %195 = math.exp %194 : vector<50x256xf32>
    %cst_71 = arith.constant 1.000000e+00 : f32
    %196 = vector.broadcast %cst_71 : f32 to vector<50x256xf32>
    %197 = arith.addf %196, %195 : vector<50x256xf32>
    %198 = arith.divf %196, %197 : vector<50x256xf32>
    %199 = arith.mulf %191, %198 : vector<50x256xf32>
    %c0_72 = arith.constant 0 : index
    %c0_73 = arith.constant 0 : index
    %c0_74 = arith.constant 0 : index
    %200 = vector.load %arg12[%c0_72, %c0_73, %c0_74] : memref<2x256x64xf32, #tpu.memory_space<vmem>>, vector<1x256x64xf32>
    %201 = vector.shape_cast %200 : vector<1x256x64xf32> to vector<256x64xf32>
    %202 = arith.truncf %199 : vector<50x256xf32> to vector<50x256xbf16>
    %203 = arith.truncf %201 : vector<256x64xf32> to vector<256x64xbf16>
    %cst_75 = arith.constant dense<0.000000e+00> : vector<50x64xf32>
    %204 = tpu.matmul %202, %203, %cst_75 {dimension_numbers = #tpu.dot_dimension_numbers<[1], [0], [0], [1], [0, 0, 1, 1], [], []>} : vector<50x256xbf16>, vector<256x64xbf16>, vector<50x64xf32> -> vector<50x64xf32>
    %205 = arith.addf %166, %204 : vector<50x64xf32>
    %c0_76 = arith.constant 0 : index
    %c0_77 = arith.constant 0 : index
    %c0_78 = arith.constant 0 : index
    %206 = vector.load %arg13[%c0_76, %c0_77, %c0_78] : memref<2x1x64xf32, #tpu.memory_space<vmem>>, vector<1x1x64xf32>
    %207 = vector.shape_cast %206 : vector<1x1x64xf32> to vector<1x64xf32>
    %208 = vector.broadcast %207 : vector<1x64xf32> to vector<50x64xf32>
    %209 = arith.addf %205, %208 : vector<50x64xf32>
    %cst_79 = arith.constant dense<0.000000e+00> : vector<50xf32>
    %210 = vector.multi_reduction <add>, %209, %cst_79 [1] : vector<50x64xf32> to vector<50xf32>
    %211 = vector.shape_cast %210 : vector<50xf32> to vector<50x1xf32>
    %cst_80 = arith.constant 6.400000e+01 : f32
    %212 = vector.broadcast %cst_80 : f32 to vector<50x1xf32>
    %213 = arith.divf %211, %212 : vector<50x1xf32>
    %214 = vector.broadcast %213 : vector<50x1xf32> to vector<50x64xf32>
    %215 = arith.subf %209, %214 : vector<50x64xf32>
    %216 = arith.mulf %215, %215 : vector<50x64xf32>
    %cst_81 = arith.constant dense<0.000000e+00> : vector<50xf32>
    %217 = vector.multi_reduction <add>, %216, %cst_81 [1] : vector<50x64xf32> to vector<50xf32>
    %218 = vector.shape_cast %217 : vector<50xf32> to vector<50x1xf32>
    %cst_82 = arith.constant 6.400000e+01 : f32
    %219 = vector.broadcast %cst_82 : f32 to vector<50x1xf32>
    %220 = arith.divf %218, %219 : vector<50x1xf32>
    %cst_83 = arith.constant 9.99999974E-6 : f32
    %221 = vector.broadcast %cst_83 : f32 to vector<50x1xf32>
    %222 = arith.addf %220, %221 : vector<50x1xf32>
    %223 = math.rsqrt %222 : vector<50x1xf32>
    %224 = vector.broadcast %223 : vector<50x1xf32> to vector<50x64xf32>
    %225 = arith.mulf %215, %224 : vector<50x64xf32>
    %c1 = arith.constant 1 : index
    %c0_84 = arith.constant 0 : index
    %c0_85 = arith.constant 0 : index
    %226 = vector.load %arg6[%c1, %c0_84, %c0_85] : memref<2x64x192xf32, #tpu.memory_space<vmem>>, vector<1x64x192xf32>
    %227 = vector.shape_cast %226 : vector<1x64x192xf32> to vector<64x192xf32>
    %228 = arith.truncf %225 : vector<50x64xf32> to vector<50x64xbf16>
    %229 = arith.truncf %227 : vector<64x192xf32> to vector<64x192xbf16>
    %cst_86 = arith.constant dense<0.000000e+00> : vector<50x192xf32>
    %230 = tpu.matmul %228, %229, %cst_86 {dimension_numbers = #tpu.dot_dimension_numbers<[1], [0], [0], [1], [0, 0, 1, 1], [], []>} : vector<50x64xbf16>, vector<64x192xbf16>, vector<50x192xf32> -> vector<50x192xf32>
    %c1_87 = arith.constant 1 : index
    %c0_88 = arith.constant 0 : index
    %c0_89 = arith.constant 0 : index
    %231 = vector.load %arg7[%c1_87, %c0_88, %c0_89] : memref<2x1x192xf32, #tpu.memory_space<vmem>>, vector<1x1x192xf32>
    %232 = vector.shape_cast %231 : vector<1x1x192xf32> to vector<1x192xf32>
    %233 = vector.broadcast %232 : vector<1x192xf32> to vector<50x192xf32>
    %234 = arith.addf %230, %233 : vector<50x192xf32>
    %c1_90 = arith.constant 1 : index
    %c0_91 = arith.constant 0 : index
    %c0_92 = arith.constant 0 : index
    %235 = vector.load %arg8[%c1_90, %c0_91, %c0_92] : memref<2x64x64xf32, #tpu.memory_space<vmem>>, vector<1x64x64xf32>
    %236 = vector.shape_cast %235 : vector<1x64x64xf32> to vector<64x64xf32>
    %cst_93 = arith.constant 0.000000e+00 : f32
    %237 = vector.broadcast %cst_93 : f32 to vector<50x64xf32>
    %238 = vector.extract_strided_slice %234 {offsets = [0, 0], sizes = [50, 16], strides = [1, 1]} : vector<50x192xf32> to vector<50x16xf32>
    %239 = vector.extract_strided_slice %234 {offsets = [0, 64], sizes = [50, 16], strides = [1, 1]} : vector<50x192xf32> to vector<50x16xf32>
    %240 = vector.extract_strided_slice %234 {offsets = [0, 128], sizes = [50, 16], strides = [1, 1]} : vector<50x192xf32> to vector<50x16xf32>
    %241 = arith.truncf %238 : vector<50x16xf32> to vector<50x16xbf16>
    %242 = arith.truncf %239 : vector<50x16xf32> to vector<50x16xbf16>
    %cst_94 = arith.constant dense<0.000000e+00> : vector<50x50xf32>
    %243 = tpu.matmul %241, %242, %cst_94 {dimension_numbers = #tpu.dot_dimension_numbers<[1], [1], [0], [0], [0, 0, 1, 0], [], []>} : vector<50x16xbf16>, vector<50x16xbf16>, vector<50x50xf32> -> vector<50x50xf32>
    %cst_95 = arith.constant 2.500000e-01 : f32
    %244 = vector.broadcast %cst_95 : f32 to vector<50x50xf32>
    %245 = arith.mulf %243, %244 : vector<50x50xf32>
    %cst_96 = arith.constant dense<0xFF800000> : vector<50xf32>
    %246 = vector.multi_reduction <maximumf>, %245, %cst_96 [1] : vector<50x50xf32> to vector<50xf32>
    %247 = vector.shape_cast %246 : vector<50xf32> to vector<50x1xf32>
    %248 = vector.broadcast %247 : vector<50x1xf32> to vector<50x50xf32>
    %249 = arith.subf %245, %248 : vector<50x50xf32>
    %250 = math.exp %249 : vector<50x50xf32>
    %cst_97 = arith.constant dense<0.000000e+00> : vector<50xf32>
    %251 = vector.multi_reduction <add>, %250, %cst_97 [1] : vector<50x50xf32> to vector<50xf32>
    %252 = vector.shape_cast %251 : vector<50xf32> to vector<50x1xf32>
    %253 = tpu.reciprocal %252 {approx = true} : vector<50x1xf32> -> vector<50x1xf32>
    %254 = vector.broadcast %253 : vector<50x1xf32> to vector<50x50xf32>
    %255 = arith.mulf %250, %254 : vector<50x50xf32>
    %256 = arith.truncf %255 : vector<50x50xf32> to vector<50x50xbf16>
    %257 = arith.truncf %240 : vector<50x16xf32> to vector<50x16xbf16>
    %cst_98 = arith.constant dense<0.000000e+00> : vector<50x16xf32>
    %258 = tpu.matmul %256, %257, %cst_98 {dimension_numbers = #tpu.dot_dimension_numbers<[1], [0], [0], [1], [0, 0, 1, 1], [], []>} : vector<50x50xbf16>, vector<50x16xbf16>, vector<50x16xf32> -> vector<50x16xf32>
    %259 = vector.extract_strided_slice %236 {offsets = [0, 0], sizes = [16, 64], strides = [1, 1]} : vector<64x64xf32> to vector<16x64xf32>
    %260 = arith.truncf %258 : vector<50x16xf32> to vector<50x16xbf16>
    %261 = arith.truncf %259 : vector<16x64xf32> to vector<16x64xbf16>
    %cst_99 = arith.constant dense<0.000000e+00> : vector<50x64xf32>
    %262 = tpu.matmul %260, %261, %cst_99 {dimension_numbers = #tpu.dot_dimension_numbers<[1], [0], [0], [1], [0, 0, 1, 1], [], []>} : vector<50x16xbf16>, vector<16x64xbf16>, vector<50x64xf32> -> vector<50x64xf32>
    %263 = arith.addf %237, %262 : vector<50x64xf32>
    %264 = vector.extract_strided_slice %234 {offsets = [0, 16], sizes = [50, 16], strides = [1, 1]} : vector<50x192xf32> to vector<50x16xf32>
    %265 = vector.extract_strided_slice %234 {offsets = [0, 80], sizes = [50, 16], strides = [1, 1]} : vector<50x192xf32> to vector<50x16xf32>
    %266 = vector.extract_strided_slice %234 {offsets = [0, 144], sizes = [50, 16], strides = [1, 1]} : vector<50x192xf32> to vector<50x16xf32>
    %267 = arith.truncf %264 : vector<50x16xf32> to vector<50x16xbf16>
    %268 = arith.truncf %265 : vector<50x16xf32> to vector<50x16xbf16>
    %cst_100 = arith.constant dense<0.000000e+00> : vector<50x50xf32>
    %269 = tpu.matmul %267, %268, %cst_100 {dimension_numbers = #tpu.dot_dimension_numbers<[1], [1], [0], [0], [0, 0, 1, 0], [], []>} : vector<50x16xbf16>, vector<50x16xbf16>, vector<50x50xf32> -> vector<50x50xf32>
    %cst_101 = arith.constant 2.500000e-01 : f32
    %270 = vector.broadcast %cst_101 : f32 to vector<50x50xf32>
    %271 = arith.mulf %269, %270 : vector<50x50xf32>
    %cst_102 = arith.constant dense<0xFF800000> : vector<50xf32>
    %272 = vector.multi_reduction <maximumf>, %271, %cst_102 [1] : vector<50x50xf32> to vector<50xf32>
    %273 = vector.shape_cast %272 : vector<50xf32> to vector<50x1xf32>
    %274 = vector.broadcast %273 : vector<50x1xf32> to vector<50x50xf32>
    %275 = arith.subf %271, %274 : vector<50x50xf32>
    %276 = math.exp %275 : vector<50x50xf32>
    %cst_103 = arith.constant dense<0.000000e+00> : vector<50xf32>
    %277 = vector.multi_reduction <add>, %276, %cst_103 [1] : vector<50x50xf32> to vector<50xf32>
    %278 = vector.shape_cast %277 : vector<50xf32> to vector<50x1xf32>
    %279 = tpu.reciprocal %278 {approx = true} : vector<50x1xf32> -> vector<50x1xf32>
    %280 = vector.broadcast %279 : vector<50x1xf32> to vector<50x50xf32>
    %281 = arith.mulf %276, %280 : vector<50x50xf32>
    %282 = arith.truncf %281 : vector<50x50xf32> to vector<50x50xbf16>
    %283 = arith.truncf %266 : vector<50x16xf32> to vector<50x16xbf16>
    %cst_104 = arith.constant dense<0.000000e+00> : vector<50x16xf32>
    %284 = tpu.matmul %282, %283, %cst_104 {dimension_numbers = #tpu.dot_dimension_numbers<[1], [0], [0], [1], [0, 0, 1, 1], [], []>} : vector<50x50xbf16>, vector<50x16xbf16>, vector<50x16xf32> -> vector<50x16xf32>
    %285 = vector.extract_strided_slice %236 {offsets = [16, 0], sizes = [16, 64], strides = [1, 1]} : vector<64x64xf32> to vector<16x64xf32>
    %286 = arith.truncf %284 : vector<50x16xf32> to vector<50x16xbf16>
    %287 = arith.truncf %285 : vector<16x64xf32> to vector<16x64xbf16>
    %cst_105 = arith.constant dense<0.000000e+00> : vector<50x64xf32>
    %288 = tpu.matmul %286, %287, %cst_105 {dimension_numbers = #tpu.dot_dimension_numbers<[1], [0], [0], [1], [0, 0, 1, 1], [], []>} : vector<50x16xbf16>, vector<16x64xbf16>, vector<50x64xf32> -> vector<50x64xf32>
    %289 = arith.addf %263, %288 : vector<50x64xf32>
    %290 = vector.extract_strided_slice %234 {offsets = [0, 32], sizes = [50, 16], strides = [1, 1]} : vector<50x192xf32> to vector<50x16xf32>
    %291 = vector.extract_strided_slice %234 {offsets = [0, 96], sizes = [50, 16], strides = [1, 1]} : vector<50x192xf32> to vector<50x16xf32>
    %292 = vector.extract_strided_slice %234 {offsets = [0, 160], sizes = [50, 16], strides = [1, 1]} : vector<50x192xf32> to vector<50x16xf32>
    %293 = arith.truncf %290 : vector<50x16xf32> to vector<50x16xbf16>
    %294 = arith.truncf %291 : vector<50x16xf32> to vector<50x16xbf16>
    %cst_106 = arith.constant dense<0.000000e+00> : vector<50x50xf32>
    %295 = tpu.matmul %293, %294, %cst_106 {dimension_numbers = #tpu.dot_dimension_numbers<[1], [1], [0], [0], [0, 0, 1, 0], [], []>} : vector<50x16xbf16>, vector<50x16xbf16>, vector<50x50xf32> -> vector<50x50xf32>
    %cst_107 = arith.constant 2.500000e-01 : f32
    %296 = vector.broadcast %cst_107 : f32 to vector<50x50xf32>
    %297 = arith.mulf %295, %296 : vector<50x50xf32>
    %cst_108 = arith.constant dense<0xFF800000> : vector<50xf32>
    %298 = vector.multi_reduction <maximumf>, %297, %cst_108 [1] : vector<50x50xf32> to vector<50xf32>
    %299 = vector.shape_cast %298 : vector<50xf32> to vector<50x1xf32>
    %300 = vector.broadcast %299 : vector<50x1xf32> to vector<50x50xf32>
    %301 = arith.subf %297, %300 : vector<50x50xf32>
    %302 = math.exp %301 : vector<50x50xf32>
    %cst_109 = arith.constant dense<0.000000e+00> : vector<50xf32>
    %303 = vector.multi_reduction <add>, %302, %cst_109 [1] : vector<50x50xf32> to vector<50xf32>
    %304 = vector.shape_cast %303 : vector<50xf32> to vector<50x1xf32>
    %305 = tpu.reciprocal %304 {approx = true} : vector<50x1xf32> -> vector<50x1xf32>
    %306 = vector.broadcast %305 : vector<50x1xf32> to vector<50x50xf32>
    %307 = arith.mulf %302, %306 : vector<50x50xf32>
    %308 = arith.truncf %307 : vector<50x50xf32> to vector<50x50xbf16>
    %309 = arith.truncf %292 : vector<50x16xf32> to vector<50x16xbf16>
    %cst_110 = arith.constant dense<0.000000e+00> : vector<50x16xf32>
    %310 = tpu.matmul %308, %309, %cst_110 {dimension_numbers = #tpu.dot_dimension_numbers<[1], [0], [0], [1], [0, 0, 1, 1], [], []>} : vector<50x50xbf16>, vector<50x16xbf16>, vector<50x16xf32> -> vector<50x16xf32>
    %311 = vector.extract_strided_slice %236 {offsets = [32, 0], sizes = [16, 64], strides = [1, 1]} : vector<64x64xf32> to vector<16x64xf32>
    %312 = arith.truncf %310 : vector<50x16xf32> to vector<50x16xbf16>
    %313 = arith.truncf %311 : vector<16x64xf32> to vector<16x64xbf16>
    %cst_111 = arith.constant dense<0.000000e+00> : vector<50x64xf32>
    %314 = tpu.matmul %312, %313, %cst_111 {dimension_numbers = #tpu.dot_dimension_numbers<[1], [0], [0], [1], [0, 0, 1, 1], [], []>} : vector<50x16xbf16>, vector<16x64xbf16>, vector<50x64xf32> -> vector<50x64xf32>
    %315 = arith.addf %289, %314 : vector<50x64xf32>
    %316 = vector.extract_strided_slice %234 {offsets = [0, 48], sizes = [50, 16], strides = [1, 1]} : vector<50x192xf32> to vector<50x16xf32>
    %317 = vector.extract_strided_slice %234 {offsets = [0, 112], sizes = [50, 16], strides = [1, 1]} : vector<50x192xf32> to vector<50x16xf32>
    %318 = vector.extract_strided_slice %234 {offsets = [0, 176], sizes = [50, 16], strides = [1, 1]} : vector<50x192xf32> to vector<50x16xf32>
    %319 = arith.truncf %316 : vector<50x16xf32> to vector<50x16xbf16>
    %320 = arith.truncf %317 : vector<50x16xf32> to vector<50x16xbf16>
    %cst_112 = arith.constant dense<0.000000e+00> : vector<50x50xf32>
    %321 = tpu.matmul %319, %320, %cst_112 {dimension_numbers = #tpu.dot_dimension_numbers<[1], [1], [0], [0], [0, 0, 1, 0], [], []>} : vector<50x16xbf16>, vector<50x16xbf16>, vector<50x50xf32> -> vector<50x50xf32>
    %cst_113 = arith.constant 2.500000e-01 : f32
    %322 = vector.broadcast %cst_113 : f32 to vector<50x50xf32>
    %323 = arith.mulf %321, %322 : vector<50x50xf32>
    %cst_114 = arith.constant dense<0xFF800000> : vector<50xf32>
    %324 = vector.multi_reduction <maximumf>, %323, %cst_114 [1] : vector<50x50xf32> to vector<50xf32>
    %325 = vector.shape_cast %324 : vector<50xf32> to vector<50x1xf32>
    %326 = vector.broadcast %325 : vector<50x1xf32> to vector<50x50xf32>
    %327 = arith.subf %323, %326 : vector<50x50xf32>
    %328 = math.exp %327 : vector<50x50xf32>
    %cst_115 = arith.constant dense<0.000000e+00> : vector<50xf32>
    %329 = vector.multi_reduction <add>, %328, %cst_115 [1] : vector<50x50xf32> to vector<50xf32>
    %330 = vector.shape_cast %329 : vector<50xf32> to vector<50x1xf32>
    %331 = tpu.reciprocal %330 {approx = true} : vector<50x1xf32> -> vector<50x1xf32>
    %332 = vector.broadcast %331 : vector<50x1xf32> to vector<50x50xf32>
    %333 = arith.mulf %328, %332 : vector<50x50xf32>
    %334 = arith.truncf %333 : vector<50x50xf32> to vector<50x50xbf16>
    %335 = arith.truncf %318 : vector<50x16xf32> to vector<50x16xbf16>
    %cst_116 = arith.constant dense<0.000000e+00> : vector<50x16xf32>
    %336 = tpu.matmul %334, %335, %cst_116 {dimension_numbers = #tpu.dot_dimension_numbers<[1], [0], [0], [1], [0, 0, 1, 1], [], []>} : vector<50x50xbf16>, vector<50x16xbf16>, vector<50x16xf32> -> vector<50x16xf32>
    %337 = vector.extract_strided_slice %236 {offsets = [48, 0], sizes = [16, 64], strides = [1, 1]} : vector<64x64xf32> to vector<16x64xf32>
    %338 = arith.truncf %336 : vector<50x16xf32> to vector<50x16xbf16>
    %339 = arith.truncf %337 : vector<16x64xf32> to vector<16x64xbf16>
    %cst_117 = arith.constant dense<0.000000e+00> : vector<50x64xf32>
    %340 = tpu.matmul %338, %339, %cst_117 {dimension_numbers = #tpu.dot_dimension_numbers<[1], [0], [0], [1], [0, 0, 1, 1], [], []>} : vector<50x16xbf16>, vector<16x64xbf16>, vector<50x64xf32> -> vector<50x64xf32>
    %341 = arith.addf %315, %340 : vector<50x64xf32>
    %342 = arith.addf %209, %341 : vector<50x64xf32>
    %c1_118 = arith.constant 1 : index
    %c0_119 = arith.constant 0 : index
    %c0_120 = arith.constant 0 : index
    %343 = vector.load %arg9[%c1_118, %c0_119, %c0_120] : memref<2x1x64xf32, #tpu.memory_space<vmem>>, vector<1x1x64xf32>
    %344 = vector.shape_cast %343 : vector<1x1x64xf32> to vector<1x64xf32>
    %345 = vector.broadcast %344 : vector<1x64xf32> to vector<50x64xf32>
    %346 = arith.addf %342, %345 : vector<50x64xf32>
    %cst_121 = arith.constant dense<0.000000e+00> : vector<50xf32>
    %347 = vector.multi_reduction <add>, %346, %cst_121 [1] : vector<50x64xf32> to vector<50xf32>
    %348 = vector.shape_cast %347 : vector<50xf32> to vector<50x1xf32>
    %cst_122 = arith.constant 6.400000e+01 : f32
    %349 = vector.broadcast %cst_122 : f32 to vector<50x1xf32>
    %350 = arith.divf %348, %349 : vector<50x1xf32>
    %351 = vector.broadcast %350 : vector<50x1xf32> to vector<50x64xf32>
    %352 = arith.subf %346, %351 : vector<50x64xf32>
    %353 = arith.mulf %352, %352 : vector<50x64xf32>
    %cst_123 = arith.constant dense<0.000000e+00> : vector<50xf32>
    %354 = vector.multi_reduction <add>, %353, %cst_123 [1] : vector<50x64xf32> to vector<50xf32>
    %355 = vector.shape_cast %354 : vector<50xf32> to vector<50x1xf32>
    %cst_124 = arith.constant 6.400000e+01 : f32
    %356 = vector.broadcast %cst_124 : f32 to vector<50x1xf32>
    %357 = arith.divf %355, %356 : vector<50x1xf32>
    %cst_125 = arith.constant 9.99999974E-6 : f32
    %358 = vector.broadcast %cst_125 : f32 to vector<50x1xf32>
    %359 = arith.addf %357, %358 : vector<50x1xf32>
    %360 = math.rsqrt %359 : vector<50x1xf32>
    %361 = vector.broadcast %360 : vector<50x1xf32> to vector<50x64xf32>
    %362 = arith.mulf %352, %361 : vector<50x64xf32>
    %c1_126 = arith.constant 1 : index
    %c0_127 = arith.constant 0 : index
    %c0_128 = arith.constant 0 : index
    %363 = vector.load %arg10[%c1_126, %c0_127, %c0_128] : memref<2x64x256xf32, #tpu.memory_space<vmem>>, vector<1x64x256xf32>
    %364 = vector.shape_cast %363 : vector<1x64x256xf32> to vector<64x256xf32>
    %365 = arith.truncf %362 : vector<50x64xf32> to vector<50x64xbf16>
    %366 = arith.truncf %364 : vector<64x256xf32> to vector<64x256xbf16>
    %cst_129 = arith.constant dense<0.000000e+00> : vector<50x256xf32>
    %367 = tpu.matmul %365, %366, %cst_129 {dimension_numbers = #tpu.dot_dimension_numbers<[1], [0], [0], [1], [0, 0, 1, 1], [], []>} : vector<50x64xbf16>, vector<64x256xbf16>, vector<50x256xf32> -> vector<50x256xf32>
    %c1_130 = arith.constant 1 : index
    %c0_131 = arith.constant 0 : index
    %c0_132 = arith.constant 0 : index
    %368 = vector.load %arg11[%c1_130, %c0_131, %c0_132] : memref<2x1x256xf32, #tpu.memory_space<vmem>>, vector<1x1x256xf32>
    %369 = vector.shape_cast %368 : vector<1x1x256xf32> to vector<1x256xf32>
    %370 = vector.broadcast %369 : vector<1x256xf32> to vector<50x256xf32>
    %371 = arith.addf %367, %370 : vector<50x256xf32>
    %cst_133 = arith.constant 1.702000e+00 : f32
    %372 = vector.broadcast %cst_133 : f32 to vector<50x256xf32>
    %373 = arith.mulf %372, %371 : vector<50x256xf32>
    %374 = arith.negf %373 : vector<50x256xf32>
    %375 = math.exp %374 : vector<50x256xf32>
    %cst_134 = arith.constant 1.000000e+00 : f32
    %376 = vector.broadcast %cst_134 : f32 to vector<50x256xf32>
    %377 = arith.addf %376, %375 : vector<50x256xf32>
    %378 = arith.divf %376, %377 : vector<50x256xf32>
    %379 = arith.mulf %371, %378 : vector<50x256xf32>
    %c1_135 = arith.constant 1 : index
    %c0_136 = arith.constant 0 : index
    %c0_137 = arith.constant 0 : index
    %380 = vector.load %arg12[%c1_135, %c0_136, %c0_137] : memref<2x256x64xf32, #tpu.memory_space<vmem>>, vector<1x256x64xf32>
    %381 = vector.shape_cast %380 : vector<1x256x64xf32> to vector<256x64xf32>
    %382 = arith.truncf %379 : vector<50x256xf32> to vector<50x256xbf16>
    %383 = arith.truncf %381 : vector<256x64xf32> to vector<256x64xbf16>
    %cst_138 = arith.constant dense<0.000000e+00> : vector<50x64xf32>
    %384 = tpu.matmul %382, %383, %cst_138 {dimension_numbers = #tpu.dot_dimension_numbers<[1], [0], [0], [1], [0, 0, 1, 1], [], []>} : vector<50x256xbf16>, vector<256x64xbf16>, vector<50x64xf32> -> vector<50x64xf32>
    %385 = arith.addf %346, %384 : vector<50x64xf32>
    %c1_139 = arith.constant 1 : index
    %c0_140 = arith.constant 0 : index
    %c0_141 = arith.constant 0 : index
    %386 = vector.load %arg13[%c1_139, %c0_140, %c0_141] : memref<2x1x64xf32, #tpu.memory_space<vmem>>, vector<1x1x64xf32>
    %387 = vector.shape_cast %386 : vector<1x1x64xf32> to vector<1x64xf32>
    %388 = vector.broadcast %387 : vector<1x64xf32> to vector<50x64xf32>
    %389 = arith.addf %385, %388 : vector<50x64xf32>
    %390 = vector.extract_strided_slice %389 {offsets = [0, 0], sizes = [1, 64], strides = [1, 1]} : vector<50x64xf32> to vector<1x64xf32>
    %cst_142 = arith.constant dense<0.000000e+00> : vector<1xf32>
    %391 = vector.multi_reduction <add>, %390, %cst_142 [1] : vector<1x64xf32> to vector<1xf32>
    %392 = vector.shape_cast %391 : vector<1xf32> to vector<1x1xf32>
    %cst_143 = arith.constant 6.400000e+01 : f32
    %393 = vector.broadcast %cst_143 : f32 to vector<1x1xf32>
    %394 = arith.divf %392, %393 : vector<1x1xf32>
    %395 = vector.broadcast %394 : vector<1x1xf32> to vector<1x64xf32>
    %396 = arith.subf %390, %395 : vector<1x64xf32>
    %397 = arith.mulf %396, %396 : vector<1x64xf32>
    %cst_144 = arith.constant dense<0.000000e+00> : vector<1xf32>
    %398 = vector.multi_reduction <add>, %397, %cst_144 [1] : vector<1x64xf32> to vector<1xf32>
    %399 = vector.shape_cast %398 : vector<1xf32> to vector<1x1xf32>
    %cst_145 = arith.constant 6.400000e+01 : f32
    %400 = vector.broadcast %cst_145 : f32 to vector<1x1xf32>
    %401 = arith.divf %399, %400 : vector<1x1xf32>
    %cst_146 = arith.constant 9.99999974E-6 : f32
    %402 = vector.broadcast %cst_146 : f32 to vector<1x1xf32>
    %403 = arith.addf %401, %402 : vector<1x1xf32>
    %404 = math.rsqrt %403 : vector<1x1xf32>
    %405 = vector.broadcast %404 : vector<1x1xf32> to vector<1x64xf32>
    %406 = arith.mulf %396, %405 : vector<1x64xf32>
    %c0_147 = arith.constant 0 : index
    %c0_148 = arith.constant 0 : index
    %407 = vector.load %arg14[%c0_147, %c0_148] : memref<64x32xf32, #tpu.memory_space<vmem>>, vector<64x32xf32>
    %408 = arith.truncf %406 : vector<1x64xf32> to vector<1x64xbf16>
    %409 = arith.truncf %407 : vector<64x32xf32> to vector<64x32xbf16>
    %cst_149 = arith.constant dense<0.000000e+00> : vector<1x32xf32>
    %410 = tpu.matmul %408, %409, %cst_149 {dimension_numbers = #tpu.dot_dimension_numbers<[1], [0], [0], [1], [0, 0, 1, 1], [], []>} : vector<1x64xbf16>, vector<64x32xbf16>, vector<1x32xf32> -> vector<1x32xf32>
    %c0_150 = arith.constant 0 : index
    %c0_151 = arith.constant 0 : index
    %411 = vector.load %arg15[%c0_150, %c0_151] : memref<1x32xf32, #tpu.memory_space<vmem>>, vector<1x32xf32>
    %412 = arith.addf %410, %411 : vector<1x32xf32>
    %c0_152 = arith.constant 0 : index
    %c0_153 = arith.constant 0 : index
    %c0_154 = arith.constant 0 : index
    %413 = vector.load %arg16[%c0_152, %c0_153, %c0_154] : memref<1x1x32xf32, #tpu.memory_space<vmem>>, vector<1x1x32xf32>
    %414 = vector.shape_cast %413 : vector<1x1x32xf32> to vector<1x32xf32>
    %415 = vector.shape_cast %412 : vector<1x32xf32> to vector<1x1x32xf32>
    tpu.vector_store %arg16[%c0_152, %c0_153, %c0_154], %415 {strides = array<i32>} : memref<1x1x32xf32, #tpu.memory_space<vmem>>, vector<1x1x32xf32>,
    return
  }
  func.func @transform_0(%arg0: i32) -> (i32, i32, i32) {
    %c0_i32 = arith.constant 0 : i32
    %c0_i32_0 = arith.constant 0 : i32
    %c0_i32_1 = arith.constant 0 : i32
    return %arg0, %c0_i32, %c0_i32_0 : i32, i32, i32
  }
  func.func @transform_1(%arg0: i32) -> (i32, i32) {
    %c0_i32 = arith.constant 0 : i32
    %c0_i32_0 = arith.constant 0 : i32
    %c0_i32_1 = arith.constant 0 : i32
    return %c0_i32, %c0_i32_0 : i32, i32
  }
  func.func @transform_2(%arg0: i32) -> (i32, i32) {
    %c0_i32 = arith.constant 0 : i32
    %c0_i32_0 = arith.constant 0 : i32
    %c0_i32_1 = arith.constant 0 : i32
    return %c0_i32, %c0_i32_0 : i32, i32
  }
  func.func @transform_3(%arg0: i32) -> (i32, i32) {
    %c0_i32 = arith.constant 0 : i32
    %c0_i32_0 = arith.constant 0 : i32
    %c0_i32_1 = arith.constant 0 : i32
    return %c0_i32, %c0_i32_0 : i32, i32
  }
  func.func @transform_4(%arg0: i32) -> (i32, i32) {
    %c0_i32 = arith.constant 0 : i32
    %c0_i32_0 = arith.constant 0 : i32
    %c0_i32_1 = arith.constant 0 : i32
    return %c0_i32, %c0_i32_0 : i32, i32
  }
  func.func @transform_5(%arg0: i32) -> (i32, i32, i32) {
    %c0_i32 = arith.constant 0 : i32
    %c0_i32_0 = arith.constant 0 : i32
    %c0_i32_1 = arith.constant 0 : i32
    %c0_i32_2 = arith.constant 0 : i32
    return %c0_i32, %c0_i32_0, %c0_i32_1 : i32, i32, i32
  }
  func.func @transform_6(%arg0: i32) -> (i32, i32, i32) {
    %c0_i32 = arith.constant 0 : i32
    %c0_i32_0 = arith.constant 0 : i32
    %c0_i32_1 = arith.constant 0 : i32
    %c0_i32_2 = arith.constant 0 : i32
    return %c0_i32, %c0_i32_0, %c0_i32_1 : i32, i32, i32
  }
  func.func @transform_7(%arg0: i32) -> (i32, i32, i32) {
    %c0_i32 = arith.constant 0 : i32
    %c0_i32_0 = arith.constant 0 : i32
    %c0_i32_1 = arith.constant 0 : i32
    %c0_i32_2 = arith.constant 0 : i32
    return %c0_i32, %c0_i32_0, %c0_i32_1 : i32, i32, i32
  }
  func.func @transform_8(%arg0: i32) -> (i32, i32, i32) {
    %c0_i32 = arith.constant 0 : i32
    %c0_i32_0 = arith.constant 0 : i32
    %c0_i32_1 = arith.constant 0 : i32
    %c0_i32_2 = arith.constant 0 : i32
    return %c0_i32, %c0_i32_0, %c0_i32_1 : i32, i32, i32
  }
  func.func @transform_9(%arg0: i32) -> (i32, i32, i32) {
    %c0_i32 = arith.constant 0 : i32
    %c0_i32_0 = arith.constant 0 : i32
    %c0_i32_1 = arith.constant 0 : i32
    %c0_i32_2 = arith.constant 0 : i32
    return %c0_i32, %c0_i32_0, %c0_i32_1 : i32, i32, i32
  }
  func.func @transform_10(%arg0: i32) -> (i32, i32, i32) {
    %c0_i32 = arith.constant 0 : i32
    %c0_i32_0 = arith.constant 0 : i32
    %c0_i32_1 = arith.constant 0 : i32
    %c0_i32_2 = arith.constant 0 : i32
    return %c0_i32, %c0_i32_0, %c0_i32_1 : i32, i32, i32
  }
  func.func @transform_11(%arg0: i32) -> (i32, i32, i32) {
    %c0_i32 = arith.constant 0 : i32
    %c0_i32_0 = arith.constant 0 : i32
    %c0_i32_1 = arith.constant 0 : i32
    %c0_i32_2 = arith.constant 0 : i32
    return %c0_i32, %c0_i32_0, %c0_i32_1 : i32, i32, i32
  }
  func.func @transform_12(%arg0: i32) -> (i32, i32, i32) {
    %c0_i32 = arith.constant 0 : i32
    %c0_i32_0 = arith.constant 0 : i32
    %c0_i32_1 = arith.constant 0 : i32
    %c0_i32_2 = arith.constant 0 : i32
    return %c0_i32, %c0_i32_0, %c0_i32_1 : i32, i32, i32
  }
  func.func @transform_13(%arg0: i32) -> (i32, i32) {
    %c0_i32 = arith.constant 0 : i32
    %c0_i32_0 = arith.constant 0 : i32
    %c0_i32_1 = arith.constant 0 : i32
    return %c0_i32, %c0_i32_0 : i32, i32
  }
  func.func @transform_14(%arg0: i32) -> (i32, i32) {
    %c0_i32 = arith.constant 0 : i32
    %c0_i32_0 = arith.constant 0 : i32
    %c0_i32_1 = arith.constant 0 : i32
    return %c0_i32, %c0_i32_0 : i32, i32
  }
  func.func @transform_15(%arg0: i32) -> (i32, i32, i32) {
    %c0_i32 = arith.constant 0 : i32
    %c0_i32_0 = arith.constant 0 : i32
    %c0_i32_1 = arith.constant 0 : i32
    return %arg0, %c0_i32, %c0_i32_0 : i32, i32, i32
  }
}

module attributes {stable_mosaic.version = 11 : i64} {
  func.func @kernel(%arg0: i32, %arg1: memref<1xf32, #tpu.memory_space<smem>>, %arg2: memref<2x32xf32, #tpu.memory_space<vmem>>, %arg3: memref<2x32xf32, #tpu.memory_space<vmem>>, %arg4: memref<2x2xf32, #tpu.memory_space<vmem>>) attributes {dimension_semantics = [#tpu.dimension_semantics<arbitrary>], iteration_bounds = array<i64: 1>, scalar_prefetch = 0 : i64, scratch_operands = 0 : i64, tpu.core_type = #tpu.core_type<tc>, window_params = [{transform_indices = @transform_0, window_bounds = array<i64: 1>}, {pipeline_mode = #tpu.pipeline_mode<synchronous>, transform_indices = @transform_1, window_bounds = array<i64: 2, 32>}, {pipeline_mode = #tpu.pipeline_mode<synchronous>, transform_indices = @transform_2, window_bounds = array<i64: 2, 32>}, {pipeline_mode = #tpu.pipeline_mode<synchronous>, transform_indices = @transform_3, window_bounds = array<i64: 2, 2>}]} {
    %c0 = arith.constant 0 : index
    %c0_0 = arith.constant 0 : index
    %0 = vector.load %arg2[%c0, %c0_0] : memref<2x32xf32, #tpu.memory_space<vmem>>, vector<2x32xf32>
    %c0_1 = arith.constant 0 : index
    %c0_2 = arith.constant 0 : index
    %1 = vector.load %arg3[%c0_1, %c0_2] : memref<2x32xf32, #tpu.memory_space<vmem>>, vector<2x32xf32>
    %2 = arith.mulf %0, %0 : vector<2x32xf32>
    %cst = arith.constant dense<0.000000e+00> : vector<2xf32>
    %3 = vector.multi_reduction <add>, %2, %cst [1] : vector<2x32xf32> to vector<2xf32>
    %4 = vector.shape_cast %3 : vector<2xf32> to vector<2x1xf32>
    %5 = math.rsqrt %4 : vector<2x1xf32>
    %6 = vector.broadcast %5 : vector<2x1xf32> to vector<2x32xf32>
    %7 = arith.mulf %0, %6 : vector<2x32xf32>
    %8 = arith.mulf %1, %1 : vector<2x32xf32>
    %cst_3 = arith.constant dense<0.000000e+00> : vector<2xf32>
    %9 = vector.multi_reduction <add>, %8, %cst_3 [1] : vector<2x32xf32> to vector<2xf32>
    %10 = vector.shape_cast %9 : vector<2xf32> to vector<2x1xf32>
    %11 = math.rsqrt %10 : vector<2x1xf32>
    %12 = vector.broadcast %11 : vector<2x1xf32> to vector<2x32xf32>
    %13 = arith.mulf %1, %12 : vector<2x32xf32>
    %c0_4 = arith.constant 0 : index
    %14 = memref.load %arg1[%c0_4] : memref<1xf32, #tpu.memory_space<smem>>
    %cst_5 = arith.constant dense<0.000000e+00> : vector<2x2xf32>
    %15 = tpu.matmul %7, %13, %cst_5 {dimension_numbers = #tpu.dot_dimension_numbers<[1], [1], [0], [0], [0, 0, 1, 0], [], []>} : vector<2x32xf32>, vector<2x32xf32>, vector<2x2xf32> -> vector<2x2xf32>
    %16 = vector.broadcast %14 : f32 to vector<2x2xf32>
    %17 = arith.mulf %16, %15 : vector<2x2xf32>
    %cst_6 = arith.constant 0.00999999977 : f32
    %18 = vector.broadcast %cst_6 : f32 to vector<2x2xf32>
    %19 = arith.mulf %17, %18 : vector<2x2xf32>
    %cst_7 = arith.constant 1.000000e+00 : f32
    %20 = vector.broadcast %cst_7 : f32 to vector<2x2xf32>
    %21 = arith.subf %20, %19 : vector<2x2xf32>
    %c0_8 = arith.constant 0 : index
    %c0_9 = arith.constant 0 : index
    %22 = vector.load %arg4[%c0_8, %c0_9] : memref<2x2xf32, #tpu.memory_space<vmem>>, vector<2x2xf32>
    tpu.vector_store %arg4[%c0_8, %c0_9], %21 {strides = array<i32>} : memref<2x2xf32, #tpu.memory_space<vmem>>, vector<2x2xf32>,
    return
  }
  func.func @transform_0(%arg0: i32) -> i32 {
    %c0_i32 = arith.constant 0 : i32
    %c0_i32_0 = arith.constant 0 : i32
    return %c0_i32 : i32
  }
  func.func @transform_1(%arg0: i32) -> (i32, i32) {
    %c0_i32 = arith.constant 0 : i32
    %c0_i32_0 = arith.constant 0 : i32
    %c0_i32_1 = arith.constant 0 : i32
    return %c0_i32, %c0_i32_0 : i32, i32
  }
  func.func @transform_2(%arg0: i32) -> (i32, i32) {
    %c0_i32 = arith.constant 0 : i32
    %c0_i32_0 = arith.constant 0 : i32
    %c0_i32_1 = arith.constant 0 : i32
    return %c0_i32, %c0_i32_0 : i32, i32
  }
  func.func @transform_3(%arg0: i32) -> (i32, i32) {
    %c0_i32 = arith.constant 0 : i32
    %c0_i32_0 = arith.constant 0 : i32
    %c0_i32_1 = arith.constant 0 : i32
    return %c0_i32, %c0_i32_0 : i32, i32
  }
}

module attributes {stable_mosaic.version = 11 : i64} {
  func.func @kernel(%arg0: i32, %arg1: memref<2xi32, #tpu.memory_space<smem>>, %arg2: memref<1x8x32xf32, #tpu.memory_space<vmem>>, %arg3: memref<2x32x96xf32, #tpu.memory_space<vmem>>, %arg4: memref<2x1x96xf32, #tpu.memory_space<vmem>>, %arg5: memref<2x32x32xf32, #tpu.memory_space<vmem>>, %arg6: memref<2x1x32xf32, #tpu.memory_space<vmem>>, %arg7: memref<2x32x128xf32, #tpu.memory_space<vmem>>, %arg8: memref<2x1x128xf32, #tpu.memory_space<vmem>>, %arg9: memref<2x128x32xf32, #tpu.memory_space<vmem>>, %arg10: memref<2x1x32xf32, #tpu.memory_space<vmem>>, %arg11: memref<32x32xf32, #tpu.memory_space<vmem>>, %arg12: memref<1x32xf32, #tpu.memory_space<vmem>>, %arg13: memref<1x1x32xf32, #tpu.memory_space<vmem>>) attributes {dimension_semantics = [#tpu.dimension_semantics<parallel>], iteration_bounds = array<i64: 2>, scalar_prefetch = 0 : i64, scratch_operands = 0 : i64, tpu.core_type = #tpu.core_type<tc>, window_params = [{transform_indices = @transform_0, window_bounds = array<i64: 2>}, {transform_indices = @transform_1, window_bounds = array<i64: 1, 8, 32>}, {pipeline_mode = #tpu.pipeline_mode<synchronous>, transform_indices = @transform_2, window_bounds = array<i64: 2, 32, 96>}, {pipeline_mode = #tpu.pipeline_mode<synchronous>, transform_indices = @transform_3, window_bounds = array<i64: 2, 1, 96>}, {pipeline_mode = #tpu.pipeline_mode<synchronous>, transform_indices = @transform_4, window_bounds = array<i64: 2, 32, 32>}, {pipeline_mode = #tpu.pipeline_mode<synchronous>, transform_indices = @transform_5, window_bounds = array<i64: 2, 1, 32>}, {pipeline_mode = #tpu.pipeline_mode<synchronous>, transform_indices = @transform_6, window_bounds = array<i64: 2, 32, 128>}, {pipeline_mode = #tpu.pipeline_mode<synchronous>, transform_indices = @transform_7, window_bounds = array<i64: 2, 1, 128>}, {pipeline_mode = #tpu.pipeline_mode<synchronous>, transform_indices = @transform_8, window_bounds = array<i64: 2, 128, 32>}, {pipeline_mode = #tpu.pipeline_mode<synchronous>, transform_indices = @transform_9, window_bounds = array<i64: 2, 1, 32>}, {pipeline_mode = #tpu.pipeline_mode<synchronous>, transform_indices = @transform_10, window_bounds = array<i64: 32, 32>}, {pipeline_mode = #tpu.pipeline_mode<synchronous>, transform_indices = @transform_11, window_bounds = array<i64: 1, 32>}, {transform_indices = @transform_12, window_bounds = array<i64: 1, 1, 32>}]} {
    %c0 = arith.constant 0 : index
    %c0_0 = arith.constant 0 : index
    %c0_1 = arith.constant 0 : index
    %0 = vector.load %arg2[%c0, %c0_0, %c0_1] : memref<1x8x32xf32, #tpu.memory_space<vmem>>, vector<1x8x32xf32>
    %1 = vector.shape_cast %0 : vector<1x8x32xf32> to vector<8x32xf32>
    %cst = arith.constant dense<0.000000e+00> : vector<8xf32>
    %2 = vector.multi_reduction <add>, %1, %cst [1] : vector<8x32xf32> to vector<8xf32>
    %3 = vector.shape_cast %2 : vector<8xf32> to vector<8x1xf32>
    %cst_2 = arith.constant 3.200000e+01 : f32
    %4 = vector.broadcast %cst_2 : f32 to vector<8x1xf32>
    %5 = arith.divf %3, %4 : vector<8x1xf32>
    %6 = vector.broadcast %5 : vector<8x1xf32> to vector<8x32xf32>
    %7 = arith.subf %1, %6 : vector<8x32xf32>
    %8 = arith.mulf %7, %7 : vector<8x32xf32>
    %cst_3 = arith.constant dense<0.000000e+00> : vector<8xf32>
    %9 = vector.multi_reduction <add>, %8, %cst_3 [1] : vector<8x32xf32> to vector<8xf32>
    %10 = vector.shape_cast %9 : vector<8xf32> to vector<8x1xf32>
    %cst_4 = arith.constant 3.200000e+01 : f32
    %11 = vector.broadcast %cst_4 : f32 to vector<8x1xf32>
    %12 = arith.divf %10, %11 : vector<8x1xf32>
    %cst_5 = arith.constant 9.99999974E-6 : f32
    %13 = vector.broadcast %cst_5 : f32 to vector<8x1xf32>
    %14 = arith.addf %12, %13 : vector<8x1xf32>
    %15 = math.rsqrt %14 : vector<8x1xf32>
    %16 = vector.broadcast %15 : vector<8x1xf32> to vector<8x32xf32>
    %17 = arith.mulf %7, %16 : vector<8x32xf32>
    %c0_6 = arith.constant 0 : index
    %c0_7 = arith.constant 0 : index
    %c0_8 = arith.constant 0 : index
    %18 = vector.load %arg3[%c0_6, %c0_7, %c0_8] : memref<2x32x96xf32, #tpu.memory_space<vmem>>, vector<1x32x96xf32>
    %19 = vector.shape_cast %18 : vector<1x32x96xf32> to vector<32x96xf32>
    %20 = arith.truncf %17 : vector<8x32xf32> to vector<8x32xbf16>
    %21 = arith.truncf %19 : vector<32x96xf32> to vector<32x96xbf16>
    %cst_9 = arith.constant dense<0.000000e+00> : vector<8x96xf32>
    %22 = tpu.matmul %20, %21, %cst_9 {dimension_numbers = #tpu.dot_dimension_numbers<[1], [0], [0], [1], [0, 0, 1, 1], [], []>} : vector<8x32xbf16>, vector<32x96xbf16>, vector<8x96xf32> -> vector<8x96xf32>
    %c0_10 = arith.constant 0 : index
    %c0_11 = arith.constant 0 : index
    %c0_12 = arith.constant 0 : index
    %23 = vector.load %arg4[%c0_10, %c0_11, %c0_12] : memref<2x1x96xf32, #tpu.memory_space<vmem>>, vector<1x1x96xf32>
    %24 = vector.shape_cast %23 : vector<1x1x96xf32> to vector<1x96xf32>
    %25 = vector.broadcast %24 : vector<1x96xf32> to vector<8x96xf32>
    %26 = arith.addf %22, %25 : vector<8x96xf32>
    %c0_13 = arith.constant 0 : index
    %c0_14 = arith.constant 0 : index
    %c0_15 = arith.constant 0 : index
    %27 = vector.load %arg5[%c0_13, %c0_14, %c0_15] : memref<2x32x32xf32, #tpu.memory_space<vmem>>, vector<1x32x32xf32>
    %28 = vector.shape_cast %27 : vector<1x32x32xf32> to vector<32x32xf32>
    %29 = tpu.iota {dimensions = array<i32: 0>} : vector<8x8xi32>
    %30 = tpu.iota {dimensions = array<i32: 1>} : vector<8x8xi32>
    %31 = arith.cmpi sle, %30, %29 : vector<8x8xi32>
    %cst_16 = arith.constant 0.000000e+00 : f32
    %32 = vector.broadcast %cst_16 : f32 to vector<8x32xf32>
    %33 = vector.extract_strided_slice %26 {offsets = [0, 0], sizes = [8, 8], strides = [1, 1]} : vector<8x96xf32> to vector<8x8xf32>
    %34 = vector.extract_strided_slice %26 {offsets = [0, 32], sizes = [8, 8], strides = [1, 1]} : vector<8x96xf32> to vector<8x8xf32>
    %35 = vector.extract_strided_slice %26 {offsets = [0, 64], sizes = [8, 8], strides = [1, 1]} : vector<8x96xf32> to vector<8x8xf32>
    %36 = arith.truncf %33 : vector<8x8xf32> to vector<8x8xbf16>
    %37 = arith.truncf %34 : vector<8x8xf32> to vector<8x8xbf16>
    %cst_17 = arith.constant dense<0.000000e+00> : vector<8x8xf32>
    %38 = tpu.matmul %36, %37, %cst_17 {dimension_numbers = #tpu.dot_dimension_numbers<[1], [1], [0], [0], [0, 0, 1, 0], [], []>} : vector<8x8xbf16>, vector<8x8xbf16>, vector<8x8xf32> -> vector<8x8xf32>
    %cst_18 = arith.constant 0.353553385 : f32
    %39 = vector.broadcast %cst_18 : f32 to vector<8x8xf32>
    %40 = arith.mulf %38, %39 : vector<8x8xf32>
    %cst_19 = arith.constant -1.000000e+09 : f32
    %41 = vector.broadcast %cst_19 : f32 to vector<8x8xf32>
    %42 = arith.select %31, %40, %41 : vector<8x8xi1>, vector<8x8xf32>
    %cst_20 = arith.constant dense<0xFF800000> : vector<8xf32>
    %43 = vector.multi_reduction <maximumf>, %42, %cst_20 [1] : vector<8x8xf32> to vector<8xf32>
    %44 = vector.shape_cast %43 : vector<8xf32> to vector<8x1xf32>
    %45 = vector.broadcast %44 : vector<8x1xf32> to vector<8x8xf32>
    %46 = arith.subf %42, %45 : vector<8x8xf32>
    %47 = math.exp %46 : vector<8x8xf32>
    %cst_21 = arith.constant dense<0.000000e+00> : vector<8xf32>
    %48 = vector.multi_reduction <add>, %47, %cst_21 [1] : vector<8x8xf32> to vector<8xf32>
    %49 = vector.shape_cast %48 : vector<8xf32> to vector<8x1xf32>
    %50 = tpu.reciprocal %49 {approx = true} : vector<8x1xf32> -> vector<8x1xf32>
    %51 = vector.broadcast %50 : vector<8x1xf32> to vector<8x8xf32>
    %52 = arith.mulf %47, %51 : vector<8x8xf32>
    %53 = arith.truncf %52 : vector<8x8xf32> to vector<8x8xbf16>
    %54 = arith.truncf %35 : vector<8x8xf32> to vector<8x8xbf16>
    %cst_22 = arith.constant dense<0.000000e+00> : vector<8x8xf32>
    %55 = tpu.matmul %53, %54, %cst_22 {dimension_numbers = #tpu.dot_dimension_numbers<[1], [0], [0], [1], [0, 0, 1, 1], [], []>} : vector<8x8xbf16>, vector<8x8xbf16>, vector<8x8xf32> -> vector<8x8xf32>
    %56 = vector.extract_strided_slice %28 {offsets = [0, 0], sizes = [8, 32], strides = [1, 1]} : vector<32x32xf32> to vector<8x32xf32>
    %57 = arith.truncf %55 : vector<8x8xf32> to vector<8x8xbf16>
    %58 = arith.truncf %56 : vector<8x32xf32> to vector<8x32xbf16>
    %cst_23 = arith.constant dense<0.000000e+00> : vector<8x32xf32>
    %59 = tpu.matmul %57, %58, %cst_23 {dimension_numbers = #tpu.dot_dimension_numbers<[1], [0], [0], [1], [0, 0, 1, 1], [], []>} : vector<8x8xbf16>, vector<8x32xbf16>, vector<8x32xf32> -> vector<8x32xf32>
    %60 = arith.addf %32, %59 : vector<8x32xf32>
    %61 = vector.extract_strided_slice %26 {offsets = [0, 8], sizes = [8, 8], strides = [1, 1]} : vector<8x96xf32> to vector<8x8xf32>
    %62 = vector.extract_strided_slice %26 {offsets = [0, 40], sizes = [8, 8], strides = [1, 1]} : vector<8x96xf32> to vector<8x8xf32>
    %63 = vector.extract_strided_slice %26 {offsets = [0, 72], sizes = [8, 8], strides = [1, 1]} : vector<8x96xf32> to vector<8x8xf32>
    %64 = arith.truncf %61 : vector<8x8xf32> to vector<8x8xbf16>
    %65 = arith.truncf %62 : vector<8x8xf32> to vector<8x8xbf16>
    %cst_24 = arith.constant dense<0.000000e+00> : vector<8x8xf32>
    %66 = tpu.matmul %64, %65, %cst_24 {dimension_numbers = #tpu.dot_dimension_numbers<[1], [1], [0], [0], [0, 0, 1, 0], [], []>} : vector<8x8xbf16>, vector<8x8xbf16>, vector<8x8xf32> -> vector<8x8xf32>
    %cst_25 = arith.constant 0.353553385 : f32
    %67 = vector.broadcast %cst_25 : f32 to vector<8x8xf32>
    %68 = arith.mulf %66, %67 : vector<8x8xf32>
    %cst_26 = arith.constant -1.000000e+09 : f32
    %69 = vector.broadcast %cst_26 : f32 to vector<8x8xf32>
    %70 = arith.select %31, %68, %69 : vector<8x8xi1>, vector<8x8xf32>
    %cst_27 = arith.constant dense<0xFF800000> : vector<8xf32>
    %71 = vector.multi_reduction <maximumf>, %70, %cst_27 [1] : vector<8x8xf32> to vector<8xf32>
    %72 = vector.shape_cast %71 : vector<8xf32> to vector<8x1xf32>
    %73 = vector.broadcast %72 : vector<8x1xf32> to vector<8x8xf32>
    %74 = arith.subf %70, %73 : vector<8x8xf32>
    %75 = math.exp %74 : vector<8x8xf32>
    %cst_28 = arith.constant dense<0.000000e+00> : vector<8xf32>
    %76 = vector.multi_reduction <add>, %75, %cst_28 [1] : vector<8x8xf32> to vector<8xf32>
    %77 = vector.shape_cast %76 : vector<8xf32> to vector<8x1xf32>
    %78 = tpu.reciprocal %77 {approx = true} : vector<8x1xf32> -> vector<8x1xf32>
    %79 = vector.broadcast %78 : vector<8x1xf32> to vector<8x8xf32>
    %80 = arith.mulf %75, %79 : vector<8x8xf32>
    %81 = arith.truncf %80 : vector<8x8xf32> to vector<8x8xbf16>
    %82 = arith.truncf %63 : vector<8x8xf32> to vector<8x8xbf16>
    %cst_29 = arith.constant dense<0.000000e+00> : vector<8x8xf32>
    %83 = tpu.matmul %81, %82, %cst_29 {dimension_numbers = #tpu.dot_dimension_numbers<[1], [0], [0], [1], [0, 0, 1, 1], [], []>} : vector<8x8xbf16>, vector<8x8xbf16>, vector<8x8xf32> -> vector<8x8xf32>
    %84 = vector.extract_strided_slice %28 {offsets = [8, 0], sizes = [8, 32], strides = [1, 1]} : vector<32x32xf32> to vector<8x32xf32>
    %85 = arith.truncf %83 : vector<8x8xf32> to vector<8x8xbf16>
    %86 = arith.truncf %84 : vector<8x32xf32> to vector<8x32xbf16>
    %cst_30 = arith.constant dense<0.000000e+00> : vector<8x32xf32>
    %87 = tpu.matmul %85, %86, %cst_30 {dimension_numbers = #tpu.dot_dimension_numbers<[1], [0], [0], [1], [0, 0, 1, 1], [], []>} : vector<8x8xbf16>, vector<8x32xbf16>, vector<8x32xf32> -> vector<8x32xf32>
    %88 = arith.addf %60, %87 : vector<8x32xf32>
    %89 = vector.extract_strided_slice %26 {offsets = [0, 16], sizes = [8, 8], strides = [1, 1]} : vector<8x96xf32> to vector<8x8xf32>
    %90 = vector.extract_strided_slice %26 {offsets = [0, 48], sizes = [8, 8], strides = [1, 1]} : vector<8x96xf32> to vector<8x8xf32>
    %91 = vector.extract_strided_slice %26 {offsets = [0, 80], sizes = [8, 8], strides = [1, 1]} : vector<8x96xf32> to vector<8x8xf32>
    %92 = arith.truncf %89 : vector<8x8xf32> to vector<8x8xbf16>
    %93 = arith.truncf %90 : vector<8x8xf32> to vector<8x8xbf16>
    %cst_31 = arith.constant dense<0.000000e+00> : vector<8x8xf32>
    %94 = tpu.matmul %92, %93, %cst_31 {dimension_numbers = #tpu.dot_dimension_numbers<[1], [1], [0], [0], [0, 0, 1, 0], [], []>} : vector<8x8xbf16>, vector<8x8xbf16>, vector<8x8xf32> -> vector<8x8xf32>
    %cst_32 = arith.constant 0.353553385 : f32
    %95 = vector.broadcast %cst_32 : f32 to vector<8x8xf32>
    %96 = arith.mulf %94, %95 : vector<8x8xf32>
    %cst_33 = arith.constant -1.000000e+09 : f32
    %97 = vector.broadcast %cst_33 : f32 to vector<8x8xf32>
    %98 = arith.select %31, %96, %97 : vector<8x8xi1>, vector<8x8xf32>
    %cst_34 = arith.constant dense<0xFF800000> : vector<8xf32>
    %99 = vector.multi_reduction <maximumf>, %98, %cst_34 [1] : vector<8x8xf32> to vector<8xf32>
    %100 = vector.shape_cast %99 : vector<8xf32> to vector<8x1xf32>
    %101 = vector.broadcast %100 : vector<8x1xf32> to vector<8x8xf32>
    %102 = arith.subf %98, %101 : vector<8x8xf32>
    %103 = math.exp %102 : vector<8x8xf32>
    %cst_35 = arith.constant dense<0.000000e+00> : vector<8xf32>
    %104 = vector.multi_reduction <add>, %103, %cst_35 [1] : vector<8x8xf32> to vector<8xf32>
    %105 = vector.shape_cast %104 : vector<8xf32> to vector<8x1xf32>
    %106 = tpu.reciprocal %105 {approx = true} : vector<8x1xf32> -> vector<8x1xf32>
    %107 = vector.broadcast %106 : vector<8x1xf32> to vector<8x8xf32>
    %108 = arith.mulf %103, %107 : vector<8x8xf32>
    %109 = arith.truncf %108 : vector<8x8xf32> to vector<8x8xbf16>
    %110 = arith.truncf %91 : vector<8x8xf32> to vector<8x8xbf16>
    %cst_36 = arith.constant dense<0.000000e+00> : vector<8x8xf32>
    %111 = tpu.matmul %109, %110, %cst_36 {dimension_numbers = #tpu.dot_dimension_numbers<[1], [0], [0], [1], [0, 0, 1, 1], [], []>} : vector<8x8xbf16>, vector<8x8xbf16>, vector<8x8xf32> -> vector<8x8xf32>
    %112 = vector.extract_strided_slice %28 {offsets = [16, 0], sizes = [8, 32], strides = [1, 1]} : vector<32x32xf32> to vector<8x32xf32>
    %113 = arith.truncf %111 : vector<8x8xf32> to vector<8x8xbf16>
    %114 = arith.truncf %112 : vector<8x32xf32> to vector<8x32xbf16>
    %cst_37 = arith.constant dense<0.000000e+00> : vector<8x32xf32>
    %115 = tpu.matmul %113, %114, %cst_37 {dimension_numbers = #tpu.dot_dimension_numbers<[1], [0], [0], [1], [0, 0, 1, 1], [], []>} : vector<8x8xbf16>, vector<8x32xbf16>, vector<8x32xf32> -> vector<8x32xf32>
    %116 = arith.addf %88, %115 : vector<8x32xf32>
    %117 = vector.extract_strided_slice %26 {offsets = [0, 24], sizes = [8, 8], strides = [1, 1]} : vector<8x96xf32> to vector<8x8xf32>
    %118 = vector.extract_strided_slice %26 {offsets = [0, 56], sizes = [8, 8], strides = [1, 1]} : vector<8x96xf32> to vector<8x8xf32>
    %119 = vector.extract_strided_slice %26 {offsets = [0, 88], sizes = [8, 8], strides = [1, 1]} : vector<8x96xf32> to vector<8x8xf32>
    %120 = arith.truncf %117 : vector<8x8xf32> to vector<8x8xbf16>
    %121 = arith.truncf %118 : vector<8x8xf32> to vector<8x8xbf16>
    %cst_38 = arith.constant dense<0.000000e+00> : vector<8x8xf32>
    %122 = tpu.matmul %120, %121, %cst_38 {dimension_numbers = #tpu.dot_dimension_numbers<[1], [1], [0], [0], [0, 0, 1, 0], [], []>} : vector<8x8xbf16>, vector<8x8xbf16>, vector<8x8xf32> -> vector<8x8xf32>
    %cst_39 = arith.constant 0.353553385 : f32
    %123 = vector.broadcast %cst_39 : f32 to vector<8x8xf32>
    %124 = arith.mulf %122, %123 : vector<8x8xf32>
    %cst_40 = arith.constant -1.000000e+09 : f32
    %125 = vector.broadcast %cst_40 : f32 to vector<8x8xf32>
    %126 = arith.select %31, %124, %125 : vector<8x8xi1>, vector<8x8xf32>
    %cst_41 = arith.constant dense<0xFF800000> : vector<8xf32>
    %127 = vector.multi_reduction <maximumf>, %126, %cst_41 [1] : vector<8x8xf32> to vector<8xf32>
    %128 = vector.shape_cast %127 : vector<8xf32> to vector<8x1xf32>
    %129 = vector.broadcast %128 : vector<8x1xf32> to vector<8x8xf32>
    %130 = arith.subf %126, %129 : vector<8x8xf32>
    %131 = math.exp %130 : vector<8x8xf32>
    %cst_42 = arith.constant dense<0.000000e+00> : vector<8xf32>
    %132 = vector.multi_reduction <add>, %131, %cst_42 [1] : vector<8x8xf32> to vector<8xf32>
    %133 = vector.shape_cast %132 : vector<8xf32> to vector<8x1xf32>
    %134 = tpu.reciprocal %133 {approx = true} : vector<8x1xf32> -> vector<8x1xf32>
    %135 = vector.broadcast %134 : vector<8x1xf32> to vector<8x8xf32>
    %136 = arith.mulf %131, %135 : vector<8x8xf32>
    %137 = arith.truncf %136 : vector<8x8xf32> to vector<8x8xbf16>
    %138 = arith.truncf %119 : vector<8x8xf32> to vector<8x8xbf16>
    %cst_43 = arith.constant dense<0.000000e+00> : vector<8x8xf32>
    %139 = tpu.matmul %137, %138, %cst_43 {dimension_numbers = #tpu.dot_dimension_numbers<[1], [0], [0], [1], [0, 0, 1, 1], [], []>} : vector<8x8xbf16>, vector<8x8xbf16>, vector<8x8xf32> -> vector<8x8xf32>
    %140 = vector.extract_strided_slice %28 {offsets = [24, 0], sizes = [8, 32], strides = [1, 1]} : vector<32x32xf32> to vector<8x32xf32>
    %141 = arith.truncf %139 : vector<8x8xf32> to vector<8x8xbf16>
    %142 = arith.truncf %140 : vector<8x32xf32> to vector<8x32xbf16>
    %cst_44 = arith.constant dense<0.000000e+00> : vector<8x32xf32>
    %143 = tpu.matmul %141, %142, %cst_44 {dimension_numbers = #tpu.dot_dimension_numbers<[1], [0], [0], [1], [0, 0, 1, 1], [], []>} : vector<8x8xbf16>, vector<8x32xbf16>, vector<8x32xf32> -> vector<8x32xf32>
    %144 = arith.addf %116, %143 : vector<8x32xf32>
    %145 = arith.addf %1, %144 : vector<8x32xf32>
    %c0_45 = arith.constant 0 : index
    %c0_46 = arith.constant 0 : index
    %c0_47 = arith.constant 0 : index
    %146 = vector.load %arg6[%c0_45, %c0_46, %c0_47] : memref<2x1x32xf32, #tpu.memory_space<vmem>>, vector<1x1x32xf32>
    %147 = vector.shape_cast %146 : vector<1x1x32xf32> to vector<1x32xf32>
    %148 = vector.broadcast %147 : vector<1x32xf32> to vector<8x32xf32>
    %149 = arith.addf %145, %148 : vector<8x32xf32>
    %cst_48 = arith.constant dense<0.000000e+00> : vector<8xf32>
    %150 = vector.multi_reduction <add>, %149, %cst_48 [1] : vector<8x32xf32> to vector<8xf32>
    %151 = vector.shape_cast %150 : vector<8xf32> to vector<8x1xf32>
    %cst_49 = arith.constant 3.200000e+01 : f32
    %152 = vector.broadcast %cst_49 : f32 to vector<8x1xf32>
    %153 = arith.divf %151, %152 : vector<8x1xf32>
    %154 = vector.broadcast %153 : vector<8x1xf32> to vector<8x32xf32>
    %155 = arith.subf %149, %154 : vector<8x32xf32>
    %156 = arith.mulf %155, %155 : vector<8x32xf32>
    %cst_50 = arith.constant dense<0.000000e+00> : vector<8xf32>
    %157 = vector.multi_reduction <add>, %156, %cst_50 [1] : vector<8x32xf32> to vector<8xf32>
    %158 = vector.shape_cast %157 : vector<8xf32> to vector<8x1xf32>
    %cst_51 = arith.constant 3.200000e+01 : f32
    %159 = vector.broadcast %cst_51 : f32 to vector<8x1xf32>
    %160 = arith.divf %158, %159 : vector<8x1xf32>
    %cst_52 = arith.constant 9.99999974E-6 : f32
    %161 = vector.broadcast %cst_52 : f32 to vector<8x1xf32>
    %162 = arith.addf %160, %161 : vector<8x1xf32>
    %163 = math.rsqrt %162 : vector<8x1xf32>
    %164 = vector.broadcast %163 : vector<8x1xf32> to vector<8x32xf32>
    %165 = arith.mulf %155, %164 : vector<8x32xf32>
    %c0_53 = arith.constant 0 : index
    %c0_54 = arith.constant 0 : index
    %c0_55 = arith.constant 0 : index
    %166 = vector.load %arg7[%c0_53, %c0_54, %c0_55] : memref<2x32x128xf32, #tpu.memory_space<vmem>>, vector<1x32x128xf32>
    %167 = vector.shape_cast %166 : vector<1x32x128xf32> to vector<32x128xf32>
    %168 = arith.truncf %165 : vector<8x32xf32> to vector<8x32xbf16>
    %169 = arith.truncf %167 : vector<32x128xf32> to vector<32x128xbf16>
    %cst_56 = arith.constant dense<0.000000e+00> : vector<8x128xf32>
    %170 = tpu.matmul %168, %169, %cst_56 {dimension_numbers = #tpu.dot_dimension_numbers<[1], [0], [0], [1], [0, 0, 1, 1], [], []>} : vector<8x32xbf16>, vector<32x128xbf16>, vector<8x128xf32> -> vector<8x128xf32>
    %c0_57 = arith.constant 0 : index
    %c0_58 = arith.constant 0 : index
    %c0_59 = arith.constant 0 : index
    %171 = vector.load %arg8[%c0_57, %c0_58, %c0_59] : memref<2x1x128xf32, #tpu.memory_space<vmem>>, vector<1x1x128xf32>
    %172 = vector.shape_cast %171 : vector<1x1x128xf32> to vector<1x128xf32>
    %173 = vector.broadcast %172 : vector<1x128xf32> to vector<8x128xf32>
    %174 = arith.addf %170, %173 : vector<8x128xf32>
    %cst_60 = arith.constant 1.702000e+00 : f32
    %175 = vector.broadcast %cst_60 : f32 to vector<8x128xf32>
    %176 = arith.mulf %175, %174 : vector<8x128xf32>
    %177 = arith.negf %176 : vector<8x128xf32>
    %178 = math.exp %177 : vector<8x128xf32>
    %cst_61 = arith.constant 1.000000e+00 : f32
    %179 = vector.broadcast %cst_61 : f32 to vector<8x128xf32>
    %180 = arith.addf %179, %178 : vector<8x128xf32>
    %181 = arith.divf %179, %180 : vector<8x128xf32>
    %182 = arith.mulf %174, %181 : vector<8x128xf32>
    %c0_62 = arith.constant 0 : index
    %c0_63 = arith.constant 0 : index
    %c0_64 = arith.constant 0 : index
    %183 = vector.load %arg9[%c0_62, %c0_63, %c0_64] : memref<2x128x32xf32, #tpu.memory_space<vmem>>, vector<1x128x32xf32>
    %184 = vector.shape_cast %183 : vector<1x128x32xf32> to vector<128x32xf32>
    %185 = arith.truncf %182 : vector<8x128xf32> to vector<8x128xbf16>
    %186 = arith.truncf %184 : vector<128x32xf32> to vector<128x32xbf16>
    %cst_65 = arith.constant dense<0.000000e+00> : vector<8x32xf32>
    %187 = tpu.matmul %185, %186, %cst_65 {dimension_numbers = #tpu.dot_dimension_numbers<[1], [0], [0], [1], [0, 0, 1, 1], [], []>} : vector<8x128xbf16>, vector<128x32xbf16>, vector<8x32xf32> -> vector<8x32xf32>
    %188 = arith.addf %149, %187 : vector<8x32xf32>
    %c0_66 = arith.constant 0 : index
    %c0_67 = arith.constant 0 : index
    %c0_68 = arith.constant 0 : index
    %189 = vector.load %arg10[%c0_66, %c0_67, %c0_68] : memref<2x1x32xf32, #tpu.memory_space<vmem>>, vector<1x1x32xf32>
    %190 = vector.shape_cast %189 : vector<1x1x32xf32> to vector<1x32xf32>
    %191 = vector.broadcast %190 : vector<1x32xf32> to vector<8x32xf32>
    %192 = arith.addf %188, %191 : vector<8x32xf32>
    %cst_69 = arith.constant dense<0.000000e+00> : vector<8xf32>
    %193 = vector.multi_reduction <add>, %192, %cst_69 [1] : vector<8x32xf32> to vector<8xf32>
    %194 = vector.shape_cast %193 : vector<8xf32> to vector<8x1xf32>
    %cst_70 = arith.constant 3.200000e+01 : f32
    %195 = vector.broadcast %cst_70 : f32 to vector<8x1xf32>
    %196 = arith.divf %194, %195 : vector<8x1xf32>
    %197 = vector.broadcast %196 : vector<8x1xf32> to vector<8x32xf32>
    %198 = arith.subf %192, %197 : vector<8x32xf32>
    %199 = arith.mulf %198, %198 : vector<8x32xf32>
    %cst_71 = arith.constant dense<0.000000e+00> : vector<8xf32>
    %200 = vector.multi_reduction <add>, %199, %cst_71 [1] : vector<8x32xf32> to vector<8xf32>
    %201 = vector.shape_cast %200 : vector<8xf32> to vector<8x1xf32>
    %cst_72 = arith.constant 3.200000e+01 : f32
    %202 = vector.broadcast %cst_72 : f32 to vector<8x1xf32>
    %203 = arith.divf %201, %202 : vector<8x1xf32>
    %cst_73 = arith.constant 9.99999974E-6 : f32
    %204 = vector.broadcast %cst_73 : f32 to vector<8x1xf32>
    %205 = arith.addf %203, %204 : vector<8x1xf32>
    %206 = math.rsqrt %205 : vector<8x1xf32>
    %207 = vector.broadcast %206 : vector<8x1xf32> to vector<8x32xf32>
    %208 = arith.mulf %198, %207 : vector<8x32xf32>
    %c1 = arith.constant 1 : index
    %c0_74 = arith.constant 0 : index
    %c0_75 = arith.constant 0 : index
    %209 = vector.load %arg3[%c1, %c0_74, %c0_75] : memref<2x32x96xf32, #tpu.memory_space<vmem>>, vector<1x32x96xf32>
    %210 = vector.shape_cast %209 : vector<1x32x96xf32> to vector<32x96xf32>
    %211 = arith.truncf %208 : vector<8x32xf32> to vector<8x32xbf16>
    %212 = arith.truncf %210 : vector<32x96xf32> to vector<32x96xbf16>
    %cst_76 = arith.constant dense<0.000000e+00> : vector<8x96xf32>
    %213 = tpu.matmul %211, %212, %cst_76 {dimension_numbers = #tpu.dot_dimension_numbers<[1], [0], [0], [1], [0, 0, 1, 1], [], []>} : vector<8x32xbf16>, vector<32x96xbf16>, vector<8x96xf32> -> vector<8x96xf32>
    %c1_77 = arith.constant 1 : index
    %c0_78 = arith.constant 0 : index
    %c0_79 = arith.constant 0 : index
    %214 = vector.load %arg4[%c1_77, %c0_78, %c0_79] : memref<2x1x96xf32, #tpu.memory_space<vmem>>, vector<1x1x96xf32>
    %215 = vector.shape_cast %214 : vector<1x1x96xf32> to vector<1x96xf32>
    %216 = vector.broadcast %215 : vector<1x96xf32> to vector<8x96xf32>
    %217 = arith.addf %213, %216 : vector<8x96xf32>
    %c1_80 = arith.constant 1 : index
    %c0_81 = arith.constant 0 : index
    %c0_82 = arith.constant 0 : index
    %218 = vector.load %arg5[%c1_80, %c0_81, %c0_82] : memref<2x32x32xf32, #tpu.memory_space<vmem>>, vector<1x32x32xf32>
    %219 = vector.shape_cast %218 : vector<1x32x32xf32> to vector<32x32xf32>
    %220 = tpu.iota {dimensions = array<i32: 0>} : vector<8x8xi32>
    %221 = tpu.iota {dimensions = array<i32: 1>} : vector<8x8xi32>
    %222 = arith.cmpi sle, %221, %220 : vector<8x8xi32>
    %cst_83 = arith.constant 0.000000e+00 : f32
    %223 = vector.broadcast %cst_83 : f32 to vector<8x32xf32>
    %224 = vector.extract_strided_slice %217 {offsets = [0, 0], sizes = [8, 8], strides = [1, 1]} : vector<8x96xf32> to vector<8x8xf32>
    %225 = vector.extract_strided_slice %217 {offsets = [0, 32], sizes = [8, 8], strides = [1, 1]} : vector<8x96xf32> to vector<8x8xf32>
    %226 = vector.extract_strided_slice %217 {offsets = [0, 64], sizes = [8, 8], strides = [1, 1]} : vector<8x96xf32> to vector<8x8xf32>
    %227 = arith.truncf %224 : vector<8x8xf32> to vector<8x8xbf16>
    %228 = arith.truncf %225 : vector<8x8xf32> to vector<8x8xbf16>
    %cst_84 = arith.constant dense<0.000000e+00> : vector<8x8xf32>
    %229 = tpu.matmul %227, %228, %cst_84 {dimension_numbers = #tpu.dot_dimension_numbers<[1], [1], [0], [0], [0, 0, 1, 0], [], []>} : vector<8x8xbf16>, vector<8x8xbf16>, vector<8x8xf32> -> vector<8x8xf32>
    %cst_85 = arith.constant 0.353553385 : f32
    %230 = vector.broadcast %cst_85 : f32 to vector<8x8xf32>
    %231 = arith.mulf %229, %230 : vector<8x8xf32>
    %cst_86 = arith.constant -1.000000e+09 : f32
    %232 = vector.broadcast %cst_86 : f32 to vector<8x8xf32>
    %233 = arith.select %222, %231, %232 : vector<8x8xi1>, vector<8x8xf32>
    %cst_87 = arith.constant dense<0xFF800000> : vector<8xf32>
    %234 = vector.multi_reduction <maximumf>, %233, %cst_87 [1] : vector<8x8xf32> to vector<8xf32>
    %235 = vector.shape_cast %234 : vector<8xf32> to vector<8x1xf32>
    %236 = vector.broadcast %235 : vector<8x1xf32> to vector<8x8xf32>
    %237 = arith.subf %233, %236 : vector<8x8xf32>
    %238 = math.exp %237 : vector<8x8xf32>
    %cst_88 = arith.constant dense<0.000000e+00> : vector<8xf32>
    %239 = vector.multi_reduction <add>, %238, %cst_88 [1] : vector<8x8xf32> to vector<8xf32>
    %240 = vector.shape_cast %239 : vector<8xf32> to vector<8x1xf32>
    %241 = tpu.reciprocal %240 {approx = true} : vector<8x1xf32> -> vector<8x1xf32>
    %242 = vector.broadcast %241 : vector<8x1xf32> to vector<8x8xf32>
    %243 = arith.mulf %238, %242 : vector<8x8xf32>
    %244 = arith.truncf %243 : vector<8x8xf32> to vector<8x8xbf16>
    %245 = arith.truncf %226 : vector<8x8xf32> to vector<8x8xbf16>
    %cst_89 = arith.constant dense<0.000000e+00> : vector<8x8xf32>
    %246 = tpu.matmul %244, %245, %cst_89 {dimension_numbers = #tpu.dot_dimension_numbers<[1], [0], [0], [1], [0, 0, 1, 1], [], []>} : vector<8x8xbf16>, vector<8x8xbf16>, vector<8x8xf32> -> vector<8x8xf32>
    %247 = vector.extract_strided_slice %219 {offsets = [0, 0], sizes = [8, 32], strides = [1, 1]} : vector<32x32xf32> to vector<8x32xf32>
    %248 = arith.truncf %246 : vector<8x8xf32> to vector<8x8xbf16>
    %249 = arith.truncf %247 : vector<8x32xf32> to vector<8x32xbf16>
    %cst_90 = arith.constant dense<0.000000e+00> : vector<8x32xf32>
    %250 = tpu.matmul %248, %249, %cst_90 {dimension_numbers = #tpu.dot_dimension_numbers<[1], [0], [0], [1], [0, 0, 1, 1], [], []>} : vector<8x8xbf16>, vector<8x32xbf16>, vector<8x32xf32> -> vector<8x32xf32>
    %251 = arith.addf %223, %250 : vector<8x32xf32>
    %252 = vector.extract_strided_slice %217 {offsets = [0, 8], sizes = [8, 8], strides = [1, 1]} : vector<8x96xf32> to vector<8x8xf32>
    %253 = vector.extract_strided_slice %217 {offsets = [0, 40], sizes = [8, 8], strides = [1, 1]} : vector<8x96xf32> to vector<8x8xf32>
    %254 = vector.extract_strided_slice %217 {offsets = [0, 72], sizes = [8, 8], strides = [1, 1]} : vector<8x96xf32> to vector<8x8xf32>
    %255 = arith.truncf %252 : vector<8x8xf32> to vector<8x8xbf16>
    %256 = arith.truncf %253 : vector<8x8xf32> to vector<8x8xbf16>
    %cst_91 = arith.constant dense<0.000000e+00> : vector<8x8xf32>
    %257 = tpu.matmul %255, %256, %cst_91 {dimension_numbers = #tpu.dot_dimension_numbers<[1], [1], [0], [0], [0, 0, 1, 0], [], []>} : vector<8x8xbf16>, vector<8x8xbf16>, vector<8x8xf32> -> vector<8x8xf32>
    %cst_92 = arith.constant 0.353553385 : f32
    %258 = vector.broadcast %cst_92 : f32 to vector<8x8xf32>
    %259 = arith.mulf %257, %258 : vector<8x8xf32>
    %cst_93 = arith.constant -1.000000e+09 : f32
    %260 = vector.broadcast %cst_93 : f32 to vector<8x8xf32>
    %261 = arith.select %222, %259, %260 : vector<8x8xi1>, vector<8x8xf32>
    %cst_94 = arith.constant dense<0xFF800000> : vector<8xf32>
    %262 = vector.multi_reduction <maximumf>, %261, %cst_94 [1] : vector<8x8xf32> to vector<8xf32>
    %263 = vector.shape_cast %262 : vector<8xf32> to vector<8x1xf32>
    %264 = vector.broadcast %263 : vector<8x1xf32> to vector<8x8xf32>
    %265 = arith.subf %261, %264 : vector<8x8xf32>
    %266 = math.exp %265 : vector<8x8xf32>
    %cst_95 = arith.constant dense<0.000000e+00> : vector<8xf32>
    %267 = vector.multi_reduction <add>, %266, %cst_95 [1] : vector<8x8xf32> to vector<8xf32>
    %268 = vector.shape_cast %267 : vector<8xf32> to vector<8x1xf32>
    %269 = tpu.reciprocal %268 {approx = true} : vector<8x1xf32> -> vector<8x1xf32>
    %270 = vector.broadcast %269 : vector<8x1xf32> to vector<8x8xf32>
    %271 = arith.mulf %266, %270 : vector<8x8xf32>
    %272 = arith.truncf %271 : vector<8x8xf32> to vector<8x8xbf16>
    %273 = arith.truncf %254 : vector<8x8xf32> to vector<8x8xbf16>
    %cst_96 = arith.constant dense<0.000000e+00> : vector<8x8xf32>
    %274 = tpu.matmul %272, %273, %cst_96 {dimension_numbers = #tpu.dot_dimension_numbers<[1], [0], [0], [1], [0, 0, 1, 1], [], []>} : vector<8x8xbf16>, vector<8x8xbf16>, vector<8x8xf32> -> vector<8x8xf32>
    %275 = vector.extract_strided_slice %219 {offsets = [8, 0], sizes = [8, 32], strides = [1, 1]} : vector<32x32xf32> to vector<8x32xf32>
    %276 = arith.truncf %274 : vector<8x8xf32> to vector<8x8xbf16>
    %277 = arith.truncf %275 : vector<8x32xf32> to vector<8x32xbf16>
    %cst_97 = arith.constant dense<0.000000e+00> : vector<8x32xf32>
    %278 = tpu.matmul %276, %277, %cst_97 {dimension_numbers = #tpu.dot_dimension_numbers<[1], [0], [0], [1], [0, 0, 1, 1], [], []>} : vector<8x8xbf16>, vector<8x32xbf16>, vector<8x32xf32> -> vector<8x32xf32>
    %279 = arith.addf %251, %278 : vector<8x32xf32>
    %280 = vector.extract_strided_slice %217 {offsets = [0, 16], sizes = [8, 8], strides = [1, 1]} : vector<8x96xf32> to vector<8x8xf32>
    %281 = vector.extract_strided_slice %217 {offsets = [0, 48], sizes = [8, 8], strides = [1, 1]} : vector<8x96xf32> to vector<8x8xf32>
    %282 = vector.extract_strided_slice %217 {offsets = [0, 80], sizes = [8, 8], strides = [1, 1]} : vector<8x96xf32> to vector<8x8xf32>
    %283 = arith.truncf %280 : vector<8x8xf32> to vector<8x8xbf16>
    %284 = arith.truncf %281 : vector<8x8xf32> to vector<8x8xbf16>
    %cst_98 = arith.constant dense<0.000000e+00> : vector<8x8xf32>
    %285 = tpu.matmul %283, %284, %cst_98 {dimension_numbers = #tpu.dot_dimension_numbers<[1], [1], [0], [0], [0, 0, 1, 0], [], []>} : vector<8x8xbf16>, vector<8x8xbf16>, vector<8x8xf32> -> vector<8x8xf32>
    %cst_99 = arith.constant 0.353553385 : f32
    %286 = vector.broadcast %cst_99 : f32 to vector<8x8xf32>
    %287 = arith.mulf %285, %286 : vector<8x8xf32>
    %cst_100 = arith.constant -1.000000e+09 : f32
    %288 = vector.broadcast %cst_100 : f32 to vector<8x8xf32>
    %289 = arith.select %222, %287, %288 : vector<8x8xi1>, vector<8x8xf32>
    %cst_101 = arith.constant dense<0xFF800000> : vector<8xf32>
    %290 = vector.multi_reduction <maximumf>, %289, %cst_101 [1] : vector<8x8xf32> to vector<8xf32>
    %291 = vector.shape_cast %290 : vector<8xf32> to vector<8x1xf32>
    %292 = vector.broadcast %291 : vector<8x1xf32> to vector<8x8xf32>
    %293 = arith.subf %289, %292 : vector<8x8xf32>
    %294 = math.exp %293 : vector<8x8xf32>
    %cst_102 = arith.constant dense<0.000000e+00> : vector<8xf32>
    %295 = vector.multi_reduction <add>, %294, %cst_102 [1] : vector<8x8xf32> to vector<8xf32>
    %296 = vector.shape_cast %295 : vector<8xf32> to vector<8x1xf32>
    %297 = tpu.reciprocal %296 {approx = true} : vector<8x1xf32> -> vector<8x1xf32>
    %298 = vector.broadcast %297 : vector<8x1xf32> to vector<8x8xf32>
    %299 = arith.mulf %294, %298 : vector<8x8xf32>
    %300 = arith.truncf %299 : vector<8x8xf32> to vector<8x8xbf16>
    %301 = arith.truncf %282 : vector<8x8xf32> to vector<8x8xbf16>
    %cst_103 = arith.constant dense<0.000000e+00> : vector<8x8xf32>
    %302 = tpu.matmul %300, %301, %cst_103 {dimension_numbers = #tpu.dot_dimension_numbers<[1], [0], [0], [1], [0, 0, 1, 1], [], []>} : vector<8x8xbf16>, vector<8x8xbf16>, vector<8x8xf32> -> vector<8x8xf32>
    %303 = vector.extract_strided_slice %219 {offsets = [16, 0], sizes = [8, 32], strides = [1, 1]} : vector<32x32xf32> to vector<8x32xf32>
    %304 = arith.truncf %302 : vector<8x8xf32> to vector<8x8xbf16>
    %305 = arith.truncf %303 : vector<8x32xf32> to vector<8x32xbf16>
    %cst_104 = arith.constant dense<0.000000e+00> : vector<8x32xf32>
    %306 = tpu.matmul %304, %305, %cst_104 {dimension_numbers = #tpu.dot_dimension_numbers<[1], [0], [0], [1], [0, 0, 1, 1], [], []>} : vector<8x8xbf16>, vector<8x32xbf16>, vector<8x32xf32> -> vector<8x32xf32>
    %307 = arith.addf %279, %306 : vector<8x32xf32>
    %308 = vector.extract_strided_slice %217 {offsets = [0, 24], sizes = [8, 8], strides = [1, 1]} : vector<8x96xf32> to vector<8x8xf32>
    %309 = vector.extract_strided_slice %217 {offsets = [0, 56], sizes = [8, 8], strides = [1, 1]} : vector<8x96xf32> to vector<8x8xf32>
    %310 = vector.extract_strided_slice %217 {offsets = [0, 88], sizes = [8, 8], strides = [1, 1]} : vector<8x96xf32> to vector<8x8xf32>
    %311 = arith.truncf %308 : vector<8x8xf32> to vector<8x8xbf16>
    %312 = arith.truncf %309 : vector<8x8xf32> to vector<8x8xbf16>
    %cst_105 = arith.constant dense<0.000000e+00> : vector<8x8xf32>
    %313 = tpu.matmul %311, %312, %cst_105 {dimension_numbers = #tpu.dot_dimension_numbers<[1], [1], [0], [0], [0, 0, 1, 0], [], []>} : vector<8x8xbf16>, vector<8x8xbf16>, vector<8x8xf32> -> vector<8x8xf32>
    %cst_106 = arith.constant 0.353553385 : f32
    %314 = vector.broadcast %cst_106 : f32 to vector<8x8xf32>
    %315 = arith.mulf %313, %314 : vector<8x8xf32>
    %cst_107 = arith.constant -1.000000e+09 : f32
    %316 = vector.broadcast %cst_107 : f32 to vector<8x8xf32>
    %317 = arith.select %222, %315, %316 : vector<8x8xi1>, vector<8x8xf32>
    %cst_108 = arith.constant dense<0xFF800000> : vector<8xf32>
    %318 = vector.multi_reduction <maximumf>, %317, %cst_108 [1] : vector<8x8xf32> to vector<8xf32>
    %319 = vector.shape_cast %318 : vector<8xf32> to vector<8x1xf32>
    %320 = vector.broadcast %319 : vector<8x1xf32> to vector<8x8xf32>
    %321 = arith.subf %317, %320 : vector<8x8xf32>
    %322 = math.exp %321 : vector<8x8xf32>
    %cst_109 = arith.constant dense<0.000000e+00> : vector<8xf32>
    %323 = vector.multi_reduction <add>, %322, %cst_109 [1] : vector<8x8xf32> to vector<8xf32>
    %324 = vector.shape_cast %323 : vector<8xf32> to vector<8x1xf32>
    %325 = tpu.reciprocal %324 {approx = true} : vector<8x1xf32> -> vector<8x1xf32>
    %326 = vector.broadcast %325 : vector<8x1xf32> to vector<8x8xf32>
    %327 = arith.mulf %322, %326 : vector<8x8xf32>
    %328 = arith.truncf %327 : vector<8x8xf32> to vector<8x8xbf16>
    %329 = arith.truncf %310 : vector<8x8xf32> to vector<8x8xbf16>
    %cst_110 = arith.constant dense<0.000000e+00> : vector<8x8xf32>
    %330 = tpu.matmul %328, %329, %cst_110 {dimension_numbers = #tpu.dot_dimension_numbers<[1], [0], [0], [1], [0, 0, 1, 1], [], []>} : vector<8x8xbf16>, vector<8x8xbf16>, vector<8x8xf32> -> vector<8x8xf32>
    %331 = vector.extract_strided_slice %219 {offsets = [24, 0], sizes = [8, 32], strides = [1, 1]} : vector<32x32xf32> to vector<8x32xf32>
    %332 = arith.truncf %330 : vector<8x8xf32> to vector<8x8xbf16>
    %333 = arith.truncf %331 : vector<8x32xf32> to vector<8x32xbf16>
    %cst_111 = arith.constant dense<0.000000e+00> : vector<8x32xf32>
    %334 = tpu.matmul %332, %333, %cst_111 {dimension_numbers = #tpu.dot_dimension_numbers<[1], [0], [0], [1], [0, 0, 1, 1], [], []>} : vector<8x8xbf16>, vector<8x32xbf16>, vector<8x32xf32> -> vector<8x32xf32>
    %335 = arith.addf %307, %334 : vector<8x32xf32>
    %336 = arith.addf %192, %335 : vector<8x32xf32>
    %c1_112 = arith.constant 1 : index
    %c0_113 = arith.constant 0 : index
    %c0_114 = arith.constant 0 : index
    %337 = vector.load %arg6[%c1_112, %c0_113, %c0_114] : memref<2x1x32xf32, #tpu.memory_space<vmem>>, vector<1x1x32xf32>
    %338 = vector.shape_cast %337 : vector<1x1x32xf32> to vector<1x32xf32>
    %339 = vector.broadcast %338 : vector<1x32xf32> to vector<8x32xf32>
    %340 = arith.addf %336, %339 : vector<8x32xf32>
    %cst_115 = arith.constant dense<0.000000e+00> : vector<8xf32>
    %341 = vector.multi_reduction <add>, %340, %cst_115 [1] : vector<8x32xf32> to vector<8xf32>
    %342 = vector.shape_cast %341 : vector<8xf32> to vector<8x1xf32>
    %cst_116 = arith.constant 3.200000e+01 : f32
    %343 = vector.broadcast %cst_116 : f32 to vector<8x1xf32>
    %344 = arith.divf %342, %343 : vector<8x1xf32>
    %345 = vector.broadcast %344 : vector<8x1xf32> to vector<8x32xf32>
    %346 = arith.subf %340, %345 : vector<8x32xf32>
    %347 = arith.mulf %346, %346 : vector<8x32xf32>
    %cst_117 = arith.constant dense<0.000000e+00> : vector<8xf32>
    %348 = vector.multi_reduction <add>, %347, %cst_117 [1] : vector<8x32xf32> to vector<8xf32>
    %349 = vector.shape_cast %348 : vector<8xf32> to vector<8x1xf32>
    %cst_118 = arith.constant 3.200000e+01 : f32
    %350 = vector.broadcast %cst_118 : f32 to vector<8x1xf32>
    %351 = arith.divf %349, %350 : vector<8x1xf32>
    %cst_119 = arith.constant 9.99999974E-6 : f32
    %352 = vector.broadcast %cst_119 : f32 to vector<8x1xf32>
    %353 = arith.addf %351, %352 : vector<8x1xf32>
    %354 = math.rsqrt %353 : vector<8x1xf32>
    %355 = vector.broadcast %354 : vector<8x1xf32> to vector<8x32xf32>
    %356 = arith.mulf %346, %355 : vector<8x32xf32>
    %c1_120 = arith.constant 1 : index
    %c0_121 = arith.constant 0 : index
    %c0_122 = arith.constant 0 : index
    %357 = vector.load %arg7[%c1_120, %c0_121, %c0_122] : memref<2x32x128xf32, #tpu.memory_space<vmem>>, vector<1x32x128xf32>
    %358 = vector.shape_cast %357 : vector<1x32x128xf32> to vector<32x128xf32>
    %359 = arith.truncf %356 : vector<8x32xf32> to vector<8x32xbf16>
    %360 = arith.truncf %358 : vector<32x128xf32> to vector<32x128xbf16>
    %cst_123 = arith.constant dense<0.000000e+00> : vector<8x128xf32>
    %361 = tpu.matmul %359, %360, %cst_123 {dimension_numbers = #tpu.dot_dimension_numbers<[1], [0], [0], [1], [0, 0, 1, 1], [], []>} : vector<8x32xbf16>, vector<32x128xbf16>, vector<8x128xf32> -> vector<8x128xf32>
    %c1_124 = arith.constant 1 : index
    %c0_125 = arith.constant 0 : index
    %c0_126 = arith.constant 0 : index
    %362 = vector.load %arg8[%c1_124, %c0_125, %c0_126] : memref<2x1x128xf32, #tpu.memory_space<vmem>>, vector<1x1x128xf32>
    %363 = vector.shape_cast %362 : vector<1x1x128xf32> to vector<1x128xf32>
    %364 = vector.broadcast %363 : vector<1x128xf32> to vector<8x128xf32>
    %365 = arith.addf %361, %364 : vector<8x128xf32>
    %cst_127 = arith.constant 1.702000e+00 : f32
    %366 = vector.broadcast %cst_127 : f32 to vector<8x128xf32>
    %367 = arith.mulf %366, %365 : vector<8x128xf32>
    %368 = arith.negf %367 : vector<8x128xf32>
    %369 = math.exp %368 : vector<8x128xf32>
    %cst_128 = arith.constant 1.000000e+00 : f32
    %370 = vector.broadcast %cst_128 : f32 to vector<8x128xf32>
    %371 = arith.addf %370, %369 : vector<8x128xf32>
    %372 = arith.divf %370, %371 : vector<8x128xf32>
    %373 = arith.mulf %365, %372 : vector<8x128xf32>
    %c1_129 = arith.constant 1 : index
    %c0_130 = arith.constant 0 : index
    %c0_131 = arith.constant 0 : index
    %374 = vector.load %arg9[%c1_129, %c0_130, %c0_131] : memref<2x128x32xf32, #tpu.memory_space<vmem>>, vector<1x128x32xf32>
    %375 = vector.shape_cast %374 : vector<1x128x32xf32> to vector<128x32xf32>
    %376 = arith.truncf %373 : vector<8x128xf32> to vector<8x128xbf16>
    %377 = arith.truncf %375 : vector<128x32xf32> to vector<128x32xbf16>
    %cst_132 = arith.constant dense<0.000000e+00> : vector<8x32xf32>
    %378 = tpu.matmul %376, %377, %cst_132 {dimension_numbers = #tpu.dot_dimension_numbers<[1], [0], [0], [1], [0, 0, 1, 1], [], []>} : vector<8x128xbf16>, vector<128x32xbf16>, vector<8x32xf32> -> vector<8x32xf32>
    %379 = arith.addf %340, %378 : vector<8x32xf32>
    %c1_133 = arith.constant 1 : index
    %c0_134 = arith.constant 0 : index
    %c0_135 = arith.constant 0 : index
    %380 = vector.load %arg10[%c1_133, %c0_134, %c0_135] : memref<2x1x32xf32, #tpu.memory_space<vmem>>, vector<1x1x32xf32>
    %381 = vector.shape_cast %380 : vector<1x1x32xf32> to vector<1x32xf32>
    %382 = vector.broadcast %381 : vector<1x32xf32> to vector<8x32xf32>
    %383 = arith.addf %379, %382 : vector<8x32xf32>
    %384 = arith.index_cast %arg0 : i32 to index
    %385 = memref.load %arg1[%384] : memref<2xi32, #tpu.memory_space<smem>>
    %386 = tpu.iota {dimensions = array<i32: 0>} : vector<8x1xi32>
    %387 = vector.broadcast %385 : i32 to vector<8x1xi32>
    %388 = arith.cmpi eq, %386, %387 : vector<8x1xi32>
    %cst_136 = arith.constant 0.000000e+00 : f32
    %389 = vector.shape_cast %388 : vector<8x1xi1> to vector<8x1xi1>
    %390 = vector.broadcast %389 : vector<8x1xi1> to vector<8x32xi1>
    %391 = vector.broadcast %cst_136 : f32 to vector<8x32xf32>
    %392 = arith.select %390, %383, %391 : vector<8x32xi1>, vector<8x32xf32>
    %cst_137 = arith.constant dense<0.000000e+00> : vector<32xf32>
    %393 = vector.multi_reduction <add>, %392, %cst_137 [0] : vector<8x32xf32> to vector<32xf32>
    %394 = vector.shape_cast %393 : vector<32xf32> to vector<1x32xf32>
    %cst_138 = arith.constant dense<0.000000e+00> : vector<1xf32>
    %395 = vector.multi_reduction <add>, %394, %cst_138 [1] : vector<1x32xf32> to vector<1xf32>
    %396 = vector.shape_cast %395 : vector<1xf32> to vector<1x1xf32>
    %cst_139 = arith.constant 3.200000e+01 : f32
    %397 = vector.broadcast %cst_139 : f32 to vector<1x1xf32>
    %398 = arith.divf %396, %397 : vector<1x1xf32>
    %399 = vector.broadcast %398 : vector<1x1xf32> to vector<1x32xf32>
    %400 = arith.subf %394, %399 : vector<1x32xf32>
    %401 = arith.mulf %400, %400 : vector<1x32xf32>
    %cst_140 = arith.constant dense<0.000000e+00> : vector<1xf32>
    %402 = vector.multi_reduction <add>, %401, %cst_140 [1] : vector<1x32xf32> to vector<1xf32>
    %403 = vector.shape_cast %402 : vector<1xf32> to vector<1x1xf32>
    %cst_141 = arith.constant 3.200000e+01 : f32
    %404 = vector.broadcast %cst_141 : f32 to vector<1x1xf32>
    %405 = arith.divf %403, %404 : vector<1x1xf32>
    %cst_142 = arith.constant 9.99999974E-6 : f32
    %406 = vector.broadcast %cst_142 : f32 to vector<1x1xf32>
    %407 = arith.addf %405, %406 : vector<1x1xf32>
    %408 = math.rsqrt %407 : vector<1x1xf32>
    %409 = vector.broadcast %408 : vector<1x1xf32> to vector<1x32xf32>
    %410 = arith.mulf %400, %409 : vector<1x32xf32>
    %c0_143 = arith.constant 0 : index
    %c0_144 = arith.constant 0 : index
    %411 = vector.load %arg11[%c0_143, %c0_144] : memref<32x32xf32, #tpu.memory_space<vmem>>, vector<32x32xf32>
    %412 = arith.truncf %410 : vector<1x32xf32> to vector<1x32xbf16>
    %413 = arith.truncf %411 : vector<32x32xf32> to vector<32x32xbf16>
    %cst_145 = arith.constant dense<0.000000e+00> : vector<1x32xf32>
    %414 = tpu.matmul %412, %413, %cst_145 {dimension_numbers = #tpu.dot_dimension_numbers<[1], [0], [0], [1], [0, 0, 1, 1], [], []>} : vector<1x32xbf16>, vector<32x32xbf16>, vector<1x32xf32> -> vector<1x32xf32>
    %c0_146 = arith.constant 0 : index
    %c0_147 = arith.constant 0 : index
    %415 = vector.load %arg12[%c0_146, %c0_147] : memref<1x32xf32, #tpu.memory_space<vmem>>, vector<1x32xf32>
    %416 = arith.addf %414, %415 : vector<1x32xf32>
    %c0_148 = arith.constant 0 : index
    %c0_149 = arith.constant 0 : index
    %c0_150 = arith.constant 0 : index
    %417 = vector.load %arg13[%c0_148, %c0_149, %c0_150] : memref<1x1x32xf32, #tpu.memory_space<vmem>>, vector<1x1x32xf32>
    %418 = vector.shape_cast %417 : vector<1x1x32xf32> to vector<1x32xf32>
    %419 = vector.shape_cast %416 : vector<1x32xf32> to vector<1x1x32xf32>
    tpu.vector_store %arg13[%c0_148, %c0_149, %c0_150], %419 {strides = array<i32>} : memref<1x1x32xf32, #tpu.memory_space<vmem>>, vector<1x1x32xf32>,
    return
  }
  func.func @transform_0(%arg0: i32) -> i32 {
    %c0_i32 = arith.constant 0 : i32
    %c0_i32_0 = arith.constant 0 : i32
    return %c0_i32 : i32
  }
  func.func @transform_1(%arg0: i32) -> (i32, i32, i32) {
    %c0_i32 = arith.constant 0 : i32
    %c0_i32_0 = arith.constant 0 : i32
    %c0_i32_1 = arith.constant 0 : i32
    return %arg0, %c0_i32, %c0_i32_0 : i32, i32, i32
  }
  func.func @transform_2(%arg0: i32) -> (i32, i32, i32) {
    %c0_i32 = arith.constant 0 : i32
    %c0_i32_0 = arith.constant 0 : i32
    %c0_i32_1 = arith.constant 0 : i32
    %c0_i32_2 = arith.constant 0 : i32
    return %c0_i32, %c0_i32_0, %c0_i32_1 : i32, i32, i32
  }
  func.func @transform_3(%arg0: i32) -> (i32, i32, i32) {
    %c0_i32 = arith.constant 0 : i32
    %c0_i32_0 = arith.constant 0 : i32
    %c0_i32_1 = arith.constant 0 : i32
    %c0_i32_2 = arith.constant 0 : i32
    return %c0_i32, %c0_i32_0, %c0_i32_1 : i32, i32, i32
  }
  func.func @transform_4(%arg0: i32) -> (i32, i32, i32) {
    %c0_i32 = arith.constant 0 : i32
    %c0_i32_0 = arith.constant 0 : i32
    %c0_i32_1 = arith.constant 0 : i32
    %c0_i32_2 = arith.constant 0 : i32
    return %c0_i32, %c0_i32_0, %c0_i32_1 : i32, i32, i32
  }
  func.func @transform_5(%arg0: i32) -> (i32, i32, i32) {
    %c0_i32 = arith.constant 0 : i32
    %c0_i32_0 = arith.constant 0 : i32
    %c0_i32_1 = arith.constant 0 : i32
    %c0_i32_2 = arith.constant 0 : i32
    return %c0_i32, %c0_i32_0, %c0_i32_1 : i32, i32, i32
  }
  func.func @transform_6(%arg0: i32) -> (i32, i32, i32) {
    %c0_i32 = arith.constant 0 : i32
    %c0_i32_0 = arith.constant 0 : i32
    %c0_i32_1 = arith.constant 0 : i32
    %c0_i32_2 = arith.constant 0 : i32
    return %c0_i32, %c0_i32_0, %c0_i32_1 : i32, i32, i32
  }
  func.func @transform_7(%arg0: i32) -> (i32, i32, i32) {
    %c0_i32 = arith.constant 0 : i32
    %c0_i32_0 = arith.constant 0 : i32
    %c0_i32_1 = arith.constant 0 : i32
    %c0_i32_2 = arith.constant 0 : i32
    return %c0_i32, %c0_i32_0, %c0_i32_1 : i32, i32, i32
  }
  func.func @transform_8(%arg0: i32) -> (i32, i32, i32) {
    %c0_i32 = arith.constant 0 : i32
    %c0_i32_0 = arith.constant 0 : i32
    %c0_i32_1 = arith.constant 0 : i32
    %c0_i32_2 = arith.constant 0 : i32
    return %c0_i32, %c0_i32_0, %c0_i32_1 : i32, i32, i32
  }
  func.func @transform_9(%arg0: i32) -> (i32, i32, i32) {
    %c0_i32 = arith.constant 0 : i32
    %c0_i32_0 = arith.constant 0 : i32
    %c0_i32_1 = arith.constant 0 : i32
    %c0_i32_2 = arith.constant 0 : i32
    return %c0_i32, %c0_i32_0, %c0_i32_1 : i32, i32, i32
  }
  func.func @transform_10(%arg0: i32) -> (i32, i32) {
    %c0_i32 = arith.constant 0 : i32
    %c0_i32_0 = arith.constant 0 : i32
    %c0_i32_1 = arith.constant 0 : i32
    return %c0_i32, %c0_i32_0 : i32, i32
  }
  func.func @transform_11(%arg0: i32) -> (i32, i32) {
    %c0_i32 = arith.constant 0 : i32
    %c0_i32_0 = arith.constant 0 : i32
    %c0_i32_1 = arith.constant 0 : i32
    return %c0_i32, %c0_i32_0 : i32, i32
  }
  func.func @transform_12(%arg0: i32) -> (i32, i32, i32) {
    %c0_i32 = arith.constant 0 : i32
    %c0_i32_0 = arith.constant 0 : i32
    %c0_i32_1 = arith.constant 0 : i32
    return %arg0, %c0_i32, %c0_i32_0 : i32, i32, i32
  }
}

</mosaic_0001>

<llo_original>
// kernel: mul.73
$region0: #{mul.73}
  %s0 = inlined_call_operand.vmem [shape: f32[3,1024], index: 0, kind: input, shape index: {}]
  %s1 = inlined_call_operand.vmem [shape: f32[3072], index: 1, kind: output, shape index: {}]
  $region1: #{mul.73} parent=0
    #allocation0 [shape = 'u8[32768]{0}', space=vmem, size = 0x8000, scoped, tag = 'scoped mem for input reshape']
    %s3 = sshllo.u32 0, 4
    %s4 = smul.addr 4, 7
    %s5 = scalar_lea.vmem %s0, %s4
    %v6 = vld [vmem:[%s5] sm:%s3]
    %s7 = scalar_lea.vmem [#allocation0], 56
    %8 = vst [vmem:[%s7] sm:%s3] %v6
    %s9 = smul.addr 4, 6
    %s10 = scalar_lea.vmem %s0, %s9
    %v11 = vld [vmem:[%s10] sm:%s3]
    %s12 = scalar_lea.vmem [#allocation0], 48
    %13 = vst [vmem:[%s12] sm:%s3] %v11
    %s14 = smul.addr 4, 5
    %s15 = scalar_lea.vmem %s0, %s14
    %v16 = vld [vmem:[%s15] sm:%s3]
    %s17 = scalar_lea.vmem [#allocation0], 40
    %18 = vst [vmem:[%s17] sm:%s3] %v16
    %s19 = smul.addr 4, 4
    %s20 = scalar_lea.vmem %s0, %s19
    %v21 = vld [vmem:[%s20] sm:%s3]
    %s22 = scalar_lea.vmem [#allocation0], 32
    %23 = vst [vmem:[%s22] sm:%s3] %v21
    %s24 = smul.addr 4, 3
    %s25 = scalar_lea.vmem %s0, %s24
    %v26 = vld [vmem:[%s25] sm:%s3]
    %s27 = scalar_lea.vmem [#allocation0], 24
    %28 = vst [vmem:[%s27] sm:%s3] %v26
    %s29 = smul.addr 4, 2
    %s30 = scalar_lea.vmem %s0, %s29
    %v31 = vld [vmem:[%s30] sm:%s3]
    %s32 = scalar_lea.vmem [#allocation0], 16
    %33 = vst [vmem:[%s32] sm:%s3] %v31
    %s34 = scalar_lea.vmem %s0, 4
    %v35 = vld [vmem:[%s34] sm:%s3]
    %s36 = scalar_lea.vmem [#allocation0], 8
    %37 = vst [vmem:[%s36] sm:%s3] %v35
    %v38 = vld [vmem:[%s0] sm:%s3]
    %39 = vst [vmem:[#allocation0] sm:%s3] %v38
    %v40 = vld [vmem:[#allocation0] sm:$0x7]
    %41 = vst [vmem:[%s1] ss:$8 sm:$0x7] %v40
    %s42 = scalar_lea.vmem [#allocation0], 8
    %v43 = vld [vmem:[%s42] sm:$0x7]
    %s44 = scalar_lea.vmem %s1, 1
    %45 = vst [vmem:[%s44] ss:$8 sm:$0x7] %v43
    %s46 = scalar_lea.vmem [#allocation0], 16
    %v47 = vld [vmem:[%s46] sm:$0x7]
    %s48 = scalar_lea.vmem %s1, 2
    %49 = vst [vmem:[%s48] ss:$8 sm:$0x7] %v47
    %s50 = scalar_lea.vmem [#allocation0], 24
    %v51 = vld [vmem:[%s50] sm:$0x7]
    %s52 = scalar_lea.vmem %s1, 3
    %53 = vst [vmem:[%s52] ss:$8 sm:$0x7] %v51
    %s54 = scalar_lea.vmem [#allocation0], 32
    %v55 = vld [vmem:[%s54] sm:$0x7]
    %s56 = scalar_lea.vmem %s1, 4
    %57 = vst [vmem:[%s56] ss:$8 sm:$0x7] %v55
    %s58 = scalar_lea.vmem [#allocation0], 40
    %v59 = vld [vmem:[%s58] sm:$0x7]
    %s60 = scalar_lea.vmem %s1, 5
    %61 = vst [vmem:[%s60] ss:$8 sm:$0x7] %v59
    %s62 = scalar_lea.vmem [#allocation0], 48
    %v63 = vld [vmem:[%s62] sm:$0x7]
    %s64 = scalar_lea.vmem %s1, 6
    %65 = vst [vmem:[%s64] ss:$8 sm:$0x7] %v63
    %s66 = scalar_lea.vmem [#allocation0], 56
    %v67 = vld [vmem:[%s66] sm:$0x7]
    %s68 = scalar_lea.vmem %s1, 7
    %69 = vst [vmem:[%s68] ss:$8 sm:$0x7] %v67

// kernel: neg.4
$region0: #{neg.4}
  #allocation0 [shape = 's32[1]{0}', space=sflag, size = 0x4, scoped, tag = 'scoped memory for neg.4']
  %s0 = inlined_call_operand.vmem [shape: f32[64], index: 0, kind: input, shape index: {}]
  %s1 = inlined_call_operand.vmem [shape: f32[64], index: 1, kind: output, shape index: {}]
  %v2 = vld [vmem:[%s0] sm:$0x1]
  %3 = xla_tuple %v2
  %4 = xla_tuple %3
  %v5 = vxor.u32 %v2, 2147483648
  %6 = xla_tuple %v5
  %7 = vst [vmem:[%s1] sm:$0x1] %v5

// kernel: clip_loss_forward.5
$region0: #{clip_loss_forward.5}
  #allocation0 [shape = 'u32[]', space=smem, size = 0x4, offset = 0x4, fixed_abs, tag = 'smem constant byte address 0x4 - core index']
  #allocation1 [shape = 'u32[144,128]{1,0:T(1,128)}', space=vmem, size = 0x12000, scoped, tag = 'internal scratch']
  #allocation2 [shape = 'f32[1]{0:T(128)S(6)}', space=smem, size = 0x200, scoped, tag = 'scoped memory for clip_loss_forward.5']
  %s0 = inlined_call_operand.<no memory space> [shape: f32[1], index: 0, kind: input, shape index: {}]
  %s1 = inlined_call_operand.vmem [shape: f32[2,32], index: 1, kind: input, shape index: {}]
  %s2 = inlined_call_operand.vmem [shape: f32[2,32], index: 2, kind: input, shape index: {}]
  %s3 = inlined_call_operand.hbm [shape: f32[2,2], index: 3, kind: output, shape index: {}]
  %s4 = sld [smem:[#allocation0]]
  $region22: #{clip_loss_forward.5} parent=0
    _
  %s6 = ssub.s32 1, %s4
  %s7 = scalar_select 0, %s6, %s4
  %8 = sst [smem:[#allocation2]] %s0
  $region1: #{clip_loss_forward.5} parent=0
    #allocation3 [shape = 'u8[1024]{0}', space=vmem, size = 0x400, scoped, tag = 'output window, operand 0, single buffered']
    #allocation4 [shape = 's32[1]{0}', space=sflag, size = 0x4, scoped, tag = 'scoped memory for clip_loss_forward.5']
    %9 = vsyncpa [#allocation4], 0
    // Predicated region
    $region2: #{clip_loss_forward.5} parent=1 // pred_check
      _
    $region3: #{clip_loss_forward.5} parent=1 // pred_check_branch
      %11 = sbr.rel (0) target = $region5
    $region4: #{clip_loss_forward.5} parent=1 // pred_region
      _
    $region5: #{clip_loss_forward.5} parent=1 // pred_fallthru
      _
    // Predicated region
    $region6: #{clip_loss_forward.5} parent=1 // pred_check
      _
    $region7: #{clip_loss_forward.5} parent=1 // pred_check_branch
      %13 = sbr.rel (0) target = $region9
    $region8: #{clip_loss_forward.5} parent=1 // pred_region
      _
    $region9: #{clip_loss_forward.5} parent=1 // pred_fallthru
      _
    // Predicated region
    $region10: #{clip_loss_forward.5} parent=1 // pred_check
      _
    $region11: #{clip_loss_forward.5} parent=1 // pred_check_branch
      %15 = sbr.rel (0) target = $region13
    $region12: #{clip_loss_forward.5} parent=1 // pred_region
      _
    $region13: #{clip_loss_forward.5} parent=1 // pred_fallthru
      _
    %v16 = vld [vmem:[%s1] sm:$0x3]
    %v17 = vld [vmem:[%s2] sm:$0x3]
    %v18 = vmul.f32 %v16, %v16
    %vm19 = vcmask 254976
    %v20 = vsel %vm19, %v18, 0.0
    %21 = vadd.xlane.f32.xlu0 %v20
    %v22 = vpop.xlane.xlu0 %21
    %v23 = vrsqrt.pop %v22
    %v24 = vmul.f32 %v16, %v23
    %v25 = vmul.f32 %v17, %v17
    %v26 = vsel %vm19, %v25, 0.0
    %27 = vadd.xlane.f32.xlu0 %v26
    %v28 = vpop.xlane.xlu0 %27
    %v29 = vrsqrt.pop %v28
    %v30 = vmul.f32 %v17, %v29
    %s31 = sld [smem:[#allocation2]]
    %vm32 = vcmask 261120
    %v34 = vsel %vm32, %v24, 0
    %v37 = vsel %vm32, %v30, 0
    %39 = vmatprep.subr.mxu0 0.0
    %40 = vmatpush1.xpose.msra.mxu0 %v37
    %41 = vmatprep.subr.mxu0 0.0
    %42 = vmatpush1.xpose.msra.mxu0 0.0
    %43 = vmatprep.subr.mxu0 0.0
    %44 = vmatpush1.xpose.msra.mxu0 0.0
    %45 = vmatprep.subr.mxu0 0.0
    %46 = vmatpush1.xpose.msra.mxu0 0.0
    %47 = vmatprep.subr.mxu0 0.0
    %48 = vmatpush1.xpose.msra.mxu0 0.0
    %49 = vmatprep.subr.mxu0 0.0
    %50 = vmatpush1.xpose.msra.mxu0 0.0
    %51 = vmatprep.subr.mxu0 0.0
    %52 = vmatpush1.xpose.msra.mxu0 0.0
    %53 = vmatprep.subr.mxu0 0.0
    %54 = vmatpush1.xpose.msra.mxu0 0.0
    %55 = vmatprep.subr.mxu0 0.0
    %56 = vmatpush1.xpose.msra.mxu0 0.0
    %57 = vmatprep.subr.mxu0 0.0
    %58 = vmatpush1.xpose.msra.mxu0 0.0
    %59 = vmatprep.subr.mxu0 0.0
    %60 = vmatpush1.xpose.msra.mxu0 0.0
    %61 = vmatprep.subr.mxu0 0.0
    %62 = vmatpush1.xpose.msra.mxu0 0.0
    %63 = vmatprep.subr.mxu0 0.0
    %64 = vmatpush1.xpose.msra.mxu0 0.0
    %65 = vmatprep.subr.mxu0 0.0
    %66 = vmatpush1.xpose.msra.mxu0 0.0
    %67 = vmatprep.subr.mxu0 0.0
    %68 = vmatpush1.xpose.msra.mxu0 0.0
    %69 = vmatprep.subr.mxu0 0.0
    %70 = vmatpush1.xpose.msra.mxu0 0.0
    %71 = vmatprep.subr.mxu0 0.0
    %72 = vmatpush1.xpose.msra.mxu0 0.0
    %73 = vmatprep.subr.mxu0 0.0
    %74 = vmatpush1.xpose.msra.mxu0 0.0
    %75 = vmatprep.subr.mxu0 0.0
    %76 = vmatpush1.xpose.msra.mxu0 0.0
    %77 = vmatprep.subr.mxu0 0.0
    %78 = vmatpush1.xpose.msra.mxu0 0.0
    %79 = vmatprep.subr.mxu0 0.0
    %80 = vmatpush1.xpose.msra.mxu0 0.0
    %81 = vmatprep.subr.mxu0 0.0
    %82 = vmatpush1.xpose.msra.mxu0 0.0
    %83 = vmatprep.subr.mxu0 0.0
    %84 = vmatpush1.xpose.msra.mxu0 0.0
    %85 = vmatprep.subr.mxu0 0.0
    %86 = vmatpush1.xpose.msra.mxu0 0.0
    %87 = vmatprep.subr.mxu0 0.0
    %88 = vmatpush1.xpose.msra.mxu0 0.0
    %89 = vmatprep.subr.mxu0 0.0
    %90 = vmatpush1.xpose.msra.mxu0 0.0
    %91 = vmatprep.subr.mxu0 0.0
    %92 = vmatpush1.xpose.msra.mxu0 0.0
    %93 = vmatprep.subr.mxu0 0.0
    %94 = vmatpush1.xpose.msra.mxu0 0.0
    %95 = vmatprep.subr.mxu0 0.0
    %96 = vmatpush1.xpose.msra.mxu0 0.0
    %97 = vmatprep.subr.mxu0 0.0
    %98 = vmatpush1.xpose.msra.mxu0 0.0
    %99 = vmatprep.subr.mxu0 0.0
    %100 = vmatpush1.xpose.msra.mxu0 0.0
    %101 = vmatprep.subr.mxu0 0.0
    %102 = vmatpush1.xpose.msra.mxu0 0.0
    %103 = vmatprep.mubr.f32.mxu0 0.0
    %104 = vmatmul.mubr.f32.gmra.mrb[0].mxu0 %v34
    %v105 = vpop.f32.mrb[0].mxu0
    %v106 = vadd.f32 0.0, %v105
    %v107 = vpop.f32.mrb[0].mxu0
    %108 = vdwg.mxu0
    %v109 = vstv %s31
    %v110 = vmul.f32 %v109, %v106
    %v111 = vmul.f32 %v110, 0.01
    %v112 = vsub.f32 1.0, %v111
    %vm113 = vcmask 9216
    %114 = vst.msk [vmem:[#allocation3] sm:$0x3] %vm113, %v112
    // Predicated region
    $region14: #{clip_loss_forward.5} parent=1 // pred_check
      _
    $region15: #{clip_loss_forward.5} parent=1 // pred_check_branch
      %116 = sbr.rel (0) target = $region17
    $region16: #{clip_loss_forward.5} parent=1 // pred_region
      %s118 = ssub.s32 32, 32
      %119 = vsyncadd [#allocation4], %s118
      %s121 = sshll.u32 [#allocation3], 4
      %s122 = int_to_ptr.vmem [resolvable:$true] %s121
      %124 = dma.vmem_to_hbm [thread:$0]  %s122, 32, %s3, [#allocation4]
    $region17: #{clip_loss_forward.5} parent=1 // pred_fallthru
      _
    // Predicated region
    $region18: #{clip_loss_forward.5} parent=1 // pred_check
      _
    $region19: #{clip_loss_forward.5} parent=1 // pred_check_branch
      %126 = sbr.rel (0) target = $region21
    $region20: #{clip_loss_forward.5} parent=1 // pred_region
      %127 = dma.done [#allocation4], 32
    $region21: #{clip_loss_forward.5} parent=1 // pred_fallthru
      _
    %128 = vsyncpa [#allocation4], 1

// kernel: clip_loss_forward.4
$region0: #{clip_loss_forward.4}
  #allocation0 [shape = 'u32[]', space=smem, size = 0x4, offset = 0x4, fixed_abs, tag = 'smem constant byte address 0x4 - core index']
  #allocation1 [shape = 'u32[144,128]{1,0:T(1,128)}', space=vmem, size = 0x12000, scoped, tag = 'internal scratch']
  %s0 = inlined_call_operand.vmem [shape: s32[2], index: 0, kind: input, shape index: {}]
  %s1 = inlined_call_operand.vmem [shape: f32[2,8,32], index: 1, kind: input, shape index: {}]
  %s2 = inlined_call_operand.vmem [shape: f32[2,32,96], index: 2, kind: input, shape index: {}]
  %s3 = inlined_call_operand.vmem [shape: f32[2,1,96], index: 3, kind: input, shape index: {}]
  %s4 = inlined_call_operand.vmem [shape: f32[2,32,32], index: 4, kind: input, shape index: {}]
  %s5 = inlined_call_operand.vmem [shape: f32[2,1,32], index: 5, kind: input, shape index: {}]
  %s6 = inlined_call_operand.vmem [shape: f32[2,32,128], index: 6, kind: input, shape index: {}]
  %s7 = inlined_call_operand.vmem [shape: f32[2,1,128], index: 7, kind: input, shape index: {}]
  %s8 = inlined_call_operand.vmem [shape: f32[2,128,32], index: 8, kind: input, shape index: {}]
  %s9 = inlined_call_operand.vmem [shape: f32[2,1,32], index: 9, kind: input, shape index: {}]
  %s10 = inlined_call_operand.vmem [shape: f32[32,32], index: 10, kind: input, shape index: {}]
  %s11 = inlined_call_operand.vmem [shape: f32[1,32], index: 11, kind: input, shape index: {}]
  %s12 = inlined_call_operand.vmem [shape: f32[2,1,32], index: 12, kind: output, shape index: {}]
  %s13 = sld [smem:[#allocation0]]
  $region85: #{clip_loss_forward.4} parent=0
    _
  %s15 = ssub.s32 1, %s13
  %s16 = scalar_select 0, %s15, %s13
  $region1: #{clip_loss_forward.4} parent=0
    #allocation2 [shape = 'u8[512]{0}', space=smem, size = 0x200, scoped, tag = 'input window, operand 0, single buffered']
    #allocation3 [shape = 's32[2]{0}', space=sflag, size = 0x8, scoped, tag = 'scoped memory for clip_loss_forward.4']
    %17 = vsyncpa [#allocation3], 0
    loop: start=0, step=1, limit=4
    $region2: #{clip_loss_forward.4} parent=1 // loop_pre_header
      _
    $region3: #{clip_loss_forward.4} parent=1 // loop_header
      %s19 = sphi 0, %s23
      %p20 = scmp.ge.s32.totalorder %s19, 4
      %s27 = sphi 0, %s27
      %s29 = sphi 0, %s27
      %s30 = sphi 0, %s29
      %s44 = sphi 0, %s30
      %s50 = sphi 0, %s52
      %s53 = sphi 0, %s50
      %s54 = sphi 0, %s53
      %s70 = sphi 0, %s54
      %s74 = sphi 0, %s74
      %s76 = sphi 0, %s74
      %s77 = sphi 0, %s76
      %s91 = sphi 0, %s77
      %s95 = sphi 0, %s95
      %s97 = sphi 0, %s95
      %s98 = sphi 0, %s97
      %s112 = sphi 0, %s98
      %s116 = sphi 0, %s116
      %s118 = sphi 0, %s116
      %s119 = sphi 0, %s118
      %s133 = sphi 0, %s119
      %s137 = sphi 0, %s137
      %s139 = sphi 0, %s137
      %s140 = sphi 0, %s139
      %s154 = sphi 0, %s140
      %s158 = sphi 0, %s158
      %s160 = sphi 0, %s158
      %s161 = sphi 0, %s160
      %s175 = sphi 0, %s161
      %s179 = sphi 0, %s179
      %s181 = sphi 0, %s179
      %s182 = sphi 0, %s181
      %s196 = sphi 0, %s182
      %s200 = sphi 0, %s200
      %s202 = sphi 0, %s200
      %s203 = sphi 0, %s202
      %s217 = sphi 0, %s203
      %s221 = sphi 0, %s221
      %s223 = sphi 0, %s221
      %s224 = sphi 0, %s223
      %s238 = sphi 0, %s224
      %s242 = sphi 0, %s242
      %s244 = sphi 0, %s242
      %s245 = sphi 0, %s244
      %s259 = sphi 0, %s245
      %s263 = sphi 0, %s263
      %s265 = sphi 0, %s263
      %s266 = sphi 0, %s265
      %s280 = sphi 0, %s266
      %s286 = sphi 0, %s288
      %s289 = sphi 0, %s286
      %s290 = sphi 0, %s289
      %s306 = sphi 0, %s290
    $region4: #{clip_loss_forward.4} parent=1 // loop_header_branch
      %22 = sbr.rel (%p20) target = $region8
    $region5: #{clip_loss_forward.4} parent=1 // loop_body
      %s24 = ssub.s32 %s19, 1
      %s25 = ssub.s32 %s19, 2
      %s26 = sadd.s32 %s19, 1
      %s28 = sadd.s32 %s27, 1
      %p31 = scmp.eq.s32.totalorder %s19, 1
      %p32 = scmp.ne.s32.totalorder %s27, %s29
      %p33 = scmp.eq.s32.totalorder %s19, 0
      %p34 = por %p32, %p33
      %p35 = scmp.ne.s32.totalorder %s27, %s29
      %p36 = scmp.eq.s32.totalorder %s24, 1
      %p37 = por %p35, %p36
      %p38 = scmp.ne.s32.totalorder %s29, %s30
      %p39 = scmp.eq.s32.totalorder %s24, 0
      %p40 = por %p38, %p39
      %p41 = scmp.ne.s32.totalorder %s29, %s30
      %p42 = scmp.eq.s32.totalorder %s25, 1
      %p43 = por %p41, %p42
      %p45 = scmp.ne.s32.totalorder %s30, %s44
      %p46 = scmp.eq.s32.totalorder %s25, 0
      %p47 = por %p45, %p46
      %s48 = ssub.s32 %s19, %s26
      %p49 = scmp.eq.s32.totalorder %s48, 0
      %s51 = sadd.s32 %s50, 1
      %s52 = scalar_select %p49, %s50, %s51
      %p55 = pneg %p49
      %p56 = scmp.eq.s32.totalorder %s19, 1
      %p57 = por %p55, %p56
      %p58 = scmp.ne.s32.totalorder %s50, %s53
      %p59 = scmp.eq.s32.totalorder %s19, 0
      %p60 = por %p58, %p59
      %p61 = scmp.ne.s32.totalorder %s50, %s53
      %p62 = scmp.eq.s32.totalorder %s24, 1
      %p63 = por %p61, %p62
      %p64 = scmp.ne.s32.totalorder %s53, %s54
      %p65 = scmp.eq.s32.totalorder %s24, 0
      %p66 = por %p64, %p65
      %p67 = scmp.ne.s32.totalorder %s53, %s54
      %p68 = scmp.eq.s32.totalorder %s25, 1
      %p69 = por %p67, %p68
      %p71 = scmp.ne.s32.totalorder %s54, %s70
      %p72 = scmp.eq.s32.totalorder %s25, 0
      %p73 = por %p71, %p72
      %s75 = sadd.s32 %s74, 1
      %p78 = scmp.eq.s32.totalorder %s19, 1
      %p79 = scmp.ne.s32.totalorder %s74, %s76
      %p80 = scmp.eq.s32.totalorder %s19, 0
      %p81 = por %p79, %p80
      %p82 = scmp.ne.s32.totalorder %s74, %s76
      %p83 = scmp.eq.s32.totalorder %s24, 1
      %p84 = por %p82, %p83
      %p85 = scmp.ne.s32.totalorder %s76, %s77
      %p86 = scmp.eq.s32.totalorder %s24, 0
      %p87 = por %p85, %p86
      %p88 = scmp.ne.s32.totalorder %s76, %s77
      %p89 = scmp.eq.s32.totalorder %s25, 1
      %p90 = por %p88, %p89
      %p92 = scmp.ne.s32.totalorder %s77, %s91
      %p93 = scmp.eq.s32.totalorder %s25, 0
      %p94 = por %p92, %p93
      %s96 = sadd.s32 %s95, 1
      %p99 = scmp.eq.s32.totalorder %s19, 1
      %p100 = scmp.ne.s32.totalorder %s95, %s97
      %p101 = scmp.eq.s32.totalorder %s19, 0
      %p102 = por %p100, %p101
      %p103 = scmp.ne.s32.totalorder %s95, %s97
      %p104 = scmp.eq.s32.totalorder %s24, 1
      %p105 = por %p103, %p104
      %p106 = scmp.ne.s32.totalorder %s97, %s98
      %p107 = scmp.eq.s32.totalorder %s24, 0
      %p108 = por %p106, %p107
      %p109 = scmp.ne.s32.totalorder %s97, %s98
      %p110 = scmp.eq.s32.totalorder %s25, 1
      %p111 = por %p109, %p110
      %p113 = scmp.ne.s32.totalorder %s98, %s112
      %p114 = scmp.eq.s32.totalorder %s25, 0
      %p115 = por %p113, %p114
      %s117 = sadd.s32 %s116, 1
      %p120 = scmp.eq.s32.totalorder %s19, 1
      %p121 = scmp.ne.s32.totalorder %s116, %s118
      %p122 = scmp.eq.s32.totalorder %s19, 0
      %p123 = por %p121, %p122
      %p124 = scmp.ne.s32.totalorder %s116, %s118
      %p125 = scmp.eq.s32.totalorder %s24, 1
      %p126 = por %p124, %p125
      %p127 = scmp.ne.s32.totalorder %s118, %s119
      %p128 = scmp.eq.s32.totalorder %s24, 0
      %p129 = por %p127, %p128
      %p130 = scmp.ne.s32.totalorder %s118, %s119
      %p131 = scmp.eq.s32.totalorder %s25, 1
      %p132 = por %p130, %p131
      %p134 = scmp.ne.s32.totalorder %s119, %s133
      %p135 = scmp.eq.s32.totalorder %s25, 0
      %p136 = por %p134, %p135
      %s138 = sadd.s32 %s137, 1
      %p141 = scmp.eq.s32.totalorder %s19, 1
      %p142 = scmp.ne.s32.totalorder %s137, %s139
      %p143 = scmp.eq.s32.totalorder %s19, 0
      %p144 = por %p142, %p143
      %p145 = scmp.ne.s32.totalorder %s137, %s139
      %p146 = scmp.eq.s32.totalorder %s24, 1
      %p147 = por %p145, %p146
      %p148 = scmp.ne.s32.totalorder %s139, %s140
      %p149 = scmp.eq.s32.totalorder %s24, 0
      %p150 = por %p148, %p149
      %p151 = scmp.ne.s32.totalorder %s139, %s140
      %p152 = scmp.eq.s32.totalorder %s25, 1
      %p153 = por %p151, %p152
      %p155 = scmp.ne.s32.totalorder %s140, %s154
      %p156 = scmp.eq.s32.totalorder %s25, 0
      %p157 = por %p155, %p156
      %s159 = sadd.s32 %s158, 1
      %p162 = scmp.eq.s32.totalorder %s19, 1
      %p163 = scmp.ne.s32.totalorder %s158, %s160
      %p164 = scmp.eq.s32.totalorder %s19, 0
      %p165 = por %p163, %p164
      %p166 = scmp.ne.s32.totalorder %s158, %s160
      %p167 = scmp.eq.s32.totalorder %s24, 1
      %p168 = por %p166, %p167
      %p169 = scmp.ne.s32.totalorder %s160, %s161
      %p170 = scmp.eq.s32.totalorder %s24, 0
      %p171 = por %p169, %p170
      %p172 = scmp.ne.s32.totalorder %s160, %s161
      %p173 = scmp.eq.s32.totalorder %s25, 1
      %p174 = por %p172, %p173
      %p176 = scmp.ne.s32.totalorder %s161, %s175
      %p177 = scmp.eq.s32.totalorder %s25, 0
      %p178 = por %p176, %p177
      %s180 = sadd.s32 %s179, 1
      %p183 = scmp.eq.s32.totalorder %s19, 1
      %p184 = scmp.ne.s32.totalorder %s179, %s181
      %p185 = scmp.eq.s32.totalorder %s19, 0
      %p186 = por %p184, %p185
      %p187 = scmp.ne.s32.totalorder %s179, %s181
      %p188 = scmp.eq.s32.totalorder %s24, 1
      %p189 = por %p187, %p188
      %p190 = scmp.ne.s32.totalorder %s181, %s182
      %p191 = scmp.eq.s32.totalorder %s24, 0
      %p192 = por %p190, %p191
      %p193 = scmp.ne.s32.totalorder %s181, %s182
      %p194 = scmp.eq.s32.totalorder %s25, 1
      %p195 = por %p193, %p194
      %p197 = scmp.ne.s32.totalorder %s182, %s196
      %p198 = scmp.eq.s32.totalorder %s25, 0
      %p199 = por %p197, %p198
      %s201 = sadd.s32 %s200, 1
      %p204 = scmp.eq.s32.totalorder %s19, 1
      %p205 = scmp.ne.s32.totalorder %s200, %s202
      %p206 = scmp.eq.s32.totalorder %s19, 0
      %p207 = por %p205, %p206
      %p208 = scmp.ne.s32.totalorder %s200, %s202
      %p209 = scmp.eq.s32.totalorder %s24, 1
      %p210 = por %p208, %p209
      %p211 = scmp.ne.s32.totalorder %s202, %s203
      %p212 = scmp.eq.s32.totalorder %s24, 0
      %p213 = por %p211, %p212
      %p214 = scmp.ne.s32.totalorder %s202, %s203
      %p215 = scmp.eq.s32.totalorder %s25, 1
      %p216 = por %p214, %p215
      %p218 = scmp.ne.s32.totalorder %s203, %s217
      %p219 = scmp.eq.s32.totalorder %s25, 0
      %p220 = por %p218, %p219
      %s222 = sadd.s32 %s221, 1
      %p225 = scmp.eq.s32.totalorder %s19, 1
      %p226 = scmp.ne.s32.totalorder %s221, %s223
      %p227 = scmp.eq.s32.totalorder %s19, 0
      %p228 = por %p226, %p227
      %p229 = scmp.ne.s32.totalorder %s221, %s223
      %p230 = scmp.eq.s32.totalorder %s24, 1
      %p231 = por %p229, %p230
      %p232 = scmp.ne.s32.totalorder %s223, %s224
      %p233 = scmp.eq.s32.totalorder %s24, 0
      %p234 = por %p232, %p233
      %p235 = scmp.ne.s32.totalorder %s223, %s224
      %p236 = scmp.eq.s32.totalorder %s25, 1
      %p237 = por %p235, %p236
      %p239 = scmp.ne.s32.totalorder %s224, %s238
      %p240 = scmp.eq.s32.totalorder %s25, 0
      %p241 = por %p239, %p240
      %s243 = sadd.s32 %s242, 1
      %p246 = scmp.eq.s32.totalorder %s19, 1
      %p247 = scmp.ne.s32.totalorder %s242, %s244
      %p248 = scmp.eq.s32.totalorder %s19, 0
      %p249 = por %p247, %p248
      %p250 = scmp.ne.s32.totalorder %s242, %s244
      %p251 = scmp.eq.s32.totalorder %s24, 1
      %p252 = por %p250, %p251
      %p253 = scmp.ne.s32.totalorder %s244, %s245
      %p254 = scmp.eq.s32.totalorder %s24, 0
      %p255 = por %p253, %p254
      %p256 = scmp.ne.s32.totalorder %s244, %s245
      %p257 = scmp.eq.s32.totalorder %s25, 1
      %p258 = por %p256, %p257
      %p260 = scmp.ne.s32.totalorder %s245, %s259
      %p261 = scmp.eq.s32.totalorder %s25, 0
      %p262 = por %p260, %p261
      %s264 = sadd.s32 %s263, 1
      %p267 = scmp.eq.s32.totalorder %s19, 1
      %p268 = scmp.ne.s32.totalorder %s263, %s265
      %p269 = scmp.eq.s32.totalorder %s19, 0
      %p270 = por %p268, %p269
      %p271 = scmp.ne.s32.totalorder %s263, %s265
      %p272 = scmp.eq.s32.totalorder %s24, 1
      %p273 = por %p271, %p272
      %p274 = scmp.ne.s32.totalorder %s265, %s266
      %p275 = scmp.eq.s32.totalorder %s24, 0
      %p276 = por %p274, %p275
      %p277 = scmp.ne.s32.totalorder %s265, %s266
      %p278 = scmp.eq.s32.totalorder %s25, 1
      %p279 = por %p277, %p278
      %p281 = scmp.ne.s32.totalorder %s266, %s280
      %p282 = scmp.eq.s32.totalorder %s25, 0
      %p283 = por %p281, %p282
      %s284 = ssub.s32 %s19, %s26
      %p285 = scmp.eq.s32.totalorder %s284, 0
      %s287 = sadd.s32 %s286, 1
      %s288 = scalar_select %p285, %s286, %s287
      %p291 = pneg %p285
      %p292 = scmp.eq.s32.totalorder %s19, 1
      %p293 = por %p291, %p292
      %p294 = scmp.ne.s32.totalorder %s286, %s289
      %p295 = scmp.eq.s32.totalorder %s19, 0
      %p296 = por %p294, %p295
      %p297 = scmp.ne.s32.totalorder %s286, %s289
      %p298 = scmp.eq.s32.totalorder %s24, 1
      %p299 = por %p297, %p298
      %p300 = scmp.ne.s32.totalorder %s289, %s290
      %p301 = scmp.eq.s32.totalorder %s24, 0
      %p302 = por %p300, %p301
      %p303 = scmp.ne.s32.totalorder %s289, %s290
      %p304 = scmp.eq.s32.totalorder %s25, 1
      %p305 = por %p303, %p304
      %p307 = scmp.ne.s32.totalorder %s290, %s306
      %p308 = scmp.eq.s32.totalorder %s25, 0
      %p309 = por %p307, %p308
      %p310 = scmp.le.s32.totalorder 1, %s19
      %p311 = scmp.lt.s32.totalorder %s19, 3
      %p312 = pnand %p310, %p311
      %p313 = pneg %p312
      // Predicated region
      $region9: #{clip_loss_forward.4} parent=5 // pred_check
        _
      $region10: #{clip_loss_forward.4} parent=5 // pred_check_branch
        %315 = sbr.rel (%p312) target = $region12
      $region11: #{clip_loss_forward.4} parent=5 // pred_region
        %s316 = ssub.s32 %s19, 1
        // Predicated region
        $region13: #{clip_loss_forward.4} parent=11 // pred_check
          %p317 = pneg %p40
        $region14: #{clip_loss_forward.4} parent=11 // pred_check_branch
          %319 = sbr.rel (%p317) target = $region16
        $region15: #{clip_loss_forward.4} parent=11 // pred_region
          %s321 = ssub.s32 16, 16
          %322 = vsyncadd [#allocation3], %s321
          %s324 = sshll.u32 %s0, 4
          %s325 = int_to_ptr.vmem [resolvable:$true] %s324
          %327 = dma.vmem_to_smem %s325, 16, [#allocation2], [#allocation3]
        $region16: #{clip_loss_forward.4} parent=11 // pred_fallthru
          _
        // Predicated region
        $region17: #{clip_loss_forward.4} parent=11 // pred_check
          %p328 = pneg %p87
        $region18: #{clip_loss_forward.4} parent=11 // pred_check_branch
          %330 = sbr.rel (%p328) target = $region20
        $region19: #{clip_loss_forward.4} parent=11 // pred_region
          _
        $region20: #{clip_loss_forward.4} parent=11 // pred_fallthru
          _
        // Predicated region
        $region21: #{clip_loss_forward.4} parent=11 // pred_check
          %p331 = pneg %p108
        $region22: #{clip_loss_forward.4} parent=11 // pred_check_branch
          %333 = sbr.rel (%p331) target = $region24
        $region23: #{clip_loss_forward.4} parent=11 // pred_region
          _
        $region24: #{clip_loss_forward.4} parent=11 // pred_fallthru
          _
        // Predicated region
        $region25: #{clip_loss_forward.4} parent=11 // pred_check
          %p334 = pneg %p129
        $region26: #{clip_loss_forward.4} parent=11 // pred_check_branch
          %336 = sbr.rel (%p334) target = $region28
        $region27: #{clip_loss_forward.4} parent=11 // pred_region
          _
        $region28: #{clip_loss_forward.4} parent=11 // pred_fallthru
          _
        // Predicated region
        $region29: #{clip_loss_forward.4} parent=11 // pred_check
          %p337 = pneg %p150
        $region30: #{clip_loss_forward.4} parent=11 // pred_check_branch
          %339 = sbr.rel (%p337) target = $region32
        $region31: #{clip_loss_forward.4} parent=11 // pred_region
          _
        $region32: #{clip_loss_forward.4} parent=11 // pred_fallthru
          _
        // Predicated region
        $region33: #{clip_loss_forward.4} parent=11 // pred_check
          %p340 = pneg %p171
        $region34: #{clip_loss_forward.4} parent=11 // pred_check_branch
          %342 = sbr.rel (%p340) target = $region36
        $region35: #{clip_loss_forward.4} parent=11 // pred_region
          _
        $region36: #{clip_loss_forward.4} parent=11 // pred_fallthru
          _
        // Predicated region
        $region37: #{clip_loss_forward.4} parent=11 // pred_check
          %p343 = pneg %p192
        $region38: #{clip_loss_forward.4} parent=11 // pred_check_branch
          %345 = sbr.rel (%p343) target = $region40
        $region39: #{clip_loss_forward.4} parent=11 // pred_region
          _
        $region40: #{clip_loss_forward.4} parent=11 // pred_fallthru
          _
        // Predicated region
        $region41: #{clip_loss_forward.4} parent=11 // pred_check
          %p346 = pneg %p213
        $region42: #{clip_loss_forward.4} parent=11 // pred_check_branch
          %348 = sbr.rel (%p346) target = $region44
        $region43: #{clip_loss_forward.4} parent=11 // pred_region
          _
        $region44: #{clip_loss_forward.4} parent=11 // pred_fallthru
          _
        // Predicated region
        $region45: #{clip_loss_forward.4} parent=11 // pred_check
          %p349 = pneg %p234
        $region46: #{clip_loss_forward.4} parent=11 // pred_check_branch
          %351 = sbr.rel (%p349) target = $region48
        $region47: #{clip_loss_forward.4} parent=11 // pred_region
          _
        $region48: #{clip_loss_forward.4} parent=11 // pred_fallthru
          _
        // Predicated region
        $region49: #{clip_loss_forward.4} parent=11 // pred_check
          %p352 = pneg %p255
        $region50: #{clip_loss_forward.4} parent=11 // pred_check_branch
          %354 = sbr.rel (%p352) target = $region52
        $region51: #{clip_loss_forward.4} parent=11 // pred_region
          _
        $region52: #{clip_loss_forward.4} parent=11 // pred_fallthru
          _
        // Predicated region
        $region53: #{clip_loss_forward.4} parent=11 // pred_check
          %p355 = pneg %p276
        $region54: #{clip_loss_forward.4} parent=11 // pred_check_branch
          %357 = sbr.rel (%p355) target = $region56
        $region55: #{clip_loss_forward.4} parent=11 // pred_region
          _
        $region56: #{clip_loss_forward.4} parent=11 // pred_fallthru
          _
      $region12: #{clip_loss_forward.4} parent=5 // pred_fallthru
        _
      %p358 = scmp.lt.s32.totalorder %s19, 2
      // Predicated region
      $region57: #{clip_loss_forward.4} parent=5 // pred_check
        %p359 = pneg %p358
      $region58: #{clip_loss_forward.4} parent=5 // pred_check_branch
        %361 = sbr.rel (%p359) target = $region60
      $region59: #{clip_loss_forward.4} parent=5 // pred_region
        // Predicated region
        $region61: #{clip_loss_forward.4} parent=59 // pred_check
          %p362 = pneg %p60
        $region62: #{clip_loss_forward.4} parent=59 // pred_check_branch
          %364 = sbr.rel (%p362) target = $region64
        $region63: #{clip_loss_forward.4} parent=59 // pred_region
          %p365 = scmp.lt.s32.totalorder %s19, 1
          %s366 = scalar_select %p365, %s19, 1
          %s367 = smul.addr %s366, 8
          %s368 = scalar_lea.vmem %s1, %s367
        $region64: #{clip_loss_forward.4} parent=59 // pred_fallthru
          _
      $region60: #{clip_loss_forward.4} parent=5 // pred_fallthru
        _
      %p369 = scmp.le.s32.totalorder 1, %s19
      %p370 = scmp.lt.s32.totalorder %s19, 3
      %p371 = pnand %p369, %p370
      %p372 = pneg %p371
      // Predicated region
      $region65: #{clip_loss_forward.4} parent=5 // pred_check
        _
      $region66: #{clip_loss_forward.4} parent=5 // pred_check_branch
        %374 = sbr.rel (%p371) target = $region68
      $region67: #{clip_loss_forward.4} parent=5 // pred_region
        %s375 = ssub.s32 %s19, 1
        // Predicated region
        $region69: #{clip_loss_forward.4} parent=67 // pred_check
          %p376 = pneg %p40
        $region70: #{clip_loss_forward.4} parent=67 // pred_check_branch
          %378 = sbr.rel (%p376) target = $region72
        $region71: #{clip_loss_forward.4} parent=67 // pred_region
          %379 = dma.done [#allocation3], 16
        $region72: #{clip_loss_forward.4} parent=67 // pred_fallthru
          _
        %380 = sfence
        %p381 = pneg %p40
        %p382 = pneg %p37
        %p383 = scmp.lt.s32.totalorder %s24, 1
        %s384 = scalar_select %p383, %s24, 1
        %s385 = smul.addr %s384, 8
        %s386 = scalar_lea.vmem %s1, %s385
        %p387 = pneg %p66
        %p388 = pneg %p63
        %p389 = pneg %p87
        %p390 = pneg %p84
        %p391 = pneg %p108
        %p392 = pneg %p105
        %p393 = pneg %p129
        %p394 = pneg %p126
        %p395 = pneg %p150
        %p396 = pneg %p147
        %p397 = pneg %p171
        %p398 = pneg %p168
        %p399 = pneg %p192
        %p400 = pneg %p189
        %p401 = pneg %p213
        %p402 = pneg %p210
        %p403 = pneg %p234
        %p404 = pneg %p231
        %p405 = pneg %p255
        %p406 = pneg %p252
        %p407 = pneg %p276
        %p408 = pneg %p273
        %p409 = pneg %p302
        %p410 = pneg %p299
        %p411 = scmp.lt.s32.totalorder %s24, 1
        %s412 = scalar_select %p411, %s24, 1
        %s413 = scalar_lea.vmem %s12, %s412
        %p414 = scmp.lt.s32.totalorder %s24, 1
        %s415 = scalar_select %p414, %s24, 1
        %s416 = smul.addr %s415, 8
        %s417 = scalar_lea.vmem %s1, %s416
        %p418 = scmp.lt.s32.totalorder %s24, 1
        %s419 = scalar_select %p418, %s24, 1
        %s420 = scalar_lea.vmem %s12, %s419
        %v422 = vld [vmem:[%s417] sm:$0xff]
        %vm423 = vcmask 261120
        %v424 = vsel %vm423, %v422, 0.0
        %425 = vadd.xlane.f32.xlu0 %v424
        %v426 = vpop.xlane.xlu0 %425
        %v427 = vrcp.pop 32.0
        %v428 = vmul.f32 %v426, %v427
        %v429 = vsub.f32 %v422, %v428
        %v430 = vmul.f32 %v429, %v429
        %v431 = vsel %vm423, %v430, 0.0
        %432 = vadd.xlane.f32.xlu0 %v431
        %v433 = vpop.xlane.xlu0 %432
        %v434 = vmul.f32 %v433, %v427
        %v435 = vadd.f32 %v434, 1e-05
        %v436 = vrsqrt.pop %v435
        %v437 = vmul.f32 %v429, %v436
        %v438 = vld [vmem:[%s2] sm:$0xff]
        %v439 = vld [vmem:[%s2 + $0x8] sm:$0xff]
        %v440 = vld [vmem:[%s2 + $0x10] sm:$0xff]
        %v441 = vld [vmem:[%s2 + $0x18] sm:$0xff]
        %v442 = vpack.c.bf16 %v437, %v437
        %v443 = vpack.c.bf16 %v439, %v438
        %v444 = vpack.c.bf16 %v441, %v440
        %v445 = vld [vmem:[%s3] sm:$0x1]
        %v447 = vlaneseq
        %v448 = vshrl.u32 %v447, 7
        %v449 = vsub.s32 0, %v448
        %v450 = vrot.slane %v445, %v449
        %v453 = vsel %vm423, %v442, 0
        %455 = vmatprep.subr.bf16.mxu0 0
        %456 = vmatpush1.bf16.msra.mxu0 %v443
        %457 = vmatprep.subr.bf16.mxu0 0
        %458 = vmatpush1.bf16.msra.mxu0 %v444
        %459 = vmatprep.subr.bf16.mxu0 0
        %460 = vmatpush1.bf16.msra.mxu0 0
        %461 = vmatprep.subr.bf16.mxu0 0
        %462 = vmatpush1.bf16.msra.mxu0 0
        %463 = vmatprep.subr.bf16.mxu0 0
        %464 = vmatpush1.bf16.msra.mxu0 0
        %465 = vmatprep.subr.bf16.mxu0 0
        %466 = vmatpush1.bf16.msra.mxu0 0
        %467 = vmatprep.subr.bf16.mxu0 0
        %468 = vmatpush1.bf16.msra.mxu0 0
        %469 = vmatprep.subr.bf16.mxu0 0
        %470 = vmatpush1.bf16.msra.mxu0 0
        %471 = vmatprep.subr.bf16.mxu0 0
        %472 = vmatpush1.bf16.msra.mxu0 0
        %473 = vmatprep.subr.bf16.mxu0 0
        %474 = vmatpush1.bf16.msra.mxu0 0
        %475 = vmatprep.subr.bf16.mxu0 0
        %476 = vmatpush1.bf16.msra.mxu0 0
        %477 = vmatprep.subr.bf16.mxu0 0
        %478 = vmatpush1.bf16.msra.mxu0 0
        %479 = vmatprep.subr.bf16.mxu0 0
        %480 = vmatpush1.bf16.msra.mxu0 0
        %481 = vmatprep.subr.bf16.mxu0 0
        %482 = vmatpush1.bf16.msra.mxu0 0
        %483 = vmatprep.subr.bf16.mxu0 0
        %484 = vmatpush1.bf16.msra.mxu0 0
        %485 = vmatprep.subr.bf16.mxu0 0
        %486 = vmatpush1.bf16.msra.mxu0 0
        %487 = vmatprep.mubr.bf16.mxu0 0
        %488 = vmatmul.mubr.bf16.gmra.mrb[0].mxu0 %v453
        %v489 = vpop.f32.mrb[0].mxu0
        %v490 = vadd.f32 %v450, %v489
        %v491 = vpop.f32.mrb[0].mxu0
        %v492 = vpop.f32.mrb[0].mxu0
        %v493 = vpop.f32.mrb[0].mxu0
        %494 = vdwg.mxu0
        %v495 = vld [vmem:[%s4] sm:$0xff]
        %v496 = vld [vmem:[%s4 + $0x8] sm:$0xff]
        %v497 = vld [vmem:[%s4 + $0x10] sm:$0xff]
        %v498 = vld [vmem:[%s4 + $0x18] sm:$0xff]
        %v499 = vlaneseq
        %v500 = vshrl.u32 %v499, 7
        %v501 = vlaneseq
        %v502 = vand.u32 %v501, 127
        %vm503 = vcmp.le.s32.totalorder %v502, %v500
        %v504 = vpack.c.bf16 %v490, %v490
        %506 = vrot.lane.b32.xlu0 %v504, 96
        %v507 = vpop.permute.xlu0 %506
        %vm508 = vcmask 64512
        %v510 = vsel %vm508, %v504, 0
        %v513 = vsel %vm508, %v507, 0
        %515 = vmatprep.subr.bf16.mxu0 0
        %516 = vmatpush1.bf16.xpose.msra.mxu0 %v513
        %517 = vmatprep.subr.bf16.mxu0 0
        %518 = vmatpush1.bf16.xpose.msra.mxu0 0
        %519 = vmatprep.subr.bf16.mxu0 0
        %520 = vmatpush1.bf16.xpose.msra.mxu0 0
        %521 = vmatprep.subr.bf16.mxu0 0
        %522 = vmatpush1.bf16.xpose.msra.mxu0 0
        %523 = vmatprep.subr.bf16.mxu0 0
        %524 = vmatpush1.bf16.xpose.msra.mxu0 0
        %525 = vmatprep.subr.bf16.mxu0 0
        %526 = vmatpush1.bf16.xpose.msra.mxu0 0
        %527 = vmatprep.subr.bf16.mxu0 0
        %528 = vmatpush1.bf16.xpose.msra.mxu0 0
        %529 = vmatprep.subr.bf16.mxu0 0
        %530 = vmatpush1.bf16.xpose.msra.mxu0 0
        %531 = vmatprep.subr.bf16.mxu0 0
        %532 = vmatpush1.bf16.xpose.msra.mxu0 0
        %533 = vmatprep.subr.bf16.mxu0 0
        %534 = vmatpush1.bf16.xpose.msra.mxu0 0
        %535 = vmatprep.subr.bf16.mxu0 0
        %536 = vmatpush1.bf16.xpose.msra.mxu0 0
        %537 = vmatprep.subr.bf16.mxu0 0
        %538 = vmatpush1.bf16.xpose.msra.mxu0 0
        %539 = vmatprep.subr.bf16.mxu0 0
        %540 = vmatpush1.bf16.xpose.msra.mxu0 0
        %541 = vmatprep.subr.bf16.mxu0 0
        %542 = vmatpush1.bf16.xpose.msra.mxu0 0
        %543 = vmatprep.subr.bf16.mxu0 0
        %544 = vmatpush1.bf16.xpose.msra.mxu0 0
        %545 = vmatprep.subr.bf16.mxu0 0
        %546 = vmatpush1.bf16.xpose.msra.mxu0 0
        %547 = vmatprep.mubr.bf16.mxu0 0
        %548 = vmatmul.mubr.bf16.gmra.mrb[0].mxu0 %v510
        %v549 = vpop.f32.mrb[0].mxu0
        %v550 = vadd.f32 0.0, %v549
        %v551 = vpop.f32.mrb[0].mxu0
        %v552 = vpop.f32.mrb[0].mxu0
        %v553 = vpop.f32.mrb[0].mxu0
        %554 = vdwg.mxu0
        %v555 = vmul.f32 %v550, 0.35355338
        %v556 = vsel %vm503, %v555, -1e+09
        %v557 = vsel %vm508, %v556, -inf
        %558 = vmax.xlane.f32.xlu0 %v557
        %v559 = vpop.xlane.xlu0 %558
        %v560 = vsub.f32 %v556, %v559
        %v561 = vmul.f32 %v560, 1.442695
        %v562 = vpow.pop %v561
        %v563 = vsel %vm508, %v562, 0.0
        %564 = vadd.xlane.f32.xlu0 %v563
        %v565 = vpop.xlane.xlu0 %564
        %v566 = vrcp.pop %v565
        %v567 = vmul.f32 %v562, %v566
        %v568 = vpack.c.bf16 %v567, %v567
        %569 = vrot.lane.b32.xlu0 %v504, 64
        %v570 = vpop.permute.xlu0 %569
        %v572 = vsel %vm508, %v568, 0
        %vm574 = vcmask 1043456
        %v576 = vsel %vm574, %v570, 0
        %578 = vmatprep.subr.bf16.mxu0 0
        %579 = vmatpush1.bf16.msra.mxu0 %v576
        %580 = vmatprep.subr.bf16.mxu0 0
        %581 = vmatpush1.bf16.msra.mxu0 0
        %582 = vmatprep.subr.bf16.mxu0 0
        %583 = vmatpush1.bf16.msra.mxu0 0
        %584 = vmatprep.subr.bf16.mxu0 0
        %585 = vmatpush1.bf16.msra.mxu0 0
        %586 = vmatprep.subr.bf16.mxu0 0
        %587 = vmatpush1.bf16.msra.mxu0 0
        %588 = vmatprep.subr.bf16.mxu0 0
        %589 = vmatpush1.bf16.msra.mxu0 0
        %590 = vmatprep.subr.bf16.mxu0 0
        %591 = vmatpush1.bf16.msra.mxu0 0
        %592 = vmatprep.subr.bf16.mxu0 0
        %593 = vmatpush1.bf16.msra.mxu0 0
        %594 = vmatprep.subr.bf16.mxu0 0
        %595 = vmatpush1.bf16.msra.mxu0 0
        %596 = vmatprep.subr.bf16.mxu0 0
        %597 = vmatpush1.bf16.msra.mxu0 0
        %598 = vmatprep.subr.bf16.mxu0 0
        %599 = vmatpush1.bf16.msra.mxu0 0
        %600 = vmatprep.subr.bf16.mxu0 0
        %601 = vmatpush1.bf16.msra.mxu0 0
        %602 = vmatprep.subr.bf16.mxu0 0
        %603 = vmatpush1.bf16.msra.mxu0 0
        %604 = vmatprep.subr.bf16.mxu0 0
        %605 = vmatpush1.bf16.msra.mxu0 0
        %606 = vmatprep.subr.bf16.mxu0 0
        %607 = vmatpush1.bf16.msra.mxu0 0
        %608 = vmatprep.subr.bf16.mxu0 0
        %609 = vmatpush1.bf16.msra.mxu0 0
        %610 = vmatprep.mubr.bf16.mxu0 0
        %611 = vmatmul.mubr.bf16.gmra.mrb[0].mxu0 %v572
        %v612 = vpop.f32.mrb[0].mxu0
        %v613 = vadd.f32 0.0, %v612
        %v614 = vpop.f32.mrb[0].mxu0
        %v615 = vpop.f32.mrb[0].mxu0
        %v616 = vpop.f32.mrb[0].mxu0
        %617 = vdwg.mxu0
        %v618 = vpack.c.bf16 %v613, %v613
        %v619 = vpack.c.bf16 %v495, %v495
        %620 = vrot.lane.b32.xlu0 %v504, 120
        %v621 = vpop.permute.xlu0 %620
        %622 = vrot.lane.b32.xlu0 %v504, 88
        %v623 = vpop.permute.xlu0 %622
        %v625 = vsel %vm508, %v621, 0
        %v628 = vsel %vm508, %v623, 0
        %630 = vmatprep.subr.bf16.mxu0 0
        %631 = vmatpush1.bf16.xpose.msra.mxu0 %v628
        %632 = vmatprep.subr.bf16.mxu0 0
        %633 = vmatpush1.bf16.xpose.msra.mxu0 0
        %634 = vmatprep.subr.bf16.mxu0 0
        %635 = vmatpush1.bf16.xpose.msra.mxu0 0
        %636 = vmatprep.subr.bf16.mxu0 0
        %637 = vmatpush1.bf16.xpose.msra.mxu0 0
        %638 = vmatprep.subr.bf16.mxu0 0
        %639 = vmatpush1.bf16.xpose.msra.mxu0 0
        %640 = vmatprep.subr.bf16.mxu0 0
        %641 = vmatpush1.bf16.xpose.msra.mxu0 0
        %642 = vmatprep.subr.bf16.mxu0 0
        %643 = vmatpush1.bf16.xpose.msra.mxu0 0
        %644 = vmatprep.subr.bf16.mxu0 0
        %645 = vmatpush1.bf16.xpose.msra.mxu0 0
        %646 = vmatprep.subr.bf16.mxu0 0
        %647 = vmatpush1.bf16.xpose.msra.mxu0 0
        %648 = vmatprep.subr.bf16.mxu0 0
        %649 = vmatpush1.bf16.xpose.msra.mxu0 0
        %650 = vmatprep.subr.bf16.mxu0 0
        %651 = vmatpush1.bf16.xpose.msra.mxu0 0
        %652 = vmatprep.subr.bf16.mxu0 0
        %653 = vmatpush1.bf16.xpose.msra.mxu0 0
        %654 = vmatprep.subr.bf16.mxu0 0
        %655 = vmatpush1.bf16.xpose.msra.mxu0 0
        %656 = vmatprep.subr.bf16.mxu0 0
        %657 = vmatpush1.bf16.xpose.msra.mxu0 0
        %658 = vmatprep.subr.bf16.mxu0 0
        %659 = vmatpush1.bf16.xpose.msra.mxu0 0
        %660 = vmatprep.subr.bf16.mxu0 0
        %661 = vmatpush1.bf16.xpose.msra.mxu0 0
        %662 = vmatprep.mubr.bf16.mxu0 0
        %663 = vmatmul.mubr.bf16.gmra.mrb[0].mxu0 %v625
        %v664 = vpop.f32.mrb[0].mxu0
        %v665 = vadd.f32 0.0, %v664
        %v666 = vpop.f32.mrb[0].mxu0
        %v667 = vpop.f32.mrb[0].mxu0
        %v668 = vpop.f32.mrb[0].mxu0
        %669 = vdwg.mxu0
        %v670 = vmul.f32 %v665, 0.35355338
        %v671 = vsel %vm503, %v670, -1e+09
        %v672 = vsel %vm508, %v671, -inf
        %673 = vmax.xlane.f32.xlu0 %v672
        %v674 = vpop.xlane.xlu0 %673
        %v675 = vsub.f32 %v671, %v674
        %v676 = vmul.f32 %v675, 1.442695
        %v677 = vpow.pop %v676
        %v678 = vsel %vm508, %v677, 0.0
        %679 = vadd.xlane.f32.xlu0 %v678
        %v680 = vpop.xlane.xlu0 %679
        %v681 = vrcp.pop %v680
        %v682 = vmul.f32 %v677, %v681
        %v683 = vpack.c.bf16 %v682, %v682
        %684 = vrot.lane.b32.xlu0 %v504, 56
        %v685 = vpop.permute.xlu0 %684
        %v687 = vsel %vm508, %v683, 0
        %v690 = vsel %vm574, %v685, 0
        %692 = vmatprep.subr.bf16.mxu0 0
        %693 = vmatpush1.bf16.msra.mxu0 %v690
        %694 = vmatprep.subr.bf16.mxu0 0
        %695 = vmatpush1.bf16.msra.mxu0 0
        %696 = vmatprep.subr.bf16.mxu0 0
        %697 = vmatpush1.bf16.msra.mxu0 0
        %698 = vmatprep.subr.bf16.mxu0 0
        %699 = vmatpush1.bf16.msra.mxu0 0
        %700 = vmatprep.subr.bf16.mxu0 0
        %701 = vmatpush1.bf16.msra.mxu0 0
        %702 = vmatprep.subr.bf16.mxu0 0
        %703 = vmatpush1.bf16.msra.mxu0 0
        %704 = vmatprep.subr.bf16.mxu0 0
        %705 = vmatpush1.bf16.msra.mxu0 0
        %706 = vmatprep.subr.bf16.mxu0 0
        %707 = vmatpush1.bf16.msra.mxu0 0
        %708 = vmatprep.subr.bf16.mxu0 0
        %709 = vmatpush1.bf16.msra.mxu0 0
        %710 = vmatprep.subr.bf16.mxu0 0
        %711 = vmatpush1.bf16.msra.mxu0 0
        %712 = vmatprep.subr.bf16.mxu0 0
        %713 = vmatpush1.bf16.msra.mxu0 0
        %714 = vmatprep.subr.bf16.mxu0 0
        %715 = vmatpush1.bf16.msra.mxu0 0
        %716 = vmatprep.subr.bf16.mxu0 0
        %717 = vmatpush1.bf16.msra.mxu0 0
        %718 = vmatprep.subr.bf16.mxu0 0
        %719 = vmatpush1.bf16.msra.mxu0 0
        %720 = vmatprep.subr.bf16.mxu0 0
        %721 = vmatpush1.bf16.msra.mxu0 0
        %722 = vmatprep.subr.bf16.mxu0 0
        %723 = vmatpush1.bf16.msra.mxu0 0
        %724 = vmatprep.mubr.bf16.mxu0 0
        %725 = vmatmul.mubr.bf16.gmra.mrb[0].mxu0 %v687
        %v726 = vpop.f32.mrb[0].mxu0
        %v727 = vadd.f32 0.0, %v726
        %v728 = vpop.f32.mrb[0].mxu0
        %v729 = vpop.f32.mrb[0].mxu0
        %v730 = vpop.f32.mrb[0].mxu0
        %731 = vdwg.mxu0
        %v732 = vpack.c.bf16 %v727, %v727
        %v733 = vpack.c.bf16 %v496, %v496
        %v735 = vsel %vm508, %v732, 0
        %v738 = vsel %vm574, %v733, 0
        %740 = vmatprep.subr.bf16.mxu0 0
        %741 = vmatpush1.bf16.msra.mxu0 %v738
        %742 = vmatprep.subr.bf16.mxu0 0
        %743 = vmatpush1.bf16.msra.mxu0 0
        %744 = vmatprep.subr.bf16.mxu0 0
        %745 = vmatpush1.bf16.msra.mxu0 0
        %746 = vmatprep.subr.bf16.mxu0 0
        %747 = vmatpush1.bf16.msra.mxu0 0
        %748 = vmatprep.subr.bf16.mxu0 0
        %749 = vmatpush1.bf16.msra.mxu0 0
        %750 = vmatprep.subr.bf16.mxu0 0
        %751 = vmatpush1.bf16.msra.mxu0 0
        %752 = vmatprep.subr.bf16.mxu0 0
        %753 = vmatpush1.bf16.msra.mxu0 0
        %754 = vmatprep.subr.bf16.mxu0 0
        %755 = vmatpush1.bf16.msra.mxu0 0
        %756 = vmatprep.subr.bf16.mxu0 0
        %757 = vmatpush1.bf16.msra.mxu0 0
        %758 = vmatprep.subr.bf16.mxu0 0
        %759 = vmatpush1.bf16.msra.mxu0 0
        %760 = vmatprep.subr.bf16.mxu0 0
        %761 = vmatpush1.bf16.msra.mxu0 0
        %762 = vmatprep.subr.bf16.mxu0 0
        %763 = vmatpush1.bf16.msra.mxu0 0
        %764 = vmatprep.subr.bf16.mxu0 0
        %765 = vmatpush1.bf16.msra.mxu0 0
        %766 = vmatprep.subr.bf16.mxu0 0
        %767 = vmatpush1.bf16.msra.mxu0 0
        %768 = vmatprep.subr.bf16.mxu0 0
        %769 = vmatpush1.bf16.msra.mxu0 0
        %770 = vmatprep.subr.bf16.mxu0 0
        %771 = vmatpush1.bf16.msra.mxu0 0
        %772 = vmatprep.mubr.bf16.mxu0 0
        %773 = vmatmul.mubr.bf16.gmra.mrb[0].mxu0 %v735
        %v774 = vpop.f32.mrb[0].mxu0
        %v775 = vadd.f32 0.0, %v774
        %v776 = vpop.f32.mrb[0].mxu0
        %v777 = vpop.f32.mrb[0].mxu0
        %v778 = vpop.f32.mrb[0].mxu0
        %779 = vdwg.mxu0
        %v781 = vsel %vm508, %v618, 0
        %v784 = vsel %vm574, %v619, 0
        %786 = vmatprep.subr.bf16.mxu0 0
        %787 = vmatpush1.bf16.msra.mxu0 %v784
        %788 = vmatprep.subr.bf16.mxu0 0
        %789 = vmatpush1.bf16.msra.mxu0 0
        %790 = vmatprep.subr.bf16.mxu0 0
        %791 = vmatpush1.bf16.msra.mxu0 0
        %792 = vmatprep.subr.bf16.mxu0 0
        %793 = vmatpush1.bf16.msra.mxu0 0
        %794 = vmatprep.subr.bf16.mxu0 0
        %795 = vmatpush1.bf16.msra.mxu0 0
        %796 = vmatprep.subr.bf16.mxu0 0
        %797 = vmatpush1.bf16.msra.mxu0 0
        %798 = vmatprep.subr.bf16.mxu0 0
        %799 = vmatpush1.bf16.msra.mxu0 0
        %800 = vmatprep.subr.bf16.mxu0 0
        %801 = vmatpush1.bf16.msra.mxu0 0
        %802 = vmatprep.subr.bf16.mxu0 0
        %803 = vmatpush1.bf16.msra.mxu0 0
        %804 = vmatprep.subr.bf16.mxu0 0
        %805 = vmatpush1.bf16.msra.mxu0 0
        %806 = vmatprep.subr.bf16.mxu0 0
        %807 = vmatpush1.bf16.msra.mxu0 0
        %808 = vmatprep.subr.bf16.mxu0 0
        %809 = vmatpush1.bf16.msra.mxu0 0
        %810 = vmatprep.subr.bf16.mxu0 0
        %811 = vmatpush1.bf16.msra.mxu0 0
        %812 = vmatprep.subr.bf16.mxu0 0
        %813 = vmatpush1.bf16.msra.mxu0 0
        %814 = vmatprep.subr.bf16.mxu0 0
        %815 = vmatpush1.bf16.msra.mxu0 0
        %816 = vmatprep.subr.bf16.mxu0 0
        %817 = vmatpush1.bf16.msra.mxu0 0
        %818 = vmatprep.mubr.bf16.mxu0 0
        %819 = vmatmul.mubr.bf16.gmra.mrb[0].mxu0 %v781
        %v820 = vpop.f32.mrb[0].mxu0
        %v821 = vadd.f32 %v775, %v820
        %v822 = vpop.f32.mrb[0].mxu0
        %v823 = vpop.f32.mrb[0].mxu0
        %v824 = vpop.f32.mrb[0].mxu0
        %825 = vdwg.mxu0
        %826 = vrot.lane.b32.xlu0 %v504, 112
        %v827 = vpop.permute.xlu0 %826
        %828 = vrot.lane.b32.xlu0 %v504, 80
        %v829 = vpop.permute.xlu0 %828
        %v831 = vsel %vm508, %v827, 0
        %v834 = vsel %vm508, %v829, 0
        %836 = vmatprep.subr.bf16.mxu0 0
        %837 = vmatpush1.bf16.xpose.msra.mxu0 %v834
        %838 = vmatprep.subr.bf16.mxu0 0
        %839 = vmatpush1.bf16.xpose.msra.mxu0 0
        %840 = vmatprep.subr.bf16.mxu0 0
        %841 = vmatpush1.bf16.xpose.msra.mxu0 0
        %842 = vmatprep.subr.bf16.mxu0 0
        %843 = vmatpush1.bf16.xpose.msra.mxu0 0
        %844 = vmatprep.subr.bf16.mxu0 0
        %845 = vmatpush1.bf16.xpose.msra.mxu0 0
        %846 = vmatprep.subr.bf16.mxu0 0
        %847 = vmatpush1.bf16.xpose.msra.mxu0 0
        %848 = vmatprep.subr.bf16.mxu0 0
        %849 = vmatpush1.bf16.xpose.msra.mxu0 0
        %850 = vmatprep.subr.bf16.mxu0 0
        %851 = vmatpush1.bf16.xpose.msra.mxu0 0
        %852 = vmatprep.subr.bf16.mxu0 0
        %853 = vmatpush1.bf16.xpose.msra.mxu0 0
        %854 = vmatprep.subr.bf16.mxu0 0
        %855 = vmatpush1.bf16.xpose.msra.mxu0 0
        %856 = vmatprep.subr.bf16.mxu0 0
        %857 = vmatpush1.bf16.xpose.msra.mxu0 0
        %858 = vmatprep.subr.bf16.mxu0 0
        %859 = vmatpush1.bf16.xpose.msra.mxu0 0
        %860 = vmatprep.subr.bf16.mxu0 0
        %861 = vmatpush1.bf16.xpose.msra.mxu0 0
        %862 = vmatprep.subr.bf16.mxu0 0
        %863 = vmatpush1.bf16.xpose.msra.mxu0 0
        %864 = vmatprep.subr.bf16.mxu0 0
        %865 = vmatpush1.bf16.xpose.msra.mxu0 0
        %866 = vmatprep.subr.bf16.mxu0 0
        %867 = vmatpush1.bf16.xpose.msra.mxu0 0
        %868 = vmatprep.mubr.bf16.mxu0 0
        %869 = vmatmul.mubr.bf16.gmra.mrb[0].mxu0 %v831
        %v870 = vpop.f32.mrb[0].mxu0
        %v871 = vadd.f32 0.0, %v870
        %v872 = vpop.f32.mrb[0].mxu0
        %v873 = vpop.f32.mrb[0].mxu0
        %v874 = vpop.f32.mrb[0].mxu0
        %875 = vdwg.mxu0
        %v876 = vmul.f32 %v871, 0.35355338
        %v877 = vsel %vm503, %v876, -1e+09
        %v878 = vsel %vm508, %v877, -inf
        %879 = vmax.xlane.f32.xlu0 %v878
        %v880 = vpop.xlane.xlu0 %879
        %v881 = vsub.f32 %v877, %v880
        %v882 = vmul.f32 %v881, 1.442695
        %v883 = vpow.pop %v882
        %v884 = vsel %vm508, %v883, 0.0
        %885 = vadd.xlane.f32.xlu0 %v884
        %v886 = vpop.xlane.xlu0 %885
        %v887 = vrcp.pop %v886
        %v888 = vmul.f32 %v883, %v887
        %v889 = vpack.c.bf16 %v888, %v888
        %890 = vrot.lane.b32.xlu0 %v504, 48
        %v891 = vpop.permute.xlu0 %890
        %v893 = vsel %vm508, %v889, 0
        %v896 = vsel %vm574, %v891, 0
        %898 = vmatprep.subr.bf16.mxu0 0
        %899 = vmatpush1.bf16.msra.mxu0 %v896
        %900 = vmatprep.subr.bf16.mxu0 0
        %901 = vmatpush1.bf16.msra.mxu0 0
        %902 = vmatprep.subr.bf16.mxu0 0
        %903 = vmatpush1.bf16.msra.mxu0 0
        %904 = vmatprep.subr.bf16.mxu0 0
        %905 = vmatpush1.bf16.msra.mxu0 0
        %906 = vmatprep.subr.bf16.mxu0 0
        %907 = vmatpush1.bf16.msra.mxu0 0
        %908 = vmatprep.subr.bf16.mxu0 0
        %909 = vmatpush1.bf16.msra.mxu0 0
        %910 = vmatprep.subr.bf16.mxu0 0
        %911 = vmatpush1.bf16.msra.mxu0 0
        %912 = vmatprep.subr.bf16.mxu0 0
        %913 = vmatpush1.bf16.msra.mxu0 0
        %914 = vmatprep.subr.bf16.mxu0 0
        %915 = vmatpush1.bf16.msra.mxu0 0
        %916 = vmatprep.subr.bf16.mxu0 0
        %917 = vmatpush1.bf16.msra.mxu0 0
        %918 = vmatprep.subr.bf16.mxu0 0
        %919 = vmatpush1.bf16.msra.mxu0 0
        %920 = vmatprep.subr.bf16.mxu0 0
        %921 = vmatpush1.bf16.msra.mxu0 0
        %922 = vmatprep.subr.bf16.mxu0 0
        %923 = vmatpush1.bf16.msra.mxu0 0
        %924 = vmatprep.subr.bf16.mxu0 0
        %925 = vmatpush1.bf16.msra.mxu0 0
        %926 = vmatprep.subr.bf16.mxu0 0
        %927 = vmatpush1.bf16.msra.mxu0 0
        %928 = vmatprep.subr.bf16.mxu0 0
        %929 = vmatpush1.bf16.msra.mxu0 0
        %930 = vmatprep.mubr.bf16.mxu0 0
        %931 = vmatmul.mubr.bf16.gmra.mrb[0].mxu0 %v893
        %v932 = vpop.f32.mrb[0].mxu0
        %v933 = vadd.f32 0.0, %v932
        %v934 = vpop.f32.mrb[0].mxu0
        %v935 = vpop.f32.mrb[0].mxu0
        %v936 = vpop.f32.mrb[0].mxu0
        %937 = vdwg.mxu0
        %v938 = vpack.c.bf16 %v933, %v933
        %v939 = vpack.c.bf16 %v497, %v497
        %v941 = vsel %vm508, %v938, 0
        %v944 = vsel %vm574, %v939, 0
        %946 = vmatprep.subr.bf16.mxu0 0
        %947 = vmatpush1.bf16.msra.mxu0 %v944
        %948 = vmatprep.subr.bf16.mxu0 0
        %949 = vmatpush1.bf16.msra.mxu0 0
        %950 = vmatprep.subr.bf16.mxu0 0
        %951 = vmatpush1.bf16.msra.mxu0 0
        %952 = vmatprep.subr.bf16.mxu0 0
        %953 = vmatpush1.bf16.msra.mxu0 0
        %954 = vmatprep.subr.bf16.mxu0 0
        %955 = vmatpush1.bf16.msra.mxu0 0
        %956 = vmatprep.subr.bf16.mxu0 0
        %957 = vmatpush1.bf16.msra.mxu0 0
        %958 = vmatprep.subr.bf16.mxu0 0
        %959 = vmatpush1.bf16.msra.mxu0 0
        %960 = vmatprep.subr.bf16.mxu0 0
        %961 = vmatpush1.bf16.msra.mxu0 0
        %962 = vmatprep.subr.bf16.mxu0 0
        %963 = vmatpush1.bf16.msra.mxu0 0
        %964 = vmatprep.subr.bf16.mxu0 0
        %965 = vmatpush1.bf16.msra.mxu0 0
        %966 = vmatprep.subr.bf16.mxu0 0
        %967 = vmatpush1.bf16.msra.mxu0 0
        %968 = vmatprep.subr.bf16.mxu0 0
        %969 = vmatpush1.bf16.msra.mxu0 0
        %970 = vmatprep.subr.bf16.mxu0 0
        %971 = vmatpush1.bf16.msra.mxu0 0
        %972 = vmatprep.subr.bf16.mxu0 0
        %973 = vmatpush1.bf16.msra.mxu0 0
        %974 = vmatprep.subr.bf16.mxu0 0
        %975 = vmatpush1.bf16.msra.mxu0 0
        %976 = vmatprep.subr.bf16.mxu0 0
        %977 = vmatpush1.bf16.msra.mxu0 0
        %978 = vmatprep.mubr.bf16.mxu0 0
        %979 = vmatmul.mubr.bf16.gmra.mrb[0].mxu0 %v941
        %v980 = vpop.f32.mrb[0].mxu0
        %v981 = vadd.f32 0.0, %v980
        %v982 = vpop.f32.mrb[0].mxu0
        %v983 = vpop.f32.mrb[0].mxu0
        %v984 = vpop.f32.mrb[0].mxu0
        %985 = vdwg.mxu0
        %v986 = vadd.f32 %v821, %v981
        %987 = vrot.lane.b32.xlu0 %v504, 104
        %v988 = vpop.permute.xlu0 %987
        %989 = vrot.lane.b32.xlu0 %v504, 72
        %v990 = vpop.permute.xlu0 %989
        %v992 = vsel %vm508, %v988, 0
        %v995 = vsel %vm508, %v990, 0
        %997 = vmatprep.subr.bf16.mxu0 0
        %998 = vmatpush1.bf16.xpose.msra.mxu0 %v995
        %999 = vmatprep.subr.bf16.mxu0 0
        %1000 = vmatpush1.bf16.xpose.msra.mxu0 0
        %1001 = vmatprep.subr.bf16.mxu0 0
        %1002 = vmatpush1.bf16.xpose.msra.mxu0 0
        %1003 = vmatprep.subr.bf16.mxu0 0
        %1004 = vmatpush1.bf16.xpose.msra.mxu0 0
        %1005 = vmatprep.subr.bf16.mxu0 0
        %1006 = vmatpush1.bf16.xpose.msra.mxu0 0
        %1007 = vmatprep.subr.bf16.mxu0 0
        %1008 = vmatpush1.bf16.xpose.msra.mxu0 0
        %1009 = vmatprep.subr.bf16.mxu0 0
        %1010 = vmatpush1.bf16.xpose.msra.mxu0 0
        %1011 = vmatprep.subr.bf16.mxu0 0
        %1012 = vmatpush1.bf16.xpose.msra.mxu0 0
        %1013 = vmatprep.subr.bf16.mxu0 0
        %1014 = vmatpush1.bf16.xpose.msra.mxu0 0
        %1015 = vmatprep.subr.bf16.mxu0 0
        %1016 = vmatpush1.bf16.xpose.msra.mxu0 0
        %1017 = vmatprep.subr.bf16.mxu0 0
        %1018 = vmatpush1.bf16.xpose.msra.mxu0 0
        %1019 = vmatprep.subr.bf16.mxu0 0
        %1020 = vmatpush1.bf16.xpose.msra.mxu0 0
        %1021 = vmatprep.subr.bf16.mxu0 0
        %1022 = vmatpush1.bf16.xpose.msra.mxu0 0
        %1023 = vmatprep.subr.bf16.mxu0 0
        %1024 = vmatpush1.bf16.xpose.msra.mxu0 0
        %1025 = vmatprep.subr.bf16.mxu0 0
        %1026 = vmatpush1.bf16.xpose.msra.mxu0 0
        %1027 = vmatprep.subr.bf16.mxu0 0
        %1028 = vmatpush1.bf16.xpose.msra.mxu0 0
        %1029 = vmatprep.mubr.bf16.mxu0 0
        %1030 = vmatmul.mubr.bf16.gmra.mrb[0].mxu0 %v992
        %v1031 = vpop.f32.mrb[0].mxu0
        %v1032 = vadd.f32 0.0, %v1031
        %v1033 = vpop.f32.mrb[0].mxu0
        %v1034 = vpop.f32.mrb[0].mxu0
        %v1035 = vpop.f32.mrb[0].mxu0
        %1036 = vdwg.mxu0
        %v1037 = vmul.f32 %v1032, 0.35355338
        %v1038 = vsel %vm503, %v1037, -1e+09
        %v1039 = vsel %vm508, %v1038, -inf
        %1040 = vmax.xlane.f32.xlu0 %v1039
        %v1041 = vpop.xlane.xlu0 %1040
        %v1042 = vsub.f32 %v1038, %v1041
        %v1043 = vmul.f32 %v1042, 1.442695
        %v1044 = vpow.pop %v1043
        %v1045 = vsel %vm508, %v1044, 0.0
        %1046 = vadd.xlane.f32.xlu0 %v1045
        %v1047 = vpop.xlane.xlu0 %1046
        %v1048 = vrcp.pop %v1047
        %v1049 = vmul.f32 %v1044, %v1048
        %v1050 = vpack.c.bf16 %v1049, %v1049
        %1051 = vrot.lane.b32.xlu0 %v504, 40
        %v1052 = vpop.permute.xlu0 %1051
        %v1054 = vsel %vm508, %v1050, 0
        %v1057 = vsel %vm574, %v1052, 0
        %1059 = vmatprep.subr.bf16.mxu0 0
        %1060 = vmatpush1.bf16.msra.mxu0 %v1057
        %1061 = vmatprep.subr.bf16.mxu0 0
        %1062 = vmatpush1.bf16.msra.mxu0 0
        %1063 = vmatprep.subr.bf16.mxu0 0
        %1064 = vmatpush1.bf16.msra.mxu0 0
        %1065 = vmatprep.subr.bf16.mxu0 0
        %1066 = vmatpush1.bf16.msra.mxu0 0
        %1067 = vmatprep.subr.bf16.mxu0 0
        %1068 = vmatpush1.bf16.msra.mxu0 0
        %1069 = vmatprep.subr.bf16.mxu0 0
        %1070 = vmatpush1.bf16.msra.mxu0 0
        %1071 = vmatprep.subr.bf16.mxu0 0
        %1072 = vmatpush1.bf16.msra.mxu0 0
        %1073 = vmatprep.subr.bf16.mxu0 0
        %1074 = vmatpush1.bf16.msra.mxu0 0
        %1075 = vmatprep.subr.bf16.mxu0 0
        %1076 = vmatpush1.bf16.msra.mxu0 0
        %1077 = vmatprep.subr.bf16.mxu0 0
        %1078 = vmatpush1.bf16.msra.mxu0 0
        %1079 = vmatprep.subr.bf16.mxu0 0
        %1080 = vmatpush1.bf16.msra.mxu0 0
        %1081 = vmatprep.subr.bf16.mxu0 0
        %1082 = vmatpush1.bf16.msra.mxu0 0
        %1083 = vmatprep.subr.bf16.mxu0 0
        %1084 = vmatpush1.bf16.msra.mxu0 0
        %1085 = vmatprep.subr.bf16.mxu0 0
        %1086 = vmatpush1.bf16.msra.mxu0 0
        %1087 = vmatprep.subr.bf16.mxu0 0
        %1088 = vmatpush1.bf16.msra.mxu0 0
        %1089 = vmatprep.subr.bf16.mxu0 0
        %1090 = vmatpush1.bf16.msra.mxu0 0
        %1091 = vmatprep.mubr.bf16.mxu0 0
        %1092 = vmatmul.mubr.bf16.gmra.mrb[0].mxu0 %v1054
        %v1093 = vpop.f32.mrb[0].mxu0
        %v1094 = vadd.f32 0.0, %v1093
        %v1095 = vpop.f32.mrb[0].mxu0
        %v1096 = vpop.f32.mrb[0].mxu0
        %v1097 = vpop.f32.mrb[0].mxu0
        %1098 = vdwg.mxu0
        %v1099 = vpack.c.bf16 %v1094, %v1094
        %v1100 = vpack.c.bf16 %v498, %v498
        %v1102 = vsel %vm508, %v1099, 0
        %v1105 = vsel %vm574, %v1100, 0
        %1107 = vmatprep.subr.bf16.mxu0 0
        %1108 = vmatpush1.bf16.msra.mxu0 %v1105
        %1109 = vmatprep.subr.bf16.mxu0 0
        %1110 = vmatpush1.bf16.msra.mxu0 0
        %1111 = vmatprep.subr.bf16.mxu0 0
        %1112 = vmatpush1.bf16.msra.mxu0 0
        %1113 = vmatprep.subr.bf16.mxu0 0
        %1114 = vmatpush1.bf16.msra.mxu0 0
        %1115 = vmatprep.subr.bf16.mxu0 0
        %1116 = vmatpush1.bf16.msra.mxu0 0
        %1117 = vmatprep.subr.bf16.mxu0 0
        %1118 = vmatpush1.bf16.msra.mxu0 0
        %1119 = vmatprep.subr.bf16.mxu0 0
        %1120 = vmatpush1.bf16.msra.mxu0 0
        %1121 = vmatprep.subr.bf16.mxu0 0
        %1122 = vmatpush1.bf16.msra.mxu0 0
        %1123 = vmatprep.subr.bf16.mxu0 0
        %1124 = vmatpush1.bf16.msra.mxu0 0
        %1125 = vmatprep.subr.bf16.mxu0 0
        %1126 = vmatpush1.bf16.msra.mxu0 0
        %1127 = vmatprep.subr.bf16.mxu0 0
        %1128 = vmatpush1.bf16.msra.mxu0 0
        %1129 = vmatprep.subr.bf16.mxu0 0
        %1130 = vmatpush1.bf16.msra.mxu0 0
        %1131 = vmatprep.subr.bf16.mxu0 0
        %1132 = vmatpush1.bf16.msra.mxu0 0
        %1133 = vmatprep.subr.bf16.mxu0 0
        %1134 = vmatpush1.bf16.msra.mxu0 0
        %1135 = vmatprep.subr.bf16.mxu0 0
        %1136 = vmatpush1.bf16.msra.mxu0 0
        %1137 = vmatprep.subr.bf16.mxu0 0
        %1138 = vmatpush1.bf16.msra.mxu0 0
        %1139 = vmatprep.mubr.bf16.mxu0 0
        %1140 = vmatmul.mubr.bf16.gmra.mrb[0].mxu0 %v1102
        %v1141 = vpop.f32.mrb[0].mxu0
        %v1142 = vadd.f32 0.0, %v1141
        %v1143 = vpop.f32.mrb[0].mxu0
        %v1144 = vpop.f32.mrb[0].mxu0
        %v1145 = vpop.f32.mrb[0].mxu0
        %1146 = vdwg.mxu0
        %v1147 = vadd.f32 %v986, %v1142
        %v1148 = vadd.f32 %v422, %v1147
        %v1149 = vld [vmem:[%s5] sm:$0x1]
        %v1151 = vlaneseq
        %v1152 = vshrl.u32 %v1151, 7
        %v1153 = vsub.s32 0, %v1152
        %v1154 = vrot.slane %v1149, %v1153
        %v1156 = vadd.f32 %v1148, %v1154
        %v1157 = vsel %vm423, %v1156, 0.0
        %1158 = vadd.xlane.f32.xlu0 %v1157
        %v1159 = vpop.xlane.xlu0 %1158
        %v1160 = vmul.f32 %v1159, %v427
        %v1161 = vsub.f32 %v1156, %v1160
        %v1162 = vmul.f32 %v1161, %v1161
        %v1163 = vsel %vm423, %v1162, 0.0
        %1164 = vadd.xlane.f32.xlu0 %v1163
        %v1165 = vpop.xlane.xlu0 %1164
        %v1166 = vmul.f32 %v1165, %v427
        %v1167 = vadd.f32 %v1166, 1e-05
        %v1168 = vrsqrt.pop %v1167
        %v1169 = vmul.f32 %v1161, %v1168
        %v1170 = vld [vmem:[%s6] sm:$0xff]
        %v1171 = vld [vmem:[%s6 + $0x8] sm:$0xff]
        %v1172 = vld [vmem:[%s6 + $0x10] sm:$0xff]
        %v1173 = vld [vmem:[%s6 + $0x18] sm:$0xff]
        %v1174 = vpack.c.bf16 %v1169, %v1169
        %v1175 = vpack.c.bf16 %v1171, %v1170
        %v1176 = vpack.c.bf16 %v1173, %v1172
        %v1177 = vld [vmem:[%s7] sm:$0x1]
        %v1179 = vlaneseq
        %v1180 = vshrl.u32 %v1179, 7
        %v1181 = vsub.s32 0, %v1180
        %v1182 = vrot.slane %v1177, %v1181
        %v1185 = vsel %vm423, %v1174, 0
        %1187 = vmatprep.subr.bf16.mxu0 0
        %1188 = vmatpush1.bf16.msra.mxu0 %v1175
        %1189 = vmatprep.subr.bf16.mxu0 0
        %1190 = vmatpush1.bf16.msra.mxu0 %v1176
        %1191 = vmatprep.subr.bf16.mxu0 0
        %1192 = vmatpush1.bf16.msra.mxu0 0
        %1193 = vmatprep.subr.bf16.mxu0 0
        %1194 = vmatpush1.bf16.msra.mxu0 0
        %1195 = vmatprep.subr.bf16.mxu0 0
        %1196 = vmatpush1.bf16.msra.mxu0 0
        %1197 = vmatprep.subr.bf16.mxu0 0
        %1198 = vmatpush1.bf16.msra.mxu0 0
        %1199 = vmatprep.subr.bf16.mxu0 0
        %1200 = vmatpush1.bf16.msra.mxu0 0
        %1201 = vmatprep.subr.bf16.mxu0 0
        %1202 = vmatpush1.bf16.msra.mxu0 0
        %1203 = vmatprep.subr.bf16.mxu0 0
        %1204 = vmatpush1.bf16.msra.mxu0 0
        %1205 = vmatprep.subr.bf16.mxu0 0
        %1206 = vmatpush1.bf16.msra.mxu0 0
        %1207 = vmatprep.subr.bf16.mxu0 0
        %1208 = vmatpush1.bf16.msra.mxu0 0
        %1209 = vmatprep.subr.bf16.mxu0 0
        %1210 = vmatpush1.bf16.msra.mxu0 0
        %1211 = vmatprep.subr.bf16.mxu0 0
        %1212 = vmatpush1.bf16.msra.mxu0 0
        %1213 = vmatprep.subr.bf16.mxu0 0
        %1214 = vmatpush1.bf16.msra.mxu0 0
        %1215 = vmatprep.subr.bf16.mxu0 0
        %1216 = vmatpush1.bf16.msra.mxu0 0
        %1217 = vmatprep.subr.bf16.mxu0 0
        %1218 = vmatpush1.bf16.msra.mxu0 0
        %1219 = vmatprep.mubr.bf16.mxu0 0
        %1220 = vmatmul.mubr.bf16.gmra.mrb[0].mxu0 %v1185
        %v1221 = vpop.f32.mrb[0].mxu0
        %v1222 = vadd.f32 %v1182, %v1221
        %v1223 = vpop.f32.mrb[0].mxu0
        %v1224 = vpop.f32.mrb[0].mxu0
        %v1225 = vpop.f32.mrb[0].mxu0
        %1226 = vdwg.mxu0
        %v1227 = vmul.f32 %v1222, 1.702
        %v1228 = vxor.u32 %v1227, 2147483648
        %v1229 = vmul.f32 %v1228, 1.442695
        %v1230 = vpow.pop %v1229
        %v1231 = vadd.f32 %v1230, 1.0
        %v1232 = vrcp.pop %v1231
        %v1233 = vmul.f32 1.0, %v1232
        %v1234 = vmul.f32 %v1222, %v1233
        %v1235 = vld [vmem:[%s8] sm:$0xff]
        %v1236 = vld [vmem:[%s8 + $0x8] sm:$0xff]
        %v1237 = vld [vmem:[%s8 + $0x10] sm:$0xff]
        %v1238 = vld [vmem:[%s8 + $0x18] sm:$0xff]
        %v1239 = vld [vmem:[%s8 + $0x20] sm:$0xff]
        %v1240 = vld [vmem:[%s8 + $0x28] sm:$0xff]
        %v1241 = vld [vmem:[%s8 + $0x30] sm:$0xff]
        %v1242 = vld [vmem:[%s8 + $0x38] sm:$0xff]
        %v1243 = vld [vmem:[%s8 + $0x40] sm:$0xff]
        %v1244 = vld [vmem:[%s8 + $0x48] sm:$0xff]
        %v1245 = vld [vmem:[%s8 + $0x50] sm:$0xff]
        %v1246 = vld [vmem:[%s8 + $0x58] sm:$0xff]
        %v1247 = vld [vmem:[%s8 + $0x60] sm:$0xff]
        %v1248 = vld [vmem:[%s8 + $0x68] sm:$0xff]
        %v1249 = vld [vmem:[%s8 + $0x70] sm:$0xff]
        %v1250 = vld [vmem:[%s8 + $0x78] sm:$0xff]
        %v1251 = vpack.c.bf16 %v1234, %v1234
        %v1252 = vpack.c.bf16 %v1236, %v1235
        %v1253 = vpack.c.bf16 %v1238, %v1237
        %v1254 = vpack.c.bf16 %v1240, %v1239
        %v1255 = vpack.c.bf16 %v1242, %v1241
        %v1256 = vpack.c.bf16 %v1244, %v1243
        %v1257 = vpack.c.bf16 %v1246, %v1245
        %v1258 = vpack.c.bf16 %v1248, %v1247
        %v1259 = vpack.c.bf16 %v1250, %v1249
        %1260 = vmatprep.subr.bf16.mxu0 0
        %1261 = vmatpush1.bf16.msra.mxu0 %v1252
        %1262 = vmatprep.subr.bf16.mxu0 0
        %1263 = vmatpush1.bf16.msra.mxu0 %v1253
        %1264 = vmatprep.subr.bf16.mxu0 0
        %1265 = vmatpush1.bf16.msra.mxu0 %v1254
        %1266 = vmatprep.subr.bf16.mxu0 0
        %1267 = vmatpush1.bf16.msra.mxu0 %v1255
        %1268 = vmatprep.subr.bf16.mxu0 0
        %1269 = vmatpush1.bf16.msra.mxu0 %v1256
        %1270 = vmatprep.subr.bf16.mxu0 0
        %1271 = vmatpush1.bf16.msra.mxu0 %v1257
        %1272 = vmatprep.subr.bf16.mxu0 0
        %1273 = vmatpush1.bf16.msra.mxu0 %v1258
        %1274 = vmatprep.subr.bf16.mxu0 0
        %1275 = vmatpush1.bf16.msra.mxu0 %v1259
        %1276 = vmatprep.subr.bf16.mxu0 0
        %1277 = vmatpush1.bf16.msra.mxu0 0
        %1278 = vmatprep.subr.bf16.mxu0 0
        %1279 = vmatpush1.bf16.msra.mxu0 0
        %1280 = vmatprep.subr.bf16.mxu0 0
        %1281 = vmatpush1.bf16.msra.mxu0 0
        %1282 = vmatprep.subr.bf16.mxu0 0
        %1283 = vmatpush1.bf16.msra.mxu0 0
        %1284 = vmatprep.subr.bf16.mxu0 0
        %1285 = vmatpush1.bf16.msra.mxu0 0
        %1286 = vmatprep.subr.bf16.mxu0 0
        %1287 = vmatpush1.bf16.msra.mxu0 0
        %1288 = vmatprep.subr.bf16.mxu0 0
        %1289 = vmatpush1.bf16.msra.mxu0 0
        %1290 = vmatprep.subr.bf16.mxu0 0
        %1291 = vmatpush1.bf16.msra.mxu0 0
        %1292 = vmatprep.mubr.bf16.mxu0 0
        %1293 = vmatmul.mubr.bf16.gmra.mrb[0].mxu0 %v1251
        %v1294 = vpop.f32.mrb[0].mxu0
        %v1295 = vadd.f32 0.0, %v1294
        %v1296 = vpop.f32.mrb[0].mxu0
        %v1297 = vpop.f32.mrb[0].mxu0
        %v1298 = vpop.f32.mrb[0].mxu0
        %1299 = vdwg.mxu0
        %v1300 = vadd.f32 %v1156, %v1295
        %v1301 = vld [vmem:[%s9] sm:$0x1]
        %v1303 = vlaneseq
        %v1304 = vshrl.u32 %v1303, 7
        %v1305 = vsub.s32 0, %v1304
        %v1306 = vrot.slane %v1301, %v1305
        %v1308 = vadd.f32 %v1300, %v1306
        %v1309 = vsel %vm423, %v1308, 0.0
        %1310 = vadd.xlane.f32.xlu0 %v1309
        %v1311 = vpop.xlane.xlu0 %1310
        %v1312 = vmul.f32 %v1311, %v427
        %v1313 = vsub.f32 %v1308, %v1312
        %v1314 = vmul.f32 %v1313, %v1313
        %v1315 = vsel %vm423, %v1314, 0.0
        %1316 = vadd.xlane.f32.xlu0 %v1315
        %v1317 = vpop.xlane.xlu0 %1316
        %v1318 = vmul.f32 %v1317, %v427
        %v1319 = vadd.f32 %v1318, 1e-05
        %v1320 = vrsqrt.pop %v1319
        %v1321 = vmul.f32 %v1313, %v1320
        %s1322 = scalar_lea.vmem %s2, 32
        %v1323 = vld [vmem:[%s1322] sm:$0xff]
        %v1324 = vld [vmem:[%s1322 + $0x8] sm:$0xff]
        %v1325 = vld [vmem:[%s1322 + $0x10] sm:$0xff]
        %v1326 = vld [vmem:[%s1322 + $0x18] sm:$0xff]
        %v1327 = vpack.c.bf16 %v1321, %v1321
        %v1328 = vpack.c.bf16 %v1324, %v1323
        %v1329 = vpack.c.bf16 %v1326, %v1325
        %s1330 = scalar_lea.vmem %s3, 1
        %v1331 = vld [vmem:[%s1330] sm:$0x1]
        %v1333 = vlaneseq
        %v1334 = vshrl.u32 %v1333, 7
        %v1335 = vsub.s32 0, %v1334
        %v1336 = vrot.slane %v1331, %v1335
        %v1339 = vsel %vm423, %v1327, 0
        %1341 = vmatprep.subr.bf16.mxu0 0
        %1342 = vmatpush1.bf16.msra.mxu0 %v1328
        %1343 = vmatprep.subr.bf16.mxu0 0
        %1344 = vmatpush1.bf16.msra.mxu0 %v1329
        %1345 = vmatprep.subr.bf16.mxu0 0
        %1346 = vmatpush1.bf16.msra.mxu0 0
        %1347 = vmatprep.subr.bf16.mxu0 0
        %1348 = vmatpush1.bf16.msra.mxu0 0
        %1349 = vmatprep.subr.bf16.mxu0 0
        %1350 = vmatpush1.bf16.msra.mxu0 0
        %1351 = vmatprep.subr.bf16.mxu0 0
        %1352 = vmatpush1.bf16.msra.mxu0 0
        %1353 = vmatprep.subr.bf16.mxu0 0
        %1354 = vmatpush1.bf16.msra.mxu0 0
        %1355 = vmatprep.subr.bf16.mxu0 0
        %1356 = vmatpush1.bf16.msra.mxu0 0
        %1357 = vmatprep.subr.bf16.mxu0 0
        %1358 = vmatpush1.bf16.msra.mxu0 0
        %1359 = vmatprep.subr.bf16.mxu0 0
        %1360 = vmatpush1.bf16.msra.mxu0 0
        %1361 = vmatprep.subr.bf16.mxu0 0
        %1362 = vmatpush1.bf16.msra.mxu0 0
        %1363 = vmatprep.subr.bf16.mxu0 0
        %1364 = vmatpush1.bf16.msra.mxu0 0
        %1365 = vmatprep.subr.bf16.mxu0 0
        %1366 = vmatpush1.bf16.msra.mxu0 0
        %1367 = vmatprep.subr.bf16.mxu0 0
        %1368 = vmatpush1.bf16.msra.mxu0 0
        %1369 = vmatprep.subr.bf16.mxu0 0
        %1370 = vmatpush1.bf16.msra.mxu0 0
        %1371 = vmatprep.subr.bf16.mxu0 0
        %1372 = vmatpush1.bf16.msra.mxu0 0
        %1373 = vmatprep.mubr.bf16.mxu0 0
        %1374 = vmatmul.mubr.bf16.gmra.mrb[0].mxu0 %v1339
        %v1375 = vpop.f32.mrb[0].mxu0
        %v1376 = vadd.f32 %v1336, %v1375
        %v1377 = vpop.f32.mrb[0].mxu0
        %v1378 = vpop.f32.mrb[0].mxu0
        %v1379 = vpop.f32.mrb[0].mxu0
        %1380 = vdwg.mxu0
        %s1381 = scalar_lea.vmem %s4, 32
        %v1382 = vld [vmem:[%s1381] sm:$0xff]
        %v1383 = vld [vmem:[%s1381 + $0x8] sm:$0xff]
        %v1384 = vld [vmem:[%s1381 + $0x10] sm:$0xff]
        %v1385 = vld [vmem:[%s1381 + $0x18] sm:$0xff]
        %v1386 = vpack.c.bf16 %v1376, %v1376
        %1388 = vrot.lane.b32.xlu0 %v1386, 96
        %v1389 = vpop.permute.xlu0 %1388
        %v1391 = vsel %vm508, %v1386, 0
        %v1394 = vsel %vm508, %v1389, 0
        %1396 = vmatprep.subr.bf16.mxu0 0
        %1397 = vmatpush1.bf16.xpose.msra.mxu0 %v1394
        %1398 = vmatprep.subr.bf16.mxu0 0
        %1399 = vmatpush1.bf16.xpose.msra.mxu0 0
        %1400 = vmatprep.subr.bf16.mxu0 0
        %1401 = vmatpush1.bf16.xpose.msra.mxu0 0
        %1402 = vmatprep.subr.bf16.mxu0 0
        %1403 = vmatpush1.bf16.xpose.msra.mxu0 0
        %1404 = vmatprep.subr.bf16.mxu0 0
        %1405 = vmatpush1.bf16.xpose.msra.mxu0 0
        %1406 = vmatprep.subr.bf16.mxu0 0
        %1407 = vmatpush1.bf16.xpose.msra.mxu0 0
        %1408 = vmatprep.subr.bf16.mxu0 0
        %1409 = vmatpush1.bf16.xpose.msra.mxu0 0
        %1410 = vmatprep.subr.bf16.mxu0 0
        %1411 = vmatpush1.bf16.xpose.msra.mxu0 0
        %1412 = vmatprep.subr.bf16.mxu0 0
        %1413 = vmatpush1.bf16.xpose.msra.mxu0 0
        %1414 = vmatprep.subr.bf16.mxu0 0
        %1415 = vmatpush1.bf16.xpose.msra.mxu0 0
        %1416 = vmatprep.subr.bf16.mxu0 0
        %1417 = vmatpush1.bf16.xpose.msra.mxu0 0
        %1418 = vmatprep.subr.bf16.mxu0 0
        %1419 = vmatpush1.bf16.xpose.msra.mxu0 0
        %1420 = vmatprep.subr.bf16.mxu0 0
        %1421 = vmatpush1.bf16.xpose.msra.mxu0 0
        %1422 = vmatprep.subr.bf16.mxu0 0
        %1423 = vmatpush1.bf16.xpose.msra.mxu0 0
        %1424 = vmatprep.subr.bf16.mxu0 0
        %1425 = vmatpush1.bf16.xpose.msra.mxu0 0
        %1426 = vmatprep.subr.bf16.mxu0 0
        %1427 = vmatpush1.bf16.xpose.msra.mxu0 0
        %1428 = vmatprep.mubr.bf16.mxu0 0
        %1429 = vmatmul.mubr.bf16.gmra.mrb[0].mxu0 %v1391
        %v1430 = vpop.f32.mrb[0].mxu0
        %v1431 = vadd.f32 0.0, %v1430
        %v1432 = vpop.f32.mrb[0].mxu0
        %v1433 = vpop.f32.mrb[0].mxu0
        %v1434 = vpop.f32.mrb[0].mxu0
        %1435 = vdwg.mxu0
        %v1436 = vmul.f32 %v1431, 0.35355338
        %v1437 = vsel %vm503, %v1436, -1e+09
        %v1438 = vsel %vm508, %v1437, -inf
        %1439 = vmax.xlane.f32.xlu0 %v1438
        %v1440 = vpop.xlane.xlu0 %1439
        %v1441 = vsub.f32 %v1437, %v1440
        %v1442 = vmul.f32 %v1441, 1.442695
        %v1443 = vpow.pop %v1442
        %v1444 = vsel %vm508, %v1443, 0.0
        %1445 = vadd.xlane.f32.xlu0 %v1444
        %v1446 = vpop.xlane.xlu0 %1445
        %v1447 = vrcp.pop %v1446
        %v1448 = vmul.f32 %v1443, %v1447
        %v1449 = vpack.c.bf16 %v1448, %v1448
        %1450 = vrot.lane.b32.xlu0 %v1386, 64
        %v1451 = vpop.permute.xlu0 %1450
        %v1453 = vsel %vm508, %v1449, 0
        %v1456 = vsel %vm574, %v1451, 0
        %1458 = vmatprep.subr.bf16.mxu0 0
        %1459 = vmatpush1.bf16.msra.mxu0 %v1456
        %1460 = vmatprep.subr.bf16.mxu0 0
        %1461 = vmatpush1.bf16.msra.mxu0 0
        %1462 = vmatprep.subr.bf16.mxu0 0
        %1463 = vmatpush1.bf16.msra.mxu0 0
        %1464 = vmatprep.subr.bf16.mxu0 0
        %1465 = vmatpush1.bf16.msra.mxu0 0
        %1466 = vmatprep.subr.bf16.mxu0 0
        %1467 = vmatpush1.bf16.msra.mxu0 0
        %1468 = vmatprep.subr.bf16.mxu0 0
        %1469 = vmatpush1.bf16.msra.mxu0 0
        %1470 = vmatprep.subr.bf16.mxu0 0
        %1471 = vmatpush1.bf16.msra.mxu0 0
        %1472 = vmatprep.subr.bf16.mxu0 0
        %1473 = vmatpush1.bf16.msra.mxu0 0
        %1474 = vmatprep.subr.bf16.mxu0 0
        %1475 = vmatpush1.bf16.msra.mxu0 0
        %1476 = vmatprep.subr.bf16.mxu0 0
        %1477 = vmatpush1.bf16.msra.mxu0 0
        %1478 = vmatprep.subr.bf16.mxu0 0
        %1479 = vmatpush1.bf16.msra.mxu0 0
        %1480 = vmatprep.subr.bf16.mxu0 0
        %1481 = vmatpush1.bf16.msra.mxu0 0
        %1482 = vmatprep.subr.bf16.mxu0 0
        %1483 = vmatpush1.bf16.msra.mxu0 0
        %1484 = vmatprep.subr.bf16.mxu0 0
        %1485 = vmatpush1.bf16.msra.mxu0 0
        %1486 = vmatprep.subr.bf16.mxu0 0
        %1487 = vmatpush1.bf16.msra.mxu0 0
        %1488 = vmatprep.subr.bf16.mxu0 0
        %1489 = vmatpush1.bf16.msra.mxu0 0
        %1490 = vmatprep.mubr.bf16.mxu0 0
        %1491 = vmatmul.mubr.bf16.gmra.mrb[0].mxu0 %v1453
        %v1492 = vpop.f32.mrb[0].mxu0
        %v1493 = vadd.f32 0.0, %v1492
        %v1494 = vpop.f32.mrb[0].mxu0
        %v1495 = vpop.f32.mrb[0].mxu0
        %v1496 = vpop.f32.mrb[0].mxu0
        %1497 = vdwg.mxu0
        %v1498 = vpack.c.bf16 %v1493, %v1493
        %v1499 = vpack.c.bf16 %v1382, %v1382
        %1500 = vrot.lane.b32.xlu0 %v1386, 120
        %v1501 = vpop.permute.xlu0 %1500
        %1502 = vrot.lane.b32.xlu0 %v1386, 88
        %v1503 = vpop.permute.xlu0 %1502
        %v1505 = vsel %vm508, %v1501, 0
        %v1508 = vsel %vm508, %v1503, 0
        %1510 = vmatprep.subr.bf16.mxu0 0
        %1511 = vmatpush1.bf16.xpose.msra.mxu0 %v1508
        %1512 = vmatprep.subr.bf16.mxu0 0
        %1513 = vmatpush1.bf16.xpose.msra.mxu0 0
        %1514 = vmatprep.subr.bf16.mxu0 0
        %1515 = vmatpush1.bf16.xpose.msra.mxu0 0
        %1516 = vmatprep.subr.bf16.mxu0 0
        %1517 = vmatpush1.bf16.xpose.msra.mxu0 0
        %1518 = vmatprep.subr.bf16.mxu0 0
        %1519 = vmatpush1.bf16.xpose.msra.mxu0 0
        %1520 = vmatprep.subr.bf16.mxu0 0
        %1521 = vmatpush1.bf16.xpose.msra.mxu0 0
        %1522 = vmatprep.subr.bf16.mxu0 0
        %1523 = vmatpush1.bf16.xpose.msra.mxu0 0
        %1524 = vmatprep.subr.bf16.mxu0 0
        %1525 = vmatpush1.bf16.xpose.msra.mxu0 0
        %1526 = vmatprep.subr.bf16.mxu0 0
        %1527 = vmatpush1.bf16.xpose.msra.mxu0 0
        %1528 = vmatprep.subr.bf16.mxu0 0
        %1529 = vmatpush1.bf16.xpose.msra.mxu0 0
        %1530 = vmatprep.subr.bf16.mxu0 0
        %1531 = vmatpush1.bf16.xpose.msra.mxu0 0
        %1532 = vmatprep.subr.bf16.mxu0 0
        %1533 = vmatpush1.bf16.xpose.msra.mxu0 0
        %1534 = vmatprep.subr.bf16.mxu0 0
        %1535 = vmatpush1.bf16.xpose.msra.mxu0 0
        %1536 = vmatprep.subr.bf16.mxu0 0
        %1537 = vmatpush1.bf16.xpose.msra.mxu0 0
        %1538 = vmatprep.subr.bf16.mxu0 0
        %1539 = vmatpush1.bf16.xpose.msra.mxu0 0
        %1540 = vmatprep.subr.bf16.mxu0 0
        %1541 = vmatpush1.bf16.xpose.msra.mxu0 0
        %1542 = vmatprep.mubr.bf16.mxu0 0
        %1543 = vmatmul.mubr.bf16.gmra.mrb[0].mxu0 %v1505
        %v1544 = vpop.f32.mrb[0].mxu0
        %v1545 = vadd.f32 0.0, %v1544
        %v1546 = vpop.f32.mrb[0].mxu0
        %v1547 = vpop.f32.mrb[0].mxu0
        %v1548 = vpop.f32.mrb[0].mxu0
        %1549 = vdwg.mxu0
        %v1550 = vmul.f32 %v1545, 0.35355338
        %v1551 = vsel %vm503, %v1550, -1e+09
        %v1552 = vsel %vm508, %v1551, -inf
        %1553 = vmax.xlane.f32.xlu0 %v1552
        %v1554 = vpop.xlane.xlu0 %1553
        %v1555 = vsub.f32 %v1551, %v1554
        %v1556 = vmul.f32 %v1555, 1.442695
        %v1557 = vpow.pop %v1556
        %v1558 = vsel %vm508, %v1557, 0.0
        %1559 = vadd.xlane.f32.xlu0 %v1558
        %v1560 = vpop.xlane.xlu0 %1559
        %v1561 = vrcp.pop %v1560
        %v1562 = vmul.f32 %v1557, %v1561
        %v1563 = vpack.c.bf16 %v1562, %v1562
        %1564 = vrot.lane.b32.xlu0 %v1386, 56
        %v1565 = vpop.permute.xlu0 %1564
        %v1567 = vsel %vm508, %v1563, 0
        %v1570 = vsel %vm574, %v1565, 0
        %1572 = vmatprep.subr.bf16.mxu0 0
        %1573 = vmatpush1.bf16.msra.mxu0 %v1570
        %1574 = vmatprep.subr.bf16.mxu0 0
        %1575 = vmatpush1.bf16.msra.mxu0 0
        %1576 = vmatprep.subr.bf16.mxu0 0
        %1577 = vmatpush1.bf16.msra.mxu0 0
        %1578 = vmatprep.subr.bf16.mxu0 0
        %1579 = vmatpush1.bf16.msra.mxu0 0
        %1580 = vmatprep.subr.bf16.mxu0 0
        %1581 = vmatpush1.bf16.msra.mxu0 0
        %1582 = vmatprep.subr.bf16.mxu0 0
        %1583 = vmatpush1.bf16.msra.mxu0 0
        %1584 = vmatprep.subr.bf16.mxu0 0
        %1585 = vmatpush1.bf16.msra.mxu0 0
        %1586 = vmatprep.subr.bf16.mxu0 0
        %1587 = vmatpush1.bf16.msra.mxu0 0
        %1588 = vmatprep.subr.bf16.mxu0 0
        %1589 = vmatpush1.bf16.msra.mxu0 0
        %1590 = vmatprep.subr.bf16.mxu0 0
        %1591 = vmatpush1.bf16.msra.mxu0 0
        %1592 = vmatprep.subr.bf16.mxu0 0
        %1593 = vmatpush1.bf16.msra.mxu0 0
        %1594 = vmatprep.subr.bf16.mxu0 0
        %1595 = vmatpush1.bf16.msra.mxu0 0
        %1596 = vmatprep.subr.bf16.mxu0 0
        %1597 = vmatpush1.bf16.msra.mxu0 0
        %1598 = vmatprep.subr.bf16.mxu0 0
        %1599 = vmatpush1.bf16.msra.mxu0 0
        %1600 = vmatprep.subr.bf16.mxu0 0
        %1601 = vmatpush1.bf16.msra.mxu0 0
        %1602 = vmatprep.subr.bf16.mxu0 0
        %1603 = vmatpush1.bf16.msra.mxu0 0
        %1604 = vmatprep.mubr.bf16.mxu0 0
        %1605 = vmatmul.mubr.bf16.gmra.mrb[0].mxu0 %v1567
        %v1606 = vpop.f32.mrb[0].mxu0
        %v1607 = vadd.f32 0.0, %v1606
        %v1608 = vpop.f32.mrb[0].mxu0
        %v1609 = vpop.f32.mrb[0].mxu0
        %v1610 = vpop.f32.mrb[0].mxu0
        %1611 = vdwg.mxu0
        %v1612 = vpack.c.bf16 %v1607, %v1607
        %v1613 = vpack.c.bf16 %v1383, %v1383
        %v1615 = vsel %vm508, %v1612, 0
        %v1618 = vsel %vm574, %v1613, 0
        %1620 = vmatprep.subr.bf16.mxu0 0
        %1621 = vmatpush1.bf16.msra.mxu0 %v1618
        %1622 = vmatprep.subr.bf16.mxu0 0
        %1623 = vmatpush1.bf16.msra.mxu0 0
        %1624 = vmatprep.subr.bf16.mxu0 0
        %1625 = vmatpush1.bf16.msra.mxu0 0
        %1626 = vmatprep.subr.bf16.mxu0 0
        %1627 = vmatpush1.bf16.msra.mxu0 0
        %1628 = vmatprep.subr.bf16.mxu0 0
        %1629 = vmatpush1.bf16.msra.mxu0 0
        %1630 = vmatprep.subr.bf16.mxu0 0
        %1631 = vmatpush1.bf16.msra.mxu0 0
        %1632 = vmatprep.subr.bf16.mxu0 0
        %1633 = vmatpush1.bf16.msra.mxu0 0
        %1634 = vmatprep.subr.bf16.mxu0 0
        %1635 = vmatpush1.bf16.msra.mxu0 0
        %1636 = vmatprep.subr.bf16.mxu0 0
        %1637 = vmatpush1.bf16.msra.mxu0 0
        %1638 = vmatprep.subr.bf16.mxu0 0
        %1639 = vmatpush1.bf16.msra.mxu0 0
        %1640 = vmatprep.subr.bf16.mxu0 0
        %1641 = vmatpush1.bf16.msra.mxu0 0
        %1642 = vmatprep.subr.bf16.mxu0 0
        %1643 = vmatpush1.bf16.msra.mxu0 0
        %1644 = vmatprep.subr.bf16.mxu0 0
        %1645 = vmatpush1.bf16.msra.mxu0 0
        %1646 = vmatprep.subr.bf16.mxu0 0
        %1647 = vmatpush1.bf16.msra.mxu0 0
        %1648 = vmatprep.subr.bf16.mxu0 0
        %1649 = vmatpush1.bf16.msra.mxu0 0
        %1650 = vmatprep.subr.bf16.mxu0 0
        %1651 = vmatpush1.bf16.msra.mxu0 0
        %1652 = vmatprep.mubr.bf16.mxu0 0
        %1653 = vmatmul.mubr.bf16.gmra.mrb[0].mxu0 %v1615
        %v1654 = vpop.f32.mrb[0].mxu0
        %v1655 = vadd.f32 0.0, %v1654
        %v1656 = vpop.f32.mrb[0].mxu0
        %v1657 = vpop.f32.mrb[0].mxu0
        %v1658 = vpop.f32.mrb[0].mxu0
        %1659 = vdwg.mxu0
        %v1661 = vsel %vm508, %v1498, 0
        %v1664 = vsel %vm574, %v1499, 0
        %1666 = vmatprep.subr.bf16.mxu0 0
        %1667 = vmatpush1.bf16.msra.mxu0 %v1664
        %1668 = vmatprep.subr.bf16.mxu0 0
        %1669 = vmatpush1.bf16.msra.mxu0 0
        %1670 = vmatprep.subr.bf16.mxu0 0
        %1671 = vmatpush1.bf16.msra.mxu0 0
        %1672 = vmatprep.subr.bf16.mxu0 0
        %1673 = vmatpush1.bf16.msra.mxu0 0
        %1674 = vmatprep.subr.bf16.mxu0 0
        %1675 = vmatpush1.bf16.msra.mxu0 0
        %1676 = vmatprep.subr.bf16.mxu0 0
        %1677 = vmatpush1.bf16.msra.mxu0 0
        %1678 = vmatprep.subr.bf16.mxu0 0
        %1679 = vmatpush1.bf16.msra.mxu0 0
        %1680 = vmatprep.subr.bf16.mxu0 0
        %1681 = vmatpush1.bf16.msra.mxu0 0
        %1682 = vmatprep.subr.bf16.mxu0 0
        %1683 = vmatpush1.bf16.msra.mxu0 0
        %1684 = vmatprep.subr.bf16.mxu0 0
        %1685 = vmatpush1.bf16.msra.mxu0 0
        %1686 = vmatprep.subr.bf16.mxu0 0
        %1687 = vmatpush1.bf16.msra.mxu0 0
        %1688 = vmatprep.subr.bf16.mxu0 0
        %1689 = vmatpush1.bf16.msra.mxu0 0
        %1690 = vmatprep.subr.bf16.mxu0 0
        %1691 = vmatpush1.bf16.msra.mxu0 0
        %1692 = vmatprep.subr.bf16.mxu0 0
        %1693 = vmatpush1.bf16.msra.mxu0 0
        %1694 = vmatprep.subr.bf16.mxu0 0
        %1695 = vmatpush1.bf16.msra.mxu0 0
        %1696 = vmatprep.subr.bf16.mxu0 0
        %1697 = vmatpush1.bf16.msra.mxu0 0
        %1698 = vmatprep.mubr.bf16.mxu0 0
        %1699 = vmatmul.mubr.bf16.gmra.mrb[0].mxu0 %v1661
        %v1700 = vpop.f32.mrb[0].mxu0
        %v1701 = vadd.f32 %v1655, %v1700
        %v1702 = vpop.f32.mrb[0].mxu0
        %v1703 = vpop.f32.mrb[0].mxu0
        %v1704 = vpop.f32.mrb[0].mxu0
        %1705 = vdwg.mxu0
        %1706 = vrot.lane.b32.xlu0 %v1386, 112
        %v1707 = vpop.permute.xlu0 %1706
        %1708 = vrot.lane.b32.xlu0 %v1386, 80
        %v1709 = vpop.permute.xlu0 %1708
        %v1711 = vsel %vm508, %v1707, 0
        %v1714 = vsel %vm508, %v1709, 0
        %1716 = vmatprep.subr.bf16.mxu0 0
        %1717 = vmatpush1.bf16.xpose.msra.mxu0 %v1714
        %1718 = vmatprep.subr.bf16.mxu0 0
        %1719 = vmatpush1.bf16.xpose.msra.mxu0 0
        %1720 = vmatprep.subr.bf16.mxu0 0
        %1721 = vmatpush1.bf16.xpose.msra.mxu0 0
        %1722 = vmatprep.subr.bf16.mxu0 0
        %1723 = vmatpush1.bf16.xpose.msra.mxu0 0
        %1724 = vmatprep.subr.bf16.mxu0 0
        %1725 = vmatpush1.bf16.xpose.msra.mxu0 0
        %1726 = vmatprep.subr.bf16.mxu0 0
        %1727 = vmatpush1.bf16.xpose.msra.mxu0 0
        %1728 = vmatprep.subr.bf16.mxu0 0
        %1729 = vmatpush1.bf16.xpose.msra.mxu0 0
        %1730 = vmatprep.subr.bf16.mxu0 0
        %1731 = vmatpush1.bf16.xpose.msra.mxu0 0
        %1732 = vmatprep.subr.bf16.mxu0 0
        %1733 = vmatpush1.bf16.xpose.msra.mxu0 0
        %1734 = vmatprep.subr.bf16.mxu0 0
        %1735 = vmatpush1.bf16.xpose.msra.mxu0 0
        %1736 = vmatprep.subr.bf16.mxu0 0
        %1737 = vmatpush1.bf16.xpose.msra.mxu0 0
        %1738 = vmatprep.subr.bf16.mxu0 0
        %1739 = vmatpush1.bf16.xpose.msra.mxu0 0
        %1740 = vmatprep.subr.bf16.mxu0 0
        %1741 = vmatpush1.bf16.xpose.msra.mxu0 0
        %1742 = vmatprep.subr.bf16.mxu0 0
        %1743 = vmatpush1.bf16.xpose.msra.mxu0 0
        %1744 = vmatprep.subr.bf16.mxu0 0
        %1745 = vmatpush1.bf16.xpose.msra.mxu0 0
        %1746 = vmatprep.subr.bf16.mxu0 0
        %1747 = vmatpush1.bf16.xpose.msra.mxu0 0
        %1748 = vmatprep.mubr.bf16.mxu0 0
        %1749 = vmatmul.mubr.bf16.gmra.mrb[0].mxu0 %v1711
        %v1750 = vpop.f32.mrb[0].mxu0
        %v1751 = vadd.f32 0.0, %v1750
        %v1752 = vpop.f32.mrb[0].mxu0
        %v1753 = vpop.f32.mrb[0].mxu0
        %v1754 = vpop.f32.mrb[0].mxu0
        %1755 = vdwg.mxu0
        %v1756 = vmul.f32 %v1751, 0.35355338
        %v1757 = vsel %vm503, %v1756, -1e+09
        %v1758 = vsel %vm508, %v1757, -inf
        %1759 = vmax.xlane.f32.xlu0 %v1758
        %v1760 = vpop.xlane.xlu0 %1759
        %v1761 = vsub.f32 %v1757, %v1760
        %v1762 = vmul.f32 %v1761, 1.442695
        %v1763 = vpow.pop %v1762
        %v1764 = vsel %vm508, %v1763, 0.0
        %1765 = vadd.xlane.f32.xlu0 %v1764
        %v1766 = vpop.xlane.xlu0 %1765
        %v1767 = vrcp.pop %v1766
        %v1768 = vmul.f32 %v1763, %v1767
        %v1769 = vpack.c.bf16 %v1768, %v1768
        %1770 = vrot.lane.b32.xlu0 %v1386, 48
        %v1771 = vpop.permute.xlu0 %1770
        %v1773 = vsel %vm508, %v1769, 0
        %v1776 = vsel %vm574, %v1771, 0
        %1778 = vmatprep.subr.bf16.mxu0 0
        %1779 = vmatpush1.bf16.msra.mxu0 %v1776
        %1780 = vmatprep.subr.bf16.mxu0 0
        %1781 = vmatpush1.bf16.msra.mxu0 0
        %1782 = vmatprep.subr.bf16.mxu0 0
        %1783 = vmatpush1.bf16.msra.mxu0 0
        %1784 = vmatprep.subr.bf16.mxu0 0
        %1785 = vmatpush1.bf16.msra.mxu0 0
        %1786 = vmatprep.subr.bf16.mxu0 0
        %1787 = vmatpush1.bf16.msra.mxu0 0
        %1788 = vmatprep.subr.bf16.mxu0 0
        %1789 = vmatpush1.bf16.msra.mxu0 0
        %1790 = vmatprep.subr.bf16.mxu0 0
        %1791 = vmatpush1.bf16.msra.mxu0 0
        %1792 = vmatprep.subr.bf16.mxu0 0
        %1793 = vmatpush1.bf16.msra.mxu0 0
        %1794 = vmatprep.subr.bf16.mxu0 0
        %1795 = vmatpush1.bf16.msra.mxu0 0
        %1796 = vmatprep.subr.bf16.mxu0 0
        %1797 = vmatpush1.bf16.msra.mxu0 0
        %1798 = vmatprep.subr.bf16.mxu0 0
        %1799 = vmatpush1.bf16.msra.mxu0 0
        %1800 = vmatprep.subr.bf16.mxu0 0
        %1801 = vmatpush1.bf16.msra.mxu0 0
        %1802 = vmatprep.subr.bf16.mxu0 0
        %1803 = vmatpush1.bf16.msra.mxu0 0
        %1804 = vmatprep.subr.bf16.mxu0 0
        %1805 = vmatpush1.bf16.msra.mxu0 0
        %1806 = vmatprep.subr.bf16.mxu0 0
        %1807 = vmatpush1.bf16.msra.mxu0 0
        %1808 = vmatprep.subr.bf16.mxu0 0
        %1809 = vmatpush1.bf16.msra.mxu0 0
        %1810 = vmatprep.mubr.bf16.mxu0 0
        %1811 = vmatmul.mubr.bf16.gmra.mrb[0].mxu0 %v1773
        %v1812 = vpop.f32.mrb[0].mxu0
        %v1813 = vadd.f32 0.0, %v1812
        %v1814 = vpop.f32.mrb[0].mxu0
        %v1815 = vpop.f32.mrb[0].mxu0
        %v1816 = vpop.f32.mrb[0].mxu0
        %1817 = vdwg.mxu0
        %v1818 = vpack.c.bf16 %v1813, %v1813
        %v1819 = vpack.c.bf16 %v1384, %v1384
        %v1821 = vsel %vm508, %v1818, 0
        %v1824 = vsel %vm574, %v1819, 0
        %1826 = vmatprep.subr.bf16.mxu0 0
        %1827 = vmatpush1.bf16.msra.mxu0 %v1824
        %1828 = vmatprep.subr.bf16.mxu0 0
        %1829 = vmatpush1.bf16.msra.mxu0 0
        %1830 = vmatprep.subr.bf16.mxu0 0
        %1831 = vmatpush1.bf16.msra.mxu0 0
        %1832 = vmatprep.subr.bf16.mxu0 0
        %1833 = vmatpush1.bf16.msra.mxu0 0
        %1834 = vmatprep.subr.bf16.mxu0 0
        %1835 = vmatpush1.bf16.msra.mxu0 0
        %1836 = vmatprep.subr.bf16.mxu0 0
        %1837 = vmatpush1.bf16.msra.mxu0 0
        %1838 = vmatprep.subr.bf16.mxu0 0
        %1839 = vmatpush1.bf16.msra.mxu0 0
        %1840 = vmatprep.subr.bf16.mxu0 0
        %1841 = vmatpush1.bf16.msra.mxu0 0
        %1842 = vmatprep.subr.bf16.mxu0 0
        %1843 = vmatpush1.bf16.msra.mxu0 0
        %1844 = vmatprep.subr.bf16.mxu0 0
        %1845 = vmatpush1.bf16.msra.mxu0 0
        %1846 = vmatprep.subr.bf16.mxu0 0
        %1847 = vmatpush1.bf16.msra.mxu0 0
        %1848 = vmatprep.subr.bf16.mxu0 0
        %1849 = vmatpush1.bf16.msra.mxu0 0
        %1850 = vmatprep.subr.bf16.mxu0 0
        %1851 = vmatpush1.bf16.msra.mxu0 0
        %1852 = vmatprep.subr.bf16.mxu0 0
        %1853 = vmatpush1.bf16.msra.mxu0 0
        %1854 = vmatprep.subr.bf16.mxu0 0
        %1855 = vmatpush1.bf16.msra.mxu0 0
        %1856 = vmatprep.subr.bf16.mxu0 0
        %1857 = vmatpush1.bf16.msra.mxu0 0
        %1858 = vmatprep.mubr.bf16.mxu0 0
        %1859 = vmatmul.mubr.bf16.gmra.mrb[0].mxu0 %v1821
        %v1860 = vpop.f32.mrb[0].mxu0
        %v1861 = vadd.f32 0.0, %v1860
        %v1862 = vpop.f32.mrb[0].mxu0
        %v1863 = vpop.f32.mrb[0].mxu0
        %v1864 = vpop.f32.mrb[0].mxu0
        %1865 = vdwg.mxu0
        %v1866 = vadd.f32 %v1701, %v1861
        %1867 = vrot.lane.b32.xlu0 %v1386, 104
        %v1868 = vpop.permute.xlu0 %1867
        %1869 = vrot.lane.b32.xlu0 %v1386, 72
        %v1870 = vpop.permute.xlu0 %1869
        %v1872 = vsel %vm508, %v1868, 0
        %v1875 = vsel %vm508, %v1870, 0
        %1877 = vmatprep.subr.bf16.mxu0 0
        %1878 = vmatpush1.bf16.xpose.msra.mxu0 %v1875
        %1879 = vmatprep.subr.bf16.mxu0 0
        %1880 = vmatpush1.bf16.xpose.msra.mxu0 0
        %1881 = vmatprep.subr.bf16.mxu0 0
        %1882 = vmatpush1.bf16.xpose.msra.mxu0 0
        %1883 = vmatprep.subr.bf16.mxu0 0
        %1884 = vmatpush1.bf16.xpose.msra.mxu0 0
        %1885 = vmatprep.subr.bf16.mxu0 0
        %1886 = vmatpush1.bf16.xpose.msra.mxu0 0
        %1887 = vmatprep.subr.bf16.mxu0 0
        %1888 = vmatpush1.bf16.xpose.msra.mxu0 0
        %1889 = vmatprep.subr.bf16.mxu0 0
        %1890 = vmatpush1.bf16.xpose.msra.mxu0 0
        %1891 = vmatprep.subr.bf16.mxu0 0
        %1892 = vmatpush1.bf16.xpose.msra.mxu0 0
        %1893 = vmatprep.subr.bf16.mxu0 0
        %1894 = vmatpush1.bf16.xpose.msra.mxu0 0
        %1895 = vmatprep.subr.bf16.mxu0 0
        %1896 = vmatpush1.bf16.xpose.msra.mxu0 0
        %1897 = vmatprep.subr.bf16.mxu0 0
        %1898 = vmatpush1.bf16.xpose.msra.mxu0 0
        %1899 = vmatprep.subr.bf16.mxu0 0
        %1900 = vmatpush1.bf16.xpose.msra.mxu0 0
        %1901 = vmatprep.subr.bf16.mxu0 0
        %1902 = vmatpush1.bf16.xpose.msra.mxu0 0
        %1903 = vmatprep.subr.bf16.mxu0 0
        %1904 = vmatpush1.bf16.xpose.msra.mxu0 0
        %1905 = vmatprep.subr.bf16.mxu0 0
        %1906 = vmatpush1.bf16.xpose.msra.mxu0 0
        %1907 = vmatprep.subr.bf16.mxu0 0
        %1908 = vmatpush1.bf16.xpose.msra.mxu0 0
        %1909 = vmatprep.mubr.bf16.mxu0 0
        %1910 = vmatmul.mubr.bf16.gmra.mrb[0].mxu0 %v1872
        %v1911 = vpop.f32.mrb[0].mxu0
        %v1912 = vadd.f32 0.0, %v1911
        %v1913 = vpop.f32.mrb[0].mxu0
        %v1914 = vpop.f32.mrb[0].mxu0
        %v1915 = vpop.f32.mrb[0].mxu0
        %1916 = vdwg.mxu0
        %v1917 = vmul.f32 %v1912, 0.35355338
        %v1918 = vsel %vm503, %v1917, -1e+09
        %v1919 = vsel %vm508, %v1918, -inf
        %1920 = vmax.xlane.f32.xlu0 %v1919
        %v1921 = vpop.xlane.xlu0 %1920
        %v1922 = vsub.f32 %v1918, %v1921
        %v1923 = vmul.f32 %v1922, 1.442695
        %v1924 = vpow.pop %v1923
        %v1925 = vsel %vm508, %v1924, 0.0
        %1926 = vadd.xlane.f32.xlu0 %v1925
        %v1927 = vpop.xlane.xlu0 %1926
        %v1928 = vrcp.pop %v1927
        %v1929 = vmul.f32 %v1924, %v1928
        %v1930 = vpack.c.bf16 %v1929, %v1929
        %1931 = vrot.lane.b32.xlu0 %v1386, 40
        %v1932 = vpop.permute.xlu0 %1931
        %v1934 = vsel %vm508, %v1930, 0
        %v1937 = vsel %vm574, %v1932, 0
        %1939 = vmatprep.subr.bf16.mxu0 0
        %1940 = vmatpush1.bf16.msra.mxu0 %v1937
        %1941 = vmatprep.subr.bf16.mxu0 0
        %1942 = vmatpush1.bf16.msra.mxu0 0
        %1943 = vmatprep.subr.bf16.mxu0 0
        %1944 = vmatpush1.bf16.msra.mxu0 0
        %1945 = vmatprep.subr.bf16.mxu0 0
        %1946 = vmatpush1.bf16.msra.mxu0 0
        %1947 = vmatprep.subr.bf16.mxu0 0
        %1948 = vmatpush1.bf16.msra.mxu0 0
        %1949 = vmatprep.subr.bf16.mxu0 0
        %1950 = vmatpush1.bf16.msra.mxu0 0
        %1951 = vmatprep.subr.bf16.mxu0 0
        %1952 = vmatpush1.bf16.msra.mxu0 0
        %1953 = vmatprep.subr.bf16.mxu0 0
        %1954 = vmatpush1.bf16.msra.mxu0 0
        %1955 = vmatprep.subr.bf16.mxu0 0
        %1956 = vmatpush1.bf16.msra.mxu0 0
        %1957 = vmatprep.subr.bf16.mxu0 0
        %1958 = vmatpush1.bf16.msra.mxu0 0
        %1959 = vmatprep.subr.bf16.mxu0 0
        %1960 = vmatpush1.bf16.msra.mxu0 0
        %1961 = vmatprep.subr.bf16.mxu0 0
        %1962 = vmatpush1.bf16.msra.mxu0 0
        %1963 = vmatprep.subr.bf16.mxu0 0
        %1964 = vmatpush1.bf16.msra.mxu0 0
        %1965 = vmatprep.subr.bf16.mxu0 0
        %1966 = vmatpush1.bf16.msra.mxu0 0
        %1967 = vmatprep.subr.bf16.mxu0 0
        %1968 = vmatpush1.bf16.msra.mxu0 0
        %1969 = vmatprep.subr.bf16.mxu0 0
        %1970 = vmatpush1.bf16.msra.mxu0 0
        %1971 = vmatprep.mubr.bf16.mxu0 0
        %1972 = vmatmul.mubr.bf16.gmra.mrb[0].mxu0 %v1934
        %v1973 = vpop.f32.mrb[0].mxu0
        %v1974 = vadd.f32 0.0, %v1973
        %v1975 = vpop.f32.mrb[0].mxu0
        %v1976 = vpop.f32.mrb[0].mxu0
        %v1977 = vpop.f32.mrb[0].mxu0
        %1978 = vdwg.mxu0
        %v1979 = vpack.c.bf16 %v1974, %v1974
        %v1980 = vpack.c.bf16 %v1385, %v1385
        %v1982 = vsel %vm508, %v1979, 0
        %v1985 = vsel %vm574, %v1980, 0
        %1987 = vmatprep.subr.bf16.mxu0 0
        %1988 = vmatpush1.bf16.msra.mxu0 %v1985
        %1989 = vmatprep.subr.bf16.mxu0 0
        %1990 = vmatpush1.bf16.msra.mxu0 0
        %1991 = vmatprep.subr.bf16.mxu0 0
        %1992 = vmatpush1.bf16.msra.mxu0 0
        %1993 = vmatprep.subr.bf16.mxu0 0
        %1994 = vmatpush1.bf16.msra.mxu0 0
        %1995 = vmatprep.subr.bf16.mxu0 0
        %1996 = vmatpush1.bf16.msra.mxu0 0
        %1997 = vmatprep.subr.bf16.mxu0 0
        %1998 = vmatpush1.bf16.msra.mxu0 0
        %1999 = vmatprep.subr.bf16.mxu0 0
        %2000 = vmatpush1.bf16.msra.mxu0 0
        %2001 = vmatprep.subr.bf16.mxu0 0
        %2002 = vmatpush1.bf16.msra.mxu0 0
        %2003 = vmatprep.subr.bf16.mxu0 0
        %2004 = vmatpush1.bf16.msra.mxu0 0
        %2005 = vmatprep.subr.bf16.mxu0 0
        %2006 = vmatpush1.bf16.msra.mxu0 0
        %2007 = vmatprep.subr.bf16.mxu0 0
        %2008 = vmatpush1.bf16.msra.mxu0 0
        %2009 = vmatprep.subr.bf16.mxu0 0
        %2010 = vmatpush1.bf16.msra.mxu0 0
        %2011 = vmatprep.subr.bf16.mxu0 0
        %2012 = vmatpush1.bf16.msra.mxu0 0
        %2013 = vmatprep.subr.bf16.mxu0 0
        %2014 = vmatpush1.bf16.msra.mxu0 0
        %2015 = vmatprep.subr.bf16.mxu0 0
        %2016 = vmatpush1.bf16.msra.mxu0 0
        %2017 = vmatprep.subr.bf16.mxu0 0
        %2018 = vmatpush1.bf16.msra.mxu0 0
        %2019 = vmatprep.mubr.bf16.mxu0 0
        %2020 = vmatmul.mubr.bf16.gmra.mrb[0].mxu0 %v1982
        %v2021 = vpop.f32.mrb[0].mxu0
        %v2022 = vadd.f32 0.0, %v2021
        %v2023 = vpop.f32.mrb[0].mxu0
        %v2024 = vpop.f32.mrb[0].mxu0
        %v2025 = vpop.f32.mrb[0].mxu0
        %2026 = vdwg.mxu0
        %v2027 = vadd.f32 %v1866, %v2022
        %v2028 = vadd.f32 %v1308, %v2027
        %s2029 = scalar_lea.vmem %s5, 1
        %v2030 = vld [vmem:[%s2029] sm:$0x1]
        %v2032 = vlaneseq
        %v2033 = vshrl.u32 %v2032, 7
        %v2034 = vsub.s32 0, %v2033
        %v2035 = vrot.slane %v2030, %v2034
        %v2037 = vadd.f32 %v2028, %v2035
        %v2038 = vsel %vm423, %v2037, 0.0
        %2039 = vadd.xlane.f32.xlu0 %v2038
        %v2040 = vpop.xlane.xlu0 %2039
        %v2041 = vmul.f32 %v2040, %v427
        %v2042 = vsub.f32 %v2037, %v2041
        %v2043 = vmul.f32 %v2042, %v2042
        %v2044 = vsel %vm423, %v2043, 0.0
        %2045 = vadd.xlane.f32.xlu0 %v2044
        %v2046 = vpop.xlane.xlu0 %2045
        %v2047 = vmul.f32 %v2046, %v427
        %v2048 = vadd.f32 %v2047, 1e-05
        %v2049 = vrsqrt.pop %v2048
        %v2050 = vmul.f32 %v2042, %v2049
        %s2051 = scalar_lea.vmem %s6, 32
        %v2052 = vld [vmem:[%s2051] sm:$0xff]
        %v2053 = vld [vmem:[%s2051 + $0x8] sm:$0xff]
        %v2054 = vld [vmem:[%s2051 + $0x10] sm:$0xff]
        %v2055 = vld [vmem:[%s2051 + $0x18] sm:$0xff]
        %v2056 = vpack.c.bf16 %v2050, %v2050
        %v2057 = vpack.c.bf16 %v2053, %v2052
        %v2058 = vpack.c.bf16 %v2055, %v2054
        %s2059 = scalar_lea.vmem %s7, 1
        %v2060 = vld [vmem:[%s2059] sm:$0x1]
        %v2062 = vlaneseq
        %v2063 = vshrl.u32 %v2062, 7
        %v2064 = vsub.s32 0, %v2063
        %v2065 = vrot.slane %v2060, %v2064
        %v2068 = vsel %vm423, %v2056, 0
        %2070 = vmatprep.subr.bf16.mxu0 0
        %2071 = vmatpush1.bf16.msra.mxu0 %v2057
        %2072 = vmatprep.subr.bf16.mxu0 0
        %2073 = vmatpush1.bf16.msra.mxu0 %v2058
        %2074 = vmatprep.subr.bf16.mxu0 0
        %2075 = vmatpush1.bf16.msra.mxu0 0
        %2076 = vmatprep.subr.bf16.mxu0 0
        %2077 = vmatpush1.bf16.msra.mxu0 0
        %2078 = vmatprep.subr.bf16.mxu0 0
        %2079 = vmatpush1.bf16.msra.mxu0 0
        %2080 = vmatprep.subr.bf16.mxu0 0
        %2081 = vmatpush1.bf16.msra.mxu0 0
        %2082 = vmatprep.subr.bf16.mxu0 0
        %2083 = vmatpush1.bf16.msra.mxu0 0
        %2084 = vmatprep.subr.bf16.mxu0 0
        %2085 = vmatpush1.bf16.msra.mxu0 0
        %2086 = vmatprep.subr.bf16.mxu0 0
        %2087 = vmatpush1.bf16.msra.mxu0 0
        %2088 = vmatprep.subr.bf16.mxu0 0
        %2089 = vmatpush1.bf16.msra.mxu0 0
        %2090 = vmatprep.subr.bf16.mxu0 0
        %2091 = vmatpush1.bf16.msra.mxu0 0
        %2092 = vmatprep.subr.bf16.mxu0 0
        %2093 = vmatpush1.bf16.msra.mxu0 0
        %2094 = vmatprep.subr.bf16.mxu0 0
        %2095 = vmatpush1.bf16.msra.mxu0 0
        %2096 = vmatprep.subr.bf16.mxu0 0
        %2097 = vmatpush1.bf16.msra.mxu0 0
        %2098 = vmatprep.subr.bf16.mxu0 0
        %2099 = vmatpush1.bf16.msra.mxu0 0
        %2100 = vmatprep.subr.bf16.mxu0 0
        %2101 = vmatpush1.bf16.msra.mxu0 0
        %2102 = vmatprep.mubr.bf16.mxu0 0
        %2103 = vmatmul.mubr.bf16.gmra.mrb[0].mxu0 %v2068
        %v2104 = vpop.f32.mrb[0].mxu0
        %v2105 = vadd.f32 %v2065, %v2104
        %v2106 = vpop.f32.mrb[0].mxu0
        %v2107 = vpop.f32.mrb[0].mxu0
        %v2108 = vpop.f32.mrb[0].mxu0
        %2109 = vdwg.mxu0
        %v2110 = vmul.f32 %v2105, 1.702
        %v2111 = vxor.u32 %v2110, 2147483648
        %v2112 = vmul.f32 %v2111, 1.442695
        %v2113 = vpow.pop %v2112
        %v2114 = vadd.f32 %v2113, 1.0
        %v2115 = vrcp.pop %v2114
        %v2116 = vmul.f32 1.0, %v2115
        %v2117 = vmul.f32 %v2105, %v2116
        %s2118 = scalar_lea.vmem %s8, 128
        %v2119 = vld [vmem:[%s2118] sm:$0xff]
        %v2120 = vld [vmem:[%s2118 + $0x8] sm:$0xff]
        %v2121 = vld [vmem:[%s2118 + $0x10] sm:$0xff]
        %v2122 = vld [vmem:[%s2118 + $0x18] sm:$0xff]
        %v2123 = vld [vmem:[%s2118 + $0x20] sm:$0xff]
        %v2124 = vld [vmem:[%s2118 + $0x28] sm:$0xff]
        %v2125 = vld [vmem:[%s2118 + $0x30] sm:$0xff]
        %v2126 = vld [vmem:[%s2118 + $0x38] sm:$0xff]
        %v2127 = vld [vmem:[%s2118 + $0x40] sm:$0xff]
        %v2128 = vld [vmem:[%s2118 + $0x48] sm:$0xff]
        %v2129 = vld [vmem:[%s2118 + $0x50] sm:$0xff]
        %v2130 = vld [vmem:[%s2118 + $0x58] sm:$0xff]
        %v2131 = vld [vmem:[%s2118 + $0x60] sm:$0xff]
        %v2132 = vld [vmem:[%s2118 + $0x68] sm:$0xff]
        %v2133 = vld [vmem:[%s2118 + $0x70] sm:$0xff]
        %v2134 = vld [vmem:[%s2118 + $0x78] sm:$0xff]
        %v2135 = vpack.c.bf16 %v2117, %v2117
        %v2136 = vpack.c.bf16 %v2120, %v2119
        %v2137 = vpack.c.bf16 %v2122, %v2121
        %v2138 = vpack.c.bf16 %v2124, %v2123
        %v2139 = vpack.c.bf16 %v2126, %v2125
        %v2140 = vpack.c.bf16 %v2128, %v2127
        %v2141 = vpack.c.bf16 %v2130, %v2129
        %v2142 = vpack.c.bf16 %v2132, %v2131
        %v2143 = vpack.c.bf16 %v2134, %v2133
        %2144 = vmatprep.subr.bf16.mxu0 0
        %2145 = vmatpush1.bf16.msra.mxu0 %v2136
        %2146 = vmatprep.subr.bf16.mxu0 0
        %2147 = vmatpush1.bf16.msra.mxu0 %v2137
        %2148 = vmatprep.subr.bf16.mxu0 0
        %2149 = vmatpush1.bf16.msra.mxu0 %v2138
        %2150 = vmatprep.subr.bf16.mxu0 0
        %2151 = vmatpush1.bf16.msra.mxu0 %v2139
        %2152 = vmatprep.subr.bf16.mxu0 0
        %2153 = vmatpush1.bf16.msra.mxu0 %v2140
        %2154 = vmatprep.subr.bf16.mxu0 0
        %2155 = vmatpush1.bf16.msra.mxu0 %v2141
        %2156 = vmatprep.subr.bf16.mxu0 0
        %2157 = vmatpush1.bf16.msra.mxu0 %v2142
        %2158 = vmatprep.subr.bf16.mxu0 0
        %2159 = vmatpush1.bf16.msra.mxu0 %v2143
        %2160 = vmatprep.subr.bf16.mxu0 0
        %2161 = vmatpush1.bf16.msra.mxu0 0
        %2162 = vmatprep.subr.bf16.mxu0 0
        %2163 = vmatpush1.bf16.msra.mxu0 0
        %2164 = vmatprep.subr.bf16.mxu0 0
        %2165 = vmatpush1.bf16.msra.mxu0 0
        %2166 = vmatprep.subr.bf16.mxu0 0
        %2167 = vmatpush1.bf16.msra.mxu0 0
        %2168 = vmatprep.subr.bf16.mxu0 0
        %2169 = vmatpush1.bf16.msra.mxu0 0
        %2170 = vmatprep.subr.bf16.mxu0 0
        %2171 = vmatpush1.bf16.msra.mxu0 0
        %2172 = vmatprep.subr.bf16.mxu0 0
        %2173 = vmatpush1.bf16.msra.mxu0 0
        %2174 = vmatprep.subr.bf16.mxu0 0
        %2175 = vmatpush1.bf16.msra.mxu0 0
        %2176 = vmatprep.mubr.bf16.mxu0 0
        %2177 = vmatmul.mubr.bf16.gmra.mrb[0].mxu0 %v2135
        %v2178 = vpop.f32.mrb[0].mxu0
        %v2179 = vadd.f32 0.0, %v2178
        %v2180 = vpop.f32.mrb[0].mxu0
        %v2181 = vpop.f32.mrb[0].mxu0
        %v2182 = vpop.f32.mrb[0].mxu0
        %2183 = vdwg.mxu0
        %v2184 = vadd.f32 %v2037, %v2179
        %s2185 = scalar_lea.vmem %s9, 1
        %v2186 = vld [vmem:[%s2185] sm:$0x1]
        %v2188 = vlaneseq
        %v2189 = vshrl.u32 %v2188, 7
        %v2190 = vsub.s32 0, %v2189
        %v2191 = vrot.slane %v2186, %v2190
        %v2193 = vadd.f32 %v2184, %v2191
        %s2194 = sld [smem:[#allocation2 + %s24]]
        %v2195 = vstv %s2194
        %vm2196 = vcmp.eq.s32.totalorder %v500, %v2195
        %v2197 = vsel %vm2196, 1, 0
        %vm2198 = vcmp.eq.s32.totalorder %v2197, 1
        %v2199 = vsel %vm2198, %v2193, 0.0
        %v2200 = vsel %vm423, %v2199, 0.0
        %v2201 = vrot.slane %v2200, 4
        %v2202 = vadd.f32 %v2200, %v2201
        %v2203 = vrot.slane %v2202, 2
        %v2204 = vadd.f32 %v2202, %v2203
        %v2205 = vrot.slane %v2204, 1
        %v2206 = vadd.f32 %v2204, %v2205
        %v2207 = vsel %vm423, %v2206, 0.0
        %2208 = vadd.xlane.f32.xlu0 %v2207
        %v2209 = vpop.xlane.xlu0 %2208
        %v2210 = vmul.f32 %v2209, %v427
        %v2211 = vsub.f32 %v2206, %v2210
        %v2212 = vmul.f32 %v2211, %v2211
        %v2213 = vsel %vm423, %v2212, 0.0
        %2214 = vadd.xlane.f32.xlu0 %v2213
        %v2215 = vpop.xlane.xlu0 %2214
        %v2216 = vmul.f32 %v2215, %v427
        %v2217 = vadd.f32 %v2216, 1e-05
        %v2218 = vrsqrt.pop %v2217
        %v2219 = vmul.f32 %v2211, %v2218
        %v2220 = vld [vmem:[%s10] sm:$0xff]
        %v2221 = vld [vmem:[%s10 + $0x8] sm:$0xff]
        %v2222 = vld [vmem:[%s10 + $0x10] sm:$0xff]
        %v2223 = vld [vmem:[%s10 + $0x18] sm:$0xff]
        %v2224 = vpack.c.bf16 %v2219, %v2219
        %v2225 = vpack.c.bf16 %v2221, %v2220
        %v2226 = vpack.c.bf16 %v2223, %v2222
        %v2227 = vld [vmem:[%s11] sm:$0x1]
        %v2229 = vsel %vm423, %v2224, 0
        %2231 = vmatprep.subr.bf16.mxu0 0
        %2232 = vmatpush1.bf16.msra.mxu0 %v2225
        %2233 = vmatprep.subr.bf16.mxu0 0
        %2234 = vmatpush1.bf16.msra.mxu0 %v2226
        %2235 = vmatprep.subr.bf16.mxu0 0
        %2236 = vmatpush1.bf16.msra.mxu0 0
        %2237 = vmatprep.subr.bf16.mxu0 0
        %2238 = vmatpush1.bf16.msra.mxu0 0
        %2239 = vmatprep.subr.bf16.mxu0 0
        %2240 = vmatpush1.bf16.msra.mxu0 0
        %2241 = vmatprep.subr.bf16.mxu0 0
        %2242 = vmatpush1.bf16.msra.mxu0 0
        %2243 = vmatprep.subr.bf16.mxu0 0
        %2244 = vmatpush1.bf16.msra.mxu0 0
        %2245 = vmatprep.subr.bf16.mxu0 0
        %2246 = vmatpush1.bf16.msra.mxu0 0
        %2247 = vmatprep.subr.bf16.mxu0 0
        %2248 = vmatpush1.bf16.msra.mxu0 0
        %2249 = vmatprep.subr.bf16.mxu0 0
        %2250 = vmatpush1.bf16.msra.mxu0 0
        %2251 = vmatprep.subr.bf16.mxu0 0
        %2252 = vmatpush1.bf16.msra.mxu0 0
        %2253 = vmatprep.subr.bf16.mxu0 0
        %2254 = vmatpush1.bf16.msra.mxu0 0
        %2255 = vmatprep.subr.bf16.mxu0 0
        %2256 = vmatpush1.bf16.msra.mxu0 0
        %2257 = vmatprep.subr.bf16.mxu0 0
        %2258 = vmatpush1.bf16.msra.mxu0 0
        %2259 = vmatprep.subr.bf16.mxu0 0
        %2260 = vmatpush1.bf16.msra.mxu0 0
        %2261 = vmatprep.subr.bf16.mxu0 0
        %2262 = vmatpush1.bf16.msra.mxu0 0
        %2263 = vmatprep.mubr.bf16.mxu0 0
        %2264 = vmatmul.mubr.bf16.gmra.mrb[0].mxu0 %v2229
        %v2265 = vpop.f32.mrb[0].mxu0
        %v2266 = vadd.f32 %v2227, %v2265
        %v2267 = vpop.f32.mrb[0].mxu0
        %v2268 = vpop.f32.mrb[0].mxu0
        %v2269 = vpop.f32.mrb[0].mxu0
        %2270 = vdwg.mxu0
        %vm2271 = vcmask 253952
        %2272 = vst.msk [vmem:[%s420] sm:$0x1] %vm2271, %v2266
        %p2273 = scmp.lt.s32.totalorder %s24, 1
        %s2274 = scalar_select %p2273, %s24, 1
        %s2275 = scalar_lea.vmem %s12, %s2274
        // Predicated region
        $region73: #{clip_loss_forward.4} parent=67 // pred_check
          %p2276 = pneg %p299
        $region74: #{clip_loss_forward.4} parent=67 // pred_check_branch
          %2278 = sbr.rel (%p2276) target = $region76
        $region75: #{clip_loss_forward.4} parent=67 // pred_region
          _
        $region76: #{clip_loss_forward.4} parent=67 // pred_fallthru
          _
      $region68: #{clip_loss_forward.4} parent=5 // pred_fallthru
        _
      %p2279 = scmp.le.s32.totalorder 2, %s19
      // Predicated region
      $region77: #{clip_loss_forward.4} parent=5 // pred_check
        %p2280 = pneg %p2279
      $region78: #{clip_loss_forward.4} parent=5 // pred_check_branch
        %2282 = sbr.rel (%p2280) target = $region80
      $region79: #{clip_loss_forward.4} parent=5 // pred_region
        %s2283 = ssub.s32 %s19, 2
        // Predicated region
        $region81: #{clip_loss_forward.4} parent=79 // pred_check
          %p2284 = pneg %p305
        $region82: #{clip_loss_forward.4} parent=79 // pred_check_branch
          %2286 = sbr.rel (%p2284) target = $region84
        $region83: #{clip_loss_forward.4} parent=79 // pred_region
          %p2287 = scmp.lt.s32.totalorder %s25, 1
          %s2288 = scalar_select %p2287, %s25, 1
          %s2289 = scalar_lea.vmem %s12, %s2288
        $region84: #{clip_loss_forward.4} parent=79 // pred_fallthru
          _
      $region80: #{clip_loss_forward.4} parent=5 // pred_fallthru
        _
    $region6: #{clip_loss_forward.4} parent=1 // loop_footer
      %s23 = sadd.s32 1, %s19
    $region7: #{clip_loss_forward.4} parent=1 // loop_footer_branch
      %18 = sbr.rel target = $region3
    $region8: #{clip_loss_forward.4} parent=1 // loop_exit
      _
    %2290 = vsyncpa [#allocation3], 1
    %s2291 = scalar_lea.sflag [#allocation3], 1
    %2292 = vsyncpa %s2291, 1

// kernel: clip_loss_forward.3
$region0: #{clip_loss_forward.3}
  #allocation0 [shape = 'u32[]', space=smem, size = 0x4, offset = 0x4, fixed_abs, tag = 'smem constant byte address 0x4 - core index']
  #allocation1 [shape = 'u32[144,128]{1,0:T(1,128)}', space=vmem, size = 0x12000, scoped, tag = 'internal scratch']
  %s0 = inlined_call_operand.vmem [shape: f32[2,50,3072], index: 0, kind: input, shape index: {}]
  %s1 = inlined_call_operand.vmem [shape: f32[3072,64], index: 1, kind: input, shape index: {}]
  %s2 = inlined_call_operand.vmem [shape: f32[50,64], index: 2, kind: input, shape index: {}]
  %s3 = inlined_call_operand.vmem [shape: f32[1,64], index: 3, kind: input, shape index: {}]
  %s4 = inlined_call_operand.vmem [shape: f32[1,64], index: 4, kind: input, shape index: {}]
  %s5 = inlined_call_operand.vmem [shape: f32[2,64,192], index: 5, kind: input, shape index: {}]
  %s6 = inlined_call_operand.vmem [shape: f32[2,1,192], index: 6, kind: input, shape index: {}]
  %s7 = inlined_call_operand.vmem [shape: f32[2,64,64], index: 7, kind: input, shape index: {}]
  %s8 = inlined_call_operand.vmem [shape: f32[2,1,64], index: 8, kind: input, shape index: {}]
  %s9 = inlined_call_operand.vmem [shape: f32[2,64,256], index: 9, kind: input, shape index: {}]
  %s10 = inlined_call_operand.vmem [shape: f32[2,1,256], index: 10, kind: input, shape index: {}]
  %s11 = inlined_call_operand.vmem [shape: f32[2,256,64], index: 11, kind: input, shape index: {}]
  %s12 = inlined_call_operand.vmem [shape: f32[2,1,64], index: 12, kind: input, shape index: {}]
  %s13 = inlined_call_operand.vmem [shape: f32[64,32], index: 13, kind: input, shape index: {}]
  %s14 = inlined_call_operand.vmem [shape: f32[1,32], index: 14, kind: input, shape index: {}]
  %s15 = inlined_call_operand.vmem [shape: f32[2,1,32], index: 15, kind: output, shape index: {}]
  %s16 = sld [smem:[#allocation0]]
  $region93: #{clip_loss_forward.3} parent=0
    _
  %s18 = ssub.s32 1, %s16
  %s19 = scalar_select 0, %s18, %s16
  loop: start=0, step=1, limit=4
  $region2: #{clip_loss_forward.3} parent=0 // loop_pre_header
    _
  $region3: #{clip_loss_forward.3} parent=0 // loop_header
    %s21 = sphi 0, %s25
    %p22 = scmp.ge.s32.totalorder %s21, 4
    %s31 = sphi 0, %s33
    %s34 = sphi 0, %s31
    %s35 = sphi 0, %s34
    %s51 = sphi 0, %s35
    %s55 = sphi 0, %s55
    %s57 = sphi 0, %s55
    %s58 = sphi 0, %s57
    %s72 = sphi 0, %s58
    %s76 = sphi 0, %s76
    %s78 = sphi 0, %s76
    %s79 = sphi 0, %s78
    %s93 = sphi 0, %s79
    %s97 = sphi 0, %s97
    %s99 = sphi 0, %s97
    %s100 = sphi 0, %s99
    %s114 = sphi 0, %s100
    %s118 = sphi 0, %s118
    %s120 = sphi 0, %s118
    %s121 = sphi 0, %s120
    %s135 = sphi 0, %s121
    %s139 = sphi 0, %s139
    %s141 = sphi 0, %s139
    %s142 = sphi 0, %s141
    %s156 = sphi 0, %s142
    %s160 = sphi 0, %s160
    %s162 = sphi 0, %s160
    %s163 = sphi 0, %s162
    %s177 = sphi 0, %s163
    %s181 = sphi 0, %s181
    %s183 = sphi 0, %s181
    %s184 = sphi 0, %s183
    %s198 = sphi 0, %s184
    %s202 = sphi 0, %s202
    %s204 = sphi 0, %s202
    %s205 = sphi 0, %s204
    %s219 = sphi 0, %s205
    %s223 = sphi 0, %s223
    %s225 = sphi 0, %s223
    %s226 = sphi 0, %s225
    %s240 = sphi 0, %s226
    %s244 = sphi 0, %s244
    %s246 = sphi 0, %s244
    %s247 = sphi 0, %s246
    %s261 = sphi 0, %s247
    %s265 = sphi 0, %s265
    %s267 = sphi 0, %s265
    %s268 = sphi 0, %s267
    %s282 = sphi 0, %s268
    %s286 = sphi 0, %s286
    %s288 = sphi 0, %s286
    %s289 = sphi 0, %s288
    %s303 = sphi 0, %s289
    %s307 = sphi 0, %s307
    %s309 = sphi 0, %s307
    %s310 = sphi 0, %s309
    %s324 = sphi 0, %s310
    %s328 = sphi 0, %s328
    %s330 = sphi 0, %s328
    %s331 = sphi 0, %s330
    %s345 = sphi 0, %s331
    %s351 = sphi 0, %s353
    %s354 = sphi 0, %s351
    %s355 = sphi 0, %s354
    %s371 = sphi 0, %s355
  $region4: #{clip_loss_forward.3} parent=0 // loop_header_branch
    %24 = sbr.rel (%p22) target = $region8
  $region5: #{clip_loss_forward.3} parent=0 // loop_body
    %s26 = ssub.s32 %s21, 1
    %s27 = ssub.s32 %s21, 2
    %s28 = sadd.s32 %s21, 1
    %s29 = ssub.s32 %s21, %s28
    %p30 = scmp.eq.s32.totalorder %s29, 0
    %s32 = sadd.s32 %s31, 1
    %s33 = scalar_select %p30, %s31, %s32
    %p36 = pneg %p30
    %p37 = scmp.eq.s32.totalorder %s21, 1
    %p38 = por %p36, %p37
    %p39 = scmp.ne.s32.totalorder %s31, %s34
    %p40 = scmp.eq.s32.totalorder %s21, 0
    %p41 = por %p39, %p40
    %p42 = scmp.ne.s32.totalorder %s31, %s34
    %p43 = scmp.eq.s32.totalorder %s26, 1
    %p44 = por %p42, %p43
    %p45 = scmp.ne.s32.totalorder %s34, %s35
    %p46 = scmp.eq.s32.totalorder %s26, 0
    %p47 = por %p45, %p46
    %p48 = scmp.ne.s32.totalorder %s34, %s35
    %p49 = scmp.eq.s32.totalorder %s27, 1
    %p50 = por %p48, %p49
    %p52 = scmp.ne.s32.totalorder %s35, %s51
    %p53 = scmp.eq.s32.totalorder %s27, 0
    %p54 = por %p52, %p53
    %s56 = sadd.s32 %s55, 1
    %p59 = scmp.eq.s32.totalorder %s21, 1
    %p60 = scmp.ne.s32.totalorder %s55, %s57
    %p61 = scmp.eq.s32.totalorder %s21, 0
    %p62 = por %p60, %p61
    %p63 = scmp.ne.s32.totalorder %s55, %s57
    %p64 = scmp.eq.s32.totalorder %s26, 1
    %p65 = por %p63, %p64
    %p66 = scmp.ne.s32.totalorder %s57, %s58
    %p67 = scmp.eq.s32.totalorder %s26, 0
    %p68 = por %p66, %p67
    %p69 = scmp.ne.s32.totalorder %s57, %s58
    %p70 = scmp.eq.s32.totalorder %s27, 1
    %p71 = por %p69, %p70
    %p73 = scmp.ne.s32.totalorder %s58, %s72
    %p74 = scmp.eq.s32.totalorder %s27, 0
    %p75 = por %p73, %p74
    %s77 = sadd.s32 %s76, 1
    %p80 = scmp.eq.s32.totalorder %s21, 1
    %p81 = scmp.ne.s32.totalorder %s76, %s78
    %p82 = scmp.eq.s32.totalorder %s21, 0
    %p83 = por %p81, %p82
    %p84 = scmp.ne.s32.totalorder %s76, %s78
    %p85 = scmp.eq.s32.totalorder %s26, 1
    %p86 = por %p84, %p85
    %p87 = scmp.ne.s32.totalorder %s78, %s79
    %p88 = scmp.eq.s32.totalorder %s26, 0
    %p89 = por %p87, %p88
    %p90 = scmp.ne.s32.totalorder %s78, %s79
    %p91 = scmp.eq.s32.totalorder %s27, 1
    %p92 = por %p90, %p91
    %p94 = scmp.ne.s32.totalorder %s79, %s93
    %p95 = scmp.eq.s32.totalorder %s27, 0
    %p96 = por %p94, %p95
    %s98 = sadd.s32 %s97, 1
    %p101 = scmp.eq.s32.totalorder %s21, 1
    %p102 = scmp.ne.s32.totalorder %s97, %s99
    %p103 = scmp.eq.s32.totalorder %s21, 0
    %p104 = por %p102, %p103
    %p105 = scmp.ne.s32.totalorder %s97, %s99
    %p106 = scmp.eq.s32.totalorder %s26, 1
    %p107 = por %p105, %p106
    %p108 = scmp.ne.s32.totalorder %s99, %s100
    %p109 = scmp.eq.s32.totalorder %s26, 0
    %p110 = por %p108, %p109
    %p111 = scmp.ne.s32.totalorder %s99, %s100
    %p112 = scmp.eq.s32.totalorder %s27, 1
    %p113 = por %p111, %p112
    %p115 = scmp.ne.s32.totalorder %s100, %s114
    %p116 = scmp.eq.s32.totalorder %s27, 0
    %p117 = por %p115, %p116
    %s119 = sadd.s32 %s118, 1
    %p122 = scmp.eq.s32.totalorder %s21, 1
    %p123 = scmp.ne.s32.totalorder %s118, %s120
    %p124 = scmp.eq.s32.totalorder %s21, 0
    %p125 = por %p123, %p124
    %p126 = scmp.ne.s32.totalorder %s118, %s120
    %p127 = scmp.eq.s32.totalorder %s26, 1
    %p128 = por %p126, %p127
    %p129 = scmp.ne.s32.totalorder %s120, %s121
    %p130 = scmp.eq.s32.totalorder %s26, 0
    %p131 = por %p129, %p130
    %p132 = scmp.ne.s32.totalorder %s120, %s121
    %p133 = scmp.eq.s32.totalorder %s27, 1
    %p134 = por %p132, %p133
    %p136 = scmp.ne.s32.totalorder %s121, %s135
    %p137 = scmp.eq.s32.totalorder %s27, 0
    %p138 = por %p136, %p137
    %s140 = sadd.s32 %s139, 1
    %p143 = scmp.eq.s32.totalorder %s21, 1
    %p144 = scmp.ne.s32.totalorder %s139, %s141
    %p145 = scmp.eq.s32.totalorder %s21, 0
    %p146 = por %p144, %p145
    %p147 = scmp.ne.s32.totalorder %s139, %s141
    %p148 = scmp.eq.s32.totalorder %s26, 1
    %p149 = por %p147, %p148
    %p150 = scmp.ne.s32.totalorder %s141, %s142
    %p151 = scmp.eq.s32.totalorder %s26, 0
    %p152 = por %p150, %p151
    %p153 = scmp.ne.s32.totalorder %s141, %s142
    %p154 = scmp.eq.s32.totalorder %s27, 1
    %p155 = por %p153, %p154
    %p157 = scmp.ne.s32.totalorder %s142, %s156
    %p158 = scmp.eq.s32.totalorder %s27, 0
    %p159 = por %p157, %p158
    %s161 = sadd.s32 %s160, 1
    %p164 = scmp.eq.s32.totalorder %s21, 1
    %p165 = scmp.ne.s32.totalorder %s160, %s162
    %p166 = scmp.eq.s32.totalorder %s21, 0
    %p167 = por %p165, %p166
    %p168 = scmp.ne.s32.totalorder %s160, %s162
    %p169 = scmp.eq.s32.totalorder %s26, 1
    %p170 = por %p168, %p169
    %p171 = scmp.ne.s32.totalorder %s162, %s163
    %p172 = scmp.eq.s32.totalorder %s26, 0
    %p173 = por %p171, %p172
    %p174 = scmp.ne.s32.totalorder %s162, %s163
    %p175 = scmp.eq.s32.totalorder %s27, 1
    %p176 = por %p174, %p175
    %p178 = scmp.ne.s32.totalorder %s163, %s177
    %p179 = scmp.eq.s32.totalorder %s27, 0
    %p180 = por %p178, %p179
    %s182 = sadd.s32 %s181, 1
    %p185 = scmp.eq.s32.totalorder %s21, 1
    %p186 = scmp.ne.s32.totalorder %s181, %s183
    %p187 = scmp.eq.s32.totalorder %s21, 0
    %p188 = por %p186, %p187
    %p189 = scmp.ne.s32.totalorder %s181, %s183
    %p190 = scmp.eq.s32.totalorder %s26, 1
    %p191 = por %p189, %p190
    %p192 = scmp.ne.s32.totalorder %s183, %s184
    %p193 = scmp.eq.s32.totalorder %s26, 0
    %p194 = por %p192, %p193
    %p195 = scmp.ne.s32.totalorder %s183, %s184
    %p196 = scmp.eq.s32.totalorder %s27, 1
    %p197 = por %p195, %p196
    %p199 = scmp.ne.s32.totalorder %s184, %s198
    %p200 = scmp.eq.s32.totalorder %s27, 0
    %p201 = por %p199, %p200
    %s203 = sadd.s32 %s202, 1
    %p206 = scmp.eq.s32.totalorder %s21, 1
    %p207 = scmp.ne.s32.totalorder %s202, %s204
    %p208 = scmp.eq.s32.totalorder %s21, 0
    %p209 = por %p207, %p208
    %p210 = scmp.ne.s32.totalorder %s202, %s204
    %p211 = scmp.eq.s32.totalorder %s26, 1
    %p212 = por %p210, %p211
    %p213 = scmp.ne.s32.totalorder %s204, %s205
    %p214 = scmp.eq.s32.totalorder %s26, 0
    %p215 = por %p213, %p214
    %p216 = scmp.ne.s32.totalorder %s204, %s205
    %p217 = scmp.eq.s32.totalorder %s27, 1
    %p218 = por %p216, %p217
    %p220 = scmp.ne.s32.totalorder %s205, %s219
    %p221 = scmp.eq.s32.totalorder %s27, 0
    %p222 = por %p220, %p221
    %s224 = sadd.s32 %s223, 1
    %p227 = scmp.eq.s32.totalorder %s21, 1
    %p228 = scmp.ne.s32.totalorder %s223, %s225
    %p229 = scmp.eq.s32.totalorder %s21, 0
    %p230 = por %p228, %p229
    %p231 = scmp.ne.s32.totalorder %s223, %s225
    %p232 = scmp.eq.s32.totalorder %s26, 1
    %p233 = por %p231, %p232
    %p234 = scmp.ne.s32.totalorder %s225, %s226
    %p235 = scmp.eq.s32.totalorder %s26, 0
    %p236 = por %p234, %p235
    %p237 = scmp.ne.s32.totalorder %s225, %s226
    %p238 = scmp.eq.s32.totalorder %s27, 1
    %p239 = por %p237, %p238
    %p241 = scmp.ne.s32.totalorder %s226, %s240
    %p242 = scmp.eq.s32.totalorder %s27, 0
    %p243 = por %p241, %p242
    %s245 = sadd.s32 %s244, 1
    %p248 = scmp.eq.s32.totalorder %s21, 1
    %p249 = scmp.ne.s32.totalorder %s244, %s246
    %p250 = scmp.eq.s32.totalorder %s21, 0
    %p251 = por %p249, %p250
    %p252 = scmp.ne.s32.totalorder %s244, %s246
    %p253 = scmp.eq.s32.totalorder %s26, 1
    %p254 = por %p252, %p253
    %p255 = scmp.ne.s32.totalorder %s246, %s247
    %p256 = scmp.eq.s32.totalorder %s26, 0
    %p257 = por %p255, %p256
    %p258 = scmp.ne.s32.totalorder %s246, %s247
    %p259 = scmp.eq.s32.totalorder %s27, 1
    %p260 = por %p258, %p259
    %p262 = scmp.ne.s32.totalorder %s247, %s261
    %p263 = scmp.eq.s32.totalorder %s27, 0
    %p264 = por %p262, %p263
    %s266 = sadd.s32 %s265, 1
    %p269 = scmp.eq.s32.totalorder %s21, 1
    %p270 = scmp.ne.s32.totalorder %s265, %s267
    %p271 = scmp.eq.s32.totalorder %s21, 0
    %p272 = por %p270, %p271
    %p273 = scmp.ne.s32.totalorder %s265, %s267
    %p274 = scmp.eq.s32.totalorder %s26, 1
    %p275 = por %p273, %p274
    %p276 = scmp.ne.s32.totalorder %s267, %s268
    %p277 = scmp.eq.s32.totalorder %s26, 0
    %p278 = por %p276, %p277
    %p279 = scmp.ne.s32.totalorder %s267, %s268
    %p280 = scmp.eq.s32.totalorder %s27, 1
    %p281 = por %p279, %p280
    %p283 = scmp.ne.s32.totalorder %s268, %s282
    %p284 = scmp.eq.s32.totalorder %s27, 0
    %p285 = por %p283, %p284
    %s287 = sadd.s32 %s286, 1
    %p290 = scmp.eq.s32.totalorder %s21, 1
    %p291 = scmp.ne.s32.totalorder %s286, %s288
    %p292 = scmp.eq.s32.totalorder %s21, 0
    %p293 = por %p291, %p292
    %p294 = scmp.ne.s32.totalorder %s286, %s288
    %p295 = scmp.eq.s32.totalorder %s26, 1
    %p296 = por %p294, %p295
    %p297 = scmp.ne.s32.totalorder %s288, %s289
    %p298 = scmp.eq.s32.totalorder %s26, 0
    %p299 = por %p297, %p298
    %p300 = scmp.ne.s32.totalorder %s288, %s289
    %p301 = scmp.eq.s32.totalorder %s27, 1
    %p302 = por %p300, %p301
    %p304 = scmp.ne.s32.totalorder %s289, %s303
    %p305 = scmp.eq.s32.totalorder %s27, 0
    %p306 = por %p304, %p305
    %s308 = sadd.s32 %s307, 1
    %p311 = scmp.eq.s32.totalorder %s21, 1
    %p312 = scmp.ne.s32.totalorder %s307, %s309
    %p313 = scmp.eq.s32.totalorder %s21, 0
    %p314 = por %p312, %p313
    %p315 = scmp.ne.s32.totalorder %s307, %s309
    %p316 = scmp.eq.s32.totalorder %s26, 1
    %p317 = por %p315, %p316
    %p318 = scmp.ne.s32.totalorder %s309, %s310
    %p319 = scmp.eq.s32.totalorder %s26, 0
    %p320 = por %p318, %p319
    %p321 = scmp.ne.s32.totalorder %s309, %s310
    %p322 = scmp.eq.s32.totalorder %s27, 1
    %p323 = por %p321, %p322
    %p325 = scmp.ne.s32.totalorder %s310, %s324
    %p326 = scmp.eq.s32.totalorder %s27, 0
    %p327 = por %p325, %p326
    %s329 = sadd.s32 %s328, 1
    %p332 = scmp.eq.s32.totalorder %s21, 1
    %p333 = scmp.ne.s32.totalorder %s328, %s330
    %p334 = scmp.eq.s32.totalorder %s21, 0
    %p335 = por %p333, %p334
    %p336 = scmp.ne.s32.totalorder %s328, %s330
    %p337 = scmp.eq.s32.totalorder %s26, 1
    %p338 = por %p336, %p337
    %p339 = scmp.ne.s32.totalorder %s330, %s331
    %p340 = scmp.eq.s32.totalorder %s26, 0
    %p341 = por %p339, %p340
    %p342 = scmp.ne.s32.totalorder %s330, %s331
    %p343 = scmp.eq.s32.totalorder %s27, 1
    %p344 = por %p342, %p343
    %p346 = scmp.ne.s32.totalorder %s331, %s345
    %p347 = scmp.eq.s32.totalorder %s27, 0
    %p348 = por %p346, %p347
    %s349 = ssub.s32 %s21, %s28
    %p350 = scmp.eq.s32.totalorder %s349, 0
    %s352 = sadd.s32 %s351, 1
    %s353 = scalar_select %p350, %s351, %s352
    %p356 = pneg %p350
    %p357 = scmp.eq.s32.totalorder %s21, 1
    %p358 = por %p356, %p357
    %p359 = scmp.ne.s32.totalorder %s351, %s354
    %p360 = scmp.eq.s32.totalorder %s21, 0
    %p361 = por %p359, %p360
    %p362 = scmp.ne.s32.totalorder %s351, %s354
    %p363 = scmp.eq.s32.totalorder %s26, 1
    %p364 = por %p362, %p363
    %p365 = scmp.ne.s32.totalorder %s354, %s355
    %p366 = scmp.eq.s32.totalorder %s26, 0
    %p367 = por %p365, %p366
    %p368 = scmp.ne.s32.totalorder %s354, %s355
    %p369 = scmp.eq.s32.totalorder %s27, 1
    %p370 = por %p368, %p369
    %p372 = scmp.ne.s32.totalorder %s355, %s371
    %p373 = scmp.eq.s32.totalorder %s27, 0
    %p374 = por %p372, %p373
    %p375 = scmp.le.s32.totalorder 1, %s21
    %p376 = scmp.lt.s32.totalorder %s21, 3
    %p377 = pnand %p375, %p376
    %p378 = pneg %p377
    // Predicated region
    $region9: #{clip_loss_forward.3} parent=5 // pred_check
      _
    $region10: #{clip_loss_forward.3} parent=5 // pred_check_branch
      %380 = sbr.rel (%p377) target = $region12
    $region11: #{clip_loss_forward.3} parent=5 // pred_region
      %s381 = ssub.s32 %s21, 1
      // Predicated region
      $region13: #{clip_loss_forward.3} parent=11 // pred_check
        %p382 = pneg %p68
      $region14: #{clip_loss_forward.3} parent=11 // pred_check_branch
        %384 = sbr.rel (%p382) target = $region16
      $region15: #{clip_loss_forward.3} parent=11 // pred_region
        _
      $region16: #{clip_loss_forward.3} parent=11 // pred_fallthru
        _
      // Predicated region
      $region17: #{clip_loss_forward.3} parent=11 // pred_check
        %p385 = pneg %p89
      $region18: #{clip_loss_forward.3} parent=11 // pred_check_branch
        %387 = sbr.rel (%p385) target = $region20
      $region19: #{clip_loss_forward.3} parent=11 // pred_region
        _
      $region20: #{clip_loss_forward.3} parent=11 // pred_fallthru
        _
      // Predicated region
      $region21: #{clip_loss_forward.3} parent=11 // pred_check
        %p388 = pneg %p110
      $region22: #{clip_loss_forward.3} parent=11 // pred_check_branch
        %390 = sbr.rel (%p388) target = $region24
      $region23: #{clip_loss_forward.3} parent=11 // pred_region
        _
      $region24: #{clip_loss_forward.3} parent=11 // pred_fallthru
        _
      // Predicated region
      $region25: #{clip_loss_forward.3} parent=11 // pred_check
        %p391 = pneg %p131
      $region26: #{clip_loss_forward.3} parent=11 // pred_check_branch
        %393 = sbr.rel (%p391) target = $region28
      $region27: #{clip_loss_forward.3} parent=11 // pred_region
        _
      $region28: #{clip_loss_forward.3} parent=11 // pred_fallthru
        _
      // Predicated region
      $region29: #{clip_loss_forward.3} parent=11 // pred_check
        %p394 = pneg %p152
      $region30: #{clip_loss_forward.3} parent=11 // pred_check_branch
        %396 = sbr.rel (%p394) target = $region32
      $region31: #{clip_loss_forward.3} parent=11 // pred_region
        _
      $region32: #{clip_loss_forward.3} parent=11 // pred_fallthru
        _
      // Predicated region
      $region33: #{clip_loss_forward.3} parent=11 // pred_check
        %p397 = pneg %p173
      $region34: #{clip_loss_forward.3} parent=11 // pred_check_branch
        %399 = sbr.rel (%p397) target = $region36
      $region35: #{clip_loss_forward.3} parent=11 // pred_region
        _
      $region36: #{clip_loss_forward.3} parent=11 // pred_fallthru
        _
      // Predicated region
      $region37: #{clip_loss_forward.3} parent=11 // pred_check
        %p400 = pneg %p194
      $region38: #{clip_loss_forward.3} parent=11 // pred_check_branch
        %402 = sbr.rel (%p400) target = $region40
      $region39: #{clip_loss_forward.3} parent=11 // pred_region
        _
      $region40: #{clip_loss_forward.3} parent=11 // pred_fallthru
        _
      // Predicated region
      $region41: #{clip_loss_forward.3} parent=11 // pred_check
        %p403 = pneg %p215
      $region42: #{clip_loss_forward.3} parent=11 // pred_check_branch
        %405 = sbr.rel (%p403) target = $region44
      $region43: #{clip_loss_forward.3} parent=11 // pred_region
        _
      $region44: #{clip_loss_forward.3} parent=11 // pred_fallthru
        _
      // Predicated region
      $region45: #{clip_loss_forward.3} parent=11 // pred_check
        %p406 = pneg %p236
      $region46: #{clip_loss_forward.3} parent=11 // pred_check_branch
        %408 = sbr.rel (%p406) target = $region48
      $region47: #{clip_loss_forward.3} parent=11 // pred_region
        _
      $region48: #{clip_loss_forward.3} parent=11 // pred_fallthru
        _
      // Predicated region
      $region49: #{clip_loss_forward.3} parent=11 // pred_check
        %p409 = pneg %p257
      $region50: #{clip_loss_forward.3} parent=11 // pred_check_branch
        %411 = sbr.rel (%p409) target = $region52
      $region51: #{clip_loss_forward.3} parent=11 // pred_region
        _
      $region52: #{clip_loss_forward.3} parent=11 // pred_fallthru
        _
      // Predicated region
      $region53: #{clip_loss_forward.3} parent=11 // pred_check
        %p412 = pneg %p278
      $region54: #{clip_loss_forward.3} parent=11 // pred_check_branch
        %414 = sbr.rel (%p412) target = $region56
      $region55: #{clip_loss_forward.3} parent=11 // pred_region
        _
      $region56: #{clip_loss_forward.3} parent=11 // pred_fallthru
        _
      // Predicated region
      $region57: #{clip_loss_forward.3} parent=11 // pred_check
        %p415 = pneg %p299
      $region58: #{clip_loss_forward.3} parent=11 // pred_check_branch
        %417 = sbr.rel (%p415) target = $region60
      $region59: #{clip_loss_forward.3} parent=11 // pred_region
        _
      $region60: #{clip_loss_forward.3} parent=11 // pred_fallthru
        _
      // Predicated region
      $region61: #{clip_loss_forward.3} parent=11 // pred_check
        %p418 = pneg %p320
      $region62: #{clip_loss_forward.3} parent=11 // pred_check_branch
        %420 = sbr.rel (%p418) target = $region64
      $region63: #{clip_loss_forward.3} parent=11 // pred_region
        _
      $region64: #{clip_loss_forward.3} parent=11 // pred_fallthru
        _
      // Predicated region
      $region65: #{clip_loss_forward.3} parent=11 // pred_check
        %p421 = pneg %p341
      $region66: #{clip_loss_forward.3} parent=11 // pred_check_branch
        %423 = sbr.rel (%p421) target = $region68
      $region67: #{clip_loss_forward.3} parent=11 // pred_region
        _
      $region68: #{clip_loss_forward.3} parent=11 // pred_fallthru
        _
    $region12: #{clip_loss_forward.3} parent=5 // pred_fallthru
      _
    %p424 = scmp.lt.s32.totalorder %s21, 2
    // Predicated region
    $region69: #{clip_loss_forward.3} parent=5 // pred_check
      %p425 = pneg %p424
    $region70: #{clip_loss_forward.3} parent=5 // pred_check_branch
      %427 = sbr.rel (%p425) target = $region72
    $region71: #{clip_loss_forward.3} parent=5 // pred_region
      // Predicated region
      $region73: #{clip_loss_forward.3} parent=71 // pred_check
        %p428 = pneg %p41
      $region74: #{clip_loss_forward.3} parent=71 // pred_check_branch
        %430 = sbr.rel (%p428) target = $region76
      $region75: #{clip_loss_forward.3} parent=71 // pred_region
        %p431 = scmp.lt.s32.totalorder %s21, 1
        %s432 = scalar_select %p431, %s21, 1
        %s433 = smul.addr %s432, 168
        %s434 = smul.addr %s433, 8
        %s435 = scalar_lea.vmem %s0, %s434
      $region76: #{clip_loss_forward.3} parent=71 // pred_fallthru
        _
    $region72: #{clip_loss_forward.3} parent=5 // pred_fallthru
      _
    %p436 = scmp.le.s32.totalorder 1, %s21
    %p437 = scmp.lt.s32.totalorder %s21, 3
    %p438 = pnand %p436, %p437
    %p439 = pneg %p438
    // Predicated region
    $region77: #{clip_loss_forward.3} parent=5 // pred_check
      _
    $region78: #{clip_loss_forward.3} parent=5 // pred_check_branch
      %441 = sbr.rel (%p438) target = $region80
    $region79: #{clip_loss_forward.3} parent=5 // pred_region
      %s442 = ssub.s32 %s21, 1
      %p443 = scmp.lt.s32.totalorder %s26, 1
      %s444 = scalar_select %p443, %s26, 1
      %s445 = smul.addr %s444, 168
      %s446 = smul.addr %s445, 8
      %s447 = scalar_lea.vmem %s0, %s446
      %p448 = pneg %p47
      %p449 = pneg %p44
      %p450 = pneg %p68
      %p451 = pneg %p65
      %p452 = pneg %p89
      %p453 = pneg %p86
      %p454 = pneg %p110
      %p455 = pneg %p107
      %p456 = pneg %p131
      %p457 = pneg %p128
      %p458 = pneg %p152
      %p459 = pneg %p149
      %p460 = pneg %p173
      %p461 = pneg %p170
      %p462 = pneg %p194
      %p463 = pneg %p191
      %p464 = pneg %p215
      %p465 = pneg %p212
      %p466 = pneg %p236
      %p467 = pneg %p233
      %p468 = pneg %p257
      %p469 = pneg %p254
      %p470 = pneg %p278
      %p471 = pneg %p275
      %p472 = pneg %p299
      %p473 = pneg %p296
      %p474 = pneg %p320
      %p475 = pneg %p317
      %p476 = pneg %p341
      %p477 = pneg %p338
      %p478 = pneg %p367
      %p479 = pneg %p364
      %p480 = scmp.lt.s32.totalorder %s26, 1
      %s481 = scalar_select %p480, %s26, 1
      %s482 = scalar_lea.vmem %s15, %s481
      %p483 = scmp.lt.s32.totalorder %s26, 1
      %s484 = scalar_select %p483, %s26, 1
      %s485 = smul.addr %s484, 168
      %s486 = smul.addr %s485, 8
      %s487 = scalar_lea.vmem %s0, %s486
      %p488 = scmp.lt.s32.totalorder %s26, 1
      %s489 = scalar_select %p488, %s26, 1
      %s490 = scalar_lea.vmem %s15, %s489
      %v492 = vld [vmem:[%s487] sm:$0xff]
      %v493 = vld [vmem:[%s487 + $0x8] sm:$0xff]
      %v494 = vld [vmem:[%s487 + $0x10] sm:$0xff]
      %v495 = vld [vmem:[%s487 + $0x18] sm:$0xff]
      %v496 = vld [vmem:[%s487 + $0x20] sm:$0xff]
      %v497 = vld [vmem:[%s487 + $0x28] sm:$0xff]
      %v498 = vld [vmem:[%s487 + $0x30] sm:$0xff]
      %v499 = vld [vmem:[%s487 + $0x38] sm:$0xff]
      %v500 = vld [vmem:[%s487 + $0x40] sm:$0xff]
      %v501 = vld [vmem:[%s487 + $0x48] sm:$0xff]
      %v502 = vld [vmem:[%s487 + $0x50] sm:$0xff]
      %v503 = vld [vmem:[%s487 + $0x58] sm:$0xff]
      %v504 = vld [vmem:[%s487 + $0x60] sm:$0xff]
      %v505 = vld [vmem:[%s487 + $0x68] sm:$0xff]
      %v506 = vld [vmem:[%s487 + $0x70] sm:$0xff]
      %v507 = vld [vmem:[%s487 + $0x78] sm:$0xff]
      %v508 = vld [vmem:[%s487 + $0x80] sm:$0xff]
      %v509 = vld [vmem:[%s487 + $0x88] sm:$0xff]
      %v510 = vld [vmem:[%s487 + $0x90] sm:$0xff]
      %v511 = vld [vmem:[%s487 + $0x98] sm:$0xff]
      %v512 = vld [vmem:[%s487 + $0xa0] sm:$0xff]
      %v513 = vld [vmem:[%s487 + $0xa8] sm:$0xff]
      %v514 = vld [vmem:[%s487 + $0xb0] sm:$0xff]
      %v515 = vld [vmem:[%s487 + $0xb8] sm:$0xff]
      %v516 = vld [vmem:[%s487 + $0xc0] sm:$0xff]
      %v517 = vld [vmem:[%s487 + $0xc8] sm:$0xff]
      %v518 = vld [vmem:[%s487 + $0xd0] sm:$0xff]
      %v519 = vld [vmem:[%s487 + $0xd8] sm:$0xff]
      %v520 = vld [vmem:[%s487 + $0xe0] sm:$0xff]
      %v521 = vld [vmem:[%s487 + $0xe8] sm:$0xff]
      %v522 = vld [vmem:[%s487 + $0xf0] sm:$0xff]
      %v523 = vld [vmem:[%s487 + $0xf8] sm:$0xff]
      %v524 = vld [vmem:[%s487 + $0x100] sm:$0xff]
      %v525 = vld [vmem:[%s487 + $0x108] sm:$0xff]
      %v526 = vld [vmem:[%s487 + $0x110] sm:$0xff]
      %v527 = vld [vmem:[%s487 + $0x118] sm:$0xff]
      %v528 = vld [vmem:[%s487 + $0x120] sm:$0xff]
      %v529 = vld [vmem:[%s487 + $0x128] sm:$0xff]
      %v530 = vld [vmem:[%s487 + $0x130] sm:$0xff]
      %v531 = vld [vmem:[%s487 + $0x138] sm:$0xff]
      %v532 = vld [vmem:[%s487 + $0x140] sm:$0xff]
      %v533 = vld [vmem:[%s487 + $0x148] sm:$0xff]
      %v534 = vld [vmem:[%s487 + $0x150] sm:$0xff]
      %v535 = vld [vmem:[%s487 + $0x158] sm:$0xff]
      %v536 = vld [vmem:[%s487 + $0x160] sm:$0xff]
      %v537 = vld [vmem:[%s487 + $0x168] sm:$0xff]
      %v538 = vld [vmem:[%s487 + $0x170] sm:$0xff]
      %v539 = vld [vmem:[%s487 + $0x178] sm:$0xff]
      %v540 = vld [vmem:[%s487 + $0x180] sm:$0xff]
      %v541 = vld [vmem:[%s487 + $0x188] sm:$0xff]
      %v542 = vld [vmem:[%s487 + $0x190] sm:$0xff]
      %v543 = vld [vmem:[%s487 + $0x198] sm:$0xff]
      %v544 = vld [vmem:[%s487 + $0x1a0] sm:$0xff]
      %v545 = vld [vmem:[%s487 + $0x1a8] sm:$0xff]
      %v546 = vld [vmem:[%s487 + $0x1b0] sm:$0xff]
      %v547 = vld [vmem:[%s487 + $0x1b8] sm:$0xff]
      %v548 = vld [vmem:[%s487 + $0x1c0] sm:$0xff]
      %v549 = vld [vmem:[%s487 + $0x1c8] sm:$0xff]
      %v550 = vld [vmem:[%s487 + $0x1d0] sm:$0xff]
      %v551 = vld [vmem:[%s487 + $0x1d8] sm:$0xff]
      %v552 = vld [vmem:[%s487 + $0x1e0] sm:$0xff]
      %v553 = vld [vmem:[%s487 + $0x1e8] sm:$0xff]
      %v554 = vld [vmem:[%s487 + $0x1f0] sm:$0xff]
      %v555 = vld [vmem:[%s487 + $0x1f8] sm:$0xff]
      %v556 = vld [vmem:[%s487 + $0x200] sm:$0xff]
      %v557 = vld [vmem:[%s487 + $0x208] sm:$0xff]
      %v558 = vld [vmem:[%s487 + $0x210] sm:$0xff]
      %v559 = vld [vmem:[%s487 + $0x218] sm:$0xff]
      %v560 = vld [vmem:[%s487 + $0x220] sm:$0xff]
      %v561 = vld [vmem:[%s487 + $0x228] sm:$0xff]
      %v562 = vld [vmem:[%s487 + $0x230] sm:$0xff]
      %v563 = vld [vmem:[%s487 + $0x238] sm:$0xff]
      %v564 = vld [vmem:[%s487 + $0x240] sm:$0xff]
      %v565 = vld [vmem:[%s487 + $0x248] sm:$0xff]
      %v566 = vld [vmem:[%s487 + $0x250] sm:$0xff]
      %v567 = vld [vmem:[%s487 + $0x258] sm:$0xff]
      %v568 = vld [vmem:[%s487 + $0x260] sm:$0xff]
      %v569 = vld [vmem:[%s487 + $0x268] sm:$0xff]
      %v570 = vld [vmem:[%s487 + $0x270] sm:$0xff]
      %v571 = vld [vmem:[%s487 + $0x278] sm:$0xff]
      %v572 = vld [vmem:[%s487 + $0x280] sm:$0xff]
      %v573 = vld [vmem:[%s487 + $0x288] sm:$0xff]
      %v574 = vld [vmem:[%s487 + $0x290] sm:$0xff]
      %v575 = vld [vmem:[%s487 + $0x298] sm:$0xff]
      %v576 = vld [vmem:[%s487 + $0x2a0] sm:$0xff]
      %v577 = vld [vmem:[%s487 + $0x2a8] sm:$0xff]
      %v578 = vld [vmem:[%s487 + $0x2b0] sm:$0xff]
      %v579 = vld [vmem:[%s487 + $0x2b8] sm:$0xff]
      %v580 = vld [vmem:[%s487 + $0x2c0] sm:$0xff]
      %v581 = vld [vmem:[%s487 + $0x2c8] sm:$0xff]
      %v582 = vld [vmem:[%s487 + $0x2d0] sm:$0xff]
      %v583 = vld [vmem:[%s487 + $0x2d8] sm:$0xff]
      %v584 = vld [vmem:[%s487 + $0x2e0] sm:$0xff]
      %v585 = vld [vmem:[%s487 + $0x2e8] sm:$0xff]
      %v586 = vld [vmem:[%s487 + $0x2f0] sm:$0xff]
      %v587 = vld [vmem:[%s487 + $0x2f8] sm:$0xff]
      %v588 = vld [vmem:[%s487 + $0x300] sm:$0xff]
      %v589 = vld [vmem:[%s487 + $0x308] sm:$0xff]
      %v590 = vld [vmem:[%s487 + $0x310] sm:$0xff]
      %v591 = vld [vmem:[%s487 + $0x318] sm:$0xff]
      %v592 = vld [vmem:[%s487 + $0x320] sm:$0xff]
      %v593 = vld [vmem:[%s487 + $0x328] sm:$0xff]
      %v594 = vld [vmem:[%s487 + $0x330] sm:$0xff]
      %v595 = vld [vmem:[%s487 + $0x338] sm:$0xff]
      %v596 = vld [vmem:[%s487 + $0x340] sm:$0xff]
      %v597 = vld [vmem:[%s487 + $0x348] sm:$0xff]
      %v598 = vld [vmem:[%s487 + $0x350] sm:$0xff]
      %v599 = vld [vmem:[%s487 + $0x358] sm:$0xff]
      %v600 = vld [vmem:[%s487 + $0x360] sm:$0xff]
      %v601 = vld [vmem:[%s487 + $0x368] sm:$0xff]
      %v602 = vld [vmem:[%s487 + $0x370] sm:$0xff]
      %v603 = vld [vmem:[%s487 + $0x378] sm:$0xff]
      %v604 = vld [vmem:[%s487 + $0x380] sm:$0xff]
      %v605 = vld [vmem:[%s487 + $0x388] sm:$0xff]
      %v606 = vld [vmem:[%s487 + $0x390] sm:$0xff]
      %v607 = vld [vmem:[%s487 + $0x398] sm:$0xff]
      %v608 = vld [vmem:[%s487 + $0x3a0] sm:$0xff]
      %v609 = vld [vmem:[%s487 + $0x3a8] sm:$0xff]
      %v610 = vld [vmem:[%s487 + $0x3b0] sm:$0xff]
      %v611 = vld [vmem:[%s487 + $0x3b8] sm:$0xff]
      %v612 = vld [vmem:[%s487 + $0x3c0] sm:$0xff]
      %v613 = vld [vmem:[%s487 + $0x3c8] sm:$0xff]
      %v614 = vld [vmem:[%s487 + $0x3d0] sm:$0xff]
      %v615 = vld [vmem:[%s487 + $0x3d8] sm:$0xff]
      %v616 = vld [vmem:[%s487 + $0x3e0] sm:$0xff]
      %v617 = vld [vmem:[%s487 + $0x3e8] sm:$0xff]
      %v618 = vld [vmem:[%s487 + $0x3f0] sm:$0xff]
      %v619 = vld [vmem:[%s487 + $0x3f8] sm:$0xff]
      %v620 = vld [vmem:[%s487 + $0x400] sm:$0xff]
      %v621 = vld [vmem:[%s487 + $0x408] sm:$0xff]
      %v622 = vld [vmem:[%s487 + $0x410] sm:$0xff]
      %v623 = vld [vmem:[%s487 + $0x418] sm:$0xff]
      %v624 = vld [vmem:[%s487 + $0x420] sm:$0xff]
      %v625 = vld [vmem:[%s487 + $0x428] sm:$0xff]
      %v626 = vld [vmem:[%s487 + $0x430] sm:$0xff]
      %v627 = vld [vmem:[%s487 + $0x438] sm:$0xff]
      %v628 = vld [vmem:[%s487 + $0x440] sm:$0xff]
      %v629 = vld [vmem:[%s487 + $0x448] sm:$0xff]
      %v630 = vld [vmem:[%s487 + $0x450] sm:$0xff]
      %v631 = vld [vmem:[%s487 + $0x458] sm:$0xff]
      %v632 = vld [vmem:[%s487 + $0x460] sm:$0xff]
      %v633 = vld [vmem:[%s487 + $0x468] sm:$0xff]
      %v634 = vld [vmem:[%s487 + $0x470] sm:$0xff]
      %v635 = vld [vmem:[%s487 + $0x478] sm:$0xff]
      %v636 = vld [vmem:[%s487 + $0x480] sm:$0x3]
      %v637 = vld [vmem:[%s487 + $0x488] sm:$0x3]
      %v638 = vld [vmem:[%s487 + $0x490] sm:$0x3]
      %v639 = vld [vmem:[%s487 + $0x498] sm:$0x3]
      %v640 = vld [vmem:[%s487 + $0x4a0] sm:$0x3]
      %v641 = vld [vmem:[%s487 + $0x4a8] sm:$0x3]
      %v642 = vld [vmem:[%s487 + $0x4b0] sm:$0x3]
      %v643 = vld [vmem:[%s487 + $0x4b8] sm:$0x3]
      %v644 = vld [vmem:[%s487 + $0x4c0] sm:$0x3]
      %v645 = vld [vmem:[%s487 + $0x4c8] sm:$0x3]
      %v646 = vld [vmem:[%s487 + $0x4d0] sm:$0x3]
      %v647 = vld [vmem:[%s487 + $0x4d8] sm:$0x3]
      %v648 = vld [vmem:[%s487 + $0x4e0] sm:$0x3]
      %v649 = vld [vmem:[%s487 + $0x4e8] sm:$0x3]
      %v650 = vld [vmem:[%s487 + $0x4f0] sm:$0x3]
      %v651 = vld [vmem:[%s487 + $0x4f8] sm:$0x3]
      %v652 = vld [vmem:[%s487 + $0x500] sm:$0x3]
      %v653 = vld [vmem:[%s487 + $0x508] sm:$0x3]
      %v654 = vld [vmem:[%s487 + $0x510] sm:$0x3]
      %v655 = vld [vmem:[%s487 + $0x518] sm:$0x3]
      %v656 = vld [vmem:[%s487 + $0x520] sm:$0x3]
      %v657 = vld [vmem:[%s487 + $0x528] sm:$0x3]
      %v658 = vld [vmem:[%s487 + $0x530] sm:$0x3]
      %v659 = vld [vmem:[%s487 + $0x538] sm:$0x3]
      %v660 = vld [vmem:[%s1] sm:$0xff]
      %v661 = vld [vmem:[%s1 + $0x8] sm:$0xff]
      %v662 = vld [vmem:[%s1 + $0x10] sm:$0xff]
      %v663 = vld [vmem:[%s1 + $0x18] sm:$0xff]
      %v664 = vld [vmem:[%s1 + $0x20] sm:$0xff]
      %v665 = vld [vmem:[%s1 + $0x28] sm:$0xff]
      %v666 = vld [vmem:[%s1 + $0x30] sm:$0xff]
      %v667 = vld [vmem:[%s1 + $0x38] sm:$0xff]
      %v668 = vld [vmem:[%s1 + $0x40] sm:$0xff]
      %v669 = vld [vmem:[%s1 + $0x48] sm:$0xff]
      %v670 = vld [vmem:[%s1 + $0x50] sm:$0xff]
      %v671 = vld [vmem:[%s1 + $0x58] sm:$0xff]
      %v672 = vld [vmem:[%s1 + $0x60] sm:$0xff]
      %v673 = vld [vmem:[%s1 + $0x68] sm:$0xff]
      %v674 = vld [vmem:[%s1 + $0x70] sm:$0xff]
      %v675 = vld [vmem:[%s1 + $0x78] sm:$0xff]
      %v676 = vld [vmem:[%s1 + $0x80] sm:$0xff]
      %v677 = vld [vmem:[%s1 + $0x88] sm:$0xff]
      %v678 = vld [vmem:[%s1 + $0x90] sm:$0xff]
      %v679 = vld [vmem:[%s1 + $0x98] sm:$0xff]
      %v680 = vld [vmem:[%s1 + $0xa0] sm:$0xff]
      %v681 = vld [vmem:[%s1 + $0xa8] sm:$0xff]
      %v682 = vld [vmem:[%s1 + $0xb0] sm:$0xff]
      %v683 = vld [vmem:[%s1 + $0xb8] sm:$0xff]
      %v684 = vld [vmem:[%s1 + $0xc0] sm:$0xff]
      %v685 = vld [vmem:[%s1 + $0xc8] sm:$0xff]
      %v686 = vld [vmem:[%s1 + $0xd0] sm:$0xff]
      %v687 = vld [vmem:[%s1 + $0xd8] sm:$0xff]
      %v688 = vld [vmem:[%s1 + $0xe0] sm:$0xff]
      %v689 = vld [vmem:[%s1 + $0xe8] sm:$0xff]
      %v690 = vld [vmem:[%s1 + $0xf0] sm:$0xff]
      %v691 = vld [vmem:[%s1 + $0xf8] sm:$0xff]
      %v692 = vld [vmem:[%s1 + $0x100] sm:$0xff]
      %v693 = vld [vmem:[%s1 + $0x108] sm:$0xff]
      %v694 = vld [vmem:[%s1 + $0x110] sm:$0xff]
      %v695 = vld [vmem:[%s1 + $0x118] sm:$0xff]
      %v696 = vld [vmem:[%s1 + $0x120] sm:$0xff]
      %v697 = vld [vmem:[%s1 + $0x128] sm:$0xff]
      %v698 = vld [vmem:[%s1 + $0x130] sm:$0xff]
      %v699 = vld [vmem:[%s1 + $0x138] sm:$0xff]
      %v700 = vld [vmem:[%s1 + $0x140] sm:$0xff]
      %v701 = vld [vmem:[%s1 + $0x148] sm:$0xff]
      %v702 = vld [vmem:[%s1 + $0x150] sm:$0xff]
      %v703 = vld [vmem:[%s1 + $0x158] sm:$0xff]
      %v704 = vld [vmem:[%s1 + $0x160] sm:$0xff]
      %v705 = vld [vmem:[%s1 + $0x168] sm:$0xff]
      %v706 = vld [vmem:[%s1 + $0x170] sm:$0xff]
      %v707 = vld [vmem:[%s1 + $0x178] sm:$0xff]
      %v708 = vld [vmem:[%s1 + $0x180] sm:$0xff]
      %v709 = vld [vmem:[%s1 + $0x188] sm:$0xff]
      %v710 = vld [vmem:[%s1 + $0x190] sm:$0xff]
      %v711 = vld [vmem:[%s1 + $0x198] sm:$0xff]
      %v712 = vld [vmem:[%s1 + $0x1a0] sm:$0xff]
      %v713 = vld [vmem:[%s1 + $0x1a8] sm:$0xff]
      %v714 = vld [vmem:[%s1 + $0x1b0] sm:$0xff]
      %v715 = vld [vmem:[%s1 + $0x1b8] sm:$0xff]
      %v716 = vld [vmem:[%s1 + $0x1c0] sm:$0xff]
      %v717 = vld [vmem:[%s1 + $0x1c8] sm:$0xff]
      %v718 = vld [vmem:[%s1 + $0x1d0] sm:$0xff]
      %v719 = vld [vmem:[%s1 + $0x1d8] sm:$0xff]
      %v720 = vld [vmem:[%s1 + $0x1e0] sm:$0xff]
      %v721 = vld [vmem:[%s1 + $0x1e8] sm:$0xff]
      %v722 = vld [vmem:[%s1 + $0x1f0] sm:$0xff]
      %v723 = vld [vmem:[%s1 + $0x1f8] sm:$0xff]
      %v724 = vld [vmem:[%s1 + $0x200] sm:$0xff]
      %v725 = vld [vmem:[%s1 + $0x208] sm:$0xff]
      %v726 = vld [vmem:[%s1 + $0x210] sm:$0xff]
      %v727 = vld [vmem:[%s1 + $0x218] sm:$0xff]
      %v728 = vld [vmem:[%s1 + $0x220] sm:$0xff]
      %v729 = vld [vmem:[%s1 + $0x228] sm:$0xff]
      %v730 = vld [vmem:[%s1 + $0x230] sm:$0xff]
      %v731 = vld [vmem:[%s1 + $0x238] sm:$0xff]
      %v732 = vld [vmem:[%s1 + $0x240] sm:$0xff]
      %v733 = vld [vmem:[%s1 + $0x248] sm:$0xff]
      %v734 = vld [vmem:[%s1 + $0x250] sm:$0xff]
      %v735 = vld [vmem:[%s1 + $0x258] sm:$0xff]
      %v736 = vld [vmem:[%s1 + $0x260] sm:$0xff]
      %v737 = vld [vmem:[%s1 + $0x268] sm:$0xff]
      %v738 = vld [vmem:[%s1 + $0x270] sm:$0xff]
      %v739 = vld [vmem:[%s1 + $0x278] sm:$0xff]
      %v740 = vld [vmem:[%s1 + $0x280] sm:$0xff]
      %v741 = vld [vmem:[%s1 + $0x288] sm:$0xff]
      %v742 = vld [vmem:[%s1 + $0x290] sm:$0xff]
      %v743 = vld [vmem:[%s1 + $0x298] sm:$0xff]
      %v744 = vld [vmem:[%s1 + $0x2a0] sm:$0xff]
      %v745 = vld [vmem:[%s1 + $0x2a8] sm:$0xff]
      %v746 = vld [vmem:[%s1 + $0x2b0] sm:$0xff]
      %v747 = vld [vmem:[%s1 + $0x2b8] sm:$0xff]
      %v748 = vld [vmem:[%s1 + $0x2c0] sm:$0xff]
      %v749 = vld [vmem:[%s1 + $0x2c8] sm:$0xff]
      %v750 = vld [vmem:[%s1 + $0x2d0] sm:$0xff]
      %v751 = vld [vmem:[%s1 + $0x2d8] sm:$0xff]
      %v752 = vld [vmem:[%s1 + $0x2e0] sm:$0xff]
      %v753 = vld [vmem:[%s1 + $0x2e8] sm:$0xff]
      %v754 = vld [vmem:[%s1 + $0x2f0] sm:$0xff]
      %v755 = vld [vmem:[%s1 + $0x2f8] sm:$0xff]
      %v756 = vld [vmem:[%s1 + $0x300] sm:$0xff]
      %v757 = vld [vmem:[%s1 + $0x308] sm:$0xff]
      %v758 = vld [vmem:[%s1 + $0x310] sm:$0xff]
      %v759 = vld [vmem:[%s1 + $0x318] sm:$0xff]
      %v760 = vld [vmem:[%s1 + $0x320] sm:$0xff]
      %v761 = vld [vmem:[%s1 + $0x328] sm:$0xff]
      %v762 = vld [vmem:[%s1 + $0x330] sm:$0xff]
      %v763 = vld [vmem:[%s1 + $0x338] sm:$0xff]
      %v764 = vld [vmem:[%s1 + $0x340] sm:$0xff]
      %v765 = vld [vmem:[%s1 + $0x348] sm:$0xff]
      %v766 = vld [vmem:[%s1 + $0x350] sm:$0xff]
      %v767 = vld [vmem:[%s1 + $0x358] sm:$0xff]
      %v768 = vld [vmem:[%s1 + $0x360] sm:$0xff]
      %v769 = vld [vmem:[%s1 + $0x368] sm:$0xff]
      %v770 = vld [vmem:[%s1 + $0x370] sm:$0xff]
      %v771 = vld [vmem:[%s1 + $0x378] sm:$0xff]
      %v772 = vld [vmem:[%s1 + $0x380] sm:$0xff]
      %v773 = vld [vmem:[%s1 + $0x388] sm:$0xff]
      %v774 = vld [vmem:[%s1 + $0x390] sm:$0xff]
      %v775 = vld [vmem:[%s1 + $0x398] sm:$0xff]
      %v776 = vld [vmem:[%s1 + $0x3a0] sm:$0xff]
      %v777 = vld [vmem:[%s1 + $0x3a8] sm:$0xff]
      %v778 = vld [vmem:[%s1 + $0x3b0] sm:$0xff]
      %v779 = vld [vmem:[%s1 + $0x3b8] sm:$0xff]
      %v780 = vld [vmem:[%s1 + $0x3c0] sm:$0xff]
      %v781 = vld [vmem:[%s1 + $0x3c8] sm:$0xff]
      %v782 = vld [vmem:[%s1 + $0x3d0] sm:$0xff]
      %v783 = vld [vmem:[%s1 + $0x3d8] sm:$0xff]
      %v784 = vld [vmem:[%s1 + $0x3e0] sm:$0xff]
      %v785 = vld [vmem:[%s1 + $0x3e8] sm:$0xff]
      %v786 = vld [vmem:[%s1 + $0x3f0] sm:$0xff]
      %v787 = vld [vmem:[%s1 + $0x3f8] sm:$0xff]
      %v788 = vld [vmem:[%s1 + $0x400] sm:$0xff]
      %v789 = vld [vmem:[%s1 + $0x408] sm:$0xff]
      %v790 = vld [vmem:[%s1 + $0x410] sm:$0xff]
      %v791 = vld [vmem:[%s1 + $0x418] sm:$0xff]
      %v792 = vld [vmem:[%s1 + $0x420] sm:$0xff]
      %v793 = vld [vmem:[%s1 + $0x428] sm:$0xff]
      %v794 = vld [vmem:[%s1 + $0x430] sm:$0xff]
      %v795 = vld [vmem:[%s1 + $0x438] sm:$0xff]
      %v796 = vld [vmem:[%s1 + $0x440] sm:$0xff]
      %v797 = vld [vmem:[%s1 + $0x448] sm:$0xff]
      %v798 = vld [vmem:[%s1 + $0x450] sm:$0xff]
      %v799 = vld [vmem:[%s1 + $0x458] sm:$0xff]
      %v800 = vld [vmem:[%s1 + $0x460] sm:$0xff]
      %v801 = vld [vmem:[%s1 + $0x468] sm:$0xff]
      %v802 = vld [vmem:[%s1 + $0x470] sm:$0xff]
      %v803 = vld [vmem:[%s1 + $0x478] sm:$0xff]
      %v804 = vld [vmem:[%s1 + $0x480] sm:$0xff]
      %v805 = vld [vmem:[%s1 + $0x488] sm:$0xff]
      %v806 = vld [vmem:[%s1 + $0x490] sm:$0xff]
      %v807 = vld [vmem:[%s1 + $0x498] sm:$0xff]
      %v808 = vld [vmem:[%s1 + $0x4a0] sm:$0xff]
      %v809 = vld [vmem:[%s1 + $0x4a8] sm:$0xff]
      %v810 = vld [vmem:[%s1 + $0x4b0] sm:$0xff]
      %v811 = vld [vmem:[%s1 + $0x4b8] sm:$0xff]
      %v812 = vld [vmem:[%s1 + $0x4c0] sm:$0xff]
      %v813 = vld [vmem:[%s1 + $0x4c8] sm:$0xff]
      %v814 = vld [vmem:[%s1 + $0x4d0] sm:$0xff]
      %v815 = vld [vmem:[%s1 + $0x4d8] sm:$0xff]
      %v816 = vld [vmem:[%s1 + $0x4e0] sm:$0xff]
      %v817 = vld [vmem:[%s1 + $0x4e8] sm:$0xff]
      %v818 = vld [vmem:[%s1 + $0x4f0] sm:$0xff]
      %v819 = vld [vmem:[%s1 + $0x4f8] sm:$0xff]
      %v820 = vld [vmem:[%s1 + $0x500] sm:$0xff]
      %v821 = vld [vmem:[%s1 + $0x508] sm:$0xff]
      %v822 = vld [vmem:[%s1 + $0x510] sm:$0xff]
      %v823 = vld [vmem:[%s1 + $0x518] sm:$0xff]
      %v824 = vld [vmem:[%s1 + $0x520] sm:$0xff]
      %v825 = vld [vmem:[%s1 + $0x528] sm:$0xff]
      %v826 = vld [vmem:[%s1 + $0x530] sm:$0xff]
      %v827 = vld [vmem:[%s1 + $0x538] sm:$0xff]
      %v828 = vld [vmem:[%s1 + $0x540] sm:$0xff]
      %v829 = vld [vmem:[%s1 + $0x548] sm:$0xff]
      %v830 = vld [vmem:[%s1 + $0x550] sm:$0xff]
      %v831 = vld [vmem:[%s1 + $0x558] sm:$0xff]
      %v832 = vld [vmem:[%s1 + $0x560] sm:$0xff]
      %v833 = vld [vmem:[%s1 + $0x568] sm:$0xff]
      %v834 = vld [vmem:[%s1 + $0x570] sm:$0xff]
      %v835 = vld [vmem:[%s1 + $0x578] sm:$0xff]
      %v836 = vld [vmem:[%s1 + $0x580] sm:$0xff]
      %v837 = vld [vmem:[%s1 + $0x588] sm:$0xff]
      %v838 = vld [vmem:[%s1 + $0x590] sm:$0xff]
      %v839 = vld [vmem:[%s1 + $0x598] sm:$0xff]
      %v840 = vld [vmem:[%s1 + $0x5a0] sm:$0xff]
      %v841 = vld [vmem:[%s1 + $0x5a8] sm:$0xff]
      %v842 = vld [vmem:[%s1 + $0x5b0] sm:$0xff]
      %v843 = vld [vmem:[%s1 + $0x5b8] sm:$0xff]
      %v844 = vld [vmem:[%s1 + $0x5c0] sm:$0xff]
      %v845 = vld [vmem:[%s1 + $0x5c8] sm:$0xff]
      %v846 = vld [vmem:[%s1 + $0x5d0] sm:$0xff]
      %v847 = vld [vmem:[%s1 + $0x5d8] sm:$0xff]
      %v848 = vld [vmem:[%s1 + $0x5e0] sm:$0xff]
      %v849 = vld [vmem:[%s1 + $0x5e8] sm:$0xff]
      %v850 = vld [vmem:[%s1 + $0x5f0] sm:$0xff]
      %v851 = vld [vmem:[%s1 + $0x5f8] sm:$0xff]
      %v852 = vld [vmem:[%s1 + $0x600] sm:$0xff]
      %v853 = vld [vmem:[%s1 + $0x608] sm:$0xff]
      %v854 = vld [vmem:[%s1 + $0x610] sm:$0xff]
      %v855 = vld [vmem:[%s1 + $0x618] sm:$0xff]
      %v856 = vld [vmem:[%s1 + $0x620] sm:$0xff]
      %v857 = vld [vmem:[%s1 + $0x628] sm:$0xff]
      %v858 = vld [vmem:[%s1 + $0x630] sm:$0xff]
      %v859 = vld [vmem:[%s1 + $0x638] sm:$0xff]
      %v860 = vld [vmem:[%s1 + $0x640] sm:$0xff]
      %v861 = vld [vmem:[%s1 + $0x648] sm:$0xff]
      %v862 = vld [vmem:[%s1 + $0x650] sm:$0xff]
      %v863 = vld [vmem:[%s1 + $0x658] sm:$0xff]
      %v864 = vld [vmem:[%s1 + $0x660] sm:$0xff]
      %v865 = vld [vmem:[%s1 + $0x668] sm:$0xff]
      %v866 = vld [vmem:[%s1 + $0x670] sm:$0xff]
      %v867 = vld [vmem:[%s1 + $0x678] sm:$0xff]
      %v868 = vld [vmem:[%s1 + $0x680] sm:$0xff]
      %v869 = vld [vmem:[%s1 + $0x688] sm:$0xff]
      %v870 = vld [vmem:[%s1 + $0x690] sm:$0xff]
      %v871 = vld [vmem:[%s1 + $0x698] sm:$0xff]
      %v872 = vld [vmem:[%s1 + $0x6a0] sm:$0xff]
      %v873 = vld [vmem:[%s1 + $0x6a8] sm:$0xff]
      %v874 = vld [vmem:[%s1 + $0x6b0] sm:$0xff]
      %v875 = vld [vmem:[%s1 + $0x6b8] sm:$0xff]
      %v876 = vld [vmem:[%s1 + $0x6c0] sm:$0xff]
      %v877 = vld [vmem:[%s1 + $0x6c8] sm:$0xff]
      %v878 = vld [vmem:[%s1 + $0x6d0] sm:$0xff]
      %v879 = vld [vmem:[%s1 + $0x6d8] sm:$0xff]
      %v880 = vld [vmem:[%s1 + $0x6e0] sm:$0xff]
      %v881 = vld [vmem:[%s1 + $0x6e8] sm:$0xff]
      %v882 = vld [vmem:[%s1 + $0x6f0] sm:$0xff]
      %v883 = vld [vmem:[%s1 + $0x6f8] sm:$0xff]
      %v884 = vld [vmem:[%s1 + $0x700] sm:$0xff]
      %v885 = vld [vmem:[%s1 + $0x708] sm:$0xff]
      %v886 = vld [vmem:[%s1 + $0x710] sm:$0xff]
      %v887 = vld [vmem:[%s1 + $0x718] sm:$0xff]
      %v888 = vld [vmem:[%s1 + $0x720] sm:$0xff]
      %v889 = vld [vmem:[%s1 + $0x728] sm:$0xff]
      %v890 = vld [vmem:[%s1 + $0x730] sm:$0xff]
      %v891 = vld [vmem:[%s1 + $0x738] sm:$0xff]
      %v892 = vld [vmem:[%s1 + $0x740] sm:$0xff]
      %v893 = vld [vmem:[%s1 + $0x748] sm:$0xff]
      %v894 = vld [vmem:[%s1 + $0x750] sm:$0xff]
      %v895 = vld [vmem:[%s1 + $0x758] sm:$0xff]
      %v896 = vld [vmem:[%s1 + $0x760] sm:$0xff]
      %v897 = vld [vmem:[%s1 + $0x768] sm:$0xff]
      %v898 = vld [vmem:[%s1 + $0x770] sm:$0xff]
      %v899 = vld [vmem:[%s1 + $0x778] sm:$0xff]
      %v900 = vld [vmem:[%s1 + $0x780] sm:$0xff]
      %v901 = vld [vmem:[%s1 + $0x788] sm:$0xff]
      %v902 = vld [vmem:[%s1 + $0x790] sm:$0xff]
      %v903 = vld [vmem:[%s1 + $0x798] sm:$0xff]
      %v904 = vld [vmem:[%s1 + $0x7a0] sm:$0xff]
      %v905 = vld [vmem:[%s1 + $0x7a8] sm:$0xff]
      %v906 = vld [vmem:[%s1 + $0x7b0] sm:$0xff]
      %v907 = vld [vmem:[%s1 + $0x7b8] sm:$0xff]
      %v908 = vld [vmem:[%s1 + $0x7c0] sm:$0xff]
      %v909 = vld [vmem:[%s1 + $0x7c8] sm:$0xff]
      %v910 = vld [vmem:[%s1 + $0x7d0] sm:$0xff]
      %v911 = vld [vmem:[%s1 + $0x7d8] sm:$0xff]
      %v912 = vld [vmem:[%s1 + $0x7e0] sm:$0xff]
      %v913 = vld [vmem:[%s1 + $0x7e8] sm:$0xff]
      %v914 = vld [vmem:[%s1 + $0x7f0] sm:$0xff]
      %v915 = vld [vmem:[%s1 + $0x7f8] sm:$0xff]
      %v916 = vld [vmem:[%s1 + $0x800] sm:$0xff]
      %v917 = vld [vmem:[%s1 + $0x808] sm:$0xff]
      %v918 = vld [vmem:[%s1 + $0x810] sm:$0xff]
      %v919 = vld [vmem:[%s1 + $0x818] sm:$0xff]
      %v920 = vld [vmem:[%s1 + $0x820] sm:$0xff]
      %v921 = vld [vmem:[%s1 + $0x828] sm:$0xff]
      %v922 = vld [vmem:[%s1 + $0x830] sm:$0xff]
      %v923 = vld [vmem:[%s1 + $0x838] sm:$0xff]
      %v924 = vld [vmem:[%s1 + $0x840] sm:$0xff]
      %v925 = vld [vmem:[%s1 + $0x848] sm:$0xff]
      %v926 = vld [vmem:[%s1 + $0x850] sm:$0xff]
      %v927 = vld [vmem:[%s1 + $0x858] sm:$0xff]
      %v928 = vld [vmem:[%s1 + $0x860] sm:$0xff]
      %v929 = vld [vmem:[%s1 + $0x868] sm:$0xff]
      %v930 = vld [vmem:[%s1 + $0x870] sm:$0xff]
      %v931 = vld [vmem:[%s1 + $0x878] sm:$0xff]
      %v932 = vld [vmem:[%s1 + $0x880] sm:$0xff]
      %v933 = vld [vmem:[%s1 + $0x888] sm:$0xff]
      %v934 = vld [vmem:[%s1 + $0x890] sm:$0xff]
      %v935 = vld [vmem:[%s1 + $0x898] sm:$0xff]
      %v936 = vld [vmem:[%s1 + $0x8a0] sm:$0xff]
      %v937 = vld [vmem:[%s1 + $0x8a8] sm:$0xff]
      %v938 = vld [vmem:[%s1 + $0x8b0] sm:$0xff]
      %v939 = vld [vmem:[%s1 + $0x8b8] sm:$0xff]
      %v940 = vld [vmem:[%s1 + $0x8c0] sm:$0xff]
      %v941 = vld [vmem:[%s1 + $0x8c8] sm:$0xff]
      %v942 = vld [vmem:[%s1 + $0x8d0] sm:$0xff]
      %v943 = vld [vmem:[%s1 + $0x8d8] sm:$0xff]
      %v944 = vld [vmem:[%s1 + $0x8e0] sm:$0xff]
      %v945 = vld [vmem:[%s1 + $0x8e8] sm:$0xff]
      %v946 = vld [vmem:[%s1 + $0x8f0] sm:$0xff]
      %v947 = vld [vmem:[%s1 + $0x8f8] sm:$0xff]
      %v948 = vld [vmem:[%s1 + $0x900] sm:$0xff]
      %v949 = vld [vmem:[%s1 + $0x908] sm:$0xff]
      %v950 = vld [vmem:[%s1 + $0x910] sm:$0xff]
      %v951 = vld [vmem:[%s1 + $0x918] sm:$0xff]
      %v952 = vld [vmem:[%s1 + $0x920] sm:$0xff]
      %v953 = vld [vmem:[%s1 + $0x928] sm:$0xff]
      %v954 = vld [vmem:[%s1 + $0x930] sm:$0xff]
      %v955 = vld [vmem:[%s1 + $0x938] sm:$0xff]
      %v956 = vld [vmem:[%s1 + $0x940] sm:$0xff]
      %v957 = vld [vmem:[%s1 + $0x948] sm:$0xff]
      %v958 = vld [vmem:[%s1 + $0x950] sm:$0xff]
      %v959 = vld [vmem:[%s1 + $0x958] sm:$0xff]
      %v960 = vld [vmem:[%s1 + $0x960] sm:$0xff]
      %v961 = vld [vmem:[%s1 + $0x968] sm:$0xff]
      %v962 = vld [vmem:[%s1 + $0x970] sm:$0xff]
      %v963 = vld [vmem:[%s1 + $0x978] sm:$0xff]
      %v964 = vld [vmem:[%s1 + $0x980] sm:$0xff]
      %v965 = vld [vmem:[%s1 + $0x988] sm:$0xff]
      %v966 = vld [vmem:[%s1 + $0x990] sm:$0xff]
      %v967 = vld [vmem:[%s1 + $0x998] sm:$0xff]
      %v968 = vld [vmem:[%s1 + $0x9a0] sm:$0xff]
      %v969 = vld [vmem:[%s1 + $0x9a8] sm:$0xff]
      %v970 = vld [vmem:[%s1 + $0x9b0] sm:$0xff]
      %v971 = vld [vmem:[%s1 + $0x9b8] sm:$0xff]
      %v972 = vld [vmem:[%s1 + $0x9c0] sm:$0xff]
      %v973 = vld [vmem:[%s1 + $0x9c8] sm:$0xff]
      %v974 = vld [vmem:[%s1 + $0x9d0] sm:$0xff]
      %v975 = vld [vmem:[%s1 + $0x9d8] sm:$0xff]
      %v976 = vld [vmem:[%s1 + $0x9e0] sm:$0xff]
      %v977 = vld [vmem:[%s1 + $0x9e8] sm:$0xff]
      %v978 = vld [vmem:[%s1 + $0x9f0] sm:$0xff]
      %v979 = vld [vmem:[%s1 + $0x9f8] sm:$0xff]
      %v980 = vld [vmem:[%s1 + $0xa00] sm:$0xff]
      %v981 = vld [vmem:[%s1 + $0xa08] sm:$0xff]
      %v982 = vld [vmem:[%s1 + $0xa10] sm:$0xff]
      %v983 = vld [vmem:[%s1 + $0xa18] sm:$0xff]
      %v984 = vld [vmem:[%s1 + $0xa20] sm:$0xff]
      %v985 = vld [vmem:[%s1 + $0xa28] sm:$0xff]
      %v986 = vld [vmem:[%s1 + $0xa30] sm:$0xff]
      %v987 = vld [vmem:[%s1 + $0xa38] sm:$0xff]
      %v988 = vld [vmem:[%s1 + $0xa40] sm:$0xff]
      %v989 = vld [vmem:[%s1 + $0xa48] sm:$0xff]
      %v990 = vld [vmem:[%s1 + $0xa50] sm:$0xff]
      %v991 = vld [vmem:[%s1 + $0xa58] sm:$0xff]
      %v992 = vld [vmem:[%s1 + $0xa60] sm:$0xff]
      %v993 = vld [vmem:[%s1 + $0xa68] sm:$0xff]
      %v994 = vld [vmem:[%s1 + $0xa70] sm:$0xff]
      %v995 = vld [vmem:[%s1 + $0xa78] sm:$0xff]
      %v996 = vld [vmem:[%s1 + $0xa80] sm:$0xff]
      %v997 = vld [vmem:[%s1 + $0xa88] sm:$0xff]
      %v998 = vld [vmem:[%s1 + $0xa90] sm:$0xff]
      %v999 = vld [vmem:[%s1 + $0xa98] sm:$0xff]
      %v1000 = vld [vmem:[%s1 + $0xaa0] sm:$0xff]
      %v1001 = vld [vmem:[%s1 + $0xaa8] sm:$0xff]
      %v1002 = vld [vmem:[%s1 + $0xab0] sm:$0xff]
      %v1003 = vld [vmem:[%s1 + $0xab8] sm:$0xff]
      %v1004 = vld [vmem:[%s1 + $0xac0] sm:$0xff]
      %v1005 = vld [vmem:[%s1 + $0xac8] sm:$0xff]
      %v1006 = vld [vmem:[%s1 + $0xad0] sm:$0xff]
      %v1007 = vld [vmem:[%s1 + $0xad8] sm:$0xff]
      %v1008 = vld [vmem:[%s1 + $0xae0] sm:$0xff]
      %v1009 = vld [vmem:[%s1 + $0xae8] sm:$0xff]
      %v1010 = vld [vmem:[%s1 + $0xaf0] sm:$0xff]
      %v1011 = vld [vmem:[%s1 + $0xaf8] sm:$0xff]
      %v1012 = vld [vmem:[%s1 + $0xb00] sm:$0xff]
      %v1013 = vld [vmem:[%s1 + $0xb08] sm:$0xff]
      %v1014 = vld [vmem:[%s1 + $0xb10] sm:$0xff]
      %v1015 = vld [vmem:[%s1 + $0xb18] sm:$0xff]
      %v1016 = vld [vmem:[%s1 + $0xb20] sm:$0xff]
      %v1017 = vld [vmem:[%s1 + $0xb28] sm:$0xff]
      %v1018 = vld [vmem:[%s1 + $0xb30] sm:$0xff]
      %v1019 = vld [vmem:[%s1 + $0xb38] sm:$0xff]
      %v1020 = vld [vmem:[%s1 + $0xb40] sm:$0xff]
      %v1021 = vld [vmem:[%s1 + $0xb48] sm:$0xff]
      %v1022 = vld [vmem:[%s1 + $0xb50] sm:$0xff]
      %v1023 = vld [vmem:[%s1 + $0xb58] sm:$0xff]
      %v1024 = vld [vmem:[%s1 + $0xb60] sm:$0xff]
      %v1025 = vld [vmem:[%s1 + $0xb68] sm:$0xff]
      %v1026 = vld [vmem:[%s1 + $0xb70] sm:$0xff]
      %v1027 = vld [vmem:[%s1 + $0xb78] sm:$0xff]
      %v1028 = vld [vmem:[%s1 + $0xb80] sm:$0xff]
      %v1029 = vld [vmem:[%s1 + $0xb88] sm:$0xff]
      %v1030 = vld [vmem:[%s1 + $0xb90] sm:$0xff]
      %v1031 = vld [vmem:[%s1 + $0xb98] sm:$0xff]
      %v1032 = vld [vmem:[%s1 + $0xba0] sm:$0xff]
      %v1033 = vld [vmem:[%s1 + $0xba8] sm:$0xff]
      %v1034 = vld [vmem:[%s1 + $0xbb0] sm:$0xff]
      %v1035 = vld [vmem:[%s1 + $0xbb8] sm:$0xff]
      %v1036 = vld [vmem:[%s1 + $0xbc0] sm:$0xff]
      %v1037 = vld [vmem:[%s1 + $0xbc8] sm:$0xff]
      %v1038 = vld [vmem:[%s1 + $0xbd0] sm:$0xff]
      %v1039 = vld [vmem:[%s1 + $0xbd8] sm:$0xff]
      %v1040 = vld [vmem:[%s1 + $0xbe0] sm:$0xff]
      %v1041 = vld [vmem:[%s1 + $0xbe8] sm:$0xff]
      %v1042 = vld [vmem:[%s1 + $0xbf0] sm:$0xff]
      %v1043 = vld [vmem:[%s1 + $0xbf8] sm:$0xff]
      %v1044 = vpack.c.bf16 %v516, %v492
      %v1045 = vpack.c.bf16 %v517, %v493
      %v1046 = vpack.c.bf16 %v518, %v494
      %v1047 = vpack.c.bf16 %v519, %v495
      %v1048 = vpack.c.bf16 %v520, %v496
      %v1049 = vpack.c.bf16 %v521, %v497
      %v1050 = vpack.c.bf16 %v522, %v498
      %v1051 = vpack.c.bf16 %v523, %v499
      %v1052 = vpack.c.bf16 %v524, %v500
      %v1053 = vpack.c.bf16 %v525, %v501
      %v1054 = vpack.c.bf16 %v526, %v502
      %v1055 = vpack.c.bf16 %v527, %v503
      %v1056 = vpack.c.bf16 %v528, %v504
      %v1057 = vpack.c.bf16 %v529, %v505
      %v1058 = vpack.c.bf16 %v530, %v506
      %v1059 = vpack.c.bf16 %v531, %v507
      %v1060 = vpack.c.bf16 %v532, %v508
      %v1061 = vpack.c.bf16 %v533, %v509
      %v1062 = vpack.c.bf16 %v534, %v510
      %v1063 = vpack.c.bf16 %v535, %v511
      %v1064 = vpack.c.bf16 %v536, %v512
      %v1065 = vpack.c.bf16 %v537, %v513
      %v1066 = vpack.c.bf16 %v538, %v514
      %v1067 = vpack.c.bf16 %v539, %v515
      %v1068 = vpack.c.bf16 %v564, %v540
      %v1069 = vpack.c.bf16 %v565, %v541
      %v1070 = vpack.c.bf16 %v566, %v542
      %v1071 = vpack.c.bf16 %v567, %v543
      %v1072 = vpack.c.bf16 %v568, %v544
      %v1073 = vpack.c.bf16 %v569, %v545
      %v1074 = vpack.c.bf16 %v570, %v546
      %v1075 = vpack.c.bf16 %v571, %v547
      %v1076 = vpack.c.bf16 %v572, %v548
      %v1077 = vpack.c.bf16 %v573, %v549
      %v1078 = vpack.c.bf16 %v574, %v550
      %v1079 = vpack.c.bf16 %v575, %v551
      %v1080 = vpack.c.bf16 %v576, %v552
      %v1081 = vpack.c.bf16 %v577, %v553
      %v1082 = vpack.c.bf16 %v578, %v554
      %v1083 = vpack.c.bf16 %v579, %v555
      %v1084 = vpack.c.bf16 %v580, %v556
      %v1085 = vpack.c.bf16 %v581, %v557
      %v1086 = vpack.c.bf16 %v582, %v558
      %v1087 = vpack.c.bf16 %v583, %v559
      %v1088 = vpack.c.bf16 %v584, %v560
      %v1089 = vpack.c.bf16 %v585, %v561
      %v1090 = vpack.c.bf16 %v586, %v562
      %v1091 = vpack.c.bf16 %v587, %v563
      %v1092 = vpack.c.bf16 %v612, %v588
      %v1093 = vpack.c.bf16 %v613, %v589
      %v1094 = vpack.c.bf16 %v614, %v590
      %v1095 = vpack.c.bf16 %v615, %v591
      %v1096 = vpack.c.bf16 %v616, %v592
      %v1097 = vpack.c.bf16 %v617, %v593
      %v1098 = vpack.c.bf16 %v618, %v594
      %v1099 = vpack.c.bf16 %v619, %v595
      %v1100 = vpack.c.bf16 %v620, %v596
      %v1101 = vpack.c.bf16 %v621, %v597
      %v1102 = vpack.c.bf16 %v622, %v598
      %v1103 = vpack.c.bf16 %v623, %v599
      %v1104 = vpack.c.bf16 %v624, %v600
      %v1105 = vpack.c.bf16 %v625, %v601
      %v1106 = vpack.c.bf16 %v626, %v602
      %v1107 = vpack.c.bf16 %v627, %v603
      %v1108 = vpack.c.bf16 %v628, %v604
      %v1109 = vpack.c.bf16 %v629, %v605
      %v1110 = vpack.c.bf16 %v630, %v606
      %v1111 = vpack.c.bf16 %v631, %v607
      %v1112 = vpack.c.bf16 %v632, %v608
      %v1113 = vpack.c.bf16 %v633, %v609
      %v1114 = vpack.c.bf16 %v634, %v610
      %v1115 = vpack.c.bf16 %v635, %v611
      %v1116 = vpack.c.bf16 %v636, %v636
      %v1117 = vpack.c.bf16 %v637, %v637
      %v1118 = vpack.c.bf16 %v638, %v638
      %v1119 = vpack.c.bf16 %v639, %v639
      %v1120 = vpack.c.bf16 %v640, %v640
      %v1121 = vpack.c.bf16 %v641, %v641
      %v1122 = vpack.c.bf16 %v642, %v642
      %v1123 = vpack.c.bf16 %v643, %v643
      %v1124 = vpack.c.bf16 %v644, %v644
      %v1125 = vpack.c.bf16 %v645, %v645
      %v1126 = vpack.c.bf16 %v646, %v646
      %v1127 = vpack.c.bf16 %v647, %v647
      %v1128 = vpack.c.bf16 %v648, %v648
      %v1129 = vpack.c.bf16 %v649, %v649
      %v1130 = vpack.c.bf16 %v650, %v650
      %v1131 = vpack.c.bf16 %v651, %v651
      %v1132 = vpack.c.bf16 %v652, %v652
      %v1133 = vpack.c.bf16 %v653, %v653
      %v1134 = vpack.c.bf16 %v654, %v654
      %v1135 = vpack.c.bf16 %v655, %v655
      %v1136 = vpack.c.bf16 %v656, %v656
      %v1137 = vpack.c.bf16 %v657, %v657
      %v1138 = vpack.c.bf16 %v658, %v658
      %v1139 = vpack.c.bf16 %v659, %v659
      %v1140 = vpack.c.bf16 %v661, %v660
      %v1141 = vpack.c.bf16 %v663, %v662
      %v1142 = vpack.c.bf16 %v665, %v664
      %v1143 = vpack.c.bf16 %v667, %v666
      %v1144 = vpack.c.bf16 %v669, %v668
      %v1145 = vpack.c.bf16 %v671, %v670
      %v1146 = vpack.c.bf16 %v673, %v672
      %v1147 = vpack.c.bf16 %v675, %v674
      %v1148 = vpack.c.bf16 %v677, %v676
      %v1149 = vpack.c.bf16 %v679, %v678
      %v1150 = vpack.c.bf16 %v681, %v680
      %v1151 = vpack.c.bf16 %v683, %v682
      %v1152 = vpack.c.bf16 %v685, %v684
      %v1153 = vpack.c.bf16 %v687, %v686
      %v1154 = vpack.c.bf16 %v689, %v688
      %v1155 = vpack.c.bf16 %v691, %v690
      %v1156 = vpack.c.bf16 %v693, %v692
      %v1157 = vpack.c.bf16 %v695, %v694
      %v1158 = vpack.c.bf16 %v697, %v696
      %v1159 = vpack.c.bf16 %v699, %v698
      %v1160 = vpack.c.bf16 %v701, %v700
      %v1161 = vpack.c.bf16 %v703, %v702
      %v1162 = vpack.c.bf16 %v705, %v704
      %v1163 = vpack.c.bf16 %v707, %v706
      %v1164 = vpack.c.bf16 %v709, %v708
      %v1165 = vpack.c.bf16 %v711, %v710
      %v1166 = vpack.c.bf16 %v713, %v712
      %v1167 = vpack.c.bf16 %v715, %v714
      %v1168 = vpack.c.bf16 %v717, %v716
      %v1169 = vpack.c.bf16 %v719, %v718
      %v1170 = vpack.c.bf16 %v721, %v720
      %v1171 = vpack.c.bf16 %v723, %v722
      %v1172 = vpack.c.bf16 %v725, %v724
      %v1173 = vpack.c.bf16 %v727, %v726
      %v1174 = vpack.c.bf16 %v729, %v728
      %v1175 = vpack.c.bf16 %v731, %v730
      %v1176 = vpack.c.bf16 %v733, %v732
      %v1177 = vpack.c.bf16 %v735, %v734
      %v1178 = vpack.c.bf16 %v737, %v736
      %v1179 = vpack.c.bf16 %v739, %v738
      %v1180 = vpack.c.bf16 %v741, %v740
      %v1181 = vpack.c.bf16 %v743, %v742
      %v1182 = vpack.c.bf16 %v745, %v744
      %v1183 = vpack.c.bf16 %v747, %v746
      %v1184 = vpack.c.bf16 %v749, %v748
      %v1185 = vpack.c.bf16 %v751, %v750
      %v1186 = vpack.c.bf16 %v753, %v752
      %v1187 = vpack.c.bf16 %v755, %v754
      %v1188 = vpack.c.bf16 %v757, %v756
      %v1189 = vpack.c.bf16 %v759, %v758
      %v1190 = vpack.c.bf16 %v761, %v760
      %v1191 = vpack.c.bf16 %v763, %v762
      %v1192 = vpack.c.bf16 %v765, %v764
      %v1193 = vpack.c.bf16 %v767, %v766
      %v1194 = vpack.c.bf16 %v769, %v768
      %v1195 = vpack.c.bf16 %v771, %v770
      %v1196 = vpack.c.bf16 %v773, %v772
      %v1197 = vpack.c.bf16 %v775, %v774
      %v1198 = vpack.c.bf16 %v777, %v776
      %v1199 = vpack.c.bf16 %v779, %v778
      %v1200 = vpack.c.bf16 %v781, %v780
      %v1201 = vpack.c.bf16 %v783, %v782
      %v1202 = vpack.c.bf16 %v785, %v784
      %v1203 = vpack.c.bf16 %v787, %v786
      %v1204 = vpack.c.bf16 %v789, %v788
      %v1205 = vpack.c.bf16 %v791, %v790
      %v1206 = vpack.c.bf16 %v793, %v792
      %v1207 = vpack.c.bf16 %v795, %v794
      %v1208 = vpack.c.bf16 %v797, %v796
      %v1209 = vpack.c.bf16 %v799, %v798
      %v1210 = vpack.c.bf16 %v801, %v800
      %v1211 = vpack.c.bf16 %v803, %v802
      %v1212 = vpack.c.bf16 %v805, %v804
      %v1213 = vpack.c.bf16 %v807, %v806
      %v1214 = vpack.c.bf16 %v809, %v808
      %v1215 = vpack.c.bf16 %v811, %v810
      %v1216 = vpack.c.bf16 %v813, %v812
      %v1217 = vpack.c.bf16 %v815, %v814
      %v1218 = vpack.c.bf16 %v817, %v816
      %v1219 = vpack.c.bf16 %v819, %v818
      %v1220 = vpack.c.bf16 %v821, %v820
      %v1221 = vpack.c.bf16 %v823, %v822
      %v1222 = vpack.c.bf16 %v825, %v824
      %v1223 = vpack.c.bf16 %v827, %v826
      %v1224 = vpack.c.bf16 %v829, %v828
      %v1225 = vpack.c.bf16 %v831, %v830
      %v1226 = vpack.c.bf16 %v833, %v832
      %v1227 = vpack.c.bf16 %v835, %v834
      %v1228 = vpack.c.bf16 %v837, %v836
      %v1229 = vpack.c.bf16 %v839, %v838
      %v1230 = vpack.c.bf16 %v841, %v840
      %v1231 = vpack.c.bf16 %v843, %v842
      %v1232 = vpack.c.bf16 %v845, %v844
      %v1233 = vpack.c.bf16 %v847, %v846
      %v1234 = vpack.c.bf16 %v849, %v848
      %v1235 = vpack.c.bf16 %v851, %v850
      %v1236 = vpack.c.bf16 %v853, %v852
      %v1237 = vpack.c.bf16 %v855, %v854
      %v1238 = vpack.c.bf16 %v857, %v856
      %v1239 = vpack.c.bf16 %v859, %v858
      %v1240 = vpack.c.bf16 %v861, %v860
      %v1241 = vpack.c.bf16 %v863, %v862
      %v1242 = vpack.c.bf16 %v865, %v864
      %v1243 = vpack.c.bf16 %v867, %v866
      %v1244 = vpack.c.bf16 %v869, %v868
      %v1245 = vpack.c.bf16 %v871, %v870
      %v1246 = vpack.c.bf16 %v873, %v872
      %v1247 = vpack.c.bf16 %v875, %v874
      %v1248 = vpack.c.bf16 %v877, %v876
      %v1249 = vpack.c.bf16 %v879, %v878
      %v1250 = vpack.c.bf16 %v881, %v880
      %v1251 = vpack.c.bf16 %v883, %v882
      %v1252 = vpack.c.bf16 %v885, %v884
      %v1253 = vpack.c.bf16 %v887, %v886
      %v1254 = vpack.c.bf16 %v889, %v888
      %v1255 = vpack.c.bf16 %v891, %v890
      %v1256 = vpack.c.bf16 %v893, %v892
      %v1257 = vpack.c.bf16 %v895, %v894
      %v1258 = vpack.c.bf16 %v897, %v896
      %v1259 = vpack.c.bf16 %v899, %v898
      %v1260 = vpack.c.bf16 %v901, %v900
      %v1261 = vpack.c.bf16 %v903, %v902
      %v1262 = vpack.c.bf16 %v905, %v904
      %v1263 = vpack.c.bf16 %v907, %v906
      %v1264 = vpack.c.bf16 %v909, %v908
      %v1265 = vpack.c.bf16 %v911, %v910
      %v1266 = vpack.c.bf16 %v913, %v912
      %v1267 = vpack.c.bf16 %v915, %v914
      %v1268 = vpack.c.bf16 %v917, %v916
      %v1269 = vpack.c.bf16 %v919, %v918
      %v1270 = vpack.c.bf16 %v921, %v920
      %v1271 = vpack.c.bf16 %v923, %v922
      %v1272 = vpack.c.bf16 %v925, %v924
      %v1273 = vpack.c.bf16 %v927, %v926
      %v1274 = vpack.c.bf16 %v929, %v928
      %v1275 = vpack.c.bf16 %v931, %v930
      %v1276 = vpack.c.bf16 %v933, %v932
      %v1277 = vpack.c.bf16 %v935, %v934
      %v1278 = vpack.c.bf16 %v937, %v936
      %v1279 = vpack.c.bf16 %v939, %v938
      %v1280 = vpack.c.bf16 %v941, %v940
      %v1281 = vpack.c.bf16 %v943, %v942
      %v1282 = vpack.c.bf16 %v945, %v944
      %v1283 = vpack.c.bf16 %v947, %v946
      %v1284 = vpack.c.bf16 %v949, %v948
      %v1285 = vpack.c.bf16 %v951, %v950
      %v1286 = vpack.c.bf16 %v953, %v952
      %v1287 = vpack.c.bf16 %v955, %v954
      %v1288 = vpack.c.bf16 %v957, %v956
      %v1289 = vpack.c.bf16 %v959, %v958
      %v1290 = vpack.c.bf16 %v961, %v960
      %v1291 = vpack.c.bf16 %v963, %v962
      %v1292 = vpack.c.bf16 %v965, %v964
      %v1293 = vpack.c.bf16 %v967, %v966
      %v1294 = vpack.c.bf16 %v969, %v968
      %v1295 = vpack.c.bf16 %v971, %v970
      %v1296 = vpack.c.bf16 %v973, %v972
      %v1297 = vpack.c.bf16 %v975, %v974
      %v1298 = vpack.c.bf16 %v977, %v976
      %v1299 = vpack.c.bf16 %v979, %v978
      %v1300 = vpack.c.bf16 %v981, %v980
      %v1301 = vpack.c.bf16 %v983, %v982
      %v1302 = vpack.c.bf16 %v985, %v984
      %v1303 = vpack.c.bf16 %v987, %v986
      %v1304 = vpack.c.bf16 %v989, %v988
      %v1305 = vpack.c.bf16 %v991, %v990
      %v1306 = vpack.c.bf16 %v993, %v992
      %v1307 = vpack.c.bf16 %v995, %v994
      %v1308 = vpack.c.bf16 %v997, %v996
      %v1309 = vpack.c.bf16 %v999, %v998
      %v1310 = vpack.c.bf16 %v1001, %v1000
      %v1311 = vpack.c.bf16 %v1003, %v1002
      %v1312 = vpack.c.bf16 %v1005, %v1004
      %v1313 = vpack.c.bf16 %v1007, %v1006
      %v1314 = vpack.c.bf16 %v1009, %v1008
      %v1315 = vpack.c.bf16 %v1011, %v1010
      %v1316 = vpack.c.bf16 %v1013, %v1012
      %v1317 = vpack.c.bf16 %v1015, %v1014
      %v1318 = vpack.c.bf16 %v1017, %v1016
      %v1319 = vpack.c.bf16 %v1019, %v1018
      %v1320 = vpack.c.bf16 %v1021, %v1020
      %v1321 = vpack.c.bf16 %v1023, %v1022
      %v1322 = vpack.c.bf16 %v1025, %v1024
      %v1323 = vpack.c.bf16 %v1027, %v1026
      %v1324 = vpack.c.bf16 %v1029, %v1028
      %v1325 = vpack.c.bf16 %v1031, %v1030
      %v1326 = vpack.c.bf16 %v1033, %v1032
      %v1327 = vpack.c.bf16 %v1035, %v1034
      %v1328 = vpack.c.bf16 %v1037, %v1036
      %v1329 = vpack.c.bf16 %v1039, %v1038
      %v1330 = vpack.c.bf16 %v1041, %v1040
      %v1331 = vpack.c.bf16 %v1043, %v1042
      %v1332 = vld [vmem:[%s2] sm:$0xff]
      %v1333 = vld [vmem:[%s2 + $0x8] sm:$0xff]
      %v1334 = vld [vmem:[%s2 + $0x10] sm:$0xff]
      %v1335 = vld [vmem:[%s2 + $0x18] sm:$0xff]
      %v1336 = vld [vmem:[%s2 + $0x20] sm:$0xff]
      %v1337 = vld [vmem:[%s2 + $0x28] sm:$0xff]
      %v1338 = vld [vmem:[%s2 + $0x30] sm:$0x3]
      %1339 = vmatprep.subr.bf16.mxu0 0
      %1340 = vmatpush1.bf16.msra.mxu0 %v1140
      %1341 = vmatprep.subr.bf16.mxu0 0
      %1342 = vmatpush1.bf16.msra.mxu0 %v1141
      %1343 = vmatprep.subr.bf16.mxu0 0
      %1344 = vmatpush1.bf16.msra.mxu0 %v1142
      %1345 = vmatprep.subr.bf16.mxu0 0
      %1346 = vmatpush1.bf16.msra.mxu0 %v1143
      %1347 = vmatprep.subr.bf16.mxu0 0
      %1348 = vmatpush1.bf16.msra.mxu0 %v1144
      %1349 = vmatprep.subr.bf16.mxu0 0
      %1350 = vmatpush1.bf16.msra.mxu0 %v1145
      %1351 = vmatprep.subr.bf16.mxu0 0
      %1352 = vmatpush1.bf16.msra.mxu0 %v1146
      %1353 = vmatprep.subr.bf16.mxu0 0
      %1354 = vmatpush1.bf16.msra.mxu0 %v1147
      %1355 = vmatprep.subr.bf16.mxu0 0
      %1356 = vmatpush1.bf16.msra.mxu0 %v1148
      %1357 = vmatprep.subr.bf16.mxu0 0
      %1358 = vmatpush1.bf16.msra.mxu0 %v1149
      %1359 = vmatprep.subr.bf16.mxu0 0
      %1360 = vmatpush1.bf16.msra.mxu0 %v1150
      %1361 = vmatprep.subr.bf16.mxu0 0
      %1362 = vmatpush1.bf16.msra.mxu0 %v1151
      %1363 = vmatprep.subr.bf16.mxu0 0
      %1364 = vmatpush1.bf16.msra.mxu0 %v1152
      %1365 = vmatprep.subr.bf16.mxu0 0
      %1366 = vmatpush1.bf16.msra.mxu0 %v1153
      %1367 = vmatprep.subr.bf16.mxu0 0
      %1368 = vmatpush1.bf16.msra.mxu0 %v1154
      %1369 = vmatprep.subr.bf16.mxu0 0
      %1370 = vmatpush1.bf16.msra.mxu0 %v1155
      %1371 = vmatprep.mubr.bf16.mxu0 %v1045
      %1372 = vmatmul.mubr.bf16.gmra.mrb[0].mxu0 %v1044
      %v1373 = vpop.f32.mrb[0].mxu0
      %v1374 = vadd.f32 %v1332, %v1373
      %v1375 = vpop.f32.mrb[0].mxu0
      %v1376 = vpop.f32.mrb[0].mxu0
      %v1377 = vadd.f32 %v1333, %v1376
      %v1378 = vpop.f32.mrb[0].mxu0
      %1379 = vmatprep.mubr.bf16.mxu0 %v1069
      %1380 = vmatmul.mubr.bf16.gmra.mrb[0].mxu0 %v1068
      %v1381 = vpop.f32.mrb[0].mxu0
      %v1382 = vadd.f32 %v1334, %v1381
      %v1383 = vpop.f32.mrb[0].mxu0
      %v1384 = vpop.f32.mrb[0].mxu0
      %v1385 = vadd.f32 %v1335, %v1384
      %v1386 = vpop.f32.mrb[0].mxu0
      %1387 = vmatprep.mubr.bf16.mxu0 %v1093
      %1388 = vmatmul.mubr.bf16.gmra.mrb[0].mxu0 %v1092
      %v1389 = vpop.f32.mrb[0].mxu0
      %v1390 = vadd.f32 %v1336, %v1389
      %v1391 = vpop.f32.mrb[0].mxu0
      %v1392 = vpop.f32.mrb[0].mxu0
      %v1393 = vadd.f32 %v1337, %v1392
      %v1394 = vpop.f32.mrb[0].mxu0
      %1395 = vmatprep.mubr.bf16.mxu0 %v1117
      %1396 = vmatmul.mubr.bf16.gmra.mrb[0].mxu0 %v1116
      %v1397 = vpop.f32.mrb[0].mxu0
      %v1398 = vadd.f32 %v1338, %v1397
      %v1399 = vpop.f32.mrb[0].mxu0
      %v1400 = vpop.f32.mrb[0].mxu0
      %v1401 = vpop.f32.mrb[0].mxu0
      %1402 = vdwg.mxu0
      %1403 = vmatprep.subr.bf16.mxu0 0
      %1404 = vmatpush1.bf16.msra.mxu0 %v1156
      %1405 = vmatprep.subr.bf16.mxu0 0
      %1406 = vmatpush1.bf16.msra.mxu0 %v1157
      %1407 = vmatprep.subr.bf16.mxu0 0
      %1408 = vmatpush1.bf16.msra.mxu0 %v1158
      %1409 = vmatprep.subr.bf16.mxu0 0
      %1410 = vmatpush1.bf16.msra.mxu0 %v1159
      %1411 = vmatprep.subr.bf16.mxu0 0
      %1412 = vmatpush1.bf16.msra.mxu0 %v1160
      %1413 = vmatprep.subr.bf16.mxu0 0
      %1414 = vmatpush1.bf16.msra.mxu0 %v1161
      %1415 = vmatprep.subr.bf16.mxu0 0
      %1416 = vmatpush1.bf16.msra.mxu0 %v1162
      %1417 = vmatprep.subr.bf16.mxu0 0
      %1418 = vmatpush1.bf16.msra.mxu0 %v1163
      %1419 = vmatprep.subr.bf16.mxu0 0
      %1420 = vmatpush1.bf16.msra.mxu0 %v1164
      %1421 = vmatprep.subr.bf16.mxu0 0
      %1422 = vmatpush1.bf16.msra.mxu0 %v1165
      %1423 = vmatprep.subr.bf16.mxu0 0
      %1424 = vmatpush1.bf16.msra.mxu0 %v1166
      %1425 = vmatprep.subr.bf16.mxu0 0
      %1426 = vmatpush1.bf16.msra.mxu0 %v1167
      %1427 = vmatprep.subr.bf16.mxu0 0
      %1428 = vmatpush1.bf16.msra.mxu0 %v1168
      %1429 = vmatprep.subr.bf16.mxu0 0
      %1430 = vmatpush1.bf16.msra.mxu0 %v1169
      %1431 = vmatprep.subr.bf16.mxu0 0
      %1432 = vmatpush1.bf16.msra.mxu0 %v1170
      %1433 = vmatprep.subr.bf16.mxu0 0
      %1434 = vmatpush1.bf16.msra.mxu0 %v1171
      %1435 = vmatprep.mubr.bf16.mxu0 %v1047
      %1436 = vmatmul.mubr.bf16.gmra.mrb[0].mxu0 %v1046
      %v1437 = vpop.f32.mrb[0].mxu0
      %v1438 = vadd.f32 %v1374, %v1437
      %v1439 = vpop.f32.mrb[0].mxu0
      %v1440 = vpop.f32.mrb[0].mxu0
      %v1441 = vadd.f32 %v1377, %v1440
      %v1442 = vpop.f32.mrb[0].mxu0
      %1443 = vmatprep.mubr.bf16.mxu0 %v1071
      %1444 = vmatmul.mubr.bf16.gmra.mrb[0].mxu0 %v1070
      %v1445 = vpop.f32.mrb[0].mxu0
      %v1446 = vadd.f32 %v1382, %v1445
      %v1447 = vpop.f32.mrb[0].mxu0
      %v1448 = vpop.f32.mrb[0].mxu0
      %v1449 = vadd.f32 %v1385, %v1448
      %v1450 = vpop.f32.mrb[0].mxu0
      %1451 = vmatprep.mubr.bf16.mxu0 %v1095
      %1452 = vmatmul.mubr.bf16.gmra.mrb[0].mxu0 %v1094
      %v1453 = vpop.f32.mrb[0].mxu0
      %v1454 = vadd.f32 %v1390, %v1453
      %v1455 = vpop.f32.mrb[0].mxu0
      %v1456 = vpop.f32.mrb[0].mxu0
      %v1457 = vadd.f32 %v1393, %v1456
      %v1458 = vpop.f32.mrb[0].mxu0
      %1459 = vmatprep.mubr.bf16.mxu0 %v1119
      %1460 = vmatmul.mubr.bf16.gmra.mrb[0].mxu0 %v1118
      %v1461 = vpop.f32.mrb[0].mxu0
      %v1462 = vadd.f32 %v1398, %v1461
      %v1463 = vpop.f32.mrb[0].mxu0
      %v1464 = vpop.f32.mrb[0].mxu0
      %v1465 = vpop.f32.mrb[0].mxu0
      %1466 = vdwg.mxu0
      %1467 = vmatprep.subr.bf16.mxu0 0
      %1468 = vmatpush1.bf16.msra.mxu0 %v1172
      %1469 = vmatprep.subr.bf16.mxu0 0
      %1470 = vmatpush1.bf16.msra.mxu0 %v1173
      %1471 = vmatprep.subr.bf16.mxu0 0
      %1472 = vmatpush1.bf16.msra.mxu0 %v1174
      %1473 = vmatprep.subr.bf16.mxu0 0
      %1474 = vmatpush1.bf16.msra.mxu0 %v1175
      %1475 = vmatprep.subr.bf16.mxu0 0
      %1476 = vmatpush1.bf16.msra.mxu0 %v1176
      %1477 = vmatprep.subr.bf16.mxu0 0
      %1478 = vmatpush1.bf16.msra.mxu0 %v1177
      %1479 = vmatprep.subr.bf16.mxu0 0
      %1480 = vmatpush1.bf16.msra.mxu0 %v1178
      %1481 = vmatprep.subr.bf16.mxu0 0
      %1482 = vmatpush1.bf16.msra.mxu0 %v1179
      %1483 = vmatprep.subr.bf16.mxu0 0
      %1484 = vmatpush1.bf16.msra.mxu0 %v1180
      %1485 = vmatprep.subr.bf16.mxu0 0
      %1486 = vmatpush1.bf16.msra.mxu0 %v1181
      %1487 = vmatprep.subr.bf16.mxu0 0
      %1488 = vmatpush1.bf16.msra.mxu0 %v1182
      %1489 = vmatprep.subr.bf16.mxu0 0
      %1490 = vmatpush1.bf16.msra.mxu0 %v1183
      %1491 = vmatprep.subr.bf16.mxu0 0
      %1492 = vmatpush1.bf16.msra.mxu0 %v1184
      %1493 = vmatprep.subr.bf16.mxu0 0
      %1494 = vmatpush1.bf16.msra.mxu0 %v1185
      %1495 = vmatprep.subr.bf16.mxu0 0
      %1496 = vmatpush1.bf16.msra.mxu0 %v1186
      %1497 = vmatprep.subr.bf16.mxu0 0
      %1498 = vmatpush1.bf16.msra.mxu0 %v1187
      %1499 = vmatprep.mubr.bf16.mxu0 %v1049
      %1500 = vmatmul.mubr.bf16.gmra.mrb[0].mxu0 %v1048
      %v1501 = vpop.f32.mrb[0].mxu0
      %v1502 = vadd.f32 %v1438, %v1501
      %v1503 = vpop.f32.mrb[0].mxu0
      %v1504 = vpop.f32.mrb[0].mxu0
      %v1505 = vadd.f32 %v1441, %v1504
      %v1506 = vpop.f32.mrb[0].mxu0
      %1507 = vmatprep.mubr.bf16.mxu0 %v1073
      %1508 = vmatmul.mubr.bf16.gmra.mrb[0].mxu0 %v1072
      %v1509 = vpop.f32.mrb[0].mxu0
      %v1510 = vadd.f32 %v1446, %v1509
      %v1511 = vpop.f32.mrb[0].mxu0
      %v1512 = vpop.f32.mrb[0].mxu0
      %v1513 = vadd.f32 %v1449, %v1512
      %v1514 = vpop.f32.mrb[0].mxu0
      %1515 = vmatprep.mubr.bf16.mxu0 %v1097
      %1516 = vmatmul.mubr.bf16.gmra.mrb[0].mxu0 %v1096
      %v1517 = vpop.f32.mrb[0].mxu0
      %v1518 = vadd.f32 %v1454, %v1517
      %v1519 = vpop.f32.mrb[0].mxu0
      %v1520 = vpop.f32.mrb[0].mxu0
      %v1521 = vadd.f32 %v1457, %v1520
      %v1522 = vpop.f32.mrb[0].mxu0
      %1523 = vmatprep.mubr.bf16.mxu0 %v1121
      %1524 = vmatmul.mubr.bf16.gmra.mrb[0].mxu0 %v1120
      %v1525 = vpop.f32.mrb[0].mxu0
      %v1526 = vadd.f32 %v1462, %v1525
      %v1527 = vpop.f32.mrb[0].mxu0
      %v1528 = vpop.f32.mrb[0].mxu0
      %v1529 = vpop.f32.mrb[0].mxu0
      %1530 = vdwg.mxu0
      %1531 = vmatprep.subr.bf16.mxu0 0
      %1532 = vmatpush1.bf16.msra.mxu0 %v1188
      %1533 = vmatprep.subr.bf16.mxu0 0
      %1534 = vmatpush1.bf16.msra.mxu0 %v1189
      %1535 = vmatprep.subr.bf16.mxu0 0
      %1536 = vmatpush1.bf16.msra.mxu0 %v1190
      %1537 = vmatprep.subr.bf16.mxu0 0
      %1538 = vmatpush1.bf16.msra.mxu0 %v1191
      %1539 = vmatprep.subr.bf16.mxu0 0
      %1540 = vmatpush1.bf16.msra.mxu0 %v1192
      %1541 = vmatprep.subr.bf16.mxu0 0
      %1542 = vmatpush1.bf16.msra.mxu0 %v1193
      %1543 = vmatprep.subr.bf16.mxu0 0
      %1544 = vmatpush1.bf16.msra.mxu0 %v1194
      %1545 = vmatprep.subr.bf16.mxu0 0
      %1546 = vmatpush1.bf16.msra.mxu0 %v1195
      %1547 = vmatprep.subr.bf16.mxu0 0
      %1548 = vmatpush1.bf16.msra.mxu0 %v1196
      %1549 = vmatprep.subr.bf16.mxu0 0
      %1550 = vmatpush1.bf16.msra.mxu0 %v1197
      %1551 = vmatprep.subr.bf16.mxu0 0
      %1552 = vmatpush1.bf16.msra.mxu0 %v1198
      %1553 = vmatprep.subr.bf16.mxu0 0
      %1554 = vmatpush1.bf16.msra.mxu0 %v1199
      %1555 = vmatprep.subr.bf16.mxu0 0
      %1556 = vmatpush1.bf16.msra.mxu0 %v1200
      %1557 = vmatprep.subr.bf16.mxu0 0
      %1558 = vmatpush1.bf16.msra.mxu0 %v1201
      %1559 = vmatprep.subr.bf16.mxu0 0
      %1560 = vmatpush1.bf16.msra.mxu0 %v1202
      %1561 = vmatprep.subr.bf16.mxu0 0
      %1562 = vmatpush1.bf16.msra.mxu0 %v1203
      %1563 = vmatprep.mubr.bf16.mxu0 %v1051
      %1564 = vmatmul.mubr.bf16.gmra.mrb[0].mxu0 %v1050
      %v1565 = vpop.f32.mrb[0].mxu0
      %v1566 = vadd.f32 %v1502, %v1565
      %v1567 = vpop.f32.mrb[0].mxu0
      %v1568 = vpop.f32.mrb[0].mxu0
      %v1569 = vadd.f32 %v1505, %v1568
      %v1570 = vpop.f32.mrb[0].mxu0
      %1571 = vmatprep.mubr.bf16.mxu0 %v1075
      %1572 = vmatmul.mubr.bf16.gmra.mrb[0].mxu0 %v1074
      %v1573 = vpop.f32.mrb[0].mxu0
      %v1574 = vadd.f32 %v1510, %v1573
      %v1575 = vpop.f32.mrb[0].mxu0
      %v1576 = vpop.f32.mrb[0].mxu0
      %v1577 = vadd.f32 %v1513, %v1576
      %v1578 = vpop.f32.mrb[0].mxu0
      %1579 = vmatprep.mubr.bf16.mxu0 %v1099
      %1580 = vmatmul.mubr.bf16.gmra.mrb[0].mxu0 %v1098
      %v1581 = vpop.f32.mrb[0].mxu0
      %v1582 = vadd.f32 %v1518, %v1581
      %v1583 = vpop.f32.mrb[0].mxu0
      %v1584 = vpop.f32.mrb[0].mxu0
      %v1585 = vadd.f32 %v1521, %v1584
      %v1586 = vpop.f32.mrb[0].mxu0
      %1587 = vmatprep.mubr.bf16.mxu0 %v1123
      %1588 = vmatmul.mubr.bf16.gmra.mrb[0].mxu0 %v1122
      %v1589 = vpop.f32.mrb[0].mxu0
      %v1590 = vadd.f32 %v1526, %v1589
      %v1591 = vpop.f32.mrb[0].mxu0
      %v1592 = vpop.f32.mrb[0].mxu0
      %v1593 = vpop.f32.mrb[0].mxu0
      %1594 = vdwg.mxu0
      %1595 = vmatprep.subr.bf16.mxu0 0
      %1596 = vmatpush1.bf16.msra.mxu0 %v1204
      %1597 = vmatprep.subr.bf16.mxu0 0
      %1598 = vmatpush1.bf16.msra.mxu0 %v1205
      %1599 = vmatprep.subr.bf16.mxu0 0
      %1600 = vmatpush1.bf16.msra.mxu0 %v1206
      %1601 = vmatprep.subr.bf16.mxu0 0
      %1602 = vmatpush1.bf16.msra.mxu0 %v1207
      %1603 = vmatprep.subr.bf16.mxu0 0
      %1604 = vmatpush1.bf16.msra.mxu0 %v1208
      %1605 = vmatprep.subr.bf16.mxu0 0
      %1606 = vmatpush1.bf16.msra.mxu0 %v1209
      %1607 = vmatprep.subr.bf16.mxu0 0
      %1608 = vmatpush1.bf16.msra.mxu0 %v1210
      %1609 = vmatprep.subr.bf16.mxu0 0
      %1610 = vmatpush1.bf16.msra.mxu0 %v1211
      %1611 = vmatprep.subr.bf16.mxu0 0
      %1612 = vmatpush1.bf16.msra.mxu0 %v1212
      %1613 = vmatprep.subr.bf16.mxu0 0
      %1614 = vmatpush1.bf16.msra.mxu0 %v1213
      %1615 = vmatprep.subr.bf16.mxu0 0
      %1616 = vmatpush1.bf16.msra.mxu0 %v1214
      %1617 = vmatprep.subr.bf16.mxu0 0
      %1618 = vmatpush1.bf16.msra.mxu0 %v1215
      %1619 = vmatprep.subr.bf16.mxu0 0
      %1620 = vmatpush1.bf16.msra.mxu0 %v1216
      %1621 = vmatprep.subr.bf16.mxu0 0
      %1622 = vmatpush1.bf16.msra.mxu0 %v1217
      %1623 = vmatprep.subr.bf16.mxu0 0
      %1624 = vmatpush1.bf16.msra.mxu0 %v1218
      %1625 = vmatprep.subr.bf16.mxu0 0
      %1626 = vmatpush1.bf16.msra.mxu0 %v1219
      %1627 = vmatprep.mubr.bf16.mxu0 %v1053
      %1628 = vmatmul.mubr.bf16.gmra.mrb[0].mxu0 %v1052
      %v1629 = vpop.f32.mrb[0].mxu0
      %v1630 = vadd.f32 %v1566, %v1629
      %v1631 = vpop.f32.mrb[0].mxu0
      %v1632 = vpop.f32.mrb[0].mxu0
      %v1633 = vadd.f32 %v1569, %v1632
      %v1634 = vpop.f32.mrb[0].mxu0
      %1635 = vmatprep.mubr.bf16.mxu0 %v1077
      %1636 = vmatmul.mubr.bf16.gmra.mrb[0].mxu0 %v1076
      %v1637 = vpop.f32.mrb[0].mxu0
      %v1638 = vadd.f32 %v1574, %v1637
      %v1639 = vpop.f32.mrb[0].mxu0
      %v1640 = vpop.f32.mrb[0].mxu0
      %v1641 = vadd.f32 %v1577, %v1640
      %v1642 = vpop.f32.mrb[0].mxu0
      %1643 = vmatprep.mubr.bf16.mxu0 %v1101
      %1644 = vmatmul.mubr.bf16.gmra.mrb[0].mxu0 %v1100
      %v1645 = vpop.f32.mrb[0].mxu0
      %v1646 = vadd.f32 %v1582, %v1645
      %v1647 = vpop.f32.mrb[0].mxu0
      %v1648 = vpop.f32.mrb[0].mxu0
      %v1649 = vadd.f32 %v1585, %v1648
      %v1650 = vpop.f32.mrb[0].mxu0
      %1651 = vmatprep.mubr.bf16.mxu0 %v1125
      %1652 = vmatmul.mubr.bf16.gmra.mrb[0].mxu0 %v1124
      %v1653 = vpop.f32.mrb[0].mxu0
      %v1654 = vadd.f32 %v1590, %v1653
      %v1655 = vpop.f32.mrb[0].mxu0
      %v1656 = vpop.f32.mrb[0].mxu0
      %v1657 = vpop.f32.mrb[0].mxu0
      %1658 = vdwg.mxu0
      %1659 = vmatprep.subr.bf16.mxu0 0
      %1660 = vmatpush1.bf16.msra.mxu0 %v1220
      %1661 = vmatprep.subr.bf16.mxu0 0
      %1662 = vmatpush1.bf16.msra.mxu0 %v1221
      %1663 = vmatprep.subr.bf16.mxu0 0
      %1664 = vmatpush1.bf16.msra.mxu0 %v1222
      %1665 = vmatprep.subr.bf16.mxu0 0
      %1666 = vmatpush1.bf16.msra.mxu0 %v1223
      %1667 = vmatprep.subr.bf16.mxu0 0
      %1668 = vmatpush1.bf16.msra.mxu0 %v1224
      %1669 = vmatprep.subr.bf16.mxu0 0
      %1670 = vmatpush1.bf16.msra.mxu0 %v1225
      %1671 = vmatprep.subr.bf16.mxu0 0
      %1672 = vmatpush1.bf16.msra.mxu0 %v1226
      %1673 = vmatprep.subr.bf16.mxu0 0
      %1674 = vmatpush1.bf16.msra.mxu0 %v1227
      %1675 = vmatprep.subr.bf16.mxu0 0
      %1676 = vmatpush1.bf16.msra.mxu0 %v1228
      %1677 = vmatprep.subr.bf16.mxu0 0
      %1678 = vmatpush1.bf16.msra.mxu0 %v1229
      %1679 = vmatprep.subr.bf16.mxu0 0
      %1680 = vmatpush1.bf16.msra.mxu0 %v1230
      %1681 = vmatprep.subr.bf16.mxu0 0
      %1682 = vmatpush1.bf16.msra.mxu0 %v1231
      %1683 = vmatprep.subr.bf16.mxu0 0
      %1684 = vmatpush1.bf16.msra.mxu0 %v1232
      %1685 = vmatprep.subr.bf16.mxu0 0
      %1686 = vmatpush1.bf16.msra.mxu0 %v1233
      %1687 = vmatprep.subr.bf16.mxu0 0
      %1688 = vmatpush1.bf16.msra.mxu0 %v1234
      %1689 = vmatprep.subr.bf16.mxu0 0
      %1690 = vmatpush1.bf16.msra.mxu0 %v1235
      %1691 = vmatprep.mubr.bf16.mxu0 %v1055
      %1692 = vmatmul.mubr.bf16.gmra.mrb[0].mxu0 %v1054
      %v1693 = vpop.f32.mrb[0].mxu0
      %v1694 = vadd.f32 %v1630, %v1693
      %v1695 = vpop.f32.mrb[0].mxu0
      %v1696 = vpop.f32.mrb[0].mxu0
      %v1697 = vadd.f32 %v1633, %v1696
      %v1698 = vpop.f32.mrb[0].mxu0
      %1699 = vmatprep.mubr.bf16.mxu0 %v1079
      %1700 = vmatmul.mubr.bf16.gmra.mrb[0].mxu0 %v1078
      %v1701 = vpop.f32.mrb[0].mxu0
      %v1702 = vadd.f32 %v1638, %v1701
      %v1703 = vpop.f32.mrb[0].mxu0
      %v1704 = vpop.f32.mrb[0].mxu0
      %v1705 = vadd.f32 %v1641, %v1704
      %v1706 = vpop.f32.mrb[0].mxu0
      %1707 = vmatprep.mubr.bf16.mxu0 %v1103
      %1708 = vmatmul.mubr.bf16.gmra.mrb[0].mxu0 %v1102
      %v1709 = vpop.f32.mrb[0].mxu0
      %v1710 = vadd.f32 %v1646, %v1709
      %v1711 = vpop.f32.mrb[0].mxu0
      %v1712 = vpop.f32.mrb[0].mxu0
      %v1713 = vadd.f32 %v1649, %v1712
      %v1714 = vpop.f32.mrb[0].mxu0
      %1715 = vmatprep.mubr.bf16.mxu0 %v1127
      %1716 = vmatmul.mubr.bf16.gmra.mrb[0].mxu0 %v1126
      %v1717 = vpop.f32.mrb[0].mxu0
      %v1718 = vadd.f32 %v1654, %v1717
      %v1719 = vpop.f32.mrb[0].mxu0
      %v1720 = vpop.f32.mrb[0].mxu0
      %v1721 = vpop.f32.mrb[0].mxu0
      %1722 = vdwg.mxu0
      %1723 = vmatprep.subr.bf16.mxu0 0
      %1724 = vmatpush1.bf16.msra.mxu0 %v1236
      %1725 = vmatprep.subr.bf16.mxu0 0
      %1726 = vmatpush1.bf16.msra.mxu0 %v1237
      %1727 = vmatprep.subr.bf16.mxu0 0
      %1728 = vmatpush1.bf16.msra.mxu0 %v1238
      %1729 = vmatprep.subr.bf16.mxu0 0
      %1730 = vmatpush1.bf16.msra.mxu0 %v1239
      %1731 = vmatprep.subr.bf16.mxu0 0
      %1732 = vmatpush1.bf16.msra.mxu0 %v1240
      %1733 = vmatprep.subr.bf16.mxu0 0
      %1734 = vmatpush1.bf16.msra.mxu0 %v1241
      %1735 = vmatprep.subr.bf16.mxu0 0
      %1736 = vmatpush1.bf16.msra.mxu0 %v1242
      %1737 = vmatprep.subr.bf16.mxu0 0
      %1738 = vmatpush1.bf16.msra.mxu0 %v1243
      %1739 = vmatprep.subr.bf16.mxu0 0
      %1740 = vmatpush1.bf16.msra.mxu0 %v1244
      %1741 = vmatprep.subr.bf16.mxu0 0
      %1742 = vmatpush1.bf16.msra.mxu0 %v1245
      %1743 = vmatprep.subr.bf16.mxu0 0
      %1744 = vmatpush1.bf16.msra.mxu0 %v1246
      %1745 = vmatprep.subr.bf16.mxu0 0
      %1746 = vmatpush1.bf16.msra.mxu0 %v1247
      %1747 = vmatprep.subr.bf16.mxu0 0
      %1748 = vmatpush1.bf16.msra.mxu0 %v1248
      %1749 = vmatprep.subr.bf16.mxu0 0
      %1750 = vmatpush1.bf16.msra.mxu0 %v1249
      %1751 = vmatprep.subr.bf16.mxu0 0
      %1752 = vmatpush1.bf16.msra.mxu0 %v1250
      %1753 = vmatprep.subr.bf16.mxu0 0
      %1754 = vmatpush1.bf16.msra.mxu0 %v1251
      %1755 = vmatprep.mubr.bf16.mxu0 %v1057
      %1756 = vmatmul.mubr.bf16.gmra.mrb[0].mxu0 %v1056
      %v1757 = vpop.f32.mrb[0].mxu0
      %v1758 = vadd.f32 %v1694, %v1757
      %v1759 = vpop.f32.mrb[0].mxu0
      %v1760 = vpop.f32.mrb[0].mxu0
      %v1761 = vadd.f32 %v1697, %v1760
      %v1762 = vpop.f32.mrb[0].mxu0
      %1763 = vmatprep.mubr.bf16.mxu0 %v1081
      %1764 = vmatmul.mubr.bf16.gmra.mrb[0].mxu0 %v1080
      %v1765 = vpop.f32.mrb[0].mxu0
      %v1766 = vadd.f32 %v1702, %v1765
      %v1767 = vpop.f32.mrb[0].mxu0
      %v1768 = vpop.f32.mrb[0].mxu0
      %v1769 = vadd.f32 %v1705, %v1768
      %v1770 = vpop.f32.mrb[0].mxu0
      %1771 = vmatprep.mubr.bf16.mxu0 %v1105
      %1772 = vmatmul.mubr.bf16.gmra.mrb[0].mxu0 %v1104
      %v1773 = vpop.f32.mrb[0].mxu0
      %v1774 = vadd.f32 %v1710, %v1773
      %v1775 = vpop.f32.mrb[0].mxu0
      %v1776 = vpop.f32.mrb[0].mxu0
      %v1777 = vadd.f32 %v1713, %v1776
      %v1778 = vpop.f32.mrb[0].mxu0
      %1779 = vmatprep.mubr.bf16.mxu0 %v1129
      %1780 = vmatmul.mubr.bf16.gmra.mrb[0].mxu0 %v1128
      %v1781 = vpop.f32.mrb[0].mxu0
      %v1782 = vadd.f32 %v1718, %v1781
      %v1783 = vpop.f32.mrb[0].mxu0
      %v1784 = vpop.f32.mrb[0].mxu0
      %v1785 = vpop.f32.mrb[0].mxu0
      %1786 = vdwg.mxu0
      %1787 = vmatprep.subr.bf16.mxu0 0
      %1788 = vmatpush1.bf16.msra.mxu0 %v1252
      %1789 = vmatprep.subr.bf16.mxu0 0
      %1790 = vmatpush1.bf16.msra.mxu0 %v1253
      %1791 = vmatprep.subr.bf16.mxu0 0
      %1792 = vmatpush1.bf16.msra.mxu0 %v1254
      %1793 = vmatprep.subr.bf16.mxu0 0
      %1794 = vmatpush1.bf16.msra.mxu0 %v1255
      %1795 = vmatprep.subr.bf16.mxu0 0
      %1796 = vmatpush1.bf16.msra.mxu0 %v1256
      %1797 = vmatprep.subr.bf16.mxu0 0
      %1798 = vmatpush1.bf16.msra.mxu0 %v1257
      %1799 = vmatprep.subr.bf16.mxu0 0
      %1800 = vmatpush1.bf16.msra.mxu0 %v1258
      %1801 = vmatprep.subr.bf16.mxu0 0
      %1802 = vmatpush1.bf16.msra.mxu0 %v1259
      %1803 = vmatprep.subr.bf16.mxu0 0
      %1804 = vmatpush1.bf16.msra.mxu0 %v1260
      %1805 = vmatprep.subr.bf16.mxu0 0
      %1806 = vmatpush1.bf16.msra.mxu0 %v1261
      %1807 = vmatprep.subr.bf16.mxu0 0
      %1808 = vmatpush1.bf16.msra.mxu0 %v1262
      %1809 = vmatprep.subr.bf16.mxu0 0
      %1810 = vmatpush1.bf16.msra.mxu0 %v1263
      %1811 = vmatprep.subr.bf16.mxu0 0
      %1812 = vmatpush1.bf16.msra.mxu0 %v1264
      %1813 = vmatprep.subr.bf16.mxu0 0
      %1814 = vmatpush1.bf16.msra.mxu0 %v1265
      %1815 = vmatprep.subr.bf16.mxu0 0
      %1816 = vmatpush1.bf16.msra.mxu0 %v1266
      %1817 = vmatprep.subr.bf16.mxu0 0
      %1818 = vmatpush1.bf16.msra.mxu0 %v1267
      %1819 = vmatprep.mubr.bf16.mxu0 %v1059
      %1820 = vmatmul.mubr.bf16.gmra.mrb[0].mxu0 %v1058
      %v1821 = vpop.f32.mrb[0].mxu0
      %v1822 = vadd.f32 %v1758, %v1821
      %v1823 = vpop.f32.mrb[0].mxu0
      %v1824 = vpop.f32.mrb[0].mxu0
      %v1825 = vadd.f32 %v1761, %v1824
      %v1826 = vpop.f32.mrb[0].mxu0
      %1827 = vmatprep.mubr.bf16.mxu0 %v1083
      %1828 = vmatmul.mubr.bf16.gmra.mrb[0].mxu0 %v1082
      %v1829 = vpop.f32.mrb[0].mxu0
      %v1830 = vadd.f32 %v1766, %v1829
      %v1831 = vpop.f32.mrb[0].mxu0
      %v1832 = vpop.f32.mrb[0].mxu0
      %v1833 = vadd.f32 %v1769, %v1832
      %v1834 = vpop.f32.mrb[0].mxu0
      %1835 = vmatprep.mubr.bf16.mxu0 %v1107
      %1836 = vmatmul.mubr.bf16.gmra.mrb[0].mxu0 %v1106
      %v1837 = vpop.f32.mrb[0].mxu0
      %v1838 = vadd.f32 %v1774, %v1837
      %v1839 = vpop.f32.mrb[0].mxu0
      %v1840 = vpop.f32.mrb[0].mxu0
      %v1841 = vadd.f32 %v1777, %v1840
      %v1842 = vpop.f32.mrb[0].mxu0
      %1843 = vmatprep.mubr.bf16.mxu0 %v1131
      %1844 = vmatmul.mubr.bf16.gmra.mrb[0].mxu0 %v1130
      %v1845 = vpop.f32.mrb[0].mxu0
      %v1846 = vadd.f32 %v1782, %v1845
      %v1847 = vpop.f32.mrb[0].mxu0
      %v1848 = vpop.f32.mrb[0].mxu0
      %v1849 = vpop.f32.mrb[0].mxu0
      %1850 = vdwg.mxu0
      %1851 = vmatprep.subr.bf16.mxu0 0
      %1852 = vmatpush1.bf16.msra.mxu0 %v1268
      %1853 = vmatprep.subr.bf16.mxu0 0
      %1854 = vmatpush1.bf16.msra.mxu0 %v1269
      %1855 = vmatprep.subr.bf16.mxu0 0
      %1856 = vmatpush1.bf16.msra.mxu0 %v1270
      %1857 = vmatprep.subr.bf16.mxu0 0
      %1858 = vmatpush1.bf16.msra.mxu0 %v1271
      %1859 = vmatprep.subr.bf16.mxu0 0
      %1860 = vmatpush1.bf16.msra.mxu0 %v1272
      %1861 = vmatprep.subr.bf16.mxu0 0
      %1862 = vmatpush1.bf16.msra.mxu0 %v1273
      %1863 = vmatprep.subr.bf16.mxu0 0
      %1864 = vmatpush1.bf16.msra.mxu0 %v1274
      %1865 = vmatprep.subr.bf16.mxu0 0
      %1866 = vmatpush1.bf16.msra.mxu0 %v1275
      %1867 = vmatprep.subr.bf16.mxu0 0
      %1868 = vmatpush1.bf16.msra.mxu0 %v1276
      %1869 = vmatprep.subr.bf16.mxu0 0
      %1870 = vmatpush1.bf16.msra.mxu0 %v1277
      %1871 = vmatprep.subr.bf16.mxu0 0
      %1872 = vmatpush1.bf16.msra.mxu0 %v1278
      %1873 = vmatprep.subr.bf16.mxu0 0
      %1874 = vmatpush1.bf16.msra.mxu0 %v1279
      %1875 = vmatprep.subr.bf16.mxu0 0
      %1876 = vmatpush1.bf16.msra.mxu0 %v1280
      %1877 = vmatprep.subr.bf16.mxu0 0
      %1878 = vmatpush1.bf16.msra.mxu0 %v1281
      %1879 = vmatprep.subr.bf16.mxu0 0
      %1880 = vmatpush1.bf16.msra.mxu0 %v1282
      %1881 = vmatprep.subr.bf16.mxu0 0
      %1882 = vmatpush1.bf16.msra.mxu0 %v1283
      %1883 = vmatprep.mubr.bf16.mxu0 %v1061
      %1884 = vmatmul.mubr.bf16.gmra.mrb[0].mxu0 %v1060
      %v1885 = vpop.f32.mrb[0].mxu0
      %v1886 = vadd.f32 %v1822, %v1885
      %v1887 = vpop.f32.mrb[0].mxu0
      %v1888 = vpop.f32.mrb[0].mxu0
      %v1889 = vadd.f32 %v1825, %v1888
      %v1890 = vpop.f32.mrb[0].mxu0
      %1891 = vmatprep.mubr.bf16.mxu0 %v1085
      %1892 = vmatmul.mubr.bf16.gmra.mrb[0].mxu0 %v1084
      %v1893 = vpop.f32.mrb[0].mxu0
      %v1894 = vadd.f32 %v1830, %v1893
      %v1895 = vpop.f32.mrb[0].mxu0
      %v1896 = vpop.f32.mrb[0].mxu0
      %v1897 = vadd.f32 %v1833, %v1896
      %v1898 = vpop.f32.mrb[0].mxu0
      %1899 = vmatprep.mubr.bf16.mxu0 %v1109
      %1900 = vmatmul.mubr.bf16.gmra.mrb[0].mxu0 %v1108
      %v1901 = vpop.f32.mrb[0].mxu0
      %v1902 = vadd.f32 %v1838, %v1901
      %v1903 = vpop.f32.mrb[0].mxu0
      %v1904 = vpop.f32.mrb[0].mxu0
      %v1905 = vadd.f32 %v1841, %v1904
      %v1906 = vpop.f32.mrb[0].mxu0
      %1907 = vmatprep.mubr.bf16.mxu0 %v1133
      %1908 = vmatmul.mubr.bf16.gmra.mrb[0].mxu0 %v1132
      %v1909 = vpop.f32.mrb[0].mxu0
      %v1910 = vadd.f32 %v1846, %v1909
      %v1911 = vpop.f32.mrb[0].mxu0
      %v1912 = vpop.f32.mrb[0].mxu0
      %v1913 = vpop.f32.mrb[0].mxu0
      %1914 = vdwg.mxu0
      %1915 = vmatprep.subr.bf16.mxu0 0
      %1916 = vmatpush1.bf16.msra.mxu0 %v1284
      %1917 = vmatprep.subr.bf16.mxu0 0
      %1918 = vmatpush1.bf16.msra.mxu0 %v1285
      %1919 = vmatprep.subr.bf16.mxu0 0
      %1920 = vmatpush1.bf16.msra.mxu0 %v1286
      %1921 = vmatprep.subr.bf16.mxu0 0
      %1922 = vmatpush1.bf16.msra.mxu0 %v1287
      %1923 = vmatprep.subr.bf16.mxu0 0
      %1924 = vmatpush1.bf16.msra.mxu0 %v1288
      %1925 = vmatprep.subr.bf16.mxu0 0
      %1926 = vmatpush1.bf16.msra.mxu0 %v1289
      %1927 = vmatprep.subr.bf16.mxu0 0
      %1928 = vmatpush1.bf16.msra.mxu0 %v1290
      %1929 = vmatprep.subr.bf16.mxu0 0
      %1930 = vmatpush1.bf16.msra.mxu0 %v1291
      %1931 = vmatprep.subr.bf16.mxu0 0
      %1932 = vmatpush1.bf16.msra.mxu0 %v1292
      %1933 = vmatprep.subr.bf16.mxu0 0
      %1934 = vmatpush1.bf16.msra.mxu0 %v1293
      %1935 = vmatprep.subr.bf16.mxu0 0
      %1936 = vmatpush1.bf16.msra.mxu0 %v1294
      %1937 = vmatprep.subr.bf16.mxu0 0
      %1938 = vmatpush1.bf16.msra.mxu0 %v1295
      %1939 = vmatprep.subr.bf16.mxu0 0
      %1940 = vmatpush1.bf16.msra.mxu0 %v1296
      %1941 = vmatprep.subr.bf16.mxu0 0
      %1942 = vmatpush1.bf16.msra.mxu0 %v1297
      %1943 = vmatprep.subr.bf16.mxu0 0
      %1944 = vmatpush1.bf16.msra.mxu0 %v1298
      %1945 = vmatprep.subr.bf16.mxu0 0
      %1946 = vmatpush1.bf16.msra.mxu0 %v1299
      %1947 = vmatprep.mubr.bf16.mxu0 %v1063
      %1948 = vmatmul.mubr.bf16.gmra.mrb[0].mxu0 %v1062
      %v1949 = vpop.f32.mrb[0].mxu0
      %v1950 = vadd.f32 %v1886, %v1949
      %v1951 = vpop.f32.mrb[0].mxu0
      %v1952 = vpop.f32.mrb[0].mxu0
      %v1953 = vadd.f32 %v1889, %v1952
      %v1954 = vpop.f32.mrb[0].mxu0
      %1955 = vmatprep.mubr.bf16.mxu0 %v1087
      %1956 = vmatmul.mubr.bf16.gmra.mrb[0].mxu0 %v1086
      %v1957 = vpop.f32.mrb[0].mxu0
      %v1958 = vadd.f32 %v1894, %v1957
      %v1959 = vpop.f32.mrb[0].mxu0
      %v1960 = vpop.f32.mrb[0].mxu0
      %v1961 = vadd.f32 %v1897, %v1960
      %v1962 = vpop.f32.mrb[0].mxu0
      %1963 = vmatprep.mubr.bf16.mxu0 %v1111
      %1964 = vmatmul.mubr.bf16.gmra.mrb[0].mxu0 %v1110
      %v1965 = vpop.f32.mrb[0].mxu0
      %v1966 = vadd.f32 %v1902, %v1965
      %v1967 = vpop.f32.mrb[0].mxu0
      %v1968 = vpop.f32.mrb[0].mxu0
      %v1969 = vadd.f32 %v1905, %v1968
      %v1970 = vpop.f32.mrb[0].mxu0
      %1971 = vmatprep.mubr.bf16.mxu0 %v1135
      %1972 = vmatmul.mubr.bf16.gmra.mrb[0].mxu0 %v1134
      %v1973 = vpop.f32.mrb[0].mxu0
      %v1974 = vadd.f32 %v1910, %v1973
      %v1975 = vpop.f32.mrb[0].mxu0
      %v1976 = vpop.f32.mrb[0].mxu0
      %v1977 = vpop.f32.mrb[0].mxu0
      %1978 = vdwg.mxu0
      %1979 = vmatprep.subr.bf16.mxu0 0
      %1980 = vmatpush1.bf16.msra.mxu0 %v1300
      %1981 = vmatprep.subr.bf16.mxu0 0
      %1982 = vmatpush1.bf16.msra.mxu0 %v1301
      %1983 = vmatprep.subr.bf16.mxu0 0
      %1984 = vmatpush1.bf16.msra.mxu0 %v1302
      %1985 = vmatprep.subr.bf16.mxu0 0
      %1986 = vmatpush1.bf16.msra.mxu0 %v1303
      %1987 = vmatprep.subr.bf16.mxu0 0
      %1988 = vmatpush1.bf16.msra.mxu0 %v1304
      %1989 = vmatprep.subr.bf16.mxu0 0
      %1990 = vmatpush1.bf16.msra.mxu0 %v1305
      %1991 = vmatprep.subr.bf16.mxu0 0
      %1992 = vmatpush1.bf16.msra.mxu0 %v1306
      %1993 = vmatprep.subr.bf16.mxu0 0
      %1994 = vmatpush1.bf16.msra.mxu0 %v1307
      %1995 = vmatprep.subr.bf16.mxu0 0
      %1996 = vmatpush1.bf16.msra.mxu0 %v1308
      %1997 = vmatprep.subr.bf16.mxu0 0
      %1998 = vmatpush1.bf16.msra.mxu0 %v1309
      %1999 = vmatprep.subr.bf16.mxu0 0
      %2000 = vmatpush1.bf16.msra.mxu0 %v1310
      %2001 = vmatprep.subr.bf16.mxu0 0
      %2002 = vmatpush1.bf16.msra.mxu0 %v1311
      %2003 = vmatprep.subr.bf16.mxu0 0
      %2004 = vmatpush1.bf16.msra.mxu0 %v1312
      %2005 = vmatprep.subr.bf16.mxu0 0
      %2006 = vmatpush1.bf16.msra.mxu0 %v1313
      %2007 = vmatprep.subr.bf16.mxu0 0
      %2008 = vmatpush1.bf16.msra.mxu0 %v1314
      %2009 = vmatprep.subr.bf16.mxu0 0
      %2010 = vmatpush1.bf16.msra.mxu0 %v1315
      %2011 = vmatprep.mubr.bf16.mxu0 %v1065
      %2012 = vmatmul.mubr.bf16.gmra.mrb[0].mxu0 %v1064
      %v2013 = vpop.f32.mrb[0].mxu0
      %v2014 = vadd.f32 %v1950, %v2013
      %v2015 = vpop.f32.mrb[0].mxu0
      %v2016 = vpop.f32.mrb[0].mxu0
      %v2017 = vadd.f32 %v1953, %v2016
      %v2018 = vpop.f32.mrb[0].mxu0
      %2019 = vmatprep.mubr.bf16.mxu0 %v1089
      %2020 = vmatmul.mubr.bf16.gmra.mrb[0].mxu0 %v1088
      %v2021 = vpop.f32.mrb[0].mxu0
      %v2022 = vadd.f32 %v1958, %v2021
      %v2023 = vpop.f32.mrb[0].mxu0
      %v2024 = vpop.f32.mrb[0].mxu0
      %v2025 = vadd.f32 %v1961, %v2024
      %v2026 = vpop.f32.mrb[0].mxu0
      %2027 = vmatprep.mubr.bf16.mxu0 %v1113
      %2028 = vmatmul.mubr.bf16.gmra.mrb[0].mxu0 %v1112
      %v2029 = vpop.f32.mrb[0].mxu0
      %v2030 = vadd.f32 %v1966, %v2029
      %v2031 = vpop.f32.mrb[0].mxu0
      %v2032 = vpop.f32.mrb[0].mxu0
      %v2033 = vadd.f32 %v1969, %v2032
      %v2034 = vpop.f32.mrb[0].mxu0
      %2035 = vmatprep.mubr.bf16.mxu0 %v1137
      %2036 = vmatmul.mubr.bf16.gmra.mrb[0].mxu0 %v1136
      %v2037 = vpop.f32.mrb[0].mxu0
      %v2038 = vadd.f32 %v1974, %v2037
      %v2039 = vpop.f32.mrb[0].mxu0
      %v2040 = vpop.f32.mrb[0].mxu0
      %v2041 = vpop.f32.mrb[0].mxu0
      %2042 = vdwg.mxu0
      %2043 = vmatprep.subr.bf16.mxu0 0
      %2044 = vmatpush1.bf16.msra.mxu0 %v1316
      %2045 = vmatprep.subr.bf16.mxu0 0
      %2046 = vmatpush1.bf16.msra.mxu0 %v1317
      %2047 = vmatprep.subr.bf16.mxu0 0
      %2048 = vmatpush1.bf16.msra.mxu0 %v1318
      %2049 = vmatprep.subr.bf16.mxu0 0
      %2050 = vmatpush1.bf16.msra.mxu0 %v1319
      %2051 = vmatprep.subr.bf16.mxu0 0
      %2052 = vmatpush1.bf16.msra.mxu0 %v1320
      %2053 = vmatprep.subr.bf16.mxu0 0
      %2054 = vmatpush1.bf16.msra.mxu0 %v1321
      %2055 = vmatprep.subr.bf16.mxu0 0
      %2056 = vmatpush1.bf16.msra.mxu0 %v1322
      %2057 = vmatprep.subr.bf16.mxu0 0
      %2058 = vmatpush1.bf16.msra.mxu0 %v1323
      %2059 = vmatprep.subr.bf16.mxu0 0
      %2060 = vmatpush1.bf16.msra.mxu0 %v1324
      %2061 = vmatprep.subr.bf16.mxu0 0
      %2062 = vmatpush1.bf16.msra.mxu0 %v1325
      %2063 = vmatprep.subr.bf16.mxu0 0
      %2064 = vmatpush1.bf16.msra.mxu0 %v1326
      %2065 = vmatprep.subr.bf16.mxu0 0
      %2066 = vmatpush1.bf16.msra.mxu0 %v1327
      %2067 = vmatprep.subr.bf16.mxu0 0
      %2068 = vmatpush1.bf16.msra.mxu0 %v1328
      %2069 = vmatprep.subr.bf16.mxu0 0
      %2070 = vmatpush1.bf16.msra.mxu0 %v1329
      %2071 = vmatprep.subr.bf16.mxu0 0
      %2072 = vmatpush1.bf16.msra.mxu0 %v1330
      %2073 = vmatprep.subr.bf16.mxu0 0
      %2074 = vmatpush1.bf16.msra.mxu0 %v1331
      %2075 = vmatprep.mubr.bf16.mxu0 %v1067
      %2076 = vmatmul.mubr.bf16.gmra.mrb[0].mxu0 %v1066
      %v2077 = vpop.f32.mrb[0].mxu0
      %v2078 = vadd.f32 %v2014, %v2077
      %v2079 = vpop.f32.mrb[0].mxu0
      %v2080 = vpop.f32.mrb[0].mxu0
      %v2081 = vadd.f32 %v2017, %v2080
      %v2082 = vpop.f32.mrb[0].mxu0
      %2083 = vmatprep.mubr.bf16.mxu0 %v1091
      %2084 = vmatmul.mubr.bf16.gmra.mrb[0].mxu0 %v1090
      %v2085 = vpop.f32.mrb[0].mxu0
      %v2086 = vadd.f32 %v2022, %v2085
      %v2087 = vpop.f32.mrb[0].mxu0
      %v2088 = vpop.f32.mrb[0].mxu0
      %v2089 = vadd.f32 %v2025, %v2088
      %v2090 = vpop.f32.mrb[0].mxu0
      %2091 = vmatprep.mubr.bf16.mxu0 %v1115
      %2092 = vmatmul.mubr.bf16.gmra.mrb[0].mxu0 %v1114
      %v2093 = vpop.f32.mrb[0].mxu0
      %v2094 = vadd.f32 %v2030, %v2093
      %v2095 = vpop.f32.mrb[0].mxu0
      %v2096 = vpop.f32.mrb[0].mxu0
      %v2097 = vadd.f32 %v2033, %v2096
      %v2098 = vpop.f32.mrb[0].mxu0
      %2099 = vmatprep.mubr.bf16.mxu0 %v1139
      %2100 = vmatmul.mubr.bf16.gmra.mrb[0].mxu0 %v1138
      %v2101 = vpop.f32.mrb[0].mxu0
      %v2102 = vadd.f32 %v2038, %v2101
      %v2103 = vpop.f32.mrb[0].mxu0
      %v2104 = vpop.f32.mrb[0].mxu0
      %v2105 = vpop.f32.mrb[0].mxu0
      %2106 = vdwg.mxu0
      %vm2107 = vcmask 523264
      %v2108 = vsel %vm2107, %v2078, 0.0
      %2109 = vadd.xlane.f32.xlu0 %v2108
      %v2110 = vpop.xlane.xlu0 %2109
      %v2111 = vsel %vm2107, %v2081, 0.0
      %2112 = vadd.xlane.f32.xlu0 %v2111
      %v2113 = vpop.xlane.xlu0 %2112
      %v2114 = vsel %vm2107, %v2086, 0.0
      %2115 = vadd.xlane.f32.xlu0 %v2114
      %v2116 = vpop.xlane.xlu0 %2115
      %v2117 = vsel %vm2107, %v2089, 0.0
      %2118 = vadd.xlane.f32.xlu0 %v2117
      %v2119 = vpop.xlane.xlu0 %2118
      %v2120 = vsel %vm2107, %v2094, 0.0
      %2121 = vadd.xlane.f32.xlu0 %v2120
      %v2122 = vpop.xlane.xlu0 %2121
      %v2123 = vsel %vm2107, %v2097, 0.0
      %2124 = vadd.xlane.f32.xlu0 %v2123
      %v2125 = vpop.xlane.xlu0 %2124
      %vm2126 = vcmask 517120
      %v2127 = vsel %vm2126, %v2102, 0.0
      %2128 = vadd.xlane.f32.xlu0 %v2127
      %v2129 = vpop.xlane.xlu0 %2128
      %v2130 = vrcp.pop 64.0
      %v2131 = vmul.f32 %v2110, %v2130
      %v2132 = vmul.f32 %v2113, %v2130
      %v2133 = vmul.f32 %v2116, %v2130
      %v2134 = vmul.f32 %v2119, %v2130
      %v2135 = vmul.f32 %v2122, %v2130
      %v2136 = vmul.f32 %v2125, %v2130
      %v2137 = vmul.f32 %v2129, %v2130
      %v2138 = vsub.f32 %v2078, %v2131
      %v2139 = vsub.f32 %v2081, %v2132
      %v2140 = vsub.f32 %v2086, %v2133
      %v2141 = vsub.f32 %v2089, %v2134
      %v2142 = vsub.f32 %v2094, %v2135
      %v2143 = vsub.f32 %v2097, %v2136
      %v2144 = vsub.f32 %v2102, %v2137
      %v2145 = vmul.f32 %v2138, %v2138
      %v2146 = vmul.f32 %v2139, %v2139
      %v2147 = vmul.f32 %v2140, %v2140
      %v2148 = vmul.f32 %v2141, %v2141
      %v2149 = vmul.f32 %v2142, %v2142
      %v2150 = vmul.f32 %v2143, %v2143
      %v2151 = vmul.f32 %v2144, %v2144
      %v2152 = vsel %vm2107, %v2145, 0.0
      %2153 = vadd.xlane.f32.xlu0 %v2152
      %v2154 = vpop.xlane.xlu0 %2153
      %v2155 = vsel %vm2107, %v2146, 0.0
      %2156 = vadd.xlane.f32.xlu0 %v2155
      %v2157 = vpop.xlane.xlu0 %2156
      %v2158 = vsel %vm2107, %v2147, 0.0
      %2159 = vadd.xlane.f32.xlu0 %v2158
      %v2160 = vpop.xlane.xlu0 %2159
      %v2161 = vsel %vm2107, %v2148, 0.0
      %2162 = vadd.xlane.f32.xlu0 %v2161
      %v2163 = vpop.xlane.xlu0 %2162
      %v2164 = vsel %vm2107, %v2149, 0.0
      %2165 = vadd.xlane.f32.xlu0 %v2164
      %v2166 = vpop.xlane.xlu0 %2165
      %v2167 = vsel %vm2107, %v2150, 0.0
      %2168 = vadd.xlane.f32.xlu0 %v2167
      %v2169 = vpop.xlane.xlu0 %2168
      %v2170 = vsel %vm2126, %v2151, 0.0
      %2171 = vadd.xlane.f32.xlu0 %v2170
      %v2172 = vpop.xlane.xlu0 %2171
      %v2173 = vmul.f32 %v2154, %v2130
      %v2174 = vmul.f32 %v2157, %v2130
      %v2175 = vmul.f32 %v2160, %v2130
      %v2176 = vmul.f32 %v2163, %v2130
      %v2177 = vmul.f32 %v2166, %v2130
      %v2178 = vmul.f32 %v2169, %v2130
      %v2179 = vmul.f32 %v2172, %v2130
      %v2180 = vadd.f32 %v2173, 1e-05
      %v2181 = vadd.f32 %v2174, 1e-05
      %v2182 = vadd.f32 %v2175, 1e-05
      %v2183 = vadd.f32 %v2176, 1e-05
      %v2184 = vadd.f32 %v2177, 1e-05
      %v2185 = vadd.f32 %v2178, 1e-05
      %v2186 = vadd.f32 %v2179, 1e-05
      %v2187 = vrsqrt.pop %v2180
      %v2188 = vrsqrt.pop %v2181
      %v2189 = vrsqrt.pop %v2182
      %v2190 = vrsqrt.pop %v2183
      %v2191 = vrsqrt.pop %v2184
      %v2192 = vrsqrt.pop %v2185
      %v2193 = vrsqrt.pop %v2186
      %v2194 = vmul.f32 %v2138, %v2187
      %v2195 = vmul.f32 %v2139, %v2188
      %v2196 = vmul.f32 %v2140, %v2189
      %v2197 = vmul.f32 %v2141, %v2190
      %v2198 = vmul.f32 %v2142, %v2191
      %v2199 = vmul.f32 %v2143, %v2192
      %v2200 = vmul.f32 %v2144, %v2193
      %v2201 = vld [vmem:[%s3] sm:$0x1]
      %v2203 = vlaneseq
      %v2204 = vshrl.u32 %v2203, 7
      %v2205 = vsub.s32 0, %v2204
      %v2206 = vrot.slane %v2201, %v2205
      %v2208 = vmul.f32 %v2194, %v2206
      %v2209 = vmul.f32 %v2195, %v2206
      %v2210 = vmul.f32 %v2196, %v2206
      %v2211 = vmul.f32 %v2197, %v2206
      %v2212 = vmul.f32 %v2198, %v2206
      %v2213 = vmul.f32 %v2199, %v2206
      %v2214 = vmul.f32 %v2200, %v2206
      %v2215 = vld [vmem:[%s4] sm:$0x1]
      %v2217 = vlaneseq
      %v2218 = vshrl.u32 %v2217, 7
      %v2219 = vsub.s32 0, %v2218
      %v2220 = vrot.slane %v2215, %v2219
      %v2222 = vadd.f32 %v2208, %v2220
      %v2223 = vadd.f32 %v2209, %v2220
      %v2224 = vadd.f32 %v2210, %v2220
      %v2225 = vadd.f32 %v2211, %v2220
      %v2226 = vadd.f32 %v2212, %v2220
      %v2227 = vadd.f32 %v2213, %v2220
      %v2228 = vadd.f32 %v2214, %v2220
      %v2229 = vsel %vm2107, %v2222, 0.0
      %2230 = vadd.xlane.f32.xlu0 %v2229
      %v2231 = vpop.xlane.xlu0 %2230
      %v2232 = vsel %vm2107, %v2223, 0.0
      %2233 = vadd.xlane.f32.xlu0 %v2232
      %v2234 = vpop.xlane.xlu0 %2233
      %v2235 = vsel %vm2107, %v2224, 0.0
      %2236 = vadd.xlane.f32.xlu0 %v2235
      %v2237 = vpop.xlane.xlu0 %2236
      %v2238 = vsel %vm2107, %v2225, 0.0
      %2239 = vadd.xlane.f32.xlu0 %v2238
      %v2240 = vpop.xlane.xlu0 %2239
      %v2241 = vsel %vm2107, %v2226, 0.0
      %2242 = vadd.xlane.f32.xlu0 %v2241
      %v2243 = vpop.xlane.xlu0 %2242
      %v2244 = vsel %vm2107, %v2227, 0.0
      %2245 = vadd.xlane.f32.xlu0 %v2244
      %v2246 = vpop.xlane.xlu0 %2245
      %v2247 = vsel %vm2126, %v2228, 0.0
      %2248 = vadd.xlane.f32.xlu0 %v2247
      %v2249 = vpop.xlane.xlu0 %2248
      %v2250 = vmul.f32 %v2231, %v2130
      %v2251 = vmul.f32 %v2234, %v2130
      %v2252 = vmul.f32 %v2237, %v2130
      %v2253 = vmul.f32 %v2240, %v2130
      %v2254 = vmul.f32 %v2243, %v2130
      %v2255 = vmul.f32 %v2246, %v2130
      %v2256 = vmul.f32 %v2249, %v2130
      %v2257 = vsub.f32 %v2222, %v2250
      %v2258 = vsub.f32 %v2223, %v2251
      %v2259 = vsub.f32 %v2224, %v2252
      %v2260 = vsub.f32 %v2225, %v2253
      %v2261 = vsub.f32 %v2226, %v2254
      %v2262 = vsub.f32 %v2227, %v2255
      %v2263 = vsub.f32 %v2228, %v2256
      %v2264 = vmul.f32 %v2257, %v2257
      %v2265 = vmul.f32 %v2258, %v2258
      %v2266 = vmul.f32 %v2259, %v2259
      %v2267 = vmul.f32 %v2260, %v2260
      %v2268 = vmul.f32 %v2261, %v2261
      %v2269 = vmul.f32 %v2262, %v2262
      %v2270 = vmul.f32 %v2263, %v2263
      %v2271 = vsel %vm2107, %v2264, 0.0
      %2272 = vadd.xlane.f32.xlu0 %v2271
      %v2273 = vpop.xlane.xlu0 %2272
      %v2274 = vsel %vm2107, %v2265, 0.0
      %2275 = vadd.xlane.f32.xlu0 %v2274
      %v2276 = vpop.xlane.xlu0 %2275
      %v2277 = vsel %vm2107, %v2266, 0.0
      %2278 = vadd.xlane.f32.xlu0 %v2277
      %v2279 = vpop.xlane.xlu0 %2278
      %v2280 = vsel %vm2107, %v2267, 0.0
      %2281 = vadd.xlane.f32.xlu0 %v2280
      %v2282 = vpop.xlane.xlu0 %2281
      %v2283 = vsel %vm2107, %v2268, 0.0
      %2284 = vadd.xlane.f32.xlu0 %v2283
      %v2285 = vpop.xlane.xlu0 %2284
      %v2286 = vsel %vm2107, %v2269, 0.0
      %2287 = vadd.xlane.f32.xlu0 %v2286
      %v2288 = vpop.xlane.xlu0 %2287
      %v2289 = vsel %vm2126, %v2270, 0.0
      %2290 = vadd.xlane.f32.xlu0 %v2289
      %v2291 = vpop.xlane.xlu0 %2290
      %v2292 = vmul.f32 %v2273, %v2130
      %v2293 = vmul.f32 %v2276, %v2130
      %v2294 = vmul.f32 %v2279, %v2130
      %v2295 = vmul.f32 %v2282, %v2130
      %v2296 = vmul.f32 %v2285, %v2130
      %v2297 = vmul.f32 %v2288, %v2130
      %v2298 = vmul.f32 %v2291, %v2130
      %v2299 = vadd.f32 %v2292, 1e-05
      %v2300 = vadd.f32 %v2293, 1e-05
      %v2301 = vadd.f32 %v2294, 1e-05
      %v2302 = vadd.f32 %v2295, 1e-05
      %v2303 = vadd.f32 %v2296, 1e-05
      %v2304 = vadd.f32 %v2297, 1e-05
      %v2305 = vadd.f32 %v2298, 1e-05
      %v2306 = vrsqrt.pop %v2299
      %v2307 = vrsqrt.pop %v2300
      %v2308 = vrsqrt.pop %v2301
      %v2309 = vrsqrt.pop %v2302
      %v2310 = vrsqrt.pop %v2303
      %v2311 = vrsqrt.pop %v2304
      %v2312 = vrsqrt.pop %v2305
      %v2313 = vmul.f32 %v2257, %v2306
      %v2314 = vmul.f32 %v2258, %v2307
      %v2315 = vmul.f32 %v2259, %v2308
      %v2316 = vmul.f32 %v2260, %v2309
      %v2317 = vmul.f32 %v2261, %v2310
      %v2318 = vmul.f32 %v2262, %v2311
      %v2319 = vmul.f32 %v2263, %v2312
      %v2320 = vld [vmem:[%s5] sm:$0xff]
      %v2321 = vld [vmem:[%s5 + $0x8] sm:$0xff]
      %v2322 = vld [vmem:[%s5 + $0x10] sm:$0xff]
      %v2323 = vld [vmem:[%s5 + $0x18] sm:$0xff]
      %v2324 = vld [vmem:[%s5 + $0x20] sm:$0xff]
      %v2325 = vld [vmem:[%s5 + $0x28] sm:$0xff]
      %v2326 = vld [vmem:[%s5 + $0x30] sm:$0xff]
      %v2327 = vld [vmem:[%s5 + $0x38] sm:$0xff]
      %v2328 = vld [vmem:[%s5 + $0x40] sm:$0xff]
      %v2329 = vld [vmem:[%s5 + $0x48] sm:$0xff]
      %v2330 = vld [vmem:[%s5 + $0x50] sm:$0xff]
      %v2331 = vld [vmem:[%s5 + $0x58] sm:$0xff]
      %v2332 = vld [vmem:[%s5 + $0x60] sm:$0xff]
      %v2333 = vld [vmem:[%s5 + $0x68] sm:$0xff]
      %v2334 = vld [vmem:[%s5 + $0x70] sm:$0xff]
      %v2335 = vld [vmem:[%s5 + $0x78] sm:$0xff]
      %v2336 = vpack.c.bf16 %v2314, %v2313
      %v2337 = vpack.c.bf16 %v2316, %v2315
      %v2338 = vpack.c.bf16 %v2318, %v2317
      %v2339 = vpack.c.bf16 %v2319, %v2319
      %v2340 = vpack.c.bf16 %v2322, %v2320
      %v2341 = vpack.c.bf16 %v2323, %v2321
      %v2342 = vpack.c.bf16 %v2326, %v2324
      %v2343 = vpack.c.bf16 %v2327, %v2325
      %v2344 = vpack.c.bf16 %v2330, %v2328
      %v2345 = vpack.c.bf16 %v2331, %v2329
      %v2346 = vpack.c.bf16 %v2334, %v2332
      %v2347 = vpack.c.bf16 %v2335, %v2333
      %v2348 = vld [vmem:[%s6] sm:$0x3]
      %v2350 = vlaneseq
      %v2351 = vshrl.u32 %v2350, 7
      %v2352 = vsub.s32 0, %v2351
      %v2353 = vrot.slane %v2348, %v2352
      %v2354 = vlaneseq
      %v2355 = vshrl.u32 %v2354, 7
      %v2356 = vsub.s32 1, %v2355
      %v2357 = vrot.slane %v2348, %v2356
      %v2361 = vsel %vm2107, %v2336, 0
      %v2364 = vsel %vm2107, %v2337, 0
      %v2367 = vsel %vm2107, %v2338, 0
      %v2370 = vsel %vm2107, %v2339, 0
      %2372 = vmatprep.subr.bf16.mxu0 %v2341
      %2373 = vmatpush1.bf16.msra.mxu0 %v2340
      %2374 = vmatprep.subr.bf16.mxu0 %v2343
      %2375 = vmatpush1.bf16.msra.mxu0 %v2342
      %2376 = vmatprep.subr.bf16.mxu0 %v2345
      %2377 = vmatpush1.bf16.msra.mxu0 %v2344
      %2378 = vmatprep.subr.bf16.mxu0 %v2347
      %2379 = vmatpush1.bf16.msra.mxu0 %v2346
      %2380 = vmatprep.subr.bf16.mxu0 0
      %2381 = vmatpush1.bf16.msra.mxu0 0
      %2382 = vmatprep.subr.bf16.mxu0 0
      %2383 = vmatpush1.bf16.msra.mxu0 0
      %2384 = vmatprep.subr.bf16.mxu0 0
      %2385 = vmatpush1.bf16.msra.mxu0 0
      %2386 = vmatprep.subr.bf16.mxu0 0
      %2387 = vmatpush1.bf16.msra.mxu0 0
      %2388 = vmatprep.subr.bf16.mxu0 0
      %2389 = vmatpush1.bf16.msra.mxu0 0
      %2390 = vmatprep.subr.bf16.mxu0 0
      %2391 = vmatpush1.bf16.msra.mxu0 0
      %2392 = vmatprep.subr.bf16.mxu0 0
      %2393 = vmatpush1.bf16.msra.mxu0 0
      %2394 = vmatprep.subr.bf16.mxu0 0
      %2395 = vmatpush1.bf16.msra.mxu0 0
      %2396 = vmatprep.subr.bf16.mxu0 0
      %2397 = vmatpush1.bf16.msra.mxu0 0
      %2398 = vmatprep.subr.bf16.mxu0 0
      %2399 = vmatpush1.bf16.msra.mxu0 0
      %2400 = vmatprep.subr.bf16.mxu0 0
      %2401 = vmatpush1.bf16.msra.mxu0 0
      %2402 = vmatprep.subr.bf16.mxu0 0
      %2403 = vmatpush1.bf16.msra.mxu0 0
      %2404 = vmatprep.mubr.bf16.mxu0 0
      %2405 = vmatmul.mubr.bf16.gmra.mrb[0].mxu0 %v2361
      %v2406 = vpop.f32.mrb[0].mxu0
      %v2407 = vadd.f32 %v2353, %v2406
      %v2408 = vpop.f32.mrb[0].mxu0
      %v2409 = vadd.f32 %v2357, %v2408
      %v2410 = vpop.f32.mrb[0].mxu0
      %v2411 = vadd.f32 %v2353, %v2410
      %v2412 = vpop.f32.mrb[0].mxu0
      %v2413 = vadd.f32 %v2357, %v2412
      %2414 = vmatprep.mubr.bf16.mxu0 0
      %2415 = vmatmul.mubr.bf16.gmra.mrb[0].mxu0 %v2364
      %v2416 = vpop.f32.mrb[0].mxu0
      %v2417 = vadd.f32 %v2353, %v2416
      %v2418 = vpop.f32.mrb[0].mxu0
      %v2419 = vadd.f32 %v2357, %v2418
      %v2420 = vpop.f32.mrb[0].mxu0
      %v2421 = vadd.f32 %v2353, %v2420
      %v2422 = vpop.f32.mrb[0].mxu0
      %v2423 = vadd.f32 %v2357, %v2422
      %2424 = vmatprep.mubr.bf16.mxu0 0
      %2425 = vmatmul.mubr.bf16.gmra.mrb[0].mxu0 %v2367
      %v2426 = vpop.f32.mrb[0].mxu0
      %v2427 = vadd.f32 %v2353, %v2426
      %v2428 = vpop.f32.mrb[0].mxu0
      %v2429 = vadd.f32 %v2357, %v2428
      %v2430 = vpop.f32.mrb[0].mxu0
      %v2431 = vadd.f32 %v2353, %v2430
      %v2432 = vpop.f32.mrb[0].mxu0
      %v2433 = vadd.f32 %v2357, %v2432
      %2434 = vmatprep.mubr.bf16.mxu0 0
      %2435 = vmatmul.mubr.bf16.gmra.mrb[0].mxu0 %v2370
      %v2436 = vpop.f32.mrb[0].mxu0
      %v2437 = vadd.f32 %v2353, %v2436
      %v2438 = vpop.f32.mrb[0].mxu0
      %v2439 = vadd.f32 %v2357, %v2438
      %v2440 = vpop.f32.mrb[0].mxu0
      %v2441 = vpop.f32.mrb[0].mxu0
      %2442 = vdwg.mxu0
      %v2443 = vld [vmem:[%s7] sm:$0xff]
      %v2444 = vld [vmem:[%s7 + $0x8] sm:$0xff]
      %v2445 = vld [vmem:[%s7 + $0x10] sm:$0xff]
      %v2446 = vld [vmem:[%s7 + $0x18] sm:$0xff]
      %v2447 = vld [vmem:[%s7 + $0x20] sm:$0xff]
      %v2448 = vld [vmem:[%s7 + $0x28] sm:$0xff]
      %v2449 = vld [vmem:[%s7 + $0x30] sm:$0xff]
      %v2450 = vld [vmem:[%s7 + $0x38] sm:$0xff]
      %v2451 = vpack.c.bf16 %v2411, %v2407
      %v2452 = vpack.c.bf16 %v2421, %v2417
      %v2453 = vpack.c.bf16 %v2431, %v2427
      %v2454 = vpack.c.bf16 %v2437, %v2437
      %2459 = vrot.lane.b32.xlu0 %v2451, 64
      %v2460 = vpop.permute.xlu0 %2459
      %2461 = vrot.lane.b32.xlu0 %v2452, 64
      %v2462 = vpop.permute.xlu0 %2461
      %2463 = vrot.lane.b32.xlu0 %v2453, 64
      %v2464 = vpop.permute.xlu0 %2463
      %2465 = vrot.lane.b32.xlu0 %v2454, 64
      %v2466 = vpop.permute.xlu0 %2465
      %vm2467 = vcmask 130048
      %v2469 = vsel %vm2467, %v2451, 0
      %v2472 = vsel %vm2467, %v2452, 0
      %v2475 = vsel %vm2467, %v2453, 0
      %v2478 = vsel %vm2467, %v2454, 0
      %v2481 = vsel %vm2467, %v2460, 0
      %v2484 = vsel %vm2467, %v2462, 0
      %v2487 = vsel %vm2467, %v2464, 0
      %v2490 = vsel %vm2467, %v2466, 0
      %2492 = vmatprep.subr.bf16.mxu0 0
      %2493 = vmatpush1.bf16.xpose.msra.mxu0 %v2481
      %2494 = vmatprep.subr.bf16.mxu0 0
      %2495 = vmatpush1.bf16.xpose.msra.mxu0 %v2484
      %2496 = vmatprep.subr.bf16.mxu0 0
      %2497 = vmatpush1.bf16.xpose.msra.mxu0 %v2487
      %2498 = vmatprep.subr.bf16.mxu0 0
      %2499 = vmatpush1.bf16.xpose.msra.mxu0 %v2490
      %2500 = vmatprep.subr.bf16.mxu0 0
      %2501 = vmatpush1.bf16.xpose.msra.mxu0 0
      %2502 = vmatprep.subr.bf16.mxu0 0
      %2503 = vmatpush1.bf16.xpose.msra.mxu0 0
      %2504 = vmatprep.subr.bf16.mxu0 0
      %2505 = vmatpush1.bf16.xpose.msra.mxu0 0
      %2506 = vmatprep.subr.bf16.mxu0 0
      %2507 = vmatpush1.bf16.xpose.msra.mxu0 0
      %2508 = vmatprep.subr.bf16.mxu0 0
      %2509 = vmatpush1.bf16.xpose.msra.mxu0 0
      %2510 = vmatprep.subr.bf16.mxu0 0
      %2511 = vmatpush1.bf16.xpose.msra.mxu0 0
      %2512 = vmatprep.subr.bf16.mxu0 0
      %2513 = vmatpush1.bf16.xpose.msra.mxu0 0
      %2514 = vmatprep.subr.bf16.mxu0 0
      %2515 = vmatpush1.bf16.xpose.msra.mxu0 0
      %2516 = vmatprep.subr.bf16.mxu0 0
      %2517 = vmatpush1.bf16.xpose.msra.mxu0 0
      %2518 = vmatprep.subr.bf16.mxu0 0
      %2519 = vmatpush1.bf16.xpose.msra.mxu0 0
      %2520 = vmatprep.subr.bf16.mxu0 0
      %2521 = vmatpush1.bf16.xpose.msra.mxu0 0
      %2522 = vmatprep.subr.bf16.mxu0 0
      %2523 = vmatpush1.bf16.xpose.msra.mxu0 0
      %2524 = vmatprep.mubr.bf16.mxu0 0
      %2525 = vmatmul.mubr.bf16.gmra.mrb[0].mxu0 %v2469
      %v2526 = vpop.f32.mrb[0].mxu0
      %v2527 = vadd.f32 0.0, %v2526
      %v2528 = vpop.f32.mrb[0].mxu0
      %v2529 = vpop.f32.mrb[0].mxu0
      %v2530 = vadd.f32 0.0, %v2529
      %v2531 = vpop.f32.mrb[0].mxu0
      %2532 = vmatprep.mubr.bf16.mxu0 0
      %2533 = vmatmul.mubr.bf16.gmra.mrb[0].mxu0 %v2472
      %v2534 = vpop.f32.mrb[0].mxu0
      %v2535 = vadd.f32 0.0, %v2534
      %v2536 = vpop.f32.mrb[0].mxu0
      %v2537 = vpop.f32.mrb[0].mxu0
      %v2538 = vadd.f32 0.0, %v2537
      %v2539 = vpop.f32.mrb[0].mxu0
      %2540 = vmatprep.mubr.bf16.mxu0 0
      %2541 = vmatmul.mubr.bf16.gmra.mrb[0].mxu0 %v2475
      %v2542 = vpop.f32.mrb[0].mxu0
      %v2543 = vadd.f32 0.0, %v2542
      %v2544 = vpop.f32.mrb[0].mxu0
      %v2545 = vpop.f32.mrb[0].mxu0
      %v2546 = vadd.f32 0.0, %v2545
      %v2547 = vpop.f32.mrb[0].mxu0
      %2548 = vmatprep.mubr.bf16.mxu0 0
      %2549 = vmatmul.mubr.bf16.gmra.mrb[0].mxu0 %v2478
      %v2550 = vpop.f32.mrb[0].mxu0
      %v2551 = vadd.f32 0.0, %v2550
      %v2552 = vpop.f32.mrb[0].mxu0
      %v2553 = vpop.f32.mrb[0].mxu0
      %v2554 = vpop.f32.mrb[0].mxu0
      %2555 = vdwg.mxu0
      %v2556 = vmul.f32 %v2527, 0.25
      %v2557 = vmul.f32 %v2530, 0.25
      %v2558 = vmul.f32 %v2535, 0.25
      %v2559 = vmul.f32 %v2538, 0.25
      %v2560 = vmul.f32 %v2543, 0.25
      %v2561 = vmul.f32 %v2546, 0.25
      %v2562 = vmul.f32 %v2551, 0.25
      %vm2563 = vcmask 408576
      %v2564 = vsel %vm2563, %v2556, -inf
      %2565 = vmax.xlane.f32.xlu0 %v2564
      %v2566 = vpop.xlane.xlu0 %2565
      %v2567 = vsel %vm2563, %v2557, -inf
      %2568 = vmax.xlane.f32.xlu0 %v2567
      %v2569 = vpop.xlane.xlu0 %2568
      %v2570 = vsel %vm2563, %v2558, -inf
      %2571 = vmax.xlane.f32.xlu0 %v2570
      %v2572 = vpop.xlane.xlu0 %2571
      %v2573 = vsel %vm2563, %v2559, -inf
      %2574 = vmax.xlane.f32.xlu0 %v2573
      %v2575 = vpop.xlane.xlu0 %2574
      %v2576 = vsel %vm2563, %v2560, -inf
      %2577 = vmax.xlane.f32.xlu0 %v2576
      %v2578 = vpop.xlane.xlu0 %2577
      %v2579 = vsel %vm2563, %v2561, -inf
      %2580 = vmax.xlane.f32.xlu0 %v2579
      %v2581 = vpop.xlane.xlu0 %2580
      %vm2582 = vcmask 402432
      %v2583 = vsel %vm2582, %v2562, -inf
      %2584 = vmax.xlane.f32.xlu0 %v2583
      %v2585 = vpop.xlane.xlu0 %2584
      %v2586 = vsub.f32 %v2556, %v2566
      %v2587 = vsub.f32 %v2557, %v2569
      %v2588 = vsub.f32 %v2558, %v2572
      %v2589 = vsub.f32 %v2559, %v2575
      %v2590 = vsub.f32 %v2560, %v2578
      %v2591 = vsub.f32 %v2561, %v2581
      %v2592 = vsub.f32 %v2562, %v2585
      %v2593 = vmul.f32 %v2586, 1.442695
      %v2594 = vpow.pop %v2593
      %v2595 = vmul.f32 %v2587, 1.442695
      %v2596 = vpow.pop %v2595
      %v2597 = vmul.f32 %v2588, 1.442695
      %v2598 = vpow.pop %v2597
      %v2599 = vmul.f32 %v2589, 1.442695
      %v2600 = vpow.pop %v2599
      %v2601 = vmul.f32 %v2590, 1.442695
      %v2602 = vpow.pop %v2601
      %v2603 = vmul.f32 %v2591, 1.442695
      %v2604 = vpow.pop %v2603
      %v2605 = vmul.f32 %v2592, 1.442695
      %v2606 = vpow.pop %v2605
      %v2607 = vsel %vm2563, %v2594, 0.0
      %2608 = vadd.xlane.f32.xlu0 %v2607
      %v2609 = vpop.xlane.xlu0 %2608
      %v2610 = vsel %vm2563, %v2596, 0.0
      %2611 = vadd.xlane.f32.xlu0 %v2610
      %v2612 = vpop.xlane.xlu0 %2611
      %v2613 = vsel %vm2563, %v2598, 0.0
      %2614 = vadd.xlane.f32.xlu0 %v2613
      %v2615 = vpop.xlane.xlu0 %2614
      %v2616 = vsel %vm2563, %v2600, 0.0
      %2617 = vadd.xlane.f32.xlu0 %v2616
      %v2618 = vpop.xlane.xlu0 %2617
      %v2619 = vsel %vm2563, %v2602, 0.0
      %2620 = vadd.xlane.f32.xlu0 %v2619
      %v2621 = vpop.xlane.xlu0 %2620
      %v2622 = vsel %vm2563, %v2604, 0.0
      %2623 = vadd.xlane.f32.xlu0 %v2622
      %v2624 = vpop.xlane.xlu0 %2623
      %v2625 = vsel %vm2582, %v2606, 0.0
      %2626 = vadd.xlane.f32.xlu0 %v2625
      %v2627 = vpop.xlane.xlu0 %2626
      %v2628 = vrcp.pop %v2609
      %v2629 = vrcp.pop %v2612
      %v2630 = vrcp.pop %v2615
      %v2631 = vrcp.pop %v2618
      %v2632 = vrcp.pop %v2621
      %v2633 = vrcp.pop %v2624
      %v2634 = vrcp.pop %v2627
      %v2635 = vmul.f32 %v2594, %v2628
      %v2636 = vmul.f32 %v2596, %v2629
      %v2637 = vmul.f32 %v2598, %v2630
      %v2638 = vmul.f32 %v2600, %v2631
      %v2639 = vmul.f32 %v2602, %v2632
      %v2640 = vmul.f32 %v2604, %v2633
      %v2641 = vmul.f32 %v2606, %v2634
      %v2642 = vpack.c.bf16 %v2636, %v2635
      %v2643 = vpack.c.bf16 %v2638, %v2637
      %v2644 = vpack.c.bf16 %v2640, %v2639
      %v2645 = vpack.c.bf16 %v2641, %v2641
      %v2646 = vpack.c.bf16 %v2413, %v2409
      %v2647 = vpack.c.bf16 %v2423, %v2419
      %v2648 = vpack.c.bf16 %v2433, %v2429
      %v2649 = vpack.c.bf16 %v2439, %v2439
      %v2651 = vsel %vm2563, %v2642, 0
      %v2654 = vsel %vm2563, %v2643, 0
      %v2657 = vsel %vm2563, %v2644, 0
      %v2660 = vsel %vm2563, %v2645, 0
      %vm2662 = vcmask 1040384
      %v2664 = vsel %vm2662, %v2649, 0
      %2666 = vmatprep.subr.bf16.mxu0 0
      %2667 = vmatpush1.bf16.msra.mxu0 %v2646
      %2668 = vmatprep.subr.bf16.mxu0 0
      %2669 = vmatpush1.bf16.msra.mxu0 %v2647
      %2670 = vmatprep.subr.bf16.mxu0 0
      %2671 = vmatpush1.bf16.msra.mxu0 %v2648
      %2672 = vmatprep.subr.bf16.mxu0 0
      %2673 = vmatpush1.bf16.msra.mxu0 %v2664
      %2674 = vmatprep.subr.bf16.mxu0 0
      %2675 = vmatpush1.bf16.msra.mxu0 0
      %2676 = vmatprep.subr.bf16.mxu0 0
      %2677 = vmatpush1.bf16.msra.mxu0 0
      %2678 = vmatprep.subr.bf16.mxu0 0
      %2679 = vmatpush1.bf16.msra.mxu0 0
      %2680 = vmatprep.subr.bf16.mxu0 0
      %2681 = vmatpush1.bf16.msra.mxu0 0
      %2682 = vmatprep.subr.bf16.mxu0 0
      %2683 = vmatpush1.bf16.msra.mxu0 0
      %2684 = vmatprep.subr.bf16.mxu0 0
      %2685 = vmatpush1.bf16.msra.mxu0 0
      %2686 = vmatprep.subr.bf16.mxu0 0
      %2687 = vmatpush1.bf16.msra.mxu0 0
      %2688 = vmatprep.subr.bf16.mxu0 0
      %2689 = vmatpush1.bf16.msra.mxu0 0
      %2690 = vmatprep.subr.bf16.mxu0 0
      %2691 = vmatpush1.bf16.msra.mxu0 0
      %2692 = vmatprep.subr.bf16.mxu0 0
      %2693 = vmatpush1.bf16.msra.mxu0 0
      %2694 = vmatprep.subr.bf16.mxu0 0
      %2695 = vmatpush1.bf16.msra.mxu0 0
      %2696 = vmatprep.subr.bf16.mxu0 0
      %2697 = vmatpush1.bf16.msra.mxu0 0
      %2698 = vmatprep.mubr.bf16.mxu0 0
      %2699 = vmatmul.mubr.bf16.gmra.mrb[0].mxu0 %v2651
      %v2700 = vpop.f32.mrb[0].mxu0
      %v2701 = vadd.f32 0.0, %v2700
      %v2702 = vpop.f32.mrb[0].mxu0
      %v2703 = vpop.f32.mrb[0].mxu0
      %v2704 = vadd.f32 0.0, %v2703
      %v2705 = vpop.f32.mrb[0].mxu0
      %2706 = vmatprep.mubr.bf16.mxu0 0
      %2707 = vmatmul.mubr.bf16.gmra.mrb[0].mxu0 %v2654
      %v2708 = vpop.f32.mrb[0].mxu0
      %v2709 = vadd.f32 0.0, %v2708
      %v2710 = vpop.f32.mrb[0].mxu0
      %v2711 = vpop.f32.mrb[0].mxu0
      %v2712 = vadd.f32 0.0, %v2711
      %v2713 = vpop.f32.mrb[0].mxu0
      %2714 = vmatprep.mubr.bf16.mxu0 0
      %2715 = vmatmul.mubr.bf16.gmra.mrb[0].mxu0 %v2657
      %v2716 = vpop.f32.mrb[0].mxu0
      %v2717 = vadd.f32 0.0, %v2716
      %v2718 = vpop.f32.mrb[0].mxu0
      %v2719 = vpop.f32.mrb[0].mxu0
      %v2720 = vadd.f32 0.0, %v2719
      %v2721 = vpop.f32.mrb[0].mxu0
      %2722 = vmatprep.mubr.bf16.mxu0 0
      %2723 = vmatmul.mubr.bf16.gmra.mrb[0].mxu0 %v2660
      %v2724 = vpop.f32.mrb[0].mxu0
      %v2725 = vadd.f32 0.0, %v2724
      %v2726 = vpop.f32.mrb[0].mxu0
      %v2727 = vpop.f32.mrb[0].mxu0
      %v2728 = vpop.f32.mrb[0].mxu0
      %2729 = vdwg.mxu0
      %v2730 = vpack.c.bf16 %v2704, %v2701
      %v2731 = vpack.c.bf16 %v2712, %v2709
      %v2732 = vpack.c.bf16 %v2720, %v2717
      %v2733 = vpack.c.bf16 %v2725, %v2725
      %v2734 = vpack.c.bf16 %v2444, %v2443
      %2735 = vrot.lane.b32.xlu0 %v2451, 112
      %v2736 = vpop.permute.xlu0 %2735
      %2737 = vrot.lane.b32.xlu0 %v2452, 112
      %v2738 = vpop.permute.xlu0 %2737
      %2739 = vrot.lane.b32.xlu0 %v2453, 112
      %v2740 = vpop.permute.xlu0 %2739
      %2741 = vrot.lane.b32.xlu0 %v2454, 112
      %v2742 = vpop.permute.xlu0 %2741
      %2743 = vrot.lane.b32.xlu0 %v2451, 48
      %v2744 = vpop.permute.xlu0 %2743
      %2745 = vrot.lane.b32.xlu0 %v2452, 48
      %v2746 = vpop.permute.xlu0 %2745
      %2747 = vrot.lane.b32.xlu0 %v2453, 48
      %v2748 = vpop.permute.xlu0 %2747
      %2749 = vrot.lane.b32.xlu0 %v2454, 48
      %v2750 = vpop.permute.xlu0 %2749
      %v2752 = vsel %vm2467, %v2736, 0
      %v2755 = vsel %vm2467, %v2738, 0
      %v2758 = vsel %vm2467, %v2740, 0
      %v2761 = vsel %vm2467, %v2742, 0
      %v2764 = vsel %vm2467, %v2744, 0
      %v2767 = vsel %vm2467, %v2746, 0
      %v2770 = vsel %vm2467, %v2748, 0
      %v2773 = vsel %vm2467, %v2750, 0
      %2775 = vmatprep.subr.bf16.mxu0 0
      %2776 = vmatpush1.bf16.xpose.msra.mxu0 %v2764
      %2777 = vmatprep.subr.bf16.mxu0 0
      %2778 = vmatpush1.bf16.xpose.msra.mxu0 %v2767
      %2779 = vmatprep.subr.bf16.mxu0 0
      %2780 = vmatpush1.bf16.xpose.msra.mxu0 %v2770
      %2781 = vmatprep.subr.bf16.mxu0 0
      %2782 = vmatpush1.bf16.xpose.msra.mxu0 %v2773
      %2783 = vmatprep.subr.bf16.mxu0 0
      %2784 = vmatpush1.bf16.xpose.msra.mxu0 0
      %2785 = vmatprep.subr.bf16.mxu0 0
      %2786 = vmatpush1.bf16.xpose.msra.mxu0 0
      %2787 = vmatprep.subr.bf16.mxu0 0
      %2788 = vmatpush1.bf16.xpose.msra.mxu0 0
      %2789 = vmatprep.subr.bf16.mxu0 0
      %2790 = vmatpush1.bf16.xpose.msra.mxu0 0
      %2791 = vmatprep.subr.bf16.mxu0 0
      %2792 = vmatpush1.bf16.xpose.msra.mxu0 0
      %2793 = vmatprep.subr.bf16.mxu0 0
      %2794 = vmatpush1.bf16.xpose.msra.mxu0 0
      %2795 = vmatprep.subr.bf16.mxu0 0
      %2796 = vmatpush1.bf16.xpose.msra.mxu0 0
      %2797 = vmatprep.subr.bf16.mxu0 0
      %2798 = vmatpush1.bf16.xpose.msra.mxu0 0
      %2799 = vmatprep.subr.bf16.mxu0 0
      %2800 = vmatpush1.bf16.xpose.msra.mxu0 0
      %2801 = vmatprep.subr.bf16.mxu0 0
      %2802 = vmatpush1.bf16.xpose.msra.mxu0 0
      %2803 = vmatprep.subr.bf16.mxu0 0
      %2804 = vmatpush1.bf16.xpose.msra.mxu0 0
      %2805 = vmatprep.subr.bf16.mxu0 0
      %2806 = vmatpush1.bf16.xpose.msra.mxu0 0
      %2807 = vmatprep.mubr.bf16.mxu0 0
      %2808 = vmatmul.mubr.bf16.gmra.mrb[0].mxu0 %v2752
      %v2809 = vpop.f32.mrb[0].mxu0
      %v2810 = vadd.f32 0.0, %v2809
      %v2811 = vpop.f32.mrb[0].mxu0
      %v2812 = vpop.f32.mrb[0].mxu0
      %v2813 = vadd.f32 0.0, %v2812
      %v2814 = vpop.f32.mrb[0].mxu0
      %2815 = vmatprep.mubr.bf16.mxu0 0
      %2816 = vmatmul.mubr.bf16.gmra.mrb[0].mxu0 %v2755
      %v2817 = vpop.f32.mrb[0].mxu0
      %v2818 = vadd.f32 0.0, %v2817
      %v2819 = vpop.f32.mrb[0].mxu0
      %v2820 = vpop.f32.mrb[0].mxu0
      %v2821 = vadd.f32 0.0, %v2820
      %v2822 = vpop.f32.mrb[0].mxu0
      %2823 = vmatprep.mubr.bf16.mxu0 0
      %2824 = vmatmul.mubr.bf16.gmra.mrb[0].mxu0 %v2758
      %v2825 = vpop.f32.mrb[0].mxu0
      %v2826 = vadd.f32 0.0, %v2825
      %v2827 = vpop.f32.mrb[0].mxu0
      %v2828 = vpop.f32.mrb[0].mxu0
      %v2829 = vadd.f32 0.0, %v2828
      %v2830 = vpop.f32.mrb[0].mxu0
      %2831 = vmatprep.mubr.bf16.mxu0 0
      %2832 = vmatmul.mubr.bf16.gmra.mrb[0].mxu0 %v2761
      %v2833 = vpop.f32.mrb[0].mxu0
      %v2834 = vadd.f32 0.0, %v2833
      %v2835 = vpop.f32.mrb[0].mxu0
      %v2836 = vpop.f32.mrb[0].mxu0
      %v2837 = vpop.f32.mrb[0].mxu0
      %2838 = vdwg.mxu0
      %v2839 = vmul.f32 %v2810, 0.25
      %v2840 = vmul.f32 %v2813, 0.25
      %v2841 = vmul.f32 %v2818, 0.25
      %v2842 = vmul.f32 %v2821, 0.25
      %v2843 = vmul.f32 %v2826, 0.25
      %v2844 = vmul.f32 %v2829, 0.25
      %v2845 = vmul.f32 %v2834, 0.25
      %v2846 = vsel %vm2563, %v2839, -inf
      %2847 = vmax.xlane.f32.xlu0 %v2846
      %v2848 = vpop.xlane.xlu0 %2847
      %v2849 = vsel %vm2563, %v2840, -inf
      %2850 = vmax.xlane.f32.xlu0 %v2849
      %v2851 = vpop.xlane.xlu0 %2850
      %v2852 = vsel %vm2563, %v2841, -inf
      %2853 = vmax.xlane.f32.xlu0 %v2852
      %v2854 = vpop.xlane.xlu0 %2853
      %v2855 = vsel %vm2563, %v2842, -inf
      %2856 = vmax.xlane.f32.xlu0 %v2855
      %v2857 = vpop.xlane.xlu0 %2856
      %v2858 = vsel %vm2563, %v2843, -inf
      %2859 = vmax.xlane.f32.xlu0 %v2858
      %v2860 = vpop.xlane.xlu0 %2859
      %v2861 = vsel %vm2563, %v2844, -inf
      %2862 = vmax.xlane.f32.xlu0 %v2861
      %v2863 = vpop.xlane.xlu0 %2862
      %v2864 = vsel %vm2582, %v2845, -inf
      %2865 = vmax.xlane.f32.xlu0 %v2864
      %v2866 = vpop.xlane.xlu0 %2865
      %v2867 = vsub.f32 %v2839, %v2848
      %v2868 = vsub.f32 %v2840, %v2851
      %v2869 = vsub.f32 %v2841, %v2854
      %v2870 = vsub.f32 %v2842, %v2857
      %v2871 = vsub.f32 %v2843, %v2860
      %v2872 = vsub.f32 %v2844, %v2863
      %v2873 = vsub.f32 %v2845, %v2866
      %v2874 = vmul.f32 %v2867, 1.442695
      %v2875 = vpow.pop %v2874
      %v2876 = vmul.f32 %v2868, 1.442695
      %v2877 = vpow.pop %v2876
      %v2878 = vmul.f32 %v2869, 1.442695
      %v2879 = vpow.pop %v2878
      %v2880 = vmul.f32 %v2870, 1.442695
      %v2881 = vpow.pop %v2880
      %v2882 = vmul.f32 %v2871, 1.442695
      %v2883 = vpow.pop %v2882
      %v2884 = vmul.f32 %v2872, 1.442695
      %v2885 = vpow.pop %v2884
      %v2886 = vmul.f32 %v2873, 1.442695
      %v2887 = vpow.pop %v2886
      %v2888 = vsel %vm2563, %v2875, 0.0
      %2889 = vadd.xlane.f32.xlu0 %v2888
      %v2890 = vpop.xlane.xlu0 %2889
      %v2891 = vsel %vm2563, %v2877, 0.0
      %2892 = vadd.xlane.f32.xlu0 %v2891
      %v2893 = vpop.xlane.xlu0 %2892
      %v2894 = vsel %vm2563, %v2879, 0.0
      %2895 = vadd.xlane.f32.xlu0 %v2894
      %v2896 = vpop.xlane.xlu0 %2895
      %v2897 = vsel %vm2563, %v2881, 0.0
      %2898 = vadd.xlane.f32.xlu0 %v2897
      %v2899 = vpop.xlane.xlu0 %2898
      %v2900 = vsel %vm2563, %v2883, 0.0
      %2901 = vadd.xlane.f32.xlu0 %v2900
      %v2902 = vpop.xlane.xlu0 %2901
      %v2903 = vsel %vm2563, %v2885, 0.0
      %2904 = vadd.xlane.f32.xlu0 %v2903
      %v2905 = vpop.xlane.xlu0 %2904
      %v2906 = vsel %vm2582, %v2887, 0.0
      %2907 = vadd.xlane.f32.xlu0 %v2906
      %v2908 = vpop.xlane.xlu0 %2907
      %v2909 = vrcp.pop %v2890
      %v2910 = vrcp.pop %v2893
      %v2911 = vrcp.pop %v2896
      %v2912 = vrcp.pop %v2899
      %v2913 = vrcp.pop %v2902
      %v2914 = vrcp.pop %v2905
      %v2915 = vrcp.pop %v2908
      %v2916 = vmul.f32 %v2875, %v2909
      %v2917 = vmul.f32 %v2877, %v2910
      %v2918 = vmul.f32 %v2879, %v2911
      %v2919 = vmul.f32 %v2881, %v2912
      %v2920 = vmul.f32 %v2883, %v2913
      %v2921 = vmul.f32 %v2885, %v2914
      %v2922 = vmul.f32 %v2887, %v2915
      %v2923 = vpack.c.bf16 %v2917, %v2916
      %v2924 = vpack.c.bf16 %v2919, %v2918
      %v2925 = vpack.c.bf16 %v2921, %v2920
      %v2926 = vpack.c.bf16 %v2922, %v2922
      %2931 = vrot.lane.b32.xlu0 %v2646, 112
      %v2932 = vpop.permute.xlu0 %2931
      %2933 = vrot.lane.b32.xlu0 %v2647, 112
      %v2934 = vpop.permute.xlu0 %2933
      %2935 = vrot.lane.b32.xlu0 %v2648, 112
      %v2936 = vpop.permute.xlu0 %2935
      %2937 = vrot.lane.b32.xlu0 %v2649, 112
      %v2938 = vpop.permute.xlu0 %2937
      %v2943 = vsel %vm2563, %v2923, 0
      %v2946 = vsel %vm2563, %v2924, 0
      %v2949 = vsel %vm2563, %v2925, 0
      %v2952 = vsel %vm2563, %v2926, 0
      %v2955 = vsel %vm2662, %v2938, 0
      %2957 = vmatprep.subr.bf16.mxu0 0
      %2958 = vmatpush1.bf16.msra.mxu0 %v2932
      %2959 = vmatprep.subr.bf16.mxu0 0
      %2960 = vmatpush1.bf16.msra.mxu0 %v2934
      %2961 = vmatprep.subr.bf16.mxu0 0
      %2962 = vmatpush1.bf16.msra.mxu0 %v2936
      %2963 = vmatprep.subr.bf16.mxu0 0
      %2964 = vmatpush1.bf16.msra.mxu0 %v2955
      %2965 = vmatprep.subr.bf16.mxu0 0
      %2966 = vmatpush1.bf16.msra.mxu0 0
      %2967 = vmatprep.subr.bf16.mxu0 0
      %2968 = vmatpush1.bf16.msra.mxu0 0
      %2969 = vmatprep.subr.bf16.mxu0 0
      %2970 = vmatpush1.bf16.msra.mxu0 0
      %2971 = vmatprep.subr.bf16.mxu0 0
      %2972 = vmatpush1.bf16.msra.mxu0 0
      %2973 = vmatprep.subr.bf16.mxu0 0
      %2974 = vmatpush1.bf16.msra.mxu0 0
      %2975 = vmatprep.subr.bf16.mxu0 0
      %2976 = vmatpush1.bf16.msra.mxu0 0
      %2977 = vmatprep.subr.bf16.mxu0 0
      %2978 = vmatpush1.bf16.msra.mxu0 0
      %2979 = vmatprep.subr.bf16.mxu0 0
      %2980 = vmatpush1.bf16.msra.mxu0 0
      %2981 = vmatprep.subr.bf16.mxu0 0
      %2982 = vmatpush1.bf16.msra.mxu0 0
      %2983 = vmatprep.subr.bf16.mxu0 0
      %2984 = vmatpush1.bf16.msra.mxu0 0
      %2985 = vmatprep.subr.bf16.mxu0 0
      %2986 = vmatpush1.bf16.msra.mxu0 0
      %2987 = vmatprep.subr.bf16.mxu0 0
      %2988 = vmatpush1.bf16.msra.mxu0 0
      %2989 = vmatprep.mubr.bf16.mxu0 0
      %2990 = vmatmul.mubr.bf16.gmra.mrb[0].mxu0 %v2943
      %v2991 = vpop.f32.mrb[0].mxu0
      %v2992 = vadd.f32 0.0, %v2991
      %v2993 = vpop.f32.mrb[0].mxu0
      %v2994 = vpop.f32.mrb[0].mxu0
      %v2995 = vadd.f32 0.0, %v2994
      %v2996 = vpop.f32.mrb[0].mxu0
      %2997 = vmatprep.mubr.bf16.mxu0 0
      %2998 = vmatmul.mubr.bf16.gmra.mrb[0].mxu0 %v2946
      %v2999 = vpop.f32.mrb[0].mxu0
      %v3000 = vadd.f32 0.0, %v2999
      %v3001 = vpop.f32.mrb[0].mxu0
      %v3002 = vpop.f32.mrb[0].mxu0
      %v3003 = vadd.f32 0.0, %v3002
      %v3004 = vpop.f32.mrb[0].mxu0
      %3005 = vmatprep.mubr.bf16.mxu0 0
      %3006 = vmatmul.mubr.bf16.gmra.mrb[0].mxu0 %v2949
      %v3007 = vpop.f32.mrb[0].mxu0
      %v3008 = vadd.f32 0.0, %v3007
      %v3009 = vpop.f32.mrb[0].mxu0
      %v3010 = vpop.f32.mrb[0].mxu0
      %v3011 = vadd.f32 0.0, %v3010
      %v3012 = vpop.f32.mrb[0].mxu0
      %3013 = vmatprep.mubr.bf16.mxu0 0
      %3014 = vmatmul.mubr.bf16.gmra.mrb[0].mxu0 %v2952
      %v3015 = vpop.f32.mrb[0].mxu0
      %v3016 = vadd.f32 0.0, %v3015
      %v3017 = vpop.f32.mrb[0].mxu0
      %v3018 = vpop.f32.mrb[0].mxu0
      %v3019 = vpop.f32.mrb[0].mxu0
      %3020 = vdwg.mxu0
      %v3021 = vpack.c.bf16 %v2995, %v2992
      %v3022 = vpack.c.bf16 %v3003, %v3000
      %v3023 = vpack.c.bf16 %v3011, %v3008
      %v3024 = vpack.c.bf16 %v3016, %v3016
      %v3025 = vpack.c.bf16 %v2446, %v2445
      %v3027 = vsel %vm2467, %v3021, 0
      %v3030 = vsel %vm2467, %v3022, 0
      %v3033 = vsel %vm2467, %v3023, 0
      %v3036 = vsel %vm2467, %v3024, 0
      %3038 = vmatprep.subr.bf16.mxu0 0
      %3039 = vmatpush1.bf16.msra.mxu0 %v3025
      %3040 = vmatprep.subr.bf16.mxu0 0
      %3041 = vmatpush1.bf16.msra.mxu0 0
      %3042 = vmatprep.subr.bf16.mxu0 0
      %3043 = vmatpush1.bf16.msra.mxu0 0
      %3044 = vmatprep.subr.bf16.mxu0 0
      %3045 = vmatpush1.bf16.msra.mxu0 0
      %3046 = vmatprep.subr.bf16.mxu0 0
      %3047 = vmatpush1.bf16.msra.mxu0 0
      %3048 = vmatprep.subr.bf16.mxu0 0
      %3049 = vmatpush1.bf16.msra.mxu0 0
      %3050 = vmatprep.subr.bf16.mxu0 0
      %3051 = vmatpush1.bf16.msra.mxu0 0
      %3052 = vmatprep.subr.bf16.mxu0 0
      %3053 = vmatpush1.bf16.msra.mxu0 0
      %3054 = vmatprep.subr.bf16.mxu0 0
      %3055 = vmatpush1.bf16.msra.mxu0 0
      %3056 = vmatprep.subr.bf16.mxu0 0
      %3057 = vmatpush1.bf16.msra.mxu0 0
      %3058 = vmatprep.subr.bf16.mxu0 0
      %3059 = vmatpush1.bf16.msra.mxu0 0
      %3060 = vmatprep.subr.bf16.mxu0 0
      %3061 = vmatpush1.bf16.msra.mxu0 0
      %3062 = vmatprep.subr.bf16.mxu0 0
      %3063 = vmatpush1.bf16.msra.mxu0 0
      %3064 = vmatprep.subr.bf16.mxu0 0
      %3065 = vmatpush1.bf16.msra.mxu0 0
      %3066 = vmatprep.subr.bf16.mxu0 0
      %3067 = vmatpush1.bf16.msra.mxu0 0
      %3068 = vmatprep.subr.bf16.mxu0 0
      %3069 = vmatpush1.bf16.msra.mxu0 0
      %3070 = vmatprep.mubr.bf16.mxu0 0
      %3071 = vmatmul.mubr.bf16.gmra.mrb[0].mxu0 %v3027
      %v3072 = vpop.f32.mrb[0].mxu0
      %v3073 = vadd.f32 0.0, %v3072
      %v3074 = vpop.f32.mrb[0].mxu0
      %v3075 = vpop.f32.mrb[0].mxu0
      %v3076 = vadd.f32 0.0, %v3075
      %v3077 = vpop.f32.mrb[0].mxu0
      %3078 = vmatprep.mubr.bf16.mxu0 0
      %3079 = vmatmul.mubr.bf16.gmra.mrb[0].mxu0 %v3030
      %v3080 = vpop.f32.mrb[0].mxu0
      %v3081 = vadd.f32 0.0, %v3080
      %v3082 = vpop.f32.mrb[0].mxu0
      %v3083 = vpop.f32.mrb[0].mxu0
      %v3084 = vadd.f32 0.0, %v3083
      %v3085 = vpop.f32.mrb[0].mxu0
      %3086 = vmatprep.mubr.bf16.mxu0 0
      %3087 = vmatmul.mubr.bf16.gmra.mrb[0].mxu0 %v3033
      %v3088 = vpop.f32.mrb[0].mxu0
      %v3089 = vadd.f32 0.0, %v3088
      %v3090 = vpop.f32.mrb[0].mxu0
      %v3091 = vpop.f32.mrb[0].mxu0
      %v3092 = vadd.f32 0.0, %v3091
      %v3093 = vpop.f32.mrb[0].mxu0
      %3094 = vmatprep.mubr.bf16.mxu0 0
      %3095 = vmatmul.mubr.bf16.gmra.mrb[0].mxu0 %v3036
      %v3096 = vpop.f32.mrb[0].mxu0
      %v3097 = vadd.f32 0.0, %v3096
      %v3098 = vpop.f32.mrb[0].mxu0
      %v3099 = vpop.f32.mrb[0].mxu0
      %v3100 = vpop.f32.mrb[0].mxu0
      %3101 = vdwg.mxu0
      %v3103 = vsel %vm2467, %v2730, 0
      %v3106 = vsel %vm2467, %v2731, 0
      %v3109 = vsel %vm2467, %v2732, 0
      %v3112 = vsel %vm2467, %v2733, 0
      %3114 = vmatprep.subr.bf16.mxu0 0
      %3115 = vmatpush1.bf16.msra.mxu0 %v2734
      %3116 = vmatprep.subr.bf16.mxu0 0
      %3117 = vmatpush1.bf16.msra.mxu0 0
      %3118 = vmatprep.subr.bf16.mxu0 0
      %3119 = vmatpush1.bf16.msra.mxu0 0
      %3120 = vmatprep.subr.bf16.mxu0 0
      %3121 = vmatpush1.bf16.msra.mxu0 0
      %3122 = vmatprep.subr.bf16.mxu0 0
      %3123 = vmatpush1.bf16.msra.mxu0 0
      %3124 = vmatprep.subr.bf16.mxu0 0
      %3125 = vmatpush1.bf16.msra.mxu0 0
      %3126 = vmatprep.subr.bf16.mxu0 0
      %3127 = vmatpush1.bf16.msra.mxu0 0
      %3128 = vmatprep.subr.bf16.mxu0 0
      %3129 = vmatpush1.bf16.msra.mxu0 0
      %3130 = vmatprep.subr.bf16.mxu0 0
      %3131 = vmatpush1.bf16.msra.mxu0 0
      %3132 = vmatprep.subr.bf16.mxu0 0
      %3133 = vmatpush1.bf16.msra.mxu0 0
      %3134 = vmatprep.subr.bf16.mxu0 0
      %3135 = vmatpush1.bf16.msra.mxu0 0
      %3136 = vmatprep.subr.bf16.mxu0 0
      %3137 = vmatpush1.bf16.msra.mxu0 0
      %3138 = vmatprep.subr.bf16.mxu0 0
      %3139 = vmatpush1.bf16.msra.mxu0 0
      %3140 = vmatprep.subr.bf16.mxu0 0
      %3141 = vmatpush1.bf16.msra.mxu0 0
      %3142 = vmatprep.subr.bf16.mxu0 0
      %3143 = vmatpush1.bf16.msra.mxu0 0
      %3144 = vmatprep.subr.bf16.mxu0 0
      %3145 = vmatpush1.bf16.msra.mxu0 0
      %3146 = vmatprep.mubr.bf16.mxu0 0
      %3147 = vmatmul.mubr.bf16.gmra.mrb[0].mxu0 %v3103
      %v3148 = vpop.f32.mrb[0].mxu0
      %v3149 = vadd.f32 %v3073, %v3148
      %v3150 = vpop.f32.mrb[0].mxu0
      %v3151 = vpop.f32.mrb[0].mxu0
      %v3152 = vadd.f32 %v3076, %v3151
      %v3153 = vpop.f32.mrb[0].mxu0
      %3154 = vmatprep.mubr.bf16.mxu0 0
      %3155 = vmatmul.mubr.bf16.gmra.mrb[0].mxu0 %v3106
      %v3156 = vpop.f32.mrb[0].mxu0
      %v3157 = vadd.f32 %v3081, %v3156
      %v3158 = vpop.f32.mrb[0].mxu0
      %v3159 = vpop.f32.mrb[0].mxu0
      %v3160 = vadd.f32 %v3084, %v3159
      %v3161 = vpop.f32.mrb[0].mxu0
      %3162 = vmatprep.mubr.bf16.mxu0 0
      %3163 = vmatmul.mubr.bf16.gmra.mrb[0].mxu0 %v3109
      %v3164 = vpop.f32.mrb[0].mxu0
      %v3165 = vadd.f32 %v3089, %v3164
      %v3166 = vpop.f32.mrb[0].mxu0
      %v3167 = vpop.f32.mrb[0].mxu0
      %v3168 = vadd.f32 %v3092, %v3167
      %v3169 = vpop.f32.mrb[0].mxu0
      %3170 = vmatprep.mubr.bf16.mxu0 0
      %3171 = vmatmul.mubr.bf16.gmra.mrb[0].mxu0 %v3112
      %v3172 = vpop.f32.mrb[0].mxu0
      %v3173 = vadd.f32 %v3097, %v3172
      %v3174 = vpop.f32.mrb[0].mxu0
      %v3175 = vpop.f32.mrb[0].mxu0
      %v3176 = vpop.f32.mrb[0].mxu0
      %3177 = vdwg.mxu0
      %3178 = vrot.lane.b32.xlu0 %v2451, 96
      %v3179 = vpop.permute.xlu0 %3178
      %3180 = vrot.lane.b32.xlu0 %v2452, 96
      %v3181 = vpop.permute.xlu0 %3180
      %3182 = vrot.lane.b32.xlu0 %v2453, 96
      %v3183 = vpop.permute.xlu0 %3182
      %3184 = vrot.lane.b32.xlu0 %v2454, 96
      %v3185 = vpop.permute.xlu0 %3184
      %3186 = vrot.lane.b32.xlu0 %v2451, 32
      %v3187 = vpop.permute.xlu0 %3186
      %3188 = vrot.lane.b32.xlu0 %v2452, 32
      %v3189 = vpop.permute.xlu0 %3188
      %3190 = vrot.lane.b32.xlu0 %v2453, 32
      %v3191 = vpop.permute.xlu0 %3190
      %3192 = vrot.lane.b32.xlu0 %v2454, 32
      %v3193 = vpop.permute.xlu0 %3192
      %v3195 = vsel %vm2467, %v3179, 0
      %v3198 = vsel %vm2467, %v3181, 0
      %v3201 = vsel %vm2467, %v3183, 0
      %v3204 = vsel %vm2467, %v3185, 0
      %v3207 = vsel %vm2467, %v3187, 0
      %v3210 = vsel %vm2467, %v3189, 0
      %v3213 = vsel %vm2467, %v3191, 0
      %v3216 = vsel %vm2467, %v3193, 0
      %3218 = vmatprep.subr.bf16.mxu0 0
      %3219 = vmatpush1.bf16.xpose.msra.mxu0 %v3207
      %3220 = vmatprep.subr.bf16.mxu0 0
      %3221 = vmatpush1.bf16.xpose.msra.mxu0 %v3210
      %3222 = vmatprep.subr.bf16.mxu0 0
      %3223 = vmatpush1.bf16.xpose.msra.mxu0 %v3213
      %3224 = vmatprep.subr.bf16.mxu0 0
      %3225 = vmatpush1.bf16.xpose.msra.mxu0 %v3216
      %3226 = vmatprep.subr.bf16.mxu0 0
      %3227 = vmatpush1.bf16.xpose.msra.mxu0 0
      %3228 = vmatprep.subr.bf16.mxu0 0
      %3229 = vmatpush1.bf16.xpose.msra.mxu0 0
      %3230 = vmatprep.subr.bf16.mxu0 0
      %3231 = vmatpush1.bf16.xpose.msra.mxu0 0
      %3232 = vmatprep.subr.bf16.mxu0 0
      %3233 = vmatpush1.bf16.xpose.msra.mxu0 0
      %3234 = vmatprep.subr.bf16.mxu0 0
      %3235 = vmatpush1.bf16.xpose.msra.mxu0 0
      %3236 = vmatprep.subr.bf16.mxu0 0
      %3237 = vmatpush1.bf16.xpose.msra.mxu0 0
      %3238 = vmatprep.subr.bf16.mxu0 0
      %3239 = vmatpush1.bf16.xpose.msra.mxu0 0
      %3240 = vmatprep.subr.bf16.mxu0 0
      %3241 = vmatpush1.bf16.xpose.msra.mxu0 0
      %3242 = vmatprep.subr.bf16.mxu0 0
      %3243 = vmatpush1.bf16.xpose.msra.mxu0 0
      %3244 = vmatprep.subr.bf16.mxu0 0
      %3245 = vmatpush1.bf16.xpose.msra.mxu0 0
      %3246 = vmatprep.subr.bf16.mxu0 0
      %3247 = vmatpush1.bf16.xpose.msra.mxu0 0
      %3248 = vmatprep.subr.bf16.mxu0 0
      %3249 = vmatpush1.bf16.xpose.msra.mxu0 0
      %3250 = vmatprep.mubr.bf16.mxu0 0
      %3251 = vmatmul.mubr.bf16.gmra.mrb[0].mxu0 %v3195
      %v3252 = vpop.f32.mrb[0].mxu0
      %v3253 = vadd.f32 0.0, %v3252
      %v3254 = vpop.f32.mrb[0].mxu0
      %v3255 = vpop.f32.mrb[0].mxu0
      %v3256 = vadd.f32 0.0, %v3255
      %v3257 = vpop.f32.mrb[0].mxu0
      %3258 = vmatprep.mubr.bf16.mxu0 0
      %3259 = vmatmul.mubr.bf16.gmra.mrb[0].mxu0 %v3198
      %v3260 = vpop.f32.mrb[0].mxu0
      %v3261 = vadd.f32 0.0, %v3260
      %v3262 = vpop.f32.mrb[0].mxu0
      %v3263 = vpop.f32.mrb[0].mxu0
      %v3264 = vadd.f32 0.0, %v3263
      %v3265 = vpop.f32.mrb[0].mxu0
      %3266 = vmatprep.mubr.bf16.mxu0 0
      %3267 = vmatmul.mubr.bf16.gmra.mrb[0].mxu0 %v3201
      %v3268 = vpop.f32.mrb[0].mxu0
      %v3269 = vadd.f32 0.0, %v3268
      %v3270 = vpop.f32.mrb[0].mxu0
      %v3271 = vpop.f32.mrb[0].mxu0
      %v3272 = vadd.f32 0.0, %v3271
      %v3273 = vpop.f32.mrb[0].mxu0
      %3274 = vmatprep.mubr.bf16.mxu0 0
      %3275 = vmatmul.mubr.bf16.gmra.mrb[0].mxu0 %v3204
      %v3276 = vpop.f32.mrb[0].mxu0
      %v3277 = vadd.f32 0.0, %v3276
      %v3278 = vpop.f32.mrb[0].mxu0
      %v3279 = vpop.f32.mrb[0].mxu0
      %v3280 = vpop.f32.mrb[0].mxu0
      %3281 = vdwg.mxu0
      %v3282 = vmul.f32 %v3253, 0.25
      %v3283 = vmul.f32 %v3256, 0.25
      %v3284 = vmul.f32 %v3261, 0.25
      %v3285 = vmul.f32 %v3264, 0.25
      %v3286 = vmul.f32 %v3269, 0.25
      %v3287 = vmul.f32 %v3272, 0.25
      %v3288 = vmul.f32 %v3277, 0.25
      %v3289 = vsel %vm2563, %v3282, -inf
      %3290 = vmax.xlane.f32.xlu0 %v3289
      %v3291 = vpop.xlane.xlu0 %3290
      %v3292 = vsel %vm2563, %v3283, -inf
      %3293 = vmax.xlane.f32.xlu0 %v3292
      %v3294 = vpop.xlane.xlu0 %3293
      %v3295 = vsel %vm2563, %v3284, -inf
      %3296 = vmax.xlane.f32.xlu0 %v3295
      %v3297 = vpop.xlane.xlu0 %3296
      %v3298 = vsel %vm2563, %v3285, -inf
      %3299 = vmax.xlane.f32.xlu0 %v3298
      %v3300 = vpop.xlane.xlu0 %3299
      %v3301 = vsel %vm2563, %v3286, -inf
      %3302 = vmax.xlane.f32.xlu0 %v3301
      %v3303 = vpop.xlane.xlu0 %3302
      %v3304 = vsel %vm2563, %v3287, -inf
      %3305 = vmax.xlane.f32.xlu0 %v3304
      %v3306 = vpop.xlane.xlu0 %3305
      %v3307 = vsel %vm2582, %v3288, -inf
      %3308 = vmax.xlane.f32.xlu0 %v3307
      %v3309 = vpop.xlane.xlu0 %3308
      %v3310 = vsub.f32 %v3282, %v3291
      %v3311 = vsub.f32 %v3283, %v3294
      %v3312 = vsub.f32 %v3284, %v3297
      %v3313 = vsub.f32 %v3285, %v3300
      %v3314 = vsub.f32 %v3286, %v3303
      %v3315 = vsub.f32 %v3287, %v3306
      %v3316 = vsub.f32 %v3288, %v3309
      %v3317 = vmul.f32 %v3310, 1.442695
      %v3318 = vpow.pop %v3317
      %v3319 = vmul.f32 %v3311, 1.442695
      %v3320 = vpow.pop %v3319
      %v3321 = vmul.f32 %v3312, 1.442695
      %v3322 = vpow.pop %v3321
      %v3323 = vmul.f32 %v3313, 1.442695
      %v3324 = vpow.pop %v3323
      %v3325 = vmul.f32 %v3314, 1.442695
      %v3326 = vpow.pop %v3325
      %v3327 = vmul.f32 %v3315, 1.442695
      %v3328 = vpow.pop %v3327
      %v3329 = vmul.f32 %v3316, 1.442695
      %v3330 = vpow.pop %v3329
      %v3331 = vsel %vm2563, %v3318, 0.0
      %3332 = vadd.xlane.f32.xlu0 %v3331
      %v3333 = vpop.xlane.xlu0 %3332
      %v3334 = vsel %vm2563, %v3320, 0.0
      %3335 = vadd.xlane.f32.xlu0 %v3334
      %v3336 = vpop.xlane.xlu0 %3335
      %v3337 = vsel %vm2563, %v3322, 0.0
      %3338 = vadd.xlane.f32.xlu0 %v3337
      %v3339 = vpop.xlane.xlu0 %3338
      %v3340 = vsel %vm2563, %v3324, 0.0
      %3341 = vadd.xlane.f32.xlu0 %v3340
      %v3342 = vpop.xlane.xlu0 %3341
      %v3343 = vsel %vm2563, %v3326, 0.0
      %3344 = vadd.xlane.f32.xlu0 %v3343
      %v3345 = vpop.xlane.xlu0 %3344
      %v3346 = vsel %vm2563, %v3328, 0.0
      %3347 = vadd.xlane.f32.xlu0 %v3346
      %v3348 = vpop.xlane.xlu0 %3347
      %v3349 = vsel %vm2582, %v3330, 0.0
      %3350 = vadd.xlane.f32.xlu0 %v3349
      %v3351 = vpop.xlane.xlu0 %3350
      %v3352 = vrcp.pop %v3333
      %v3353 = vrcp.pop %v3336
      %v3354 = vrcp.pop %v3339
      %v3355 = vrcp.pop %v3342
      %v3356 = vrcp.pop %v3345
      %v3357 = vrcp.pop %v3348
      %v3358 = vrcp.pop %v3351
      %v3359 = vmul.f32 %v3318, %v3352
      %v3360 = vmul.f32 %v3320, %v3353
      %v3361 = vmul.f32 %v3322, %v3354
      %v3362 = vmul.f32 %v3324, %v3355
      %v3363 = vmul.f32 %v3326, %v3356
      %v3364 = vmul.f32 %v3328, %v3357
      %v3365 = vmul.f32 %v3330, %v3358
      %v3366 = vpack.c.bf16 %v3360, %v3359
      %v3367 = vpack.c.bf16 %v3362, %v3361
      %v3368 = vpack.c.bf16 %v3364, %v3363
      %v3369 = vpack.c.bf16 %v3365, %v3365
      %3370 = vrot.lane.b32.xlu0 %v2646, 96
      %v3371 = vpop.permute.xlu0 %3370
      %3372 = vrot.lane.b32.xlu0 %v2647, 96
      %v3373 = vpop.permute.xlu0 %3372
      %3374 = vrot.lane.b32.xlu0 %v2648, 96
      %v3375 = vpop.permute.xlu0 %3374
      %3376 = vrot.lane.b32.xlu0 %v2649, 96
      %v3377 = vpop.permute.xlu0 %3376
      %v3382 = vsel %vm2563, %v3366, 0
      %v3385 = vsel %vm2563, %v3367, 0
      %v3388 = vsel %vm2563, %v3368, 0
      %v3391 = vsel %vm2563, %v3369, 0
      %v3394 = vsel %vm2662, %v3377, 0
      %3396 = vmatprep.subr.bf16.mxu0 0
      %3397 = vmatpush1.bf16.msra.mxu0 %v3371
      %3398 = vmatprep.subr.bf16.mxu0 0
      %3399 = vmatpush1.bf16.msra.mxu0 %v3373
      %3400 = vmatprep.subr.bf16.mxu0 0
      %3401 = vmatpush1.bf16.msra.mxu0 %v3375
      %3402 = vmatprep.subr.bf16.mxu0 0
      %3403 = vmatpush1.bf16.msra.mxu0 %v3394
      %3404 = vmatprep.subr.bf16.mxu0 0
      %3405 = vmatpush1.bf16.msra.mxu0 0
      %3406 = vmatprep.subr.bf16.mxu0 0
      %3407 = vmatpush1.bf16.msra.mxu0 0
      %3408 = vmatprep.subr.bf16.mxu0 0
      %3409 = vmatpush1.bf16.msra.mxu0 0
      %3410 = vmatprep.subr.bf16.mxu0 0
      %3411 = vmatpush1.bf16.msra.mxu0 0
      %3412 = vmatprep.subr.bf16.mxu0 0
      %3413 = vmatpush1.bf16.msra.mxu0 0
      %3414 = vmatprep.subr.bf16.mxu0 0
      %3415 = vmatpush1.bf16.msra.mxu0 0
      %3416 = vmatprep.subr.bf16.mxu0 0
      %3417 = vmatpush1.bf16.msra.mxu0 0
      %3418 = vmatprep.subr.bf16.mxu0 0
      %3419 = vmatpush1.bf16.msra.mxu0 0
      %3420 = vmatprep.subr.bf16.mxu0 0
      %3421 = vmatpush1.bf16.msra.mxu0 0
      %3422 = vmatprep.subr.bf16.mxu0 0
      %3423 = vmatpush1.bf16.msra.mxu0 0
      %3424 = vmatprep.subr.bf16.mxu0 0
      %3425 = vmatpush1.bf16.msra.mxu0 0
      %3426 = vmatprep.subr.bf16.mxu0 0
      %3427 = vmatpush1.bf16.msra.mxu0 0
      %3428 = vmatprep.mubr.bf16.mxu0 0
      %3429 = vmatmul.mubr.bf16.gmra.mrb[0].mxu0 %v3382
      %v3430 = vpop.f32.mrb[0].mxu0
      %v3431 = vadd.f32 0.0, %v3430
      %v3432 = vpop.f32.mrb[0].mxu0
      %v3433 = vpop.f32.mrb[0].mxu0
      %v3434 = vadd.f32 0.0, %v3433
      %v3435 = vpop.f32.mrb[0].mxu0
      %3436 = vmatprep.mubr.bf16.mxu0 0
      %3437 = vmatmul.mubr.bf16.gmra.mrb[0].mxu0 %v3385
      %v3438 = vpop.f32.mrb[0].mxu0
      %v3439 = vadd.f32 0.0, %v3438
      %v3440 = vpop.f32.mrb[0].mxu0
      %v3441 = vpop.f32.mrb[0].mxu0
      %v3442 = vadd.f32 0.0, %v3441
      %v3443 = vpop.f32.mrb[0].mxu0
      %3444 = vmatprep.mubr.bf16.mxu0 0
      %3445 = vmatmul.mubr.bf16.gmra.mrb[0].mxu0 %v3388
      %v3446 = vpop.f32.mrb[0].mxu0
      %v3447 = vadd.f32 0.0, %v3446
      %v3448 = vpop.f32.mrb[0].mxu0
      %v3449 = vpop.f32.mrb[0].mxu0
      %v3450 = vadd.f32 0.0, %v3449
      %v3451 = vpop.f32.mrb[0].mxu0
      %3452 = vmatprep.mubr.bf16.mxu0 0
      %3453 = vmatmul.mubr.bf16.gmra.mrb[0].mxu0 %v3391
      %v3454 = vpop.f32.mrb[0].mxu0
      %v3455 = vadd.f32 0.0, %v3454
      %v3456 = vpop.f32.mrb[0].mxu0
      %v3457 = vpop.f32.mrb[0].mxu0
      %v3458 = vpop.f32.mrb[0].mxu0
      %3459 = vdwg.mxu0
      %v3460 = vpack.c.bf16 %v3434, %v3431
      %v3461 = vpack.c.bf16 %v3442, %v3439
      %v3462 = vpack.c.bf16 %v3450, %v3447
      %v3463 = vpack.c.bf16 %v3455, %v3455
      %v3464 = vpack.c.bf16 %v2448, %v2447
      %v3466 = vsel %vm2467, %v3460, 0
      %v3469 = vsel %vm2467, %v3461, 0
      %v3472 = vsel %vm2467, %v3462, 0
      %v3475 = vsel %vm2467, %v3463, 0
      %3477 = vmatprep.subr.bf16.mxu0 0
      %3478 = vmatpush1.bf16.msra.mxu0 %v3464
      %3479 = vmatprep.subr.bf16.mxu0 0
      %3480 = vmatpush1.bf16.msra.mxu0 0
      %3481 = vmatprep.subr.bf16.mxu0 0
      %3482 = vmatpush1.bf16.msra.mxu0 0
      %3483 = vmatprep.subr.bf16.mxu0 0
      %3484 = vmatpush1.bf16.msra.mxu0 0
      %3485 = vmatprep.subr.bf16.mxu0 0
      %3486 = vmatpush1.bf16.msra.mxu0 0
      %3487 = vmatprep.subr.bf16.mxu0 0
      %3488 = vmatpush1.bf16.msra.mxu0 0
      %3489 = vmatprep.subr.bf16.mxu0 0
      %3490 = vmatpush1.bf16.msra.mxu0 0
      %3491 = vmatprep.subr.bf16.mxu0 0
      %3492 = vmatpush1.bf16.msra.mxu0 0
      %3493 = vmatprep.subr.bf16.mxu0 0
      %3494 = vmatpush1.bf16.msra.mxu0 0
      %3495 = vmatprep.subr.bf16.mxu0 0
      %3496 = vmatpush1.bf16.msra.mxu0 0
      %3497 = vmatprep.subr.bf16.mxu0 0
      %3498 = vmatpush1.bf16.msra.mxu0 0
      %3499 = vmatprep.subr.bf16.mxu0 0
      %3500 = vmatpush1.bf16.msra.mxu0 0
      %3501 = vmatprep.subr.bf16.mxu0 0
      %3502 = vmatpush1.bf16.msra.mxu0 0
      %3503 = vmatprep.subr.bf16.mxu0 0
      %3504 = vmatpush1.bf16.msra.mxu0 0
      %3505 = vmatprep.subr.bf16.mxu0 0
      %3506 = vmatpush1.bf16.msra.mxu0 0
      %3507 = vmatprep.subr.bf16.mxu0 0
      %3508 = vmatpush1.bf16.msra.mxu0 0
      %3509 = vmatprep.mubr.bf16.mxu0 0
      %3510 = vmatmul.mubr.bf16.gmra.mrb[0].mxu0 %v3466
      %v3511 = vpop.f32.mrb[0].mxu0
      %v3512 = vadd.f32 0.0, %v3511
      %v3513 = vpop.f32.mrb[0].mxu0
      %v3514 = vpop.f32.mrb[0].mxu0
      %v3515 = vadd.f32 0.0, %v3514
      %v3516 = vpop.f32.mrb[0].mxu0
      %3517 = vmatprep.mubr.bf16.mxu0 0
      %3518 = vmatmul.mubr.bf16.gmra.mrb[0].mxu0 %v3469
      %v3519 = vpop.f32.mrb[0].mxu0
      %v3520 = vadd.f32 0.0, %v3519
      %v3521 = vpop.f32.mrb[0].mxu0
      %v3522 = vpop.f32.mrb[0].mxu0
      %v3523 = vadd.f32 0.0, %v3522
      %v3524 = vpop.f32.mrb[0].mxu0
      %3525 = vmatprep.mubr.bf16.mxu0 0
      %3526 = vmatmul.mubr.bf16.gmra.mrb[0].mxu0 %v3472
      %v3527 = vpop.f32.mrb[0].mxu0
      %v3528 = vadd.f32 0.0, %v3527
      %v3529 = vpop.f32.mrb[0].mxu0
      %v3530 = vpop.f32.mrb[0].mxu0
      %v3531 = vadd.f32 0.0, %v3530
      %v3532 = vpop.f32.mrb[0].mxu0
      %3533 = vmatprep.mubr.bf16.mxu0 0
      %3534 = vmatmul.mubr.bf16.gmra.mrb[0].mxu0 %v3475
      %v3535 = vpop.f32.mrb[0].mxu0
      %v3536 = vadd.f32 0.0, %v3535
      %v3537 = vpop.f32.mrb[0].mxu0
      %v3538 = vpop.f32.mrb[0].mxu0
      %v3539 = vpop.f32.mrb[0].mxu0
      %3540 = vdwg.mxu0
      %v3541 = vadd.f32 %v3149, %v3512
      %v3542 = vadd.f32 %v3152, %v3515
      %v3543 = vadd.f32 %v3157, %v3520
      %v3544 = vadd.f32 %v3160, %v3523
      %v3545 = vadd.f32 %v3165, %v3528
      %v3546 = vadd.f32 %v3168, %v3531
      %v3547 = vadd.f32 %v3173, %v3536
      %3548 = vrot.lane.b32.xlu0 %v2451, 80
      %v3549 = vpop.permute.xlu0 %3548
      %3550 = vrot.lane.b32.xlu0 %v2452, 80
      %v3551 = vpop.permute.xlu0 %3550
      %3552 = vrot.lane.b32.xlu0 %v2453, 80
      %v3553 = vpop.permute.xlu0 %3552
      %3554 = vrot.lane.b32.xlu0 %v2454, 80
      %v3555 = vpop.permute.xlu0 %3554
      %3556 = vrot.lane.b32.xlu0 %v2451, 16
      %v3557 = vpop.permute.xlu0 %3556
      %3558 = vrot.lane.b32.xlu0 %v2452, 16
      %v3559 = vpop.permute.xlu0 %3558
      %3560 = vrot.lane.b32.xlu0 %v2453, 16
      %v3561 = vpop.permute.xlu0 %3560
      %3562 = vrot.lane.b32.xlu0 %v2454, 16
      %v3563 = vpop.permute.xlu0 %3562
      %v3565 = vsel %vm2467, %v3549, 0
      %v3568 = vsel %vm2467, %v3551, 0
      %v3571 = vsel %vm2467, %v3553, 0
      %v3574 = vsel %vm2467, %v3555, 0
      %v3577 = vsel %vm2467, %v3557, 0
      %v3580 = vsel %vm2467, %v3559, 0
      %v3583 = vsel %vm2467, %v3561, 0
      %v3586 = vsel %vm2467, %v3563, 0
      %3588 = vmatprep.subr.bf16.mxu0 0
      %3589 = vmatpush1.bf16.xpose.msra.mxu0 %v3577
      %3590 = vmatprep.subr.bf16.mxu0 0
      %3591 = vmatpush1.bf16.xpose.msra.mxu0 %v3580
      %3592 = vmatprep.subr.bf16.mxu0 0
      %3593 = vmatpush1.bf16.xpose.msra.mxu0 %v3583
      %3594 = vmatprep.subr.bf16.mxu0 0
      %3595 = vmatpush1.bf16.xpose.msra.mxu0 %v3586
      %3596 = vmatprep.subr.bf16.mxu0 0
      %3597 = vmatpush1.bf16.xpose.msra.mxu0 0
      %3598 = vmatprep.subr.bf16.mxu0 0
      %3599 = vmatpush1.bf16.xpose.msra.mxu0 0
      %3600 = vmatprep.subr.bf16.mxu0 0
      %3601 = vmatpush1.bf16.xpose.msra.mxu0 0
      %3602 = vmatprep.subr.bf16.mxu0 0
      %3603 = vmatpush1.bf16.xpose.msra.mxu0 0
      %3604 = vmatprep.subr.bf16.mxu0 0
      %3605 = vmatpush1.bf16.xpose.msra.mxu0 0
      %3606 = vmatprep.subr.bf16.mxu0 0
      %3607 = vmatpush1.bf16.xpose.msra.mxu0 0
      %3608 = vmatprep.subr.bf16.mxu0 0
      %3609 = vmatpush1.bf16.xpose.msra.mxu0 0
      %3610 = vmatprep.subr.bf16.mxu0 0
      %3611 = vmatpush1.bf16.xpose.msra.mxu0 0
      %3612 = vmatprep.subr.bf16.mxu0 0
      %3613 = vmatpush1.bf16.xpose.msra.mxu0 0
      %3614 = vmatprep.subr.bf16.mxu0 0
      %3615 = vmatpush1.bf16.xpose.msra.mxu0 0
      %3616 = vmatprep.subr.bf16.mxu0 0
      %3617 = vmatpush1.bf16.xpose.msra.mxu0 0
      %3618 = vmatprep.subr.bf16.mxu0 0
      %3619 = vmatpush1.bf16.xpose.msra.mxu0 0
      %3620 = vmatprep.mubr.bf16.mxu0 0
      %3621 = vmatmul.mubr.bf16.gmra.mrb[0].mxu0 %v3565
      %v3622 = vpop.f32.mrb[0].mxu0
      %v3623 = vadd.f32 0.0, %v3622
      %v3624 = vpop.f32.mrb[0].mxu0
      %v3625 = vpop.f32.mrb[0].mxu0
      %v3626 = vadd.f32 0.0, %v3625
      %v3627 = vpop.f32.mrb[0].mxu0
      %3628 = vmatprep.mubr.bf16.mxu0 0
      %3629 = vmatmul.mubr.bf16.gmra.mrb[0].mxu0 %v3568
      %v3630 = vpop.f32.mrb[0].mxu0
      %v3631 = vadd.f32 0.0, %v3630
      %v3632 = vpop.f32.mrb[0].mxu0
      %v3633 = vpop.f32.mrb[0].mxu0
      %v3634 = vadd.f32 0.0, %v3633
      %v3635 = vpop.f32.mrb[0].mxu0
      %3636 = vmatprep.mubr.bf16.mxu0 0
      %3637 = vmatmul.mubr.bf16.gmra.mrb[0].mxu0 %v3571
      %v3638 = vpop.f32.mrb[0].mxu0
      %v3639 = vadd.f32 0.0, %v3638
      %v3640 = vpop.f32.mrb[0].mxu0
      %v3641 = vpop.f32.mrb[0].mxu0
      %v3642 = vadd.f32 0.0, %v3641
      %v3643 = vpop.f32.mrb[0].mxu0
      %3644 = vmatprep.mubr.bf16.mxu0 0
      %3645 = vmatmul.mubr.bf16.gmra.mrb[0].mxu0 %v3574
      %v3646 = vpop.f32.mrb[0].mxu0
      %v3647 = vadd.f32 0.0, %v3646
      %v3648 = vpop.f32.mrb[0].mxu0
      %v3649 = vpop.f32.mrb[0].mxu0
      %v3650 = vpop.f32.mrb[0].mxu0
      %3651 = vdwg.mxu0
      %v3652 = vmul.f32 %v3623, 0.25
      %v3653 = vmul.f32 %v3626, 0.25
      %v3654 = vmul.f32 %v3631, 0.25
      %v3655 = vmul.f32 %v3634, 0.25
      %v3656 = vmul.f32 %v3639, 0.25
      %v3657 = vmul.f32 %v3642, 0.25
      %v3658 = vmul.f32 %v3647, 0.25
      %v3659 = vsel %vm2563, %v3652, -inf
      %3660 = vmax.xlane.f32.xlu0 %v3659
      %v3661 = vpop.xlane.xlu0 %3660
      %v3662 = vsel %vm2563, %v3653, -inf
      %3663 = vmax.xlane.f32.xlu0 %v3662
      %v3664 = vpop.xlane.xlu0 %3663
      %v3665 = vsel %vm2563, %v3654, -inf
      %3666 = vmax.xlane.f32.xlu0 %v3665
      %v3667 = vpop.xlane.xlu0 %3666
      %v3668 = vsel %vm2563, %v3655, -inf
      %3669 = vmax.xlane.f32.xlu0 %v3668
      %v3670 = vpop.xlane.xlu0 %3669
      %v3671 = vsel %vm2563, %v3656, -inf
      %3672 = vmax.xlane.f32.xlu0 %v3671
      %v3673 = vpop.xlane.xlu0 %3672
      %v3674 = vsel %vm2563, %v3657, -inf
      %3675 = vmax.xlane.f32.xlu0 %v3674
      %v3676 = vpop.xlane.xlu0 %3675
      %v3677 = vsel %vm2582, %v3658, -inf
      %3678 = vmax.xlane.f32.xlu0 %v3677
      %v3679 = vpop.xlane.xlu0 %3678
      %v3680 = vsub.f32 %v3652, %v3661
      %v3681 = vsub.f32 %v3653, %v3664
      %v3682 = vsub.f32 %v3654, %v3667
      %v3683 = vsub.f32 %v3655, %v3670
      %v3684 = vsub.f32 %v3656, %v3673
      %v3685 = vsub.f32 %v3657, %v3676
      %v3686 = vsub.f32 %v3658, %v3679
      %v3687 = vmul.f32 %v3680, 1.442695
      %v3688 = vpow.pop %v3687
      %v3689 = vmul.f32 %v3681, 1.442695
      %v3690 = vpow.pop %v3689
      %v3691 = vmul.f32 %v3682, 1.442695
      %v3692 = vpow.pop %v3691
      %v3693 = vmul.f32 %v3683, 1.442695
      %v3694 = vpow.pop %v3693
      %v3695 = vmul.f32 %v3684, 1.442695
      %v3696 = vpow.pop %v3695
      %v3697 = vmul.f32 %v3685, 1.442695
      %v3698 = vpow.pop %v3697
      %v3699 = vmul.f32 %v3686, 1.442695
      %v3700 = vpow.pop %v3699
      %v3701 = vsel %vm2563, %v3688, 0.0
      %3702 = vadd.xlane.f32.xlu0 %v3701
      %v3703 = vpop.xlane.xlu0 %3702
      %v3704 = vsel %vm2563, %v3690, 0.0
      %3705 = vadd.xlane.f32.xlu0 %v3704
      %v3706 = vpop.xlane.xlu0 %3705
      %v3707 = vsel %vm2563, %v3692, 0.0
      %3708 = vadd.xlane.f32.xlu0 %v3707
      %v3709 = vpop.xlane.xlu0 %3708
      %v3710 = vsel %vm2563, %v3694, 0.0
      %3711 = vadd.xlane.f32.xlu0 %v3710
      %v3712 = vpop.xlane.xlu0 %3711
      %v3713 = vsel %vm2563, %v3696, 0.0
      %3714 = vadd.xlane.f32.xlu0 %v3713
      %v3715 = vpop.xlane.xlu0 %3714
      %v3716 = vsel %vm2563, %v3698, 0.0
      %3717 = vadd.xlane.f32.xlu0 %v3716
      %v3718 = vpop.xlane.xlu0 %3717
      %v3719 = vsel %vm2582, %v3700, 0.0
      %3720 = vadd.xlane.f32.xlu0 %v3719
      %v3721 = vpop.xlane.xlu0 %3720
      %v3722 = vrcp.pop %v3703
      %v3723 = vrcp.pop %v3706
      %v3724 = vrcp.pop %v3709
      %v3725 = vrcp.pop %v3712
      %v3726 = vrcp.pop %v3715
      %v3727 = vrcp.pop %v3718
      %v3728 = vrcp.pop %v3721
      %v3729 = vmul.f32 %v3688, %v3722
      %v3730 = vmul.f32 %v3690, %v3723
      %v3731 = vmul.f32 %v3692, %v3724
      %v3732 = vmul.f32 %v3694, %v3725
      %v3733 = vmul.f32 %v3696, %v3726
      %v3734 = vmul.f32 %v3698, %v3727
      %v3735 = vmul.f32 %v3700, %v3728
      %v3736 = vpack.c.bf16 %v3730, %v3729
      %v3737 = vpack.c.bf16 %v3732, %v3731
      %v3738 = vpack.c.bf16 %v3734, %v3733
      %v3739 = vpack.c.bf16 %v3735, %v3735
      %3740 = vrot.lane.b32.xlu0 %v2646, 80
      %v3741 = vpop.permute.xlu0 %3740
      %3742 = vrot.lane.b32.xlu0 %v2647, 80
      %v3743 = vpop.permute.xlu0 %3742
      %3744 = vrot.lane.b32.xlu0 %v2648, 80
      %v3745 = vpop.permute.xlu0 %3744
      %3746 = vrot.lane.b32.xlu0 %v2649, 80
      %v3747 = vpop.permute.xlu0 %3746
      %v3752 = vsel %vm2563, %v3736, 0
      %v3755 = vsel %vm2563, %v3737, 0
      %v3758 = vsel %vm2563, %v3738, 0
      %v3761 = vsel %vm2563, %v3739, 0
      %v3764 = vsel %vm2662, %v3747, 0
      %3766 = vmatprep.subr.bf16.mxu0 0
      %3767 = vmatpush1.bf16.msra.mxu0 %v3741
      %3768 = vmatprep.subr.bf16.mxu0 0
      %3769 = vmatpush1.bf16.msra.mxu0 %v3743
      %3770 = vmatprep.subr.bf16.mxu0 0
      %3771 = vmatpush1.bf16.msra.mxu0 %v3745
      %3772 = vmatprep.subr.bf16.mxu0 0
      %3773 = vmatpush1.bf16.msra.mxu0 %v3764
      %3774 = vmatprep.subr.bf16.mxu0 0
      %3775 = vmatpush1.bf16.msra.mxu0 0
      %3776 = vmatprep.subr.bf16.mxu0 0
      %3777 = vmatpush1.bf16.msra.mxu0 0
      %3778 = vmatprep.subr.bf16.mxu0 0
      %3779 = vmatpush1.bf16.msra.mxu0 0
      %3780 = vmatprep.subr.bf16.mxu0 0
      %3781 = vmatpush1.bf16.msra.mxu0 0
      %3782 = vmatprep.subr.bf16.mxu0 0
      %3783 = vmatpush1.bf16.msra.mxu0 0
      %3784 = vmatprep.subr.bf16.mxu0 0
      %3785 = vmatpush1.bf16.msra.mxu0 0
      %3786 = vmatprep.subr.bf16.mxu0 0
      %3787 = vmatpush1.bf16.msra.mxu0 0
      %3788 = vmatprep.subr.bf16.mxu0 0
      %3789 = vmatpush1.bf16.msra.mxu0 0
      %3790 = vmatprep.subr.bf16.mxu0 0
      %3791 = vmatpush1.bf16.msra.mxu0 0
      %3792 = vmatprep.subr.bf16.mxu0 0
      %3793 = vmatpush1.bf16.msra.mxu0 0
      %3794 = vmatprep.subr.bf16.mxu0 0
      %3795 = vmatpush1.bf16.msra.mxu0 0
      %3796 = vmatprep.subr.bf16.mxu0 0
      %3797 = vmatpush1.bf16.msra.mxu0 0
      %3798 = vmatprep.mubr.bf16.mxu0 0
      %3799 = vmatmul.mubr.bf16.gmra.mrb[0].mxu0 %v3752
      %v3800 = vpop.f32.mrb[0].mxu0
      %v3801 = vadd.f32 0.0, %v3800
      %v3802 = vpop.f32.mrb[0].mxu0
      %v3803 = vpop.f32.mrb[0].mxu0
      %v3804 = vadd.f32 0.0, %v3803
      %v3805 = vpop.f32.mrb[0].mxu0
      %3806 = vmatprep.mubr.bf16.mxu0 0
      %3807 = vmatmul.mubr.bf16.gmra.mrb[0].mxu0 %v3755
      %v3808 = vpop.f32.mrb[0].mxu0
      %v3809 = vadd.f32 0.0, %v3808
      %v3810 = vpop.f32.mrb[0].mxu0
      %v3811 = vpop.f32.mrb[0].mxu0
      %v3812 = vadd.f32 0.0, %v3811
      %v3813 = vpop.f32.mrb[0].mxu0
      %3814 = vmatprep.mubr.bf16.mxu0 0
      %3815 = vmatmul.mubr.bf16.gmra.mrb[0].mxu0 %v3758
      %v3816 = vpop.f32.mrb[0].mxu0
      %v3817 = vadd.f32 0.0, %v3816
      %v3818 = vpop.f32.mrb[0].mxu0
      %v3819 = vpop.f32.mrb[0].mxu0
      %v3820 = vadd.f32 0.0, %v3819
      %v3821 = vpop.f32.mrb[0].mxu0
      %3822 = vmatprep.mubr.bf16.mxu0 0
      %3823 = vmatmul.mubr.bf16.gmra.mrb[0].mxu0 %v3761
      %v3824 = vpop.f32.mrb[0].mxu0
      %v3825 = vadd.f32 0.0, %v3824
      %v3826 = vpop.f32.mrb[0].mxu0
      %v3827 = vpop.f32.mrb[0].mxu0
      %v3828 = vpop.f32.mrb[0].mxu0
      %3829 = vdwg.mxu0
      %v3830 = vpack.c.bf16 %v3804, %v3801
      %v3831 = vpack.c.bf16 %v3812, %v3809
      %v3832 = vpack.c.bf16 %v3820, %v3817
      %v3833 = vpack.c.bf16 %v3825, %v3825
      %v3834 = vpack.c.bf16 %v2450, %v2449
      %v3836 = vsel %vm2467, %v3830, 0
      %v3839 = vsel %vm2467, %v3831, 0
      %v3842 = vsel %vm2467, %v3832, 0
      %v3845 = vsel %vm2467, %v3833, 0
      %3847 = vmatprep.subr.bf16.mxu0 0
      %3848 = vmatpush1.bf16.msra.mxu0 %v3834
      %3849 = vmatprep.subr.bf16.mxu0 0
      %3850 = vmatpush1.bf16.msra.mxu0 0
      %3851 = vmatprep.subr.bf16.mxu0 0
      %3852 = vmatpush1.bf16.msra.mxu0 0
      %3853 = vmatprep.subr.bf16.mxu0 0
      %3854 = vmatpush1.bf16.msra.mxu0 0
      %3855 = vmatprep.subr.bf16.mxu0 0
      %3856 = vmatpush1.bf16.msra.mxu0 0
      %3857 = vmatprep.subr.bf16.mxu0 0
      %3858 = vmatpush1.bf16.msra.mxu0 0
      %3859 = vmatprep.subr.bf16.mxu0 0
      %3860 = vmatpush1.bf16.msra.mxu0 0
      %3861 = vmatprep.subr.bf16.mxu0 0
      %3862 = vmatpush1.bf16.msra.mxu0 0
      %3863 = vmatprep.subr.bf16.mxu0 0
      %3864 = vmatpush1.bf16.msra.mxu0 0
      %3865 = vmatprep.subr.bf16.mxu0 0
      %3866 = vmatpush1.bf16.msra.mxu0 0
      %3867 = vmatprep.subr.bf16.mxu0 0
      %3868 = vmatpush1.bf16.msra.mxu0 0
      %3869 = vmatprep.subr.bf16.mxu0 0
      %3870 = vmatpush1.bf16.msra.mxu0 0
      %3871 = vmatprep.subr.bf16.mxu0 0
      %3872 = vmatpush1.bf16.msra.mxu0 0
      %3873 = vmatprep.subr.bf16.mxu0 0
      %3874 = vmatpush1.bf16.msra.mxu0 0
      %3875 = vmatprep.subr.bf16.mxu0 0
      %3876 = vmatpush1.bf16.msra.mxu0 0
      %3877 = vmatprep.subr.bf16.mxu0 0
      %3878 = vmatpush1.bf16.msra.mxu0 0
      %3879 = vmatprep.mubr.bf16.mxu0 0
      %3880 = vmatmul.mubr.bf16.gmra.mrb[0].mxu0 %v3836
      %v3881 = vpop.f32.mrb[0].mxu0
      %v3882 = vadd.f32 0.0, %v3881
      %v3883 = vpop.f32.mrb[0].mxu0
      %v3884 = vpop.f32.mrb[0].mxu0
      %v3885 = vadd.f32 0.0, %v3884
      %v3886 = vpop.f32.mrb[0].mxu0
      %3887 = vmatprep.mubr.bf16.mxu0 0
      %3888 = vmatmul.mubr.bf16.gmra.mrb[0].mxu0 %v3839
      %v3889 = vpop.f32.mrb[0].mxu0
      %v3890 = vadd.f32 0.0, %v3889
      %v3891 = vpop.f32.mrb[0].mxu0
      %v3892 = vpop.f32.mrb[0].mxu0
      %v3893 = vadd.f32 0.0, %v3892
      %v3894 = vpop.f32.mrb[0].mxu0
      %3895 = vmatprep.mubr.bf16.mxu0 0
      %3896 = vmatmul.mubr.bf16.gmra.mrb[0].mxu0 %v3842
      %v3897 = vpop.f32.mrb[0].mxu0
      %v3898 = vadd.f32 0.0, %v3897
      %v3899 = vpop.f32.mrb[0].mxu0
      %v3900 = vpop.f32.mrb[0].mxu0
      %v3901 = vadd.f32 0.0, %v3900
      %v3902 = vpop.f32.mrb[0].mxu0
      %3903 = vmatprep.mubr.bf16.mxu0 0
      %3904 = vmatmul.mubr.bf16.gmra.mrb[0].mxu0 %v3845
      %v3905 = vpop.f32.mrb[0].mxu0
      %v3906 = vadd.f32 0.0, %v3905
      %v3907 = vpop.f32.mrb[0].mxu0
      %v3908 = vpop.f32.mrb[0].mxu0
      %v3909 = vpop.f32.mrb[0].mxu0
      %3910 = vdwg.mxu0
      %v3911 = vadd.f32 %v3541, %v3882
      %v3912 = vadd.f32 %v3542, %v3885
      %v3913 = vadd.f32 %v3543, %v3890
      %v3914 = vadd.f32 %v3544, %v3893
      %v3915 = vadd.f32 %v3545, %v3898
      %v3916 = vadd.f32 %v3546, %v3901
      %v3917 = vadd.f32 %v3547, %v3906
      %v3918 = vadd.f32 %v2222, %v3911
      %v3919 = vadd.f32 %v2223, %v3912
      %v3920 = vadd.f32 %v2224, %v3913
      %v3921 = vadd.f32 %v2225, %v3914
      %v3922 = vadd.f32 %v2226, %v3915
      %v3923 = vadd.f32 %v2227, %v3916
      %v3924 = vadd.f32 %v2228, %v3917
      %v3925 = vld [vmem:[%s8] sm:$0x1]
      %v3927 = vlaneseq
      %v3928 = vshrl.u32 %v3927, 7
      %v3929 = vsub.s32 0, %v3928
      %v3930 = vrot.slane %v3925, %v3929
      %v3932 = vadd.f32 %v3918, %v3930
      %v3933 = vadd.f32 %v3919, %v3930
      %v3934 = vadd.f32 %v3920, %v3930
      %v3935 = vadd.f32 %v3921, %v3930
      %v3936 = vadd.f32 %v3922, %v3930
      %v3937 = vadd.f32 %v3923, %v3930
      %v3938 = vadd.f32 %v3924, %v3930
      %v3939 = vsel %vm2107, %v3932, 0.0
      %3940 = vadd.xlane.f32.xlu0 %v3939
      %v3941 = vpop.xlane.xlu0 %3940
      %v3942 = vsel %vm2107, %v3933, 0.0
      %3943 = vadd.xlane.f32.xlu0 %v3942
      %v3944 = vpop.xlane.xlu0 %3943
      %v3945 = vsel %vm2107, %v3934, 0.0
      %3946 = vadd.xlane.f32.xlu0 %v3945
      %v3947 = vpop.xlane.xlu0 %3946
      %v3948 = vsel %vm2107, %v3935, 0.0
      %3949 = vadd.xlane.f32.xlu0 %v3948
      %v3950 = vpop.xlane.xlu0 %3949
      %v3951 = vsel %vm2107, %v3936, 0.0
      %3952 = vadd.xlane.f32.xlu0 %v3951
      %v3953 = vpop.xlane.xlu0 %3952
      %v3954 = vsel %vm2107, %v3937, 0.0
      %3955 = vadd.xlane.f32.xlu0 %v3954
      %v3956 = vpop.xlane.xlu0 %3955
      %v3957 = vsel %vm2126, %v3938, 0.0
      %3958 = vadd.xlane.f32.xlu0 %v3957
      %v3959 = vpop.xlane.xlu0 %3958
      %v3960 = vmul.f32 %v3941, %v2130
      %v3961 = vmul.f32 %v3944, %v2130
      %v3962 = vmul.f32 %v3947, %v2130
      %v3963 = vmul.f32 %v3950, %v2130
      %v3964 = vmul.f32 %v3953, %v2130
      %v3965 = vmul.f32 %v3956, %v2130
      %v3966 = vmul.f32 %v3959, %v2130
      %v3967 = vsub.f32 %v3932, %v3960
      %v3968 = vsub.f32 %v3933, %v3961
      %v3969 = vsub.f32 %v3934, %v3962
      %v3970 = vsub.f32 %v3935, %v3963
      %v3971 = vsub.f32 %v3936, %v3964
      %v3972 = vsub.f32 %v3937, %v3965
      %v3973 = vsub.f32 %v3938, %v3966
      %v3974 = vmul.f32 %v3967, %v3967
      %v3975 = vmul.f32 %v3968, %v3968
      %v3976 = vmul.f32 %v3969, %v3969
      %v3977 = vmul.f32 %v3970, %v3970
      %v3978 = vmul.f32 %v3971, %v3971
      %v3979 = vmul.f32 %v3972, %v3972
      %v3980 = vmul.f32 %v3973, %v3973
      %v3981 = vsel %vm2107, %v3974, 0.0
      %3982 = vadd.xlane.f32.xlu0 %v3981
      %v3983 = vpop.xlane.xlu0 %3982
      %v3984 = vsel %vm2107, %v3975, 0.0
      %3985 = vadd.xlane.f32.xlu0 %v3984
      %v3986 = vpop.xlane.xlu0 %3985
      %v3987 = vsel %vm2107, %v3976, 0.0
      %3988 = vadd.xlane.f32.xlu0 %v3987
      %v3989 = vpop.xlane.xlu0 %3988
      %v3990 = vsel %vm2107, %v3977, 0.0
      %3991 = vadd.xlane.f32.xlu0 %v3990
      %v3992 = vpop.xlane.xlu0 %3991
      %v3993 = vsel %vm2107, %v3978, 0.0
      %3994 = vadd.xlane.f32.xlu0 %v3993
      %v3995 = vpop.xlane.xlu0 %3994
      %v3996 = vsel %vm2107, %v3979, 0.0
      %3997 = vadd.xlane.f32.xlu0 %v3996
      %v3998 = vpop.xlane.xlu0 %3997
      %v3999 = vsel %vm2126, %v3980, 0.0
      %4000 = vadd.xlane.f32.xlu0 %v3999
      %v4001 = vpop.xlane.xlu0 %4000
      %v4002 = vmul.f32 %v3983, %v2130
      %v4003 = vmul.f32 %v3986, %v2130
      %v4004 = vmul.f32 %v3989, %v2130
      %v4005 = vmul.f32 %v3992, %v2130
      %v4006 = vmul.f32 %v3995, %v2130
      %v4007 = vmul.f32 %v3998, %v2130
      %v4008 = vmul.f32 %v4001, %v2130
      %v4009 = vadd.f32 %v4002, 1e-05
      %v4010 = vadd.f32 %v4003, 1e-05
      %v4011 = vadd.f32 %v4004, 1e-05
      %v4012 = vadd.f32 %v4005, 1e-05
      %v4013 = vadd.f32 %v4006, 1e-05
      %v4014 = vadd.f32 %v4007, 1e-05
      %v4015 = vadd.f32 %v4008, 1e-05
      %v4016 = vrsqrt.pop %v4009
      %v4017 = vrsqrt.pop %v4010
      %v4018 = vrsqrt.pop %v4011
      %v4019 = vrsqrt.pop %v4012
      %v4020 = vrsqrt.pop %v4013
      %v4021 = vrsqrt.pop %v4014
      %v4022 = vrsqrt.pop %v4015
      %v4023 = vmul.f32 %v3967, %v4016
      %v4024 = vmul.f32 %v3968, %v4017
      %v4025 = vmul.f32 %v3969, %v4018
      %v4026 = vmul.f32 %v3970, %v4019
      %v4027 = vmul.f32 %v3971, %v4020
      %v4028 = vmul.f32 %v3972, %v4021
      %v4029 = vmul.f32 %v3973, %v4022
      %v4030 = vld [vmem:[%s9] sm:$0xff]
      %v4031 = vld [vmem:[%s9 + $0x8] sm:$0xff]
      %v4032 = vld [vmem:[%s9 + $0x10] sm:$0xff]
      %v4033 = vld [vmem:[%s9 + $0x18] sm:$0xff]
      %v4034 = vld [vmem:[%s9 + $0x20] sm:$0xff]
      %v4035 = vld [vmem:[%s9 + $0x28] sm:$0xff]
      %v4036 = vld [vmem:[%s9 + $0x30] sm:$0xff]
      %v4037 = vld [vmem:[%s9 + $0x38] sm:$0xff]
      %v4038 = vld [vmem:[%s9 + $0x40] sm:$0xff]
      %v4039 = vld [vmem:[%s9 + $0x48] sm:$0xff]
      %v4040 = vld [vmem:[%s9 + $0x50] sm:$0xff]
      %v4041 = vld [vmem:[%s9 + $0x58] sm:$0xff]
      %v4042 = vld [vmem:[%s9 + $0x60] sm:$0xff]
      %v4043 = vld [vmem:[%s9 + $0x68] sm:$0xff]
      %v4044 = vld [vmem:[%s9 + $0x70] sm:$0xff]
      %v4045 = vld [vmem:[%s9 + $0x78] sm:$0xff]
      %v4046 = vpack.c.bf16 %v4024, %v4023
      %v4047 = vpack.c.bf16 %v4026, %v4025
      %v4048 = vpack.c.bf16 %v4028, %v4027
      %v4049 = vpack.c.bf16 %v4029, %v4029
      %v4050 = vpack.c.bf16 %v4032, %v4030
      %v4051 = vpack.c.bf16 %v4033, %v4031
      %v4052 = vpack.c.bf16 %v4036, %v4034
      %v4053 = vpack.c.bf16 %v4037, %v4035
      %v4054 = vpack.c.bf16 %v4040, %v4038
      %v4055 = vpack.c.bf16 %v4041, %v4039
      %v4056 = vpack.c.bf16 %v4044, %v4042
      %v4057 = vpack.c.bf16 %v4045, %v4043
      %v4058 = vld [vmem:[%s10] sm:$0x3]
      %v4060 = vlaneseq
      %v4061 = vshrl.u32 %v4060, 7
      %v4062 = vsub.s32 0, %v4061
      %v4063 = vrot.slane %v4058, %v4062
      %v4064 = vlaneseq
      %v4065 = vshrl.u32 %v4064, 7
      %v4066 = vsub.s32 1, %v4065
      %v4067 = vrot.slane %v4058, %v4066
      %v4071 = vsel %vm2107, %v4046, 0
      %v4074 = vsel %vm2107, %v4047, 0
      %v4077 = vsel %vm2107, %v4048, 0
      %v4080 = vsel %vm2107, %v4049, 0
      %4082 = vmatprep.subr.bf16.mxu0 %v4051
      %4083 = vmatpush1.bf16.msra.mxu0 %v4050
      %4084 = vmatprep.subr.bf16.mxu0 %v4053
      %4085 = vmatpush1.bf16.msra.mxu0 %v4052
      %4086 = vmatprep.subr.bf16.mxu0 %v4055
      %4087 = vmatpush1.bf16.msra.mxu0 %v4054
      %4088 = vmatprep.subr.bf16.mxu0 %v4057
      %4089 = vmatpush1.bf16.msra.mxu0 %v4056
      %4090 = vmatprep.subr.bf16.mxu0 0
      %4091 = vmatpush1.bf16.msra.mxu0 0
      %4092 = vmatprep.subr.bf16.mxu0 0
      %4093 = vmatpush1.bf16.msra.mxu0 0
      %4094 = vmatprep.subr.bf16.mxu0 0
      %4095 = vmatpush1.bf16.msra.mxu0 0
      %4096 = vmatprep.subr.bf16.mxu0 0
      %4097 = vmatpush1.bf16.msra.mxu0 0
      %4098 = vmatprep.subr.bf16.mxu0 0
      %4099 = vmatpush1.bf16.msra.mxu0 0
      %4100 = vmatprep.subr.bf16.mxu0 0
      %4101 = vmatpush1.bf16.msra.mxu0 0
      %4102 = vmatprep.subr.bf16.mxu0 0
      %4103 = vmatpush1.bf16.msra.mxu0 0
      %4104 = vmatprep.subr.bf16.mxu0 0
      %4105 = vmatpush1.bf16.msra.mxu0 0
      %4106 = vmatprep.subr.bf16.mxu0 0
      %4107 = vmatpush1.bf16.msra.mxu0 0
      %4108 = vmatprep.subr.bf16.mxu0 0
      %4109 = vmatpush1.bf16.msra.mxu0 0
      %4110 = vmatprep.subr.bf16.mxu0 0
      %4111 = vmatpush1.bf16.msra.mxu0 0
      %4112 = vmatprep.subr.bf16.mxu0 0
      %4113 = vmatpush1.bf16.msra.mxu0 0
      %4114 = vmatprep.mubr.bf16.mxu0 0
      %4115 = vmatmul.mubr.bf16.gmra.mrb[0].mxu0 %v4071
      %v4116 = vpop.f32.mrb[0].mxu0
      %v4117 = vadd.f32 %v4063, %v4116
      %v4118 = vpop.f32.mrb[0].mxu0
      %v4119 = vadd.f32 %v4067, %v4118
      %v4120 = vpop.f32.mrb[0].mxu0
      %v4121 = vadd.f32 %v4063, %v4120
      %v4122 = vpop.f32.mrb[0].mxu0
      %v4123 = vadd.f32 %v4067, %v4122
      %4124 = vmatprep.mubr.bf16.mxu0 0
      %4125 = vmatmul.mubr.bf16.gmra.mrb[0].mxu0 %v4074
      %v4126 = vpop.f32.mrb[0].mxu0
      %v4127 = vadd.f32 %v4063, %v4126
      %v4128 = vpop.f32.mrb[0].mxu0
      %v4129 = vadd.f32 %v4067, %v4128
      %v4130 = vpop.f32.mrb[0].mxu0
      %v4131 = vadd.f32 %v4063, %v4130
      %v4132 = vpop.f32.mrb[0].mxu0
      %v4133 = vadd.f32 %v4067, %v4132
      %4134 = vmatprep.mubr.bf16.mxu0 0
      %4135 = vmatmul.mubr.bf16.gmra.mrb[0].mxu0 %v4077
      %v4136 = vpop.f32.mrb[0].mxu0
      %v4137 = vadd.f32 %v4063, %v4136
      %v4138 = vpop.f32.mrb[0].mxu0
      %v4139 = vadd.f32 %v4067, %v4138
      %v4140 = vpop.f32.mrb[0].mxu0
      %v4141 = vadd.f32 %v4063, %v4140
      %v4142 = vpop.f32.mrb[0].mxu0
      %v4143 = vadd.f32 %v4067, %v4142
      %4144 = vmatprep.mubr.bf16.mxu0 0
      %4145 = vmatmul.mubr.bf16.gmra.mrb[0].mxu0 %v4080
      %v4146 = vpop.f32.mrb[0].mxu0
      %v4147 = vadd.f32 %v4063, %v4146
      %v4148 = vpop.f32.mrb[0].mxu0
      %v4149 = vadd.f32 %v4067, %v4148
      %v4150 = vpop.f32.mrb[0].mxu0
      %v4151 = vpop.f32.mrb[0].mxu0
      %4152 = vdwg.mxu0
      %v4153 = vmul.f32 %v4117, 1.702
      %v4154 = vmul.f32 %v4119, 1.702
      %v4155 = vmul.f32 %v4121, 1.702
      %v4156 = vmul.f32 %v4123, 1.702
      %v4157 = vmul.f32 %v4127, 1.702
      %v4158 = vmul.f32 %v4129, 1.702
      %v4159 = vmul.f32 %v4131, 1.702
      %v4160 = vmul.f32 %v4133, 1.702
      %v4161 = vmul.f32 %v4137, 1.702
      %v4162 = vmul.f32 %v4139, 1.702
      %v4163 = vmul.f32 %v4141, 1.702
      %v4164 = vmul.f32 %v4143, 1.702
      %v4165 = vmul.f32 %v4147, 1.702
      %v4166 = vmul.f32 %v4149, 1.702
      %v4167 = vxor.u32 %v4153, 2147483648
      %v4168 = vxor.u32 %v4154, 2147483648
      %v4169 = vxor.u32 %v4155, 2147483648
      %v4170 = vxor.u32 %v4156, 2147483648
      %v4171 = vxor.u32 %v4157, 2147483648
      %v4172 = vxor.u32 %v4158, 2147483648
      %v4173 = vxor.u32 %v4159, 2147483648
      %v4174 = vxor.u32 %v4160, 2147483648
      %v4175 = vxor.u32 %v4161, 2147483648
      %v4176 = vxor.u32 %v4162, 2147483648
      %v4177 = vxor.u32 %v4163, 2147483648
      %v4178 = vxor.u32 %v4164, 2147483648
      %v4179 = vxor.u32 %v4165, 2147483648
      %v4180 = vxor.u32 %v4166, 2147483648
      %v4181 = vmul.f32 %v4167, 1.442695
      %v4182 = vpow.pop %v4181
      %v4183 = vmul.f32 %v4168, 1.442695
      %v4184 = vpow.pop %v4183
      %v4185 = vmul.f32 %v4169, 1.442695
      %v4186 = vpow.pop %v4185
      %v4187 = vmul.f32 %v4170, 1.442695
      %v4188 = vpow.pop %v4187
      %v4189 = vmul.f32 %v4171, 1.442695
      %v4190 = vpow.pop %v4189
      %v4191 = vmul.f32 %v4172, 1.442695
      %v4192 = vpow.pop %v4191
      %v4193 = vmul.f32 %v4173, 1.442695
      %v4194 = vpow.pop %v4193
      %v4195 = vmul.f32 %v4174, 1.442695
      %v4196 = vpow.pop %v4195
      %v4197 = vmul.f32 %v4175, 1.442695
      %v4198 = vpow.pop %v4197
      %v4199 = vmul.f32 %v4176, 1.442695
      %v4200 = vpow.pop %v4199
      %v4201 = vmul.f32 %v4177, 1.442695
      %v4202 = vpow.pop %v4201
      %v4203 = vmul.f32 %v4178, 1.442695
      %v4204 = vpow.pop %v4203
      %v4205 = vmul.f32 %v4179, 1.442695
      %v4206 = vpow.pop %v4205
      %v4207 = vmul.f32 %v4180, 1.442695
      %v4208 = vpow.pop %v4207
      %v4209 = vadd.f32 %v4182, 1.0
      %v4210 = vadd.f32 %v4184, 1.0
      %v4211 = vadd.f32 %v4186, 1.0
      %v4212 = vadd.f32 %v4188, 1.0
      %v4213 = vadd.f32 %v4190, 1.0
      %v4214 = vadd.f32 %v4192, 1.0
      %v4215 = vadd.f32 %v4194, 1.0
      %v4216 = vadd.f32 %v4196, 1.0
      %v4217 = vadd.f32 %v4198, 1.0
      %v4218 = vadd.f32 %v4200, 1.0
      %v4219 = vadd.f32 %v4202, 1.0
      %v4220 = vadd.f32 %v4204, 1.0
      %v4221 = vadd.f32 %v4206, 1.0
      %v4222 = vadd.f32 %v4208, 1.0
      %v4223 = vrcp.pop %v4209
      %v4224 = vmul.f32 1.0, %v4223
      %v4225 = vrcp.pop %v4210
      %v4226 = vmul.f32 1.0, %v4225
      %v4227 = vrcp.pop %v4211
      %v4228 = vmul.f32 1.0, %v4227
      %v4229 = vrcp.pop %v4212
      %v4230 = vmul.f32 1.0, %v4229
      %v4231 = vrcp.pop %v4213
      %v4232 = vmul.f32 1.0, %v4231
      %v4233 = vrcp.pop %v4214
      %v4234 = vmul.f32 1.0, %v4233
      %v4235 = vrcp.pop %v4215
      %v4236 = vmul.f32 1.0, %v4235
      %v4237 = vrcp.pop %v4216
      %v4238 = vmul.f32 1.0, %v4237
      %v4239 = vrcp.pop %v4217
      %v4240 = vmul.f32 1.0, %v4239
      %v4241 = vrcp.pop %v4218
      %v4242 = vmul.f32 1.0, %v4241
      %v4243 = vrcp.pop %v4219
      %v4244 = vmul.f32 1.0, %v4243
      %v4245 = vrcp.pop %v4220
      %v4246 = vmul.f32 1.0, %v4245
      %v4247 = vrcp.pop %v4221
      %v4248 = vmul.f32 1.0, %v4247
      %v4249 = vrcp.pop %v4222
      %v4250 = vmul.f32 1.0, %v4249
      %v4251 = vmul.f32 %v4117, %v4224
      %v4252 = vmul.f32 %v4119, %v4226
      %v4253 = vmul.f32 %v4121, %v4228
      %v4254 = vmul.f32 %v4123, %v4230
      %v4255 = vmul.f32 %v4127, %v4232
      %v4256 = vmul.f32 %v4129, %v4234
      %v4257 = vmul.f32 %v4131, %v4236
      %v4258 = vmul.f32 %v4133, %v4238
      %v4259 = vmul.f32 %v4137, %v4240
      %v4260 = vmul.f32 %v4139, %v4242
      %v4261 = vmul.f32 %v4141, %v4244
      %v4262 = vmul.f32 %v4143, %v4246
      %v4263 = vmul.f32 %v4147, %v4248
      %v4264 = vmul.f32 %v4149, %v4250
      %v4265 = vld [vmem:[%s11] sm:$0xff]
      %v4266 = vld [vmem:[%s11 + $0x8] sm:$0xff]
      %v4267 = vld [vmem:[%s11 + $0x10] sm:$0xff]
      %v4268 = vld [vmem:[%s11 + $0x18] sm:$0xff]
      %v4269 = vld [vmem:[%s11 + $0x20] sm:$0xff]
      %v4270 = vld [vmem:[%s11 + $0x28] sm:$0xff]
      %v4271 = vld [vmem:[%s11 + $0x30] sm:$0xff]
      %v4272 = vld [vmem:[%s11 + $0x38] sm:$0xff]
      %v4273 = vld [vmem:[%s11 + $0x40] sm:$0xff]
      %v4274 = vld [vmem:[%s11 + $0x48] sm:$0xff]
      %v4275 = vld [vmem:[%s11 + $0x50] sm:$0xff]
      %v4276 = vld [vmem:[%s11 + $0x58] sm:$0xff]
      %v4277 = vld [vmem:[%s11 + $0x60] sm:$0xff]
      %v4278 = vld [vmem:[%s11 + $0x68] sm:$0xff]
      %v4279 = vld [vmem:[%s11 + $0x70] sm:$0xff]
      %v4280 = vld [vmem:[%s11 + $0x78] sm:$0xff]
      %v4281 = vld [vmem:[%s11 + $0x80] sm:$0xff]
      %v4282 = vld [vmem:[%s11 + $0x88] sm:$0xff]
      %v4283 = vld [vmem:[%s11 + $0x90] sm:$0xff]
      %v4284 = vld [vmem:[%s11 + $0x98] sm:$0xff]
      %v4285 = vld [vmem:[%s11 + $0xa0] sm:$0xff]
      %v4286 = vld [vmem:[%s11 + $0xa8] sm:$0xff]
      %v4287 = vld [vmem:[%s11 + $0xb0] sm:$0xff]
      %v4288 = vld [vmem:[%s11 + $0xb8] sm:$0xff]
      %v4289 = vld [vmem:[%s11 + $0xc0] sm:$0xff]
      %v4290 = vld [vmem:[%s11 + $0xc8] sm:$0xff]
      %v4291 = vld [vmem:[%s11 + $0xd0] sm:$0xff]
      %v4292 = vld [vmem:[%s11 + $0xd8] sm:$0xff]
      %v4293 = vld [vmem:[%s11 + $0xe0] sm:$0xff]
      %v4294 = vld [vmem:[%s11 + $0xe8] sm:$0xff]
      %v4295 = vld [vmem:[%s11 + $0xf0] sm:$0xff]
      %v4296 = vld [vmem:[%s11 + $0xf8] sm:$0xff]
      %v4297 = vpack.c.bf16 %v4253, %v4251
      %v4298 = vpack.c.bf16 %v4254, %v4252
      %v4299 = vpack.c.bf16 %v4257, %v4255
      %v4300 = vpack.c.bf16 %v4258, %v4256
      %v4301 = vpack.c.bf16 %v4261, %v4259
      %v4302 = vpack.c.bf16 %v4262, %v4260
      %v4303 = vpack.c.bf16 %v4263, %v4263
      %v4304 = vpack.c.bf16 %v4264, %v4264
      %v4305 = vpack.c.bf16 %v4266, %v4265
      %v4306 = vpack.c.bf16 %v4268, %v4267
      %v4307 = vpack.c.bf16 %v4270, %v4269
      %v4308 = vpack.c.bf16 %v4272, %v4271
      %v4309 = vpack.c.bf16 %v4274, %v4273
      %v4310 = vpack.c.bf16 %v4276, %v4275
      %v4311 = vpack.c.bf16 %v4278, %v4277
      %v4312 = vpack.c.bf16 %v4280, %v4279
      %v4313 = vpack.c.bf16 %v4282, %v4281
      %v4314 = vpack.c.bf16 %v4284, %v4283
      %v4315 = vpack.c.bf16 %v4286, %v4285
      %v4316 = vpack.c.bf16 %v4288, %v4287
      %v4317 = vpack.c.bf16 %v4290, %v4289
      %v4318 = vpack.c.bf16 %v4292, %v4291
      %v4319 = vpack.c.bf16 %v4294, %v4293
      %v4320 = vpack.c.bf16 %v4296, %v4295
      %4321 = vmatprep.subr.bf16.mxu0 0
      %4322 = vmatpush1.bf16.msra.mxu0 %v4305
      %4323 = vmatprep.subr.bf16.mxu0 0
      %4324 = vmatpush1.bf16.msra.mxu0 %v4306
      %4325 = vmatprep.subr.bf16.mxu0 0
      %4326 = vmatpush1.bf16.msra.mxu0 %v4307
      %4327 = vmatprep.subr.bf16.mxu0 0
      %4328 = vmatpush1.bf16.msra.mxu0 %v4308
      %4329 = vmatprep.subr.bf16.mxu0 0
      %4330 = vmatpush1.bf16.msra.mxu0 %v4309
      %4331 = vmatprep.subr.bf16.mxu0 0
      %4332 = vmatpush1.bf16.msra.mxu0 %v4310
      %4333 = vmatprep.subr.bf16.mxu0 0
      %4334 = vmatpush1.bf16.msra.mxu0 %v4311
      %4335 = vmatprep.subr.bf16.mxu0 0
      %4336 = vmatpush1.bf16.msra.mxu0 %v4312
      %4337 = vmatprep.subr.bf16.mxu0 0
      %4338 = vmatpush1.bf16.msra.mxu0 %v4313
      %4339 = vmatprep.subr.bf16.mxu0 0
      %4340 = vmatpush1.bf16.msra.mxu0 %v4314
      %4341 = vmatprep.subr.bf16.mxu0 0
      %4342 = vmatpush1.bf16.msra.mxu0 %v4315
      %4343 = vmatprep.subr.bf16.mxu0 0
      %4344 = vmatpush1.bf16.msra.mxu0 %v4316
      %4345 = vmatprep.subr.bf16.mxu0 0
      %4346 = vmatpush1.bf16.msra.mxu0 %v4317
      %4347 = vmatprep.subr.bf16.mxu0 0
      %4348 = vmatpush1.bf16.msra.mxu0 %v4318
      %4349 = vmatprep.subr.bf16.mxu0 0
      %4350 = vmatpush1.bf16.msra.mxu0 %v4319
      %4351 = vmatprep.subr.bf16.mxu0 0
      %4352 = vmatpush1.bf16.msra.mxu0 %v4320
      %4353 = vmatprep.mubr.bf16.mxu0 %v4298
      %4354 = vmatmul.mubr.bf16.gmra.mrb[0].mxu0 %v4297
      %v4355 = vpop.f32.mrb[0].mxu0
      %v4356 = vadd.f32 0.0, %v4355
      %v4357 = vpop.f32.mrb[0].mxu0
      %v4358 = vpop.f32.mrb[0].mxu0
      %v4359 = vadd.f32 0.0, %v4358
      %v4360 = vpop.f32.mrb[0].mxu0
      %4361 = vmatprep.mubr.bf16.mxu0 %v4300
      %4362 = vmatmul.mubr.bf16.gmra.mrb[0].mxu0 %v4299
      %v4363 = vpop.f32.mrb[0].mxu0
      %v4364 = vadd.f32 0.0, %v4363
      %v4365 = vpop.f32.mrb[0].mxu0
      %v4366 = vpop.f32.mrb[0].mxu0
      %v4367 = vadd.f32 0.0, %v4366
      %v4368 = vpop.f32.mrb[0].mxu0
      %4369 = vmatprep.mubr.bf16.mxu0 %v4302
      %4370 = vmatmul.mubr.bf16.gmra.mrb[0].mxu0 %v4301
      %v4371 = vpop.f32.mrb[0].mxu0
      %v4372 = vadd.f32 0.0, %v4371
      %v4373 = vpop.f32.mrb[0].mxu0
      %v4374 = vpop.f32.mrb[0].mxu0
      %v4375 = vadd.f32 0.0, %v4374
      %v4376 = vpop.f32.mrb[0].mxu0
      %4377 = vmatprep.mubr.bf16.mxu0 %v4304
      %4378 = vmatmul.mubr.bf16.gmra.mrb[0].mxu0 %v4303
      %v4379 = vpop.f32.mrb[0].mxu0
      %v4380 = vadd.f32 0.0, %v4379
      %v4381 = vpop.f32.mrb[0].mxu0
      %v4382 = vpop.f32.mrb[0].mxu0
      %v4383 = vpop.f32.mrb[0].mxu0
      %4384 = vdwg.mxu0
      %v4385 = vadd.f32 %v3932, %v4356
      %v4386 = vadd.f32 %v3933, %v4359
      %v4387 = vadd.f32 %v3934, %v4364
      %v4388 = vadd.f32 %v3935, %v4367
      %v4389 = vadd.f32 %v3936, %v4372
      %v4390 = vadd.f32 %v3937, %v4375
      %v4391 = vadd.f32 %v3938, %v4380
      %v4392 = vld [vmem:[%s12] sm:$0x1]
      %v4394 = vlaneseq
      %v4395 = vshrl.u32 %v4394, 7
      %v4396 = vsub.s32 0, %v4395
      %v4397 = vrot.slane %v4392, %v4396
      %v4399 = vadd.f32 %v4385, %v4397
      %v4400 = vadd.f32 %v4386, %v4397
      %v4401 = vadd.f32 %v4387, %v4397
      %v4402 = vadd.f32 %v4388, %v4397
      %v4403 = vadd.f32 %v4389, %v4397
      %v4404 = vadd.f32 %v4390, %v4397
      %v4405 = vadd.f32 %v4391, %v4397
      %v4406 = vsel %vm2107, %v4399, 0.0
      %4407 = vadd.xlane.f32.xlu0 %v4406
      %v4408 = vpop.xlane.xlu0 %4407
      %v4409 = vsel %vm2107, %v4400, 0.0
      %4410 = vadd.xlane.f32.xlu0 %v4409
      %v4411 = vpop.xlane.xlu0 %4410
      %v4412 = vsel %vm2107, %v4401, 0.0
      %4413 = vadd.xlane.f32.xlu0 %v4412
      %v4414 = vpop.xlane.xlu0 %4413
      %v4415 = vsel %vm2107, %v4402, 0.0
      %4416 = vadd.xlane.f32.xlu0 %v4415
      %v4417 = vpop.xlane.xlu0 %4416
      %v4418 = vsel %vm2107, %v4403, 0.0
      %4419 = vadd.xlane.f32.xlu0 %v4418
      %v4420 = vpop.xlane.xlu0 %4419
      %v4421 = vsel %vm2107, %v4404, 0.0
      %4422 = vadd.xlane.f32.xlu0 %v4421
      %v4423 = vpop.xlane.xlu0 %4422
      %v4424 = vsel %vm2126, %v4405, 0.0
      %4425 = vadd.xlane.f32.xlu0 %v4424
      %v4426 = vpop.xlane.xlu0 %4425
      %v4427 = vmul.f32 %v4408, %v2130
      %v4428 = vmul.f32 %v4411, %v2130
      %v4429 = vmul.f32 %v4414, %v2130
      %v4430 = vmul.f32 %v4417, %v2130
      %v4431 = vmul.f32 %v4420, %v2130
      %v4432 = vmul.f32 %v4423, %v2130
      %v4433 = vmul.f32 %v4426, %v2130
      %v4434 = vsub.f32 %v4399, %v4427
      %v4435 = vsub.f32 %v4400, %v4428
      %v4436 = vsub.f32 %v4401, %v4429
      %v4437 = vsub.f32 %v4402, %v4430
      %v4438 = vsub.f32 %v4403, %v4431
      %v4439 = vsub.f32 %v4404, %v4432
      %v4440 = vsub.f32 %v4405, %v4433
      %v4441 = vmul.f32 %v4434, %v4434
      %v4442 = vmul.f32 %v4435, %v4435
      %v4443 = vmul.f32 %v4436, %v4436
      %v4444 = vmul.f32 %v4437, %v4437
      %v4445 = vmul.f32 %v4438, %v4438
      %v4446 = vmul.f32 %v4439, %v4439
      %v4447 = vmul.f32 %v4440, %v4440
      %v4448 = vsel %vm2107, %v4441, 0.0
      %4449 = vadd.xlane.f32.xlu0 %v4448
      %v4450 = vpop.xlane.xlu0 %4449
      %v4451 = vsel %vm2107, %v4442, 0.0
      %4452 = vadd.xlane.f32.xlu0 %v4451
      %v4453 = vpop.xlane.xlu0 %4452
      %v4454 = vsel %vm2107, %v4443, 0.0
      %4455 = vadd.xlane.f32.xlu0 %v4454
      %v4456 = vpop.xlane.xlu0 %4455
      %v4457 = vsel %vm2107, %v4444, 0.0
      %4458 = vadd.xlane.f32.xlu0 %v4457
      %v4459 = vpop.xlane.xlu0 %4458
      %v4460 = vsel %vm2107, %v4445, 0.0
      %4461 = vadd.xlane.f32.xlu0 %v4460
      %v4462 = vpop.xlane.xlu0 %4461
      %v4463 = vsel %vm2107, %v4446, 0.0
      %4464 = vadd.xlane.f32.xlu0 %v4463
      %v4465 = vpop.xlane.xlu0 %4464
      %v4466 = vsel %vm2126, %v4447, 0.0
      %4467 = vadd.xlane.f32.xlu0 %v4466
      %v4468 = vpop.xlane.xlu0 %4467
      %v4469 = vmul.f32 %v4450, %v2130
      %v4470 = vmul.f32 %v4453, %v2130
      %v4471 = vmul.f32 %v4456, %v2130
      %v4472 = vmul.f32 %v4459, %v2130
      %v4473 = vmul.f32 %v4462, %v2130
      %v4474 = vmul.f32 %v4465, %v2130
      %v4475 = vmul.f32 %v4468, %v2130
      %v4476 = vadd.f32 %v4469, 1e-05
      %v4477 = vadd.f32 %v4470, 1e-05
      %v4478 = vadd.f32 %v4471, 1e-05
      %v4479 = vadd.f32 %v4472, 1e-05
      %v4480 = vadd.f32 %v4473, 1e-05
      %v4481 = vadd.f32 %v4474, 1e-05
      %v4482 = vadd.f32 %v4475, 1e-05
      %v4483 = vrsqrt.pop %v4476
      %v4484 = vrsqrt.pop %v4477
      %v4485 = vrsqrt.pop %v4478
      %v4486 = vrsqrt.pop %v4479
      %v4487 = vrsqrt.pop %v4480
      %v4488 = vrsqrt.pop %v4481
      %v4489 = vrsqrt.pop %v4482
      %v4490 = vmul.f32 %v4434, %v4483
      %v4491 = vmul.f32 %v4435, %v4484
      %v4492 = vmul.f32 %v4436, %v4485
      %v4493 = vmul.f32 %v4437, %v4486
      %v4494 = vmul.f32 %v4438, %v4487
      %v4495 = vmul.f32 %v4439, %v4488
      %v4496 = vmul.f32 %v4440, %v4489
      %s4497 = scalar_lea.vmem %s5, 128
      %v4498 = vld [vmem:[%s4497] sm:$0xff]
      %v4499 = vld [vmem:[%s4497 + $0x8] sm:$0xff]
      %v4500 = vld [vmem:[%s4497 + $0x10] sm:$0xff]
      %v4501 = vld [vmem:[%s4497 + $0x18] sm:$0xff]
      %v4502 = vld [vmem:[%s4497 + $0x20] sm:$0xff]
      %v4503 = vld [vmem:[%s4497 + $0x28] sm:$0xff]
      %v4504 = vld [vmem:[%s4497 + $0x30] sm:$0xff]
      %v4505 = vld [vmem:[%s4497 + $0x38] sm:$0xff]
      %v4506 = vld [vmem:[%s4497 + $0x40] sm:$0xff]
      %v4507 = vld [vmem:[%s4497 + $0x48] sm:$0xff]
      %v4508 = vld [vmem:[%s4497 + $0x50] sm:$0xff]
      %v4509 = vld [vmem:[%s4497 + $0x58] sm:$0xff]
      %v4510 = vld [vmem:[%s4497 + $0x60] sm:$0xff]
      %v4511 = vld [vmem:[%s4497 + $0x68] sm:$0xff]
      %v4512 = vld [vmem:[%s4497 + $0x70] sm:$0xff]
      %v4513 = vld [vmem:[%s4497 + $0x78] sm:$0xff]
      %v4514 = vpack.c.bf16 %v4491, %v4490
      %v4515 = vpack.c.bf16 %v4493, %v4492
      %v4516 = vpack.c.bf16 %v4495, %v4494
      %v4517 = vpack.c.bf16 %v4496, %v4496
      %v4518 = vpack.c.bf16 %v4500, %v4498
      %v4519 = vpack.c.bf16 %v4501, %v4499
      %v4520 = vpack.c.bf16 %v4504, %v4502
      %v4521 = vpack.c.bf16 %v4505, %v4503
      %v4522 = vpack.c.bf16 %v4508, %v4506
      %v4523 = vpack.c.bf16 %v4509, %v4507
      %v4524 = vpack.c.bf16 %v4512, %v4510
      %v4525 = vpack.c.bf16 %v4513, %v4511
      %s4526 = scalar_lea.vmem %s6, 2
      %v4527 = vld [vmem:[%s4526] sm:$0x3]
      %v4529 = vlaneseq
      %v4530 = vshrl.u32 %v4529, 7
      %v4531 = vsub.s32 0, %v4530
      %v4532 = vrot.slane %v4527, %v4531
      %v4533 = vlaneseq
      %v4534 = vshrl.u32 %v4533, 7
      %v4535 = vsub.s32 1, %v4534
      %v4536 = vrot.slane %v4527, %v4535
      %v4540 = vsel %vm2107, %v4514, 0
      %v4543 = vsel %vm2107, %v4515, 0
      %v4546 = vsel %vm2107, %v4516, 0
      %v4549 = vsel %vm2107, %v4517, 0
      %4551 = vmatprep.subr.bf16.mxu0 %v4519
      %4552 = vmatpush1.bf16.msra.mxu0 %v4518
      %4553 = vmatprep.subr.bf16.mxu0 %v4521
      %4554 = vmatpush1.bf16.msra.mxu0 %v4520
      %4555 = vmatprep.subr.bf16.mxu0 %v4523
      %4556 = vmatpush1.bf16.msra.mxu0 %v4522
      %4557 = vmatprep.subr.bf16.mxu0 %v4525
      %4558 = vmatpush1.bf16.msra.mxu0 %v4524
      %4559 = vmatprep.subr.bf16.mxu0 0
      %4560 = vmatpush1.bf16.msra.mxu0 0
      %4561 = vmatprep.subr.bf16.mxu0 0
      %4562 = vmatpush1.bf16.msra.mxu0 0
      %4563 = vmatprep.subr.bf16.mxu0 0
      %4564 = vmatpush1.bf16.msra.mxu0 0
      %4565 = vmatprep.subr.bf16.mxu0 0
      %4566 = vmatpush1.bf16.msra.mxu0 0
      %4567 = vmatprep.subr.bf16.mxu0 0
      %4568 = vmatpush1.bf16.msra.mxu0 0
      %4569 = vmatprep.subr.bf16.mxu0 0
      %4570 = vmatpush1.bf16.msra.mxu0 0
      %4571 = vmatprep.subr.bf16.mxu0 0
      %4572 = vmatpush1.bf16.msra.mxu0 0
      %4573 = vmatprep.subr.bf16.mxu0 0
      %4574 = vmatpush1.bf16.msra.mxu0 0
      %4575 = vmatprep.subr.bf16.mxu0 0
      %4576 = vmatpush1.bf16.msra.mxu0 0
      %4577 = vmatprep.subr.bf16.mxu0 0
      %4578 = vmatpush1.bf16.msra.mxu0 0
      %4579 = vmatprep.subr.bf16.mxu0 0
      %4580 = vmatpush1.bf16.msra.mxu0 0
      %4581 = vmatprep.subr.bf16.mxu0 0
      %4582 = vmatpush1.bf16.msra.mxu0 0
      %4583 = vmatprep.mubr.bf16.mxu0 0
      %4584 = vmatmul.mubr.bf16.gmra.mrb[0].mxu0 %v4540
      %v4585 = vpop.f32.mrb[0].mxu0
      %v4586 = vadd.f32 %v4532, %v4585
      %v4587 = vpop.f32.mrb[0].mxu0
      %v4588 = vadd.f32 %v4536, %v4587
      %v4589 = vpop.f32.mrb[0].mxu0
      %v4590 = vadd.f32 %v4532, %v4589
      %v4591 = vpop.f32.mrb[0].mxu0
      %v4592 = vadd.f32 %v4536, %v4591
      %4593 = vmatprep.mubr.bf16.mxu0 0
      %4594 = vmatmul.mubr.bf16.gmra.mrb[0].mxu0 %v4543
      %v4595 = vpop.f32.mrb[0].mxu0
      %v4596 = vadd.f32 %v4532, %v4595
      %v4597 = vpop.f32.mrb[0].mxu0
      %v4598 = vadd.f32 %v4536, %v4597
      %v4599 = vpop.f32.mrb[0].mxu0
      %v4600 = vadd.f32 %v4532, %v4599
      %v4601 = vpop.f32.mrb[0].mxu0
      %v4602 = vadd.f32 %v4536, %v4601
      %4603 = vmatprep.mubr.bf16.mxu0 0
      %4604 = vmatmul.mubr.bf16.gmra.mrb[0].mxu0 %v4546
      %v4605 = vpop.f32.mrb[0].mxu0
      %v4606 = vadd.f32 %v4532, %v4605
      %v4607 = vpop.f32.mrb[0].mxu0
      %v4608 = vadd.f32 %v4536, %v4607
      %v4609 = vpop.f32.mrb[0].mxu0
      %v4610 = vadd.f32 %v4532, %v4609
      %v4611 = vpop.f32.mrb[0].mxu0
      %v4612 = vadd.f32 %v4536, %v4611
      %4613 = vmatprep.mubr.bf16.mxu0 0
      %4614 = vmatmul.mubr.bf16.gmra.mrb[0].mxu0 %v4549
      %v4615 = vpop.f32.mrb[0].mxu0
      %v4616 = vadd.f32 %v4532, %v4615
      %v4617 = vpop.f32.mrb[0].mxu0
      %v4618 = vadd.f32 %v4536, %v4617
      %v4619 = vpop.f32.mrb[0].mxu0
      %v4620 = vpop.f32.mrb[0].mxu0
      %4621 = vdwg.mxu0
      %s4622 = scalar_lea.vmem %s7, 64
      %v4623 = vld [vmem:[%s4622] sm:$0xff]
      %v4624 = vld [vmem:[%s4622 + $0x8] sm:$0xff]
      %v4625 = vld [vmem:[%s4622 + $0x10] sm:$0xff]
      %v4626 = vld [vmem:[%s4622 + $0x18] sm:$0xff]
      %v4627 = vld [vmem:[%s4622 + $0x20] sm:$0xff]
      %v4628 = vld [vmem:[%s4622 + $0x28] sm:$0xff]
      %v4629 = vld [vmem:[%s4622 + $0x30] sm:$0xff]
      %v4630 = vld [vmem:[%s4622 + $0x38] sm:$0xff]
      %v4631 = vpack.c.bf16 %v4590, %v4586
      %v4632 = vpack.c.bf16 %v4600, %v4596
      %v4633 = vpack.c.bf16 %v4610, %v4606
      %v4634 = vpack.c.bf16 %v4616, %v4616
      %4639 = vrot.lane.b32.xlu0 %v4631, 64
      %v4640 = vpop.permute.xlu0 %4639
      %4641 = vrot.lane.b32.xlu0 %v4632, 64
      %v4642 = vpop.permute.xlu0 %4641
      %4643 = vrot.lane.b32.xlu0 %v4633, 64
      %v4644 = vpop.permute.xlu0 %4643
      %4645 = vrot.lane.b32.xlu0 %v4634, 64
      %v4646 = vpop.permute.xlu0 %4645
      %v4648 = vsel %vm2467, %v4631, 0
      %v4651 = vsel %vm2467, %v4632, 0
      %v4654 = vsel %vm2467, %v4633, 0
      %v4657 = vsel %vm2467, %v4634, 0
      %v4660 = vsel %vm2467, %v4640, 0
      %v4663 = vsel %vm2467, %v4642, 0
      %v4666 = vsel %vm2467, %v4644, 0
      %v4669 = vsel %vm2467, %v4646, 0
      %4671 = vmatprep.subr.bf16.mxu0 0
      %4672 = vmatpush1.bf16.xpose.msra.mxu0 %v4660
      %4673 = vmatprep.subr.bf16.mxu0 0
      %4674 = vmatpush1.bf16.xpose.msra.mxu0 %v4663
      %4675 = vmatprep.subr.bf16.mxu0 0
      %4676 = vmatpush1.bf16.xpose.msra.mxu0 %v4666
      %4677 = vmatprep.subr.bf16.mxu0 0
      %4678 = vmatpush1.bf16.xpose.msra.mxu0 %v4669
      %4679 = vmatprep.subr.bf16.mxu0 0
      %4680 = vmatpush1.bf16.xpose.msra.mxu0 0
      %4681 = vmatprep.subr.bf16.mxu0 0
      %4682 = vmatpush1.bf16.xpose.msra.mxu0 0
      %4683 = vmatprep.subr.bf16.mxu0 0
      %4684 = vmatpush1.bf16.xpose.msra.mxu0 0
      %4685 = vmatprep.subr.bf16.mxu0 0
      %4686 = vmatpush1.bf16.xpose.msra.mxu0 0
      %4687 = vmatprep.subr.bf16.mxu0 0
      %4688 = vmatpush1.bf16.xpose.msra.mxu0 0
      %4689 = vmatprep.subr.bf16.mxu0 0
      %4690 = vmatpush1.bf16.xpose.msra.mxu0 0
      %4691 = vmatprep.subr.bf16.mxu0 0
      %4692 = vmatpush1.bf16.xpose.msra.mxu0 0
      %4693 = vmatprep.subr.bf16.mxu0 0
      %4694 = vmatpush1.bf16.xpose.msra.mxu0 0
      %4695 = vmatprep.subr.bf16.mxu0 0
      %4696 = vmatpush1.bf16.xpose.msra.mxu0 0
      %4697 = vmatprep.subr.bf16.mxu0 0
      %4698 = vmatpush1.bf16.xpose.msra.mxu0 0
      %4699 = vmatprep.subr.bf16.mxu0 0
      %4700 = vmatpush1.bf16.xpose.msra.mxu0 0
      %4701 = vmatprep.subr.bf16.mxu0 0
      %4702 = vmatpush1.bf16.xpose.msra.mxu0 0
      %4703 = vmatprep.mubr.bf16.mxu0 0
      %4704 = vmatmul.mubr.bf16.gmra.mrb[0].mxu0 %v4648
      %v4705 = vpop.f32.mrb[0].mxu0
      %v4706 = vadd.f32 0.0, %v4705
      %v4707 = vpop.f32.mrb[0].mxu0
      %v4708 = vpop.f32.mrb[0].mxu0
      %v4709 = vadd.f32 0.0, %v4708
      %v4710 = vpop.f32.mrb[0].mxu0
      %4711 = vmatprep.mubr.bf16.mxu0 0
      %4712 = vmatmul.mubr.bf16.gmra.mrb[0].mxu0 %v4651
      %v4713 = vpop.f32.mrb[0].mxu0
      %v4714 = vadd.f32 0.0, %v4713
      %v4715 = vpop.f32.mrb[0].mxu0
      %v4716 = vpop.f32.mrb[0].mxu0
      %v4717 = vadd.f32 0.0, %v4716
      %v4718 = vpop.f32.mrb[0].mxu0
      %4719 = vmatprep.mubr.bf16.mxu0 0
      %4720 = vmatmul.mubr.bf16.gmra.mrb[0].mxu0 %v4654
      %v4721 = vpop.f32.mrb[0].mxu0
      %v4722 = vadd.f32 0.0, %v4721
      %v4723 = vpop.f32.mrb[0].mxu0
      %v4724 = vpop.f32.mrb[0].mxu0
      %v4725 = vadd.f32 0.0, %v4724
      %v4726 = vpop.f32.mrb[0].mxu0
      %4727 = vmatprep.mubr.bf16.mxu0 0
      %4728 = vmatmul.mubr.bf16.gmra.mrb[0].mxu0 %v4657
      %v4729 = vpop.f32.mrb[0].mxu0
      %v4730 = vadd.f32 0.0, %v4729
      %v4731 = vpop.f32.mrb[0].mxu0
      %v4732 = vpop.f32.mrb[0].mxu0
      %v4733 = vpop.f32.mrb[0].mxu0
      %4734 = vdwg.mxu0
      %v4735 = vmul.f32 %v4706, 0.25
      %v4736 = vmul.f32 %v4709, 0.25
      %v4737 = vmul.f32 %v4714, 0.25
      %v4738 = vmul.f32 %v4717, 0.25
      %v4739 = vmul.f32 %v4722, 0.25
      %v4740 = vmul.f32 %v4725, 0.25
      %v4741 = vmul.f32 %v4730, 0.25
      %v4742 = vsel %vm2563, %v4735, -inf
      %4743 = vmax.xlane.f32.xlu0 %v4742
      %v4744 = vpop.xlane.xlu0 %4743
      %v4745 = vsel %vm2563, %v4736, -inf
      %4746 = vmax.xlane.f32.xlu0 %v4745
      %v4747 = vpop.xlane.xlu0 %4746
      %v4748 = vsel %vm2563, %v4737, -inf
      %4749 = vmax.xlane.f32.xlu0 %v4748
      %v4750 = vpop.xlane.xlu0 %4749
      %v4751 = vsel %vm2563, %v4738, -inf
      %4752 = vmax.xlane.f32.xlu0 %v4751
      %v4753 = vpop.xlane.xlu0 %4752
      %v4754 = vsel %vm2563, %v4739, -inf
      %4755 = vmax.xlane.f32.xlu0 %v4754
      %v4756 = vpop.xlane.xlu0 %4755
      %v4757 = vsel %vm2563, %v4740, -inf
      %4758 = vmax.xlane.f32.xlu0 %v4757
      %v4759 = vpop.xlane.xlu0 %4758
      %v4760 = vsel %vm2582, %v4741, -inf
      %4761 = vmax.xlane.f32.xlu0 %v4760
      %v4762 = vpop.xlane.xlu0 %4761
      %v4763 = vsub.f32 %v4735, %v4744
      %v4764 = vsub.f32 %v4736, %v4747
      %v4765 = vsub.f32 %v4737, %v4750
      %v4766 = vsub.f32 %v4738, %v4753
      %v4767 = vsub.f32 %v4739, %v4756
      %v4768 = vsub.f32 %v4740, %v4759
      %v4769 = vsub.f32 %v4741, %v4762
      %v4770 = vmul.f32 %v4763, 1.442695
      %v4771 = vpow.pop %v4770
      %v4772 = vmul.f32 %v4764, 1.442695
      %v4773 = vpow.pop %v4772
      %v4774 = vmul.f32 %v4765, 1.442695
      %v4775 = vpow.pop %v4774
      %v4776 = vmul.f32 %v4766, 1.442695
      %v4777 = vpow.pop %v4776
      %v4778 = vmul.f32 %v4767, 1.442695
      %v4779 = vpow.pop %v4778
      %v4780 = vmul.f32 %v4768, 1.442695
      %v4781 = vpow.pop %v4780
      %v4782 = vmul.f32 %v4769, 1.442695
      %v4783 = vpow.pop %v4782
      %v4784 = vsel %vm2563, %v4771, 0.0
      %4785 = vadd.xlane.f32.xlu0 %v4784
      %v4786 = vpop.xlane.xlu0 %4785
      %v4787 = vsel %vm2563, %v4773, 0.0
      %4788 = vadd.xlane.f32.xlu0 %v4787
      %v4789 = vpop.xlane.xlu0 %4788
      %v4790 = vsel %vm2563, %v4775, 0.0
      %4791 = vadd.xlane.f32.xlu0 %v4790
      %v4792 = vpop.xlane.xlu0 %4791
      %v4793 = vsel %vm2563, %v4777, 0.0
      %4794 = vadd.xlane.f32.xlu0 %v4793
      %v4795 = vpop.xlane.xlu0 %4794
      %v4796 = vsel %vm2563, %v4779, 0.0
      %4797 = vadd.xlane.f32.xlu0 %v4796
      %v4798 = vpop.xlane.xlu0 %4797
      %v4799 = vsel %vm2563, %v4781, 0.0
      %4800 = vadd.xlane.f32.xlu0 %v4799
      %v4801 = vpop.xlane.xlu0 %4800
      %v4802 = vsel %vm2582, %v4783, 0.0
      %4803 = vadd.xlane.f32.xlu0 %v4802
      %v4804 = vpop.xlane.xlu0 %4803
      %v4805 = vrcp.pop %v4786
      %v4806 = vrcp.pop %v4789
      %v4807 = vrcp.pop %v4792
      %v4808 = vrcp.pop %v4795
      %v4809 = vrcp.pop %v4798
      %v4810 = vrcp.pop %v4801
      %v4811 = vrcp.pop %v4804
      %v4812 = vmul.f32 %v4771, %v4805
      %v4813 = vmul.f32 %v4773, %v4806
      %v4814 = vmul.f32 %v4775, %v4807
      %v4815 = vmul.f32 %v4777, %v4808
      %v4816 = vmul.f32 %v4779, %v4809
      %v4817 = vmul.f32 %v4781, %v4810
      %v4818 = vmul.f32 %v4783, %v4811
      %v4819 = vpack.c.bf16 %v4813, %v4812
      %v4820 = vpack.c.bf16 %v4815, %v4814
      %v4821 = vpack.c.bf16 %v4817, %v4816
      %v4822 = vpack.c.bf16 %v4818, %v4818
      %v4823 = vpack.c.bf16 %v4592, %v4588
      %v4824 = vpack.c.bf16 %v4602, %v4598
      %v4825 = vpack.c.bf16 %v4612, %v4608
      %v4826 = vpack.c.bf16 %v4618, %v4618
      %v4828 = vsel %vm2563, %v4819, 0
      %v4831 = vsel %vm2563, %v4820, 0
      %v4834 = vsel %vm2563, %v4821, 0
      %v4837 = vsel %vm2563, %v4822, 0
      %v4840 = vsel %vm2662, %v4826, 0
      %4842 = vmatprep.subr.bf16.mxu0 0
      %4843 = vmatpush1.bf16.msra.mxu0 %v4823
      %4844 = vmatprep.subr.bf16.mxu0 0
      %4845 = vmatpush1.bf16.msra.mxu0 %v4824
      %4846 = vmatprep.subr.bf16.mxu0 0
      %4847 = vmatpush1.bf16.msra.mxu0 %v4825
      %4848 = vmatprep.subr.bf16.mxu0 0
      %4849 = vmatpush1.bf16.msra.mxu0 %v4840
      %4850 = vmatprep.subr.bf16.mxu0 0
      %4851 = vmatpush1.bf16.msra.mxu0 0
      %4852 = vmatprep.subr.bf16.mxu0 0
      %4853 = vmatpush1.bf16.msra.mxu0 0
      %4854 = vmatprep.subr.bf16.mxu0 0
      %4855 = vmatpush1.bf16.msra.mxu0 0
      %4856 = vmatprep.subr.bf16.mxu0 0
      %4857 = vmatpush1.bf16.msra.mxu0 0
      %4858 = vmatprep.subr.bf16.mxu0 0
      %4859 = vmatpush1.bf16.msra.mxu0 0
      %4860 = vmatprep.subr.bf16.mxu0 0
      %4861 = vmatpush1.bf16.msra.mxu0 0
      %4862 = vmatprep.subr.bf16.mxu0 0
      %4863 = vmatpush1.bf16.msra.mxu0 0
      %4864 = vmatprep.subr.bf16.mxu0 0
      %4865 = vmatpush1.bf16.msra.mxu0 0
      %4866 = vmatprep.subr.bf16.mxu0 0
      %4867 = vmatpush1.bf16.msra.mxu0 0
      %4868 = vmatprep.subr.bf16.mxu0 0
      %4869 = vmatpush1.bf16.msra.mxu0 0
      %4870 = vmatprep.subr.bf16.mxu0 0
      %4871 = vmatpush1.bf16.msra.mxu0 0
      %4872 = vmatprep.subr.bf16.mxu0 0
      %4873 = vmatpush1.bf16.msra.mxu0 0
      %4874 = vmatprep.mubr.bf16.mxu0 0
      %4875 = vmatmul.mubr.bf16.gmra.mrb[0].mxu0 %v4828
      %v4876 = vpop.f32.mrb[0].mxu0
      %v4877 = vadd.f32 0.0, %v4876
      %v4878 = vpop.f32.mrb[0].mxu0
      %v4879 = vpop.f32.mrb[0].mxu0
      %v4880 = vadd.f32 0.0, %v4879
      %v4881 = vpop.f32.mrb[0].mxu0
      %4882 = vmatprep.mubr.bf16.mxu0 0
      %4883 = vmatmul.mubr.bf16.gmra.mrb[0].mxu0 %v4831
      %v4884 = vpop.f32.mrb[0].mxu0
      %v4885 = vadd.f32 0.0, %v4884
      %v4886 = vpop.f32.mrb[0].mxu0
      %v4887 = vpop.f32.mrb[0].mxu0
      %v4888 = vadd.f32 0.0, %v4887
      %v4889 = vpop.f32.mrb[0].mxu0
      %4890 = vmatprep.mubr.bf16.mxu0 0
      %4891 = vmatmul.mubr.bf16.gmra.mrb[0].mxu0 %v4834
      %v4892 = vpop.f32.mrb[0].mxu0
      %v4893 = vadd.f32 0.0, %v4892
      %v4894 = vpop.f32.mrb[0].mxu0
      %v4895 = vpop.f32.mrb[0].mxu0
      %v4896 = vadd.f32 0.0, %v4895
      %v4897 = vpop.f32.mrb[0].mxu0
      %4898 = vmatprep.mubr.bf16.mxu0 0
      %4899 = vmatmul.mubr.bf16.gmra.mrb[0].mxu0 %v4837
      %v4900 = vpop.f32.mrb[0].mxu0
      %v4901 = vadd.f32 0.0, %v4900
      %v4902 = vpop.f32.mrb[0].mxu0
      %v4903 = vpop.f32.mrb[0].mxu0
      %v4904 = vpop.f32.mrb[0].mxu0
      %4905 = vdwg.mxu0
      %v4906 = vpack.c.bf16 %v4880, %v4877
      %v4907 = vpack.c.bf16 %v4888, %v4885
      %v4908 = vpack.c.bf16 %v4896, %v4893
      %v4909 = vpack.c.bf16 %v4901, %v4901
      %v4910 = vpack.c.bf16 %v4624, %v4623
      %4911 = vrot.lane.b32.xlu0 %v4631, 112
      %v4912 = vpop.permute.xlu0 %4911
      %4913 = vrot.lane.b32.xlu0 %v4632, 112
      %v4914 = vpop.permute.xlu0 %4913
      %4915 = vrot.lane.b32.xlu0 %v4633, 112
      %v4916 = vpop.permute.xlu0 %4915
      %4917 = vrot.lane.b32.xlu0 %v4634, 112
      %v4918 = vpop.permute.xlu0 %4917
      %4919 = vrot.lane.b32.xlu0 %v4631, 48
      %v4920 = vpop.permute.xlu0 %4919
      %4921 = vrot.lane.b32.xlu0 %v4632, 48
      %v4922 = vpop.permute.xlu0 %4921
      %4923 = vrot.lane.b32.xlu0 %v4633, 48
      %v4924 = vpop.permute.xlu0 %4923
      %4925 = vrot.lane.b32.xlu0 %v4634, 48
      %v4926 = vpop.permute.xlu0 %4925
      %v4928 = vsel %vm2467, %v4912, 0
      %v4931 = vsel %vm2467, %v4914, 0
      %v4934 = vsel %vm2467, %v4916, 0
      %v4937 = vsel %vm2467, %v4918, 0
      %v4940 = vsel %vm2467, %v4920, 0
      %v4943 = vsel %vm2467, %v4922, 0
      %v4946 = vsel %vm2467, %v4924, 0
      %v4949 = vsel %vm2467, %v4926, 0
      %4951 = vmatprep.subr.bf16.mxu0 0
      %4952 = vmatpush1.bf16.xpose.msra.mxu0 %v4940
      %4953 = vmatprep.subr.bf16.mxu0 0
      %4954 = vmatpush1.bf16.xpose.msra.mxu0 %v4943
      %4955 = vmatprep.subr.bf16.mxu0 0
      %4956 = vmatpush1.bf16.xpose.msra.mxu0 %v4946
      %4957 = vmatprep.subr.bf16.mxu0 0
      %4958 = vmatpush1.bf16.xpose.msra.mxu0 %v4949
      %4959 = vmatprep.subr.bf16.mxu0 0
      %4960 = vmatpush1.bf16.xpose.msra.mxu0 0
      %4961 = vmatprep.subr.bf16.mxu0 0
      %4962 = vmatpush1.bf16.xpose.msra.mxu0 0
      %4963 = vmatprep.subr.bf16.mxu0 0
      %4964 = vmatpush1.bf16.xpose.msra.mxu0 0
      %4965 = vmatprep.subr.bf16.mxu0 0
      %4966 = vmatpush1.bf16.xpose.msra.mxu0 0
      %4967 = vmatprep.subr.bf16.mxu0 0
      %4968 = vmatpush1.bf16.xpose.msra.mxu0 0
      %4969 = vmatprep.subr.bf16.mxu0 0
      %4970 = vmatpush1.bf16.xpose.msra.mxu0 0
      %4971 = vmatprep.subr.bf16.mxu0 0
      %4972 = vmatpush1.bf16.xpose.msra.mxu0 0
      %4973 = vmatprep.subr.bf16.mxu0 0
      %4974 = vmatpush1.bf16.xpose.msra.mxu0 0
      %4975 = vmatprep.subr.bf16.mxu0 0
      %4976 = vmatpush1.bf16.xpose.msra.mxu0 0
      %4977 = vmatprep.subr.bf16.mxu0 0
      %4978 = vmatpush1.bf16.xpose.msra.mxu0 0
      %4979 = vmatprep.subr.bf16.mxu0 0
      %4980 = vmatpush1.bf16.xpose.msra.mxu0 0
      %4981 = vmatprep.subr.bf16.mxu0 0
      %4982 = vmatpush1.bf16.xpose.msra.mxu0 0
      %4983 = vmatprep.mubr.bf16.mxu0 0
      %4984 = vmatmul.mubr.bf16.gmra.mrb[0].mxu0 %v4928
      %v4985 = vpop.f32.mrb[0].mxu0
      %v4986 = vadd.f32 0.0, %v4985
      %v4987 = vpop.f32.mrb[0].mxu0
      %v4988 = vpop.f32.mrb[0].mxu0
      %v4989 = vadd.f32 0.0, %v4988
      %v4990 = vpop.f32.mrb[0].mxu0
      %4991 = vmatprep.mubr.bf16.mxu0 0
      %4992 = vmatmul.mubr.bf16.gmra.mrb[0].mxu0 %v4931
      %v4993 = vpop.f32.mrb[0].mxu0
      %v4994 = vadd.f32 0.0, %v4993
      %v4995 = vpop.f32.mrb[0].mxu0
      %v4996 = vpop.f32.mrb[0].mxu0
      %v4997 = vadd.f32 0.0, %v4996
      %v4998 = vpop.f32.mrb[0].mxu0
      %4999 = vmatprep.mubr.bf16.mxu0 0
      %5000 = vmatmul.mubr.bf16.gmra.mrb[0].mxu0 %v4934
      %v5001 = vpop.f32.mrb[0].mxu0
      %v5002 = vadd.f32 0.0, %v5001
      %v5003 = vpop.f32.mrb[0].mxu0
      %v5004 = vpop.f32.mrb[0].mxu0
      %v5005 = vadd.f32 0.0, %v5004
      %v5006 = vpop.f32.mrb[0].mxu0
      %5007 = vmatprep.mubr.bf16.mxu0 0
      %5008 = vmatmul.mubr.bf16.gmra.mrb[0].mxu0 %v4937
      %v5009 = vpop.f32.mrb[0].mxu0
      %v5010 = vadd.f32 0.0, %v5009
      %v5011 = vpop.f32.mrb[0].mxu0
      %v5012 = vpop.f32.mrb[0].mxu0
      %v5013 = vpop.f32.mrb[0].mxu0
      %5014 = vdwg.mxu0
      %v5015 = vmul.f32 %v4986, 0.25
      %v5016 = vmul.f32 %v4989, 0.25
      %v5017 = vmul.f32 %v4994, 0.25
      %v5018 = vmul.f32 %v4997, 0.25
      %v5019 = vmul.f32 %v5002, 0.25
      %v5020 = vmul.f32 %v5005, 0.25
      %v5021 = vmul.f32 %v5010, 0.25
      %v5022 = vsel %vm2563, %v5015, -inf
      %5023 = vmax.xlane.f32.xlu0 %v5022
      %v5024 = vpop.xlane.xlu0 %5023
      %v5025 = vsel %vm2563, %v5016, -inf
      %5026 = vmax.xlane.f32.xlu0 %v5025
      %v5027 = vpop.xlane.xlu0 %5026
      %v5028 = vsel %vm2563, %v5017, -inf
      %5029 = vmax.xlane.f32.xlu0 %v5028
      %v5030 = vpop.xlane.xlu0 %5029
      %v5031 = vsel %vm2563, %v5018, -inf
      %5032 = vmax.xlane.f32.xlu0 %v5031
      %v5033 = vpop.xlane.xlu0 %5032
      %v5034 = vsel %vm2563, %v5019, -inf
      %5035 = vmax.xlane.f32.xlu0 %v5034
      %v5036 = vpop.xlane.xlu0 %5035
      %v5037 = vsel %vm2563, %v5020, -inf
      %5038 = vmax.xlane.f32.xlu0 %v5037
      %v5039 = vpop.xlane.xlu0 %5038
      %v5040 = vsel %vm2582, %v5021, -inf
      %5041 = vmax.xlane.f32.xlu0 %v5040
      %v5042 = vpop.xlane.xlu0 %5041
      %v5043 = vsub.f32 %v5015, %v5024
      %v5044 = vsub.f32 %v5016, %v5027
      %v5045 = vsub.f32 %v5017, %v5030
      %v5046 = vsub.f32 %v5018, %v5033
      %v5047 = vsub.f32 %v5019, %v5036
      %v5048 = vsub.f32 %v5020, %v5039
      %v5049 = vsub.f32 %v5021, %v5042
      %v5050 = vmul.f32 %v5043, 1.442695
      %v5051 = vpow.pop %v5050
      %v5052 = vmul.f32 %v5044, 1.442695
      %v5053 = vpow.pop %v5052
      %v5054 = vmul.f32 %v5045, 1.442695
      %v5055 = vpow.pop %v5054
      %v5056 = vmul.f32 %v5046, 1.442695
      %v5057 = vpow.pop %v5056
      %v5058 = vmul.f32 %v5047, 1.442695
      %v5059 = vpow.pop %v5058
      %v5060 = vmul.f32 %v5048, 1.442695
      %v5061 = vpow.pop %v5060
      %v5062 = vmul.f32 %v5049, 1.442695
      %v5063 = vpow.pop %v5062
      %v5064 = vsel %vm2563, %v5051, 0.0
      %5065 = vadd.xlane.f32.xlu0 %v5064
      %v5066 = vpop.xlane.xlu0 %5065
      %v5067 = vsel %vm2563, %v5053, 0.0
      %5068 = vadd.xlane.f32.xlu0 %v5067
      %v5069 = vpop.xlane.xlu0 %5068
      %v5070 = vsel %vm2563, %v5055, 0.0
      %5071 = vadd.xlane.f32.xlu0 %v5070
      %v5072 = vpop.xlane.xlu0 %5071
      %v5073 = vsel %vm2563, %v5057, 0.0
      %5074 = vadd.xlane.f32.xlu0 %v5073
      %v5075 = vpop.xlane.xlu0 %5074
      %v5076 = vsel %vm2563, %v5059, 0.0
      %5077 = vadd.xlane.f32.xlu0 %v5076
      %v5078 = vpop.xlane.xlu0 %5077
      %v5079 = vsel %vm2563, %v5061, 0.0
      %5080 = vadd.xlane.f32.xlu0 %v5079
      %v5081 = vpop.xlane.xlu0 %5080
      %v5082 = vsel %vm2582, %v5063, 0.0
      %5083 = vadd.xlane.f32.xlu0 %v5082
      %v5084 = vpop.xlane.xlu0 %5083
      %v5085 = vrcp.pop %v5066
      %v5086 = vrcp.pop %v5069
      %v5087 = vrcp.pop %v5072
      %v5088 = vrcp.pop %v5075
      %v5089 = vrcp.pop %v5078
      %v5090 = vrcp.pop %v5081
      %v5091 = vrcp.pop %v5084
      %v5092 = vmul.f32 %v5051, %v5085
      %v5093 = vmul.f32 %v5053, %v5086
      %v5094 = vmul.f32 %v5055, %v5087
      %v5095 = vmul.f32 %v5057, %v5088
      %v5096 = vmul.f32 %v5059, %v5089
      %v5097 = vmul.f32 %v5061, %v5090
      %v5098 = vmul.f32 %v5063, %v5091
      %v5099 = vpack.c.bf16 %v5093, %v5092
      %v5100 = vpack.c.bf16 %v5095, %v5094
      %v5101 = vpack.c.bf16 %v5097, %v5096
      %v5102 = vpack.c.bf16 %v5098, %v5098
      %5107 = vrot.lane.b32.xlu0 %v4823, 112
      %v5108 = vpop.permute.xlu0 %5107
      %5109 = vrot.lane.b32.xlu0 %v4824, 112
      %v5110 = vpop.permute.xlu0 %5109
      %5111 = vrot.lane.b32.xlu0 %v4825, 112
      %v5112 = vpop.permute.xlu0 %5111
      %5113 = vrot.lane.b32.xlu0 %v4826, 112
      %v5114 = vpop.permute.xlu0 %5113
      %v5119 = vsel %vm2563, %v5099, 0
      %v5122 = vsel %vm2563, %v5100, 0
      %v5125 = vsel %vm2563, %v5101, 0
      %v5128 = vsel %vm2563, %v5102, 0
      %v5131 = vsel %vm2662, %v5114, 0
      %5133 = vmatprep.subr.bf16.mxu0 0
      %5134 = vmatpush1.bf16.msra.mxu0 %v5108
      %5135 = vmatprep.subr.bf16.mxu0 0
      %5136 = vmatpush1.bf16.msra.mxu0 %v5110
      %5137 = vmatprep.subr.bf16.mxu0 0
      %5138 = vmatpush1.bf16.msra.mxu0 %v5112
      %5139 = vmatprep.subr.bf16.mxu0 0
      %5140 = vmatpush1.bf16.msra.mxu0 %v5131
      %5141 = vmatprep.subr.bf16.mxu0 0
      %5142 = vmatpush1.bf16.msra.mxu0 0
      %5143 = vmatprep.subr.bf16.mxu0 0
      %5144 = vmatpush1.bf16.msra.mxu0 0
      %5145 = vmatprep.subr.bf16.mxu0 0
      %5146 = vmatpush1.bf16.msra.mxu0 0
      %5147 = vmatprep.subr.bf16.mxu0 0
      %5148 = vmatpush1.bf16.msra.mxu0 0
      %5149 = vmatprep.subr.bf16.mxu0 0
      %5150 = vmatpush1.bf16.msra.mxu0 0
      %5151 = vmatprep.subr.bf16.mxu0 0
      %5152 = vmatpush1.bf16.msra.mxu0 0
      %5153 = vmatprep.subr.bf16.mxu0 0
      %5154 = vmatpush1.bf16.msra.mxu0 0
      %5155 = vmatprep.subr.bf16.mxu0 0
      %5156 = vmatpush1.bf16.msra.mxu0 0
      %5157 = vmatprep.subr.bf16.mxu0 0
      %5158 = vmatpush1.bf16.msra.mxu0 0
      %5159 = vmatprep.subr.bf16.mxu0 0
      %5160 = vmatpush1.bf16.msra.mxu0 0
      %5161 = vmatprep.subr.bf16.mxu0 0
      %5162 = vmatpush1.bf16.msra.mxu0 0
      %5163 = vmatprep.subr.bf16.mxu0 0
      %5164 = vmatpush1.bf16.msra.mxu0 0
      %5165 = vmatprep.mubr.bf16.mxu0 0
      %5166 = vmatmul.mubr.bf16.gmra.mrb[0].mxu0 %v5119
      %v5167 = vpop.f32.mrb[0].mxu0
      %v5168 = vadd.f32 0.0, %v5167
      %v5169 = vpop.f32.mrb[0].mxu0
      %v5170 = vpop.f32.mrb[0].mxu0
      %v5171 = vadd.f32 0.0, %v5170
      %v5172 = vpop.f32.mrb[0].mxu0
      %5173 = vmatprep.mubr.bf16.mxu0 0
      %5174 = vmatmul.mubr.bf16.gmra.mrb[0].mxu0 %v5122
      %v5175 = vpop.f32.mrb[0].mxu0
      %v5176 = vadd.f32 0.0, %v5175
      %v5177 = vpop.f32.mrb[0].mxu0
      %v5178 = vpop.f32.mrb[0].mxu0
      %v5179 = vadd.f32 0.0, %v5178
      %v5180 = vpop.f32.mrb[0].mxu0
      %5181 = vmatprep.mubr.bf16.mxu0 0
      %5182 = vmatmul.mubr.bf16.gmra.mrb[0].mxu0 %v5125
      %v5183 = vpop.f32.mrb[0].mxu0
      %v5184 = vadd.f32 0.0, %v5183
      %v5185 = vpop.f32.mrb[0].mxu0
      %v5186 = vpop.f32.mrb[0].mxu0
      %v5187 = vadd.f32 0.0, %v5186
      %v5188 = vpop.f32.mrb[0].mxu0
      %5189 = vmatprep.mubr.bf16.mxu0 0
      %5190 = vmatmul.mubr.bf16.gmra.mrb[0].mxu0 %v5128
      %v5191 = vpop.f32.mrb[0].mxu0
      %v5192 = vadd.f32 0.0, %v5191
      %v5193 = vpop.f32.mrb[0].mxu0
      %v5194 = vpop.f32.mrb[0].mxu0
      %v5195 = vpop.f32.mrb[0].mxu0
      %5196 = vdwg.mxu0
      %v5197 = vpack.c.bf16 %v5171, %v5168
      %v5198 = vpack.c.bf16 %v5179, %v5176
      %v5199 = vpack.c.bf16 %v5187, %v5184
      %v5200 = vpack.c.bf16 %v5192, %v5192
      %v5201 = vpack.c.bf16 %v4626, %v4625
      %v5203 = vsel %vm2467, %v5197, 0
      %v5206 = vsel %vm2467, %v5198, 0
      %v5209 = vsel %vm2467, %v5199, 0
      %v5212 = vsel %vm2467, %v5200, 0
      %5214 = vmatprep.subr.bf16.mxu0 0
      %5215 = vmatpush1.bf16.msra.mxu0 %v5201
      %5216 = vmatprep.subr.bf16.mxu0 0
      %5217 = vmatpush1.bf16.msra.mxu0 0
      %5218 = vmatprep.subr.bf16.mxu0 0
      %5219 = vmatpush1.bf16.msra.mxu0 0
      %5220 = vmatprep.subr.bf16.mxu0 0
      %5221 = vmatpush1.bf16.msra.mxu0 0
      %5222 = vmatprep.subr.bf16.mxu0 0
      %5223 = vmatpush1.bf16.msra.mxu0 0
      %5224 = vmatprep.subr.bf16.mxu0 0
      %5225 = vmatpush1.bf16.msra.mxu0 0
      %5226 = vmatprep.subr.bf16.mxu0 0
      %5227 = vmatpush1.bf16.msra.mxu0 0
      %5228 = vmatprep.subr.bf16.mxu0 0
      %5229 = vmatpush1.bf16.msra.mxu0 0
      %5230 = vmatprep.subr.bf16.mxu0 0
      %5231 = vmatpush1.bf16.msra.mxu0 0
      %5232 = vmatprep.subr.bf16.mxu0 0
      %5233 = vmatpush1.bf16.msra.mxu0 0
      %5234 = vmatprep.subr.bf16.mxu0 0
      %5235 = vmatpush1.bf16.msra.mxu0 0
      %5236 = vmatprep.subr.bf16.mxu0 0
      %5237 = vmatpush1.bf16.msra.mxu0 0
      %5238 = vmatprep.subr.bf16.mxu0 0
      %5239 = vmatpush1.bf16.msra.mxu0 0
      %5240 = vmatprep.subr.bf16.mxu0 0
      %5241 = vmatpush1.bf16.msra.mxu0 0
      %5242 = vmatprep.subr.bf16.mxu0 0
      %5243 = vmatpush1.bf16.msra.mxu0 0
      %5244 = vmatprep.subr.bf16.mxu0 0
      %5245 = vmatpush1.bf16.msra.mxu0 0
      %5246 = vmatprep.mubr.bf16.mxu0 0
      %5247 = vmatmul.mubr.bf16.gmra.mrb[0].mxu0 %v5203
      %v5248 = vpop.f32.mrb[0].mxu0
      %v5249 = vadd.f32 0.0, %v5248
      %v5250 = vpop.f32.mrb[0].mxu0
      %v5251 = vpop.f32.mrb[0].mxu0
      %v5252 = vadd.f32 0.0, %v5251
      %v5253 = vpop.f32.mrb[0].mxu0
      %5254 = vmatprep.mubr.bf16.mxu0 0
      %5255 = vmatmul.mubr.bf16.gmra.mrb[0].mxu0 %v5206
      %v5256 = vpop.f32.mrb[0].mxu0
      %v5257 = vadd.f32 0.0, %v5256
      %v5258 = vpop.f32.mrb[0].mxu0
      %v5259 = vpop.f32.mrb[0].mxu0
      %v5260 = vadd.f32 0.0, %v5259
      %v5261 = vpop.f32.mrb[0].mxu0
      %5262 = vmatprep.mubr.bf16.mxu0 0
      %5263 = vmatmul.mubr.bf16.gmra.mrb[0].mxu0 %v5209
      %v5264 = vpop.f32.mrb[0].mxu0
      %v5265 = vadd.f32 0.0, %v5264
      %v5266 = vpop.f32.mrb[0].mxu0
      %v5267 = vpop.f32.mrb[0].mxu0
      %v5268 = vadd.f32 0.0, %v5267
      %v5269 = vpop.f32.mrb[0].mxu0
      %5270 = vmatprep.mubr.bf16.mxu0 0
      %5271 = vmatmul.mubr.bf16.gmra.mrb[0].mxu0 %v5212
      %v5272 = vpop.f32.mrb[0].mxu0
      %v5273 = vadd.f32 0.0, %v5272
      %v5274 = vpop.f32.mrb[0].mxu0
      %v5275 = vpop.f32.mrb[0].mxu0
      %v5276 = vpop.f32.mrb[0].mxu0
      %5277 = vdwg.mxu0
      %v5279 = vsel %vm2467, %v4906, 0
      %v5282 = vsel %vm2467, %v4907, 0
      %v5285 = vsel %vm2467, %v4908, 0
      %v5288 = vsel %vm2467, %v4909, 0
      %5290 = vmatprep.subr.bf16.mxu0 0
      %5291 = vmatpush1.bf16.msra.mxu0 %v4910
      %5292 = vmatprep.subr.bf16.mxu0 0
      %5293 = vmatpush1.bf16.msra.mxu0 0
      %5294 = vmatprep.subr.bf16.mxu0 0
      %5295 = vmatpush1.bf16.msra.mxu0 0
      %5296 = vmatprep.subr.bf16.mxu0 0
      %5297 = vmatpush1.bf16.msra.mxu0 0
      %5298 = vmatprep.subr.bf16.mxu0 0
      %5299 = vmatpush1.bf16.msra.mxu0 0
      %5300 = vmatprep.subr.bf16.mxu0 0
      %5301 = vmatpush1.bf16.msra.mxu0 0
      %5302 = vmatprep.subr.bf16.mxu0 0
      %5303 = vmatpush1.bf16.msra.mxu0 0
      %5304 = vmatprep.subr.bf16.mxu0 0
      %5305 = vmatpush1.bf16.msra.mxu0 0
      %5306 = vmatprep.subr.bf16.mxu0 0
      %5307 = vmatpush1.bf16.msra.mxu0 0
      %5308 = vmatprep.subr.bf16.mxu0 0
      %5309 = vmatpush1.bf16.msra.mxu0 0
      %5310 = vmatprep.subr.bf16.mxu0 0
      %5311 = vmatpush1.bf16.msra.mxu0 0
      %5312 = vmatprep.subr.bf16.mxu0 0
      %5313 = vmatpush1.bf16.msra.mxu0 0
      %5314 = vmatprep.subr.bf16.mxu0 0
      %5315 = vmatpush1.bf16.msra.mxu0 0
      %5316 = vmatprep.subr.bf16.mxu0 0
      %5317 = vmatpush1.bf16.msra.mxu0 0
      %5318 = vmatprep.subr.bf16.mxu0 0
      %5319 = vmatpush1.bf16.msra.mxu0 0
      %5320 = vmatprep.subr.bf16.mxu0 0
      %5321 = vmatpush1.bf16.msra.mxu0 0
      %5322 = vmatprep.mubr.bf16.mxu0 0
      %5323 = vmatmul.mubr.bf16.gmra.mrb[0].mxu0 %v5279
      %v5324 = vpop.f32.mrb[0].mxu0
      %v5325 = vadd.f32 %v5249, %v5324
      %v5326 = vpop.f32.mrb[0].mxu0
      %v5327 = vpop.f32.mrb[0].mxu0
      %v5328 = vadd.f32 %v5252, %v5327
      %v5329 = vpop.f32.mrb[0].mxu0
      %5330 = vmatprep.mubr.bf16.mxu0 0
      %5331 = vmatmul.mubr.bf16.gmra.mrb[0].mxu0 %v5282
      %v5332 = vpop.f32.mrb[0].mxu0
      %v5333 = vadd.f32 %v5257, %v5332
      %v5334 = vpop.f32.mrb[0].mxu0
      %v5335 = vpop.f32.mrb[0].mxu0
      %v5336 = vadd.f32 %v5260, %v5335
      %v5337 = vpop.f32.mrb[0].mxu0
      %5338 = vmatprep.mubr.bf16.mxu0 0
      %5339 = vmatmul.mubr.bf16.gmra.mrb[0].mxu0 %v5285
      %v5340 = vpop.f32.mrb[0].mxu0
      %v5341 = vadd.f32 %v5265, %v5340
      %v5342 = vpop.f32.mrb[0].mxu0
      %v5343 = vpop.f32.mrb[0].mxu0
      %v5344 = vadd.f32 %v5268, %v5343
      %v5345 = vpop.f32.mrb[0].mxu0
      %5346 = vmatprep.mubr.bf16.mxu0 0
      %5347 = vmatmul.mubr.bf16.gmra.mrb[0].mxu0 %v5288
      %v5348 = vpop.f32.mrb[0].mxu0
      %v5349 = vadd.f32 %v5273, %v5348
      %v5350 = vpop.f32.mrb[0].mxu0
      %v5351 = vpop.f32.mrb[0].mxu0
      %v5352 = vpop.f32.mrb[0].mxu0
      %5353 = vdwg.mxu0
      %5354 = vrot.lane.b32.xlu0 %v4631, 96
      %v5355 = vpop.permute.xlu0 %5354
      %5356 = vrot.lane.b32.xlu0 %v4632, 96
      %v5357 = vpop.permute.xlu0 %5356
      %5358 = vrot.lane.b32.xlu0 %v4633, 96
      %v5359 = vpop.permute.xlu0 %5358
      %5360 = vrot.lane.b32.xlu0 %v4634, 96
      %v5361 = vpop.permute.xlu0 %5360
      %5362 = vrot.lane.b32.xlu0 %v4631, 32
      %v5363 = vpop.permute.xlu0 %5362
      %5364 = vrot.lane.b32.xlu0 %v4632, 32
      %v5365 = vpop.permute.xlu0 %5364
      %5366 = vrot.lane.b32.xlu0 %v4633, 32
      %v5367 = vpop.permute.xlu0 %5366
      %5368 = vrot.lane.b32.xlu0 %v4634, 32
      %v5369 = vpop.permute.xlu0 %5368
      %v5371 = vsel %vm2467, %v5355, 0
      %v5374 = vsel %vm2467, %v5357, 0
      %v5377 = vsel %vm2467, %v5359, 0
      %v5380 = vsel %vm2467, %v5361, 0
      %v5383 = vsel %vm2467, %v5363, 0
      %v5386 = vsel %vm2467, %v5365, 0
      %v5389 = vsel %vm2467, %v5367, 0
      %v5392 = vsel %vm2467, %v5369, 0
      %5394 = vmatprep.subr.bf16.mxu0 0
      %5395 = vmatpush1.bf16.xpose.msra.mxu0 %v5383
      %5396 = vmatprep.subr.bf16.mxu0 0
      %5397 = vmatpush1.bf16.xpose.msra.mxu0 %v5386
      %5398 = vmatprep.subr.bf16.mxu0 0
      %5399 = vmatpush1.bf16.xpose.msra.mxu0 %v5389
      %5400 = vmatprep.subr.bf16.mxu0 0
      %5401 = vmatpush1.bf16.xpose.msra.mxu0 %v5392
      %5402 = vmatprep.subr.bf16.mxu0 0
      %5403 = vmatpush1.bf16.xpose.msra.mxu0 0
      %5404 = vmatprep.subr.bf16.mxu0 0
      %5405 = vmatpush1.bf16.xpose.msra.mxu0 0
      %5406 = vmatprep.subr.bf16.mxu0 0
      %5407 = vmatpush1.bf16.xpose.msra.mxu0 0
      %5408 = vmatprep.subr.bf16.mxu0 0
      %5409 = vmatpush1.bf16.xpose.msra.mxu0 0
      %5410 = vmatprep.subr.bf16.mxu0 0
      %5411 = vmatpush1.bf16.xpose.msra.mxu0 0
      %5412 = vmatprep.subr.bf16.mxu0 0
      %5413 = vmatpush1.bf16.xpose.msra.mxu0 0
      %5414 = vmatprep.subr.bf16.mxu0 0
      %5415 = vmatpush1.bf16.xpose.msra.mxu0 0
      %5416 = vmatprep.subr.bf16.mxu0 0
      %5417 = vmatpush1.bf16.xpose.msra.mxu0 0
      %5418 = vmatprep.subr.bf16.mxu0 0
      %5419 = vmatpush1.bf16.xpose.msra.mxu0 0
      %5420 = vmatprep.subr.bf16.mxu0 0
      %5421 = vmatpush1.bf16.xpose.msra.mxu0 0
      %5422 = vmatprep.subr.bf16.mxu0 0
      %5423 = vmatpush1.bf16.xpose.msra.mxu0 0
      %5424 = vmatprep.subr.bf16.mxu0 0
      %5425 = vmatpush1.bf16.xpose.msra.mxu0 0
      %5426 = vmatprep.mubr.bf16.mxu0 0
      %5427 = vmatmul.mubr.bf16.gmra.mrb[0].mxu0 %v5371
      %v5428 = vpop.f32.mrb[0].mxu0
      %v5429 = vadd.f32 0.0, %v5428
      %v5430 = vpop.f32.mrb[0].mxu0
      %v5431 = vpop.f32.mrb[0].mxu0
      %v5432 = vadd.f32 0.0, %v5431
      %v5433 = vpop.f32.mrb[0].mxu0
      %5434 = vmatprep.mubr.bf16.mxu0 0
      %5435 = vmatmul.mubr.bf16.gmra.mrb[0].mxu0 %v5374
      %v5436 = vpop.f32.mrb[0].mxu0
      %v5437 = vadd.f32 0.0, %v5436
      %v5438 = vpop.f32.mrb[0].mxu0
      %v5439 = vpop.f32.mrb[0].mxu0
      %v5440 = vadd.f32 0.0, %v5439
      %v5441 = vpop.f32.mrb[0].mxu0
      %5442 = vmatprep.mubr.bf16.mxu0 0
      %5443 = vmatmul.mubr.bf16.gmra.mrb[0].mxu0 %v5377
      %v5444 = vpop.f32.mrb[0].mxu0
      %v5445 = vadd.f32 0.0, %v5444
      %v5446 = vpop.f32.mrb[0].mxu0
      %v5447 = vpop.f32.mrb[0].mxu0
      %v5448 = vadd.f32 0.0, %v5447
      %v5449 = vpop.f32.mrb[0].mxu0
      %5450 = vmatprep.mubr.bf16.mxu0 0
      %5451 = vmatmul.mubr.bf16.gmra.mrb[0].mxu0 %v5380
      %v5452 = vpop.f32.mrb[0].mxu0
      %v5453 = vadd.f32 0.0, %v5452
      %v5454 = vpop.f32.mrb[0].mxu0
      %v5455 = vpop.f32.mrb[0].mxu0
      %v5456 = vpop.f32.mrb[0].mxu0
      %5457 = vdwg.mxu0
      %v5458 = vmul.f32 %v5429, 0.25
      %v5459 = vmul.f32 %v5432, 0.25
      %v5460 = vmul.f32 %v5437, 0.25
      %v5461 = vmul.f32 %v5440, 0.25
      %v5462 = vmul.f32 %v5445, 0.25
      %v5463 = vmul.f32 %v5448, 0.25
      %v5464 = vmul.f32 %v5453, 0.25
      %v5465 = vsel %vm2563, %v5458, -inf
      %5466 = vmax.xlane.f32.xlu0 %v5465
      %v5467 = vpop.xlane.xlu0 %5466
      %v5468 = vsel %vm2563, %v5459, -inf
      %5469 = vmax.xlane.f32.xlu0 %v5468
      %v5470 = vpop.xlane.xlu0 %5469
      %v5471 = vsel %vm2563, %v5460, -inf
      %5472 = vmax.xlane.f32.xlu0 %v5471
      %v5473 = vpop.xlane.xlu0 %5472
      %v5474 = vsel %vm2563, %v5461, -inf
      %5475 = vmax.xlane.f32.xlu0 %v5474
      %v5476 = vpop.xlane.xlu0 %5475
      %v5477 = vsel %vm2563, %v5462, -inf
      %5478 = vmax.xlane.f32.xlu0 %v5477
      %v5479 = vpop.xlane.xlu0 %5478
      %v5480 = vsel %vm2563, %v5463, -inf
      %5481 = vmax.xlane.f32.xlu0 %v5480
      %v5482 = vpop.xlane.xlu0 %5481
      %v5483 = vsel %vm2582, %v5464, -inf
      %5484 = vmax.xlane.f32.xlu0 %v5483
      %v5485 = vpop.xlane.xlu0 %5484
      %v5486 = vsub.f32 %v5458, %v5467
      %v5487 = vsub.f32 %v5459, %v5470
      %v5488 = vsub.f32 %v5460, %v5473
      %v5489 = vsub.f32 %v5461, %v5476
      %v5490 = vsub.f32 %v5462, %v5479
      %v5491 = vsub.f32 %v5463, %v5482
      %v5492 = vsub.f32 %v5464, %v5485
      %v5493 = vmul.f32 %v5486, 1.442695
      %v5494 = vpow.pop %v5493
      %v5495 = vmul.f32 %v5487, 1.442695
      %v5496 = vpow.pop %v5495
      %v5497 = vmul.f32 %v5488, 1.442695
      %v5498 = vpow.pop %v5497
      %v5499 = vmul.f32 %v5489, 1.442695
      %v5500 = vpow.pop %v5499
      %v5501 = vmul.f32 %v5490, 1.442695
      %v5502 = vpow.pop %v5501
      %v5503 = vmul.f32 %v5491, 1.442695
      %v5504 = vpow.pop %v5503
      %v5505 = vmul.f32 %v5492, 1.442695
      %v5506 = vpow.pop %v5505
      %v5507 = vsel %vm2563, %v5494, 0.0
      %5508 = vadd.xlane.f32.xlu0 %v5507
      %v5509 = vpop.xlane.xlu0 %5508
      %v5510 = vsel %vm2563, %v5496, 0.0
      %5511 = vadd.xlane.f32.xlu0 %v5510
      %v5512 = vpop.xlane.xlu0 %5511
      %v5513 = vsel %vm2563, %v5498, 0.0
      %5514 = vadd.xlane.f32.xlu0 %v5513
      %v5515 = vpop.xlane.xlu0 %5514
      %v5516 = vsel %vm2563, %v5500, 0.0
      %5517 = vadd.xlane.f32.xlu0 %v5516
      %v5518 = vpop.xlane.xlu0 %5517
      %v5519 = vsel %vm2563, %v5502, 0.0
      %5520 = vadd.xlane.f32.xlu0 %v5519
      %v5521 = vpop.xlane.xlu0 %5520
      %v5522 = vsel %vm2563, %v5504, 0.0
      %5523 = vadd.xlane.f32.xlu0 %v5522
      %v5524 = vpop.xlane.xlu0 %5523
      %v5525 = vsel %vm2582, %v5506, 0.0
      %5526 = vadd.xlane.f32.xlu0 %v5525
      %v5527 = vpop.xlane.xlu0 %5526
      %v5528 = vrcp.pop %v5509
      %v5529 = vrcp.pop %v5512
      %v5530 = vrcp.pop %v5515
      %v5531 = vrcp.pop %v5518
      %v5532 = vrcp.pop %v5521
      %v5533 = vrcp.pop %v5524
      %v5534 = vrcp.pop %v5527
      %v5535 = vmul.f32 %v5494, %v5528
      %v5536 = vmul.f32 %v5496, %v5529
      %v5537 = vmul.f32 %v5498, %v5530
      %v5538 = vmul.f32 %v5500, %v5531
      %v5539 = vmul.f32 %v5502, %v5532
      %v5540 = vmul.f32 %v5504, %v5533
      %v5541 = vmul.f32 %v5506, %v5534
      %v5542 = vpack.c.bf16 %v5536, %v5535
      %v5543 = vpack.c.bf16 %v5538, %v5537
      %v5544 = vpack.c.bf16 %v5540, %v5539
      %v5545 = vpack.c.bf16 %v5541, %v5541
      %5546 = vrot.lane.b32.xlu0 %v4823, 96
      %v5547 = vpop.permute.xlu0 %5546
      %5548 = vrot.lane.b32.xlu0 %v4824, 96
      %v5549 = vpop.permute.xlu0 %5548
      %5550 = vrot.lane.b32.xlu0 %v4825, 96
      %v5551 = vpop.permute.xlu0 %5550
      %5552 = vrot.lane.b32.xlu0 %v4826, 96
      %v5553 = vpop.permute.xlu0 %5552
      %v5558 = vsel %vm2563, %v5542, 0
      %v5561 = vsel %vm2563, %v5543, 0
      %v5564 = vsel %vm2563, %v5544, 0
      %v5567 = vsel %vm2563, %v5545, 0
      %v5570 = vsel %vm2662, %v5553, 0
      %5572 = vmatprep.subr.bf16.mxu0 0
      %5573 = vmatpush1.bf16.msra.mxu0 %v5547
      %5574 = vmatprep.subr.bf16.mxu0 0
      %5575 = vmatpush1.bf16.msra.mxu0 %v5549
      %5576 = vmatprep.subr.bf16.mxu0 0
      %5577 = vmatpush1.bf16.msra.mxu0 %v5551
      %5578 = vmatprep.subr.bf16.mxu0 0
      %5579 = vmatpush1.bf16.msra.mxu0 %v5570
      %5580 = vmatprep.subr.bf16.mxu0 0
      %5581 = vmatpush1.bf16.msra.mxu0 0
      %5582 = vmatprep.subr.bf16.mxu0 0
      %5583 = vmatpush1.bf16.msra.mxu0 0
      %5584 = vmatprep.subr.bf16.mxu0 0
      %5585 = vmatpush1.bf16.msra.mxu0 0
      %5586 = vmatprep.subr.bf16.mxu0 0
      %5587 = vmatpush1.bf16.msra.mxu0 0
      %5588 = vmatprep.subr.bf16.mxu0 0
      %5589 = vmatpush1.bf16.msra.mxu0 0
      %5590 = vmatprep.subr.bf16.mxu0 0
      %5591 = vmatpush1.bf16.msra.mxu0 0
      %5592 = vmatprep.subr.bf16.mxu0 0
      %5593 = vmatpush1.bf16.msra.mxu0 0
      %5594 = vmatprep.subr.bf16.mxu0 0
      %5595 = vmatpush1.bf16.msra.mxu0 0
      %5596 = vmatprep.subr.bf16.mxu0 0
      %5597 = vmatpush1.bf16.msra.mxu0 0
      %5598 = vmatprep.subr.bf16.mxu0 0
      %5599 = vmatpush1.bf16.msra.mxu0 0
      %5600 = vmatprep.subr.bf16.mxu0 0
      %5601 = vmatpush1.bf16.msra.mxu0 0
      %5602 = vmatprep.subr.bf16.mxu0 0
      %5603 = vmatpush1.bf16.msra.mxu0 0
      %5604 = vmatprep.mubr.bf16.mxu0 0
      %5605 = vmatmul.mubr.bf16.gmra.mrb[0].mxu0 %v5558
      %v5606 = vpop.f32.mrb[0].mxu0
      %v5607 = vadd.f32 0.0, %v5606
      %v5608 = vpop.f32.mrb[0].mxu0
      %v5609 = vpop.f32.mrb[0].mxu0
      %v5610 = vadd.f32 0.0, %v5609
      %v5611 = vpop.f32.mrb[0].mxu0
      %5612 = vmatprep.mubr.bf16.mxu0 0
      %5613 = vmatmul.mubr.bf16.gmra.mrb[0].mxu0 %v5561
      %v5614 = vpop.f32.mrb[0].mxu0
      %v5615 = vadd.f32 0.0, %v5614
      %v5616 = vpop.f32.mrb[0].mxu0
      %v5617 = vpop.f32.mrb[0].mxu0
      %v5618 = vadd.f32 0.0, %v5617
      %v5619 = vpop.f32.mrb[0].mxu0
      %5620 = vmatprep.mubr.bf16.mxu0 0
      %5621 = vmatmul.mubr.bf16.gmra.mrb[0].mxu0 %v5564
      %v5622 = vpop.f32.mrb[0].mxu0
      %v5623 = vadd.f32 0.0, %v5622
      %v5624 = vpop.f32.mrb[0].mxu0
      %v5625 = vpop.f32.mrb[0].mxu0
      %v5626 = vadd.f32 0.0, %v5625
      %v5627 = vpop.f32.mrb[0].mxu0
      %5628 = vmatprep.mubr.bf16.mxu0 0
      %5629 = vmatmul.mubr.bf16.gmra.mrb[0].mxu0 %v5567
      %v5630 = vpop.f32.mrb[0].mxu0
      %v5631 = vadd.f32 0.0, %v5630
      %v5632 = vpop.f32.mrb[0].mxu0
      %v5633 = vpop.f32.mrb[0].mxu0
      %v5634 = vpop.f32.mrb[0].mxu0
      %5635 = vdwg.mxu0
      %v5636 = vpack.c.bf16 %v5610, %v5607
      %v5637 = vpack.c.bf16 %v5618, %v5615
      %v5638 = vpack.c.bf16 %v5626, %v5623
      %v5639 = vpack.c.bf16 %v5631, %v5631
      %v5640 = vpack.c.bf16 %v4628, %v4627
      %v5642 = vsel %vm2467, %v5636, 0
      %v5645 = vsel %vm2467, %v5637, 0
      %v5648 = vsel %vm2467, %v5638, 0
      %v5651 = vsel %vm2467, %v5639, 0
      %5653 = vmatprep.subr.bf16.mxu0 0
      %5654 = vmatpush1.bf16.msra.mxu0 %v5640
      %5655 = vmatprep.subr.bf16.mxu0 0
      %5656 = vmatpush1.bf16.msra.mxu0 0
      %5657 = vmatprep.subr.bf16.mxu0 0
      %5658 = vmatpush1.bf16.msra.mxu0 0
      %5659 = vmatprep.subr.bf16.mxu0 0
      %5660 = vmatpush1.bf16.msra.mxu0 0
      %5661 = vmatprep.subr.bf16.mxu0 0
      %5662 = vmatpush1.bf16.msra.mxu0 0
      %5663 = vmatprep.subr.bf16.mxu0 0
      %5664 = vmatpush1.bf16.msra.mxu0 0
      %5665 = vmatprep.subr.bf16.mxu0 0
      %5666 = vmatpush1.bf16.msra.mxu0 0
      %5667 = vmatprep.subr.bf16.mxu0 0
      %5668 = vmatpush1.bf16.msra.mxu0 0
      %5669 = vmatprep.subr.bf16.mxu0 0
      %5670 = vmatpush1.bf16.msra.mxu0 0
      %5671 = vmatprep.subr.bf16.mxu0 0
      %5672 = vmatpush1.bf16.msra.mxu0 0
      %5673 = vmatprep.subr.bf16.mxu0 0
      %5674 = vmatpush1.bf16.msra.mxu0 0
      %5675 = vmatprep.subr.bf16.mxu0 0
      %5676 = vmatpush1.bf16.msra.mxu0 0
      %5677 = vmatprep.subr.bf16.mxu0 0
      %5678 = vmatpush1.bf16.msra.mxu0 0
      %5679 = vmatprep.subr.bf16.mxu0 0
      %5680 = vmatpush1.bf16.msra.mxu0 0
      %5681 = vmatprep.subr.bf16.mxu0 0
      %5682 = vmatpush1.bf16.msra.mxu0 0
      %5683 = vmatprep.subr.bf16.mxu0 0
      %5684 = vmatpush1.bf16.msra.mxu0 0
      %5685 = vmatprep.mubr.bf16.mxu0 0
      %5686 = vmatmul.mubr.bf16.gmra.mrb[0].mxu0 %v5642
      %v5687 = vpop.f32.mrb[0].mxu0
      %v5688 = vadd.f32 0.0, %v5687
      %v5689 = vpop.f32.mrb[0].mxu0
      %v5690 = vpop.f32.mrb[0].mxu0
      %v5691 = vadd.f32 0.0, %v5690
      %v5692 = vpop.f32.mrb[0].mxu0
      %5693 = vmatprep.mubr.bf16.mxu0 0
      %5694 = vmatmul.mubr.bf16.gmra.mrb[0].mxu0 %v5645
      %v5695 = vpop.f32.mrb[0].mxu0
      %v5696 = vadd.f32 0.0, %v5695
      %v5697 = vpop.f32.mrb[0].mxu0
      %v5698 = vpop.f32.mrb[0].mxu0
      %v5699 = vadd.f32 0.0, %v5698
      %v5700 = vpop.f32.mrb[0].mxu0
      %5701 = vmatprep.mubr.bf16.mxu0 0
      %5702 = vmatmul.mubr.bf16.gmra.mrb[0].mxu0 %v5648
      %v5703 = vpop.f32.mrb[0].mxu0
      %v5704 = vadd.f32 0.0, %v5703
      %v5705 = vpop.f32.mrb[0].mxu0
      %v5706 = vpop.f32.mrb[0].mxu0
      %v5707 = vadd.f32 0.0, %v5706
      %v5708 = vpop.f32.mrb[0].mxu0
      %5709 = vmatprep.mubr.bf16.mxu0 0
      %5710 = vmatmul.mubr.bf16.gmra.mrb[0].mxu0 %v5651
      %v5711 = vpop.f32.mrb[0].mxu0
      %v5712 = vadd.f32 0.0, %v5711
      %v5713 = vpop.f32.mrb[0].mxu0
      %v5714 = vpop.f32.mrb[0].mxu0
      %v5715 = vpop.f32.mrb[0].mxu0
      %5716 = vdwg.mxu0
      %v5717 = vadd.f32 %v5325, %v5688
      %v5718 = vadd.f32 %v5328, %v5691
      %v5719 = vadd.f32 %v5333, %v5696
      %v5720 = vadd.f32 %v5336, %v5699
      %v5721 = vadd.f32 %v5341, %v5704
      %v5722 = vadd.f32 %v5344, %v5707
      %v5723 = vadd.f32 %v5349, %v5712
      %5724 = vrot.lane.b32.xlu0 %v4631, 80
      %v5725 = vpop.permute.xlu0 %5724
      %5726 = vrot.lane.b32.xlu0 %v4632, 80
      %v5727 = vpop.permute.xlu0 %5726
      %5728 = vrot.lane.b32.xlu0 %v4633, 80
      %v5729 = vpop.permute.xlu0 %5728
      %5730 = vrot.lane.b32.xlu0 %v4634, 80
      %v5731 = vpop.permute.xlu0 %5730
      %5732 = vrot.lane.b32.xlu0 %v4631, 16
      %v5733 = vpop.permute.xlu0 %5732
      %5734 = vrot.lane.b32.xlu0 %v4632, 16
      %v5735 = vpop.permute.xlu0 %5734
      %5736 = vrot.lane.b32.xlu0 %v4633, 16
      %v5737 = vpop.permute.xlu0 %5736
      %5738 = vrot.lane.b32.xlu0 %v4634, 16
      %v5739 = vpop.permute.xlu0 %5738
      %v5741 = vsel %vm2467, %v5725, 0
      %v5744 = vsel %vm2467, %v5727, 0
      %v5747 = vsel %vm2467, %v5729, 0
      %v5750 = vsel %vm2467, %v5731, 0
      %v5753 = vsel %vm2467, %v5733, 0
      %v5756 = vsel %vm2467, %v5735, 0
      %v5759 = vsel %vm2467, %v5737, 0
      %v5762 = vsel %vm2467, %v5739, 0
      %5764 = vmatprep.subr.bf16.mxu0 0
      %5765 = vmatpush1.bf16.xpose.msra.mxu0 %v5753
      %5766 = vmatprep.subr.bf16.mxu0 0
      %5767 = vmatpush1.bf16.xpose.msra.mxu0 %v5756
      %5768 = vmatprep.subr.bf16.mxu0 0
      %5769 = vmatpush1.bf16.xpose.msra.mxu0 %v5759
      %5770 = vmatprep.subr.bf16.mxu0 0
      %5771 = vmatpush1.bf16.xpose.msra.mxu0 %v5762
      %5772 = vmatprep.subr.bf16.mxu0 0
      %5773 = vmatpush1.bf16.xpose.msra.mxu0 0
      %5774 = vmatprep.subr.bf16.mxu0 0
      %5775 = vmatpush1.bf16.xpose.msra.mxu0 0
      %5776 = vmatprep.subr.bf16.mxu0 0
      %5777 = vmatpush1.bf16.xpose.msra.mxu0 0
      %5778 = vmatprep.subr.bf16.mxu0 0
      %5779 = vmatpush1.bf16.xpose.msra.mxu0 0
      %5780 = vmatprep.subr.bf16.mxu0 0
      %5781 = vmatpush1.bf16.xpose.msra.mxu0 0
      %5782 = vmatprep.subr.bf16.mxu0 0
      %5783 = vmatpush1.bf16.xpose.msra.mxu0 0
      %5784 = vmatprep.subr.bf16.mxu0 0
      %5785 = vmatpush1.bf16.xpose.msra.mxu0 0
      %5786 = vmatprep.subr.bf16.mxu0 0
      %5787 = vmatpush1.bf16.xpose.msra.mxu0 0
      %5788 = vmatprep.subr.bf16.mxu0 0
      %5789 = vmatpush1.bf16.xpose.msra.mxu0 0
      %5790 = vmatprep.subr.bf16.mxu0 0
      %5791 = vmatpush1.bf16.xpose.msra.mxu0 0
      %5792 = vmatprep.subr.bf16.mxu0 0
      %5793 = vmatpush1.bf16.xpose.msra.mxu0 0
      %5794 = vmatprep.subr.bf16.mxu0 0
      %5795 = vmatpush1.bf16.xpose.msra.mxu0 0
      %5796 = vmatprep.mubr.bf16.mxu0 0
      %5797 = vmatmul.mubr.bf16.gmra.mrb[0].mxu0 %v5741
      %v5798 = vpop.f32.mrb[0].mxu0
      %v5799 = vadd.f32 0.0, %v5798
      %v5800 = vpop.f32.mrb[0].mxu0
      %v5801 = vpop.f32.mrb[0].mxu0
      %v5802 = vadd.f32 0.0, %v5801
      %v5803 = vpop.f32.mrb[0].mxu0
      %5804 = vmatprep.mubr.bf16.mxu0 0
      %5805 = vmatmul.mubr.bf16.gmra.mrb[0].mxu0 %v5744
      %v5806 = vpop.f32.mrb[0].mxu0
      %v5807 = vadd.f32 0.0, %v5806
      %v5808 = vpop.f32.mrb[0].mxu0
      %v5809 = vpop.f32.mrb[0].mxu0
      %v5810 = vadd.f32 0.0, %v5809
      %v5811 = vpop.f32.mrb[0].mxu0
      %5812 = vmatprep.mubr.bf16.mxu0 0
      %5813 = vmatmul.mubr.bf16.gmra.mrb[0].mxu0 %v5747
      %v5814 = vpop.f32.mrb[0].mxu0
      %v5815 = vadd.f32 0.0, %v5814
      %v5816 = vpop.f32.mrb[0].mxu0
      %v5817 = vpop.f32.mrb[0].mxu0
      %v5818 = vadd.f32 0.0, %v5817
      %v5819 = vpop.f32.mrb[0].mxu0
      %5820 = vmatprep.mubr.bf16.mxu0 0
      %5821 = vmatmul.mubr.bf16.gmra.mrb[0].mxu0 %v5750
      %v5822 = vpop.f32.mrb[0].mxu0
      %v5823 = vadd.f32 0.0, %v5822
      %v5824 = vpop.f32.mrb[0].mxu0
      %v5825 = vpop.f32.mrb[0].mxu0
      %v5826 = vpop.f32.mrb[0].mxu0
      %5827 = vdwg.mxu0
      %v5828 = vmul.f32 %v5799, 0.25
      %v5829 = vmul.f32 %v5802, 0.25
      %v5830 = vmul.f32 %v5807, 0.25
      %v5831 = vmul.f32 %v5810, 0.25
      %v5832 = vmul.f32 %v5815, 0.25
      %v5833 = vmul.f32 %v5818, 0.25
      %v5834 = vmul.f32 %v5823, 0.25
      %v5835 = vsel %vm2563, %v5828, -inf
      %5836 = vmax.xlane.f32.xlu0 %v5835
      %v5837 = vpop.xlane.xlu0 %5836
      %v5838 = vsel %vm2563, %v5829, -inf
      %5839 = vmax.xlane.f32.xlu0 %v5838
      %v5840 = vpop.xlane.xlu0 %5839
      %v5841 = vsel %vm2563, %v5830, -inf
      %5842 = vmax.xlane.f32.xlu0 %v5841
      %v5843 = vpop.xlane.xlu0 %5842
      %v5844 = vsel %vm2563, %v5831, -inf
      %5845 = vmax.xlane.f32.xlu0 %v5844
      %v5846 = vpop.xlane.xlu0 %5845
      %v5847 = vsel %vm2563, %v5832, -inf
      %5848 = vmax.xlane.f32.xlu0 %v5847
      %v5849 = vpop.xlane.xlu0 %5848
      %v5850 = vsel %vm2563, %v5833, -inf
      %5851 = vmax.xlane.f32.xlu0 %v5850
      %v5852 = vpop.xlane.xlu0 %5851
      %v5853 = vsel %vm2582, %v5834, -inf
      %5854 = vmax.xlane.f32.xlu0 %v5853
      %v5855 = vpop.xlane.xlu0 %5854
      %v5856 = vsub.f32 %v5828, %v5837
      %v5857 = vsub.f32 %v5829, %v5840
      %v5858 = vsub.f32 %v5830, %v5843
      %v5859 = vsub.f32 %v5831, %v5846
      %v5860 = vsub.f32 %v5832, %v5849
      %v5861 = vsub.f32 %v5833, %v5852
      %v5862 = vsub.f32 %v5834, %v5855
      %v5863 = vmul.f32 %v5856, 1.442695
      %v5864 = vpow.pop %v5863
      %v5865 = vmul.f32 %v5857, 1.442695
      %v5866 = vpow.pop %v5865
      %v5867 = vmul.f32 %v5858, 1.442695
      %v5868 = vpow.pop %v5867
      %v5869 = vmul.f32 %v5859, 1.442695
      %v5870 = vpow.pop %v5869
      %v5871 = vmul.f32 %v5860, 1.442695
      %v5872 = vpow.pop %v5871
      %v5873 = vmul.f32 %v5861, 1.442695
      %v5874 = vpow.pop %v5873
      %v5875 = vmul.f32 %v5862, 1.442695
      %v5876 = vpow.pop %v5875
      %v5877 = vsel %vm2563, %v5864, 0.0
      %5878 = vadd.xlane.f32.xlu0 %v5877
      %v5879 = vpop.xlane.xlu0 %5878
      %v5880 = vsel %vm2563, %v5866, 0.0
      %5881 = vadd.xlane.f32.xlu0 %v5880
      %v5882 = vpop.xlane.xlu0 %5881
      %v5883 = vsel %vm2563, %v5868, 0.0
      %5884 = vadd.xlane.f32.xlu0 %v5883
      %v5885 = vpop.xlane.xlu0 %5884
      %v5886 = vsel %vm2563, %v5870, 0.0
      %5887 = vadd.xlane.f32.xlu0 %v5886
      %v5888 = vpop.xlane.xlu0 %5887
      %v5889 = vsel %vm2563, %v5872, 0.0
      %5890 = vadd.xlane.f32.xlu0 %v5889
      %v5891 = vpop.xlane.xlu0 %5890
      %v5892 = vsel %vm2563, %v5874, 0.0
      %5893 = vadd.xlane.f32.xlu0 %v5892
      %v5894 = vpop.xlane.xlu0 %5893
      %v5895 = vsel %vm2582, %v5876, 0.0
      %5896 = vadd.xlane.f32.xlu0 %v5895
      %v5897 = vpop.xlane.xlu0 %5896
      %v5898 = vrcp.pop %v5879
      %v5899 = vrcp.pop %v5882
      %v5900 = vrcp.pop %v5885
      %v5901 = vrcp.pop %v5888
      %v5902 = vrcp.pop %v5891
      %v5903 = vrcp.pop %v5894
      %v5904 = vrcp.pop %v5897
      %v5905 = vmul.f32 %v5864, %v5898
      %v5906 = vmul.f32 %v5866, %v5899
      %v5907 = vmul.f32 %v5868, %v5900
      %v5908 = vmul.f32 %v5870, %v5901
      %v5909 = vmul.f32 %v5872, %v5902
      %v5910 = vmul.f32 %v5874, %v5903
      %v5911 = vmul.f32 %v5876, %v5904
      %v5912 = vpack.c.bf16 %v5906, %v5905
      %v5913 = vpack.c.bf16 %v5908, %v5907
      %v5914 = vpack.c.bf16 %v5910, %v5909
      %v5915 = vpack.c.bf16 %v5911, %v5911
      %5916 = vrot.lane.b32.xlu0 %v4823, 80
      %v5917 = vpop.permute.xlu0 %5916
      %5918 = vrot.lane.b32.xlu0 %v4824, 80
      %v5919 = vpop.permute.xlu0 %5918
      %5920 = vrot.lane.b32.xlu0 %v4825, 80
      %v5921 = vpop.permute.xlu0 %5920
      %5922 = vrot.lane.b32.xlu0 %v4826, 80
      %v5923 = vpop.permute.xlu0 %5922
      %v5928 = vsel %vm2563, %v5912, 0
      %v5931 = vsel %vm2563, %v5913, 0
      %v5934 = vsel %vm2563, %v5914, 0
      %v5937 = vsel %vm2563, %v5915, 0
      %v5940 = vsel %vm2662, %v5923, 0
      %5942 = vmatprep.subr.bf16.mxu0 0
      %5943 = vmatpush1.bf16.msra.mxu0 %v5917
      %5944 = vmatprep.subr.bf16.mxu0 0
      %5945 = vmatpush1.bf16.msra.mxu0 %v5919
      %5946 = vmatprep.subr.bf16.mxu0 0
      %5947 = vmatpush1.bf16.msra.mxu0 %v5921
      %5948 = vmatprep.subr.bf16.mxu0 0
      %5949 = vmatpush1.bf16.msra.mxu0 %v5940
      %5950 = vmatprep.subr.bf16.mxu0 0
      %5951 = vmatpush1.bf16.msra.mxu0 0
      %5952 = vmatprep.subr.bf16.mxu0 0
      %5953 = vmatpush1.bf16.msra.mxu0 0
      %5954 = vmatprep.subr.bf16.mxu0 0
      %5955 = vmatpush1.bf16.msra.mxu0 0
      %5956 = vmatprep.subr.bf16.mxu0 0
      %5957 = vmatpush1.bf16.msra.mxu0 0
      %5958 = vmatprep.subr.bf16.mxu0 0
      %5959 = vmatpush1.bf16.msra.mxu0 0
      %5960 = vmatprep.subr.bf16.mxu0 0
      %5961 = vmatpush1.bf16.msra.mxu0 0
      %5962 = vmatprep.subr.bf16.mxu0 0
      %5963 = vmatpush1.bf16.msra.mxu0 0
      %5964 = vmatprep.subr.bf16.mxu0 0
      %5965 = vmatpush1.bf16.msra.mxu0 0
      %5966 = vmatprep.subr.bf16.mxu0 0
      %5967 = vmatpush1.bf16.msra.mxu0 0
      %5968 = vmatprep.subr.bf16.mxu0 0
      %5969 = vmatpush1.bf16.msra.mxu0 0
      %5970 = vmatprep.subr.bf16.mxu0 0
      %5971 = vmatpush1.bf16.msra.mxu0 0
      %5972 = vmatprep.subr.bf16.mxu0 0
      %5973 = vmatpush1.bf16.msra.mxu0 0
      %5974 = vmatprep.mubr.bf16.mxu0 0
      %5975 = vmatmul.mubr.bf16.gmra.mrb[0].mxu0 %v5928
      %v5976 = vpop.f32.mrb[0].mxu0
      %v5977 = vadd.f32 0.0, %v5976
      %v5978 = vpop.f32.mrb[0].mxu0
      %v5979 = vpop.f32.mrb[0].mxu0
      %v5980 = vadd.f32 0.0, %v5979
      %v5981 = vpop.f32.mrb[0].mxu0
      %5982 = vmatprep.mubr.bf16.mxu0 0
      %5983 = vmatmul.mubr.bf16.gmra.mrb[0].mxu0 %v5931
      %v5984 = vpop.f32.mrb[0].mxu0
      %v5985 = vadd.f32 0.0, %v5984
      %v5986 = vpop.f32.mrb[0].mxu0
      %v5987 = vpop.f32.mrb[0].mxu0
      %v5988 = vadd.f32 0.0, %v5987
      %v5989 = vpop.f32.mrb[0].mxu0
      %5990 = vmatprep.mubr.bf16.mxu0 0
      %5991 = vmatmul.mubr.bf16.gmra.mrb[0].mxu0 %v5934
      %v5992 = vpop.f32.mrb[0].mxu0
      %v5993 = vadd.f32 0.0, %v5992
      %v5994 = vpop.f32.mrb[0].mxu0
      %v5995 = vpop.f32.mrb[0].mxu0
      %v5996 = vadd.f32 0.0, %v5995
      %v5997 = vpop.f32.mrb[0].mxu0
      %5998 = vmatprep.mubr.bf16.mxu0 0
      %5999 = vmatmul.mubr.bf16.gmra.mrb[0].mxu0 %v5937
      %v6000 = vpop.f32.mrb[0].mxu0
      %v6001 = vadd.f32 0.0, %v6000
      %v6002 = vpop.f32.mrb[0].mxu0
      %v6003 = vpop.f32.mrb[0].mxu0
      %v6004 = vpop.f32.mrb[0].mxu0
      %6005 = vdwg.mxu0
      %v6006 = vpack.c.bf16 %v5980, %v5977
      %v6007 = vpack.c.bf16 %v5988, %v5985
      %v6008 = vpack.c.bf16 %v5996, %v5993
      %v6009 = vpack.c.bf16 %v6001, %v6001
      %v6010 = vpack.c.bf16 %v4630, %v4629
      %v6012 = vsel %vm2467, %v6006, 0
      %v6015 = vsel %vm2467, %v6007, 0
      %v6018 = vsel %vm2467, %v6008, 0
      %v6021 = vsel %vm2467, %v6009, 0
      %6023 = vmatprep.subr.bf16.mxu0 0
      %6024 = vmatpush1.bf16.msra.mxu0 %v6010
      %6025 = vmatprep.subr.bf16.mxu0 0
      %6026 = vmatpush1.bf16.msra.mxu0 0
      %6027 = vmatprep.subr.bf16.mxu0 0
      %6028 = vmatpush1.bf16.msra.mxu0 0
      %6029 = vmatprep.subr.bf16.mxu0 0
      %6030 = vmatpush1.bf16.msra.mxu0 0
      %6031 = vmatprep.subr.bf16.mxu0 0
      %6032 = vmatpush1.bf16.msra.mxu0 0
      %6033 = vmatprep.subr.bf16.mxu0 0
      %6034 = vmatpush1.bf16.msra.mxu0 0
      %6035 = vmatprep.subr.bf16.mxu0 0
      %6036 = vmatpush1.bf16.msra.mxu0 0
      %6037 = vmatprep.subr.bf16.mxu0 0
      %6038 = vmatpush1.bf16.msra.mxu0 0
      %6039 = vmatprep.subr.bf16.mxu0 0
      %6040 = vmatpush1.bf16.msra.mxu0 0
      %6041 = vmatprep.subr.bf16.mxu0 0
      %6042 = vmatpush1.bf16.msra.mxu0 0
      %6043 = vmatprep.subr.bf16.mxu0 0
      %6044 = vmatpush1.bf16.msra.mxu0 0
      %6045 = vmatprep.subr.bf16.mxu0 0
      %6046 = vmatpush1.bf16.msra.mxu0 0
      %6047 = vmatprep.subr.bf16.mxu0 0
      %6048 = vmatpush1.bf16.msra.mxu0 0
      %6049 = vmatprep.subr.bf16.mxu0 0
      %6050 = vmatpush1.bf16.msra.mxu0 0
      %6051 = vmatprep.subr.bf16.mxu0 0
      %6052 = vmatpush1.bf16.msra.mxu0 0
      %6053 = vmatprep.subr.bf16.mxu0 0
      %6054 = vmatpush1.bf16.msra.mxu0 0
      %6055 = vmatprep.mubr.bf16.mxu0 0
      %6056 = vmatmul.mubr.bf16.gmra.mrb[0].mxu0 %v6012
      %v6057 = vpop.f32.mrb[0].mxu0
      %v6058 = vadd.f32 0.0, %v6057
      %v6059 = vpop.f32.mrb[0].mxu0
      %v6060 = vpop.f32.mrb[0].mxu0
      %v6061 = vadd.f32 0.0, %v6060
      %v6062 = vpop.f32.mrb[0].mxu0
      %6063 = vmatprep.mubr.bf16.mxu0 0
      %6064 = vmatmul.mubr.bf16.gmra.mrb[0].mxu0 %v6015
      %v6065 = vpop.f32.mrb[0].mxu0
      %v6066 = vadd.f32 0.0, %v6065
      %v6067 = vpop.f32.mrb[0].mxu0
      %v6068 = vpop.f32.mrb[0].mxu0
      %v6069 = vadd.f32 0.0, %v6068
      %v6070 = vpop.f32.mrb[0].mxu0
      %6071 = vmatprep.mubr.bf16.mxu0 0
      %6072 = vmatmul.mubr.bf16.gmra.mrb[0].mxu0 %v6018
      %v6073 = vpop.f32.mrb[0].mxu0
      %v6074 = vadd.f32 0.0, %v6073
      %v6075 = vpop.f32.mrb[0].mxu0
      %v6076 = vpop.f32.mrb[0].mxu0
      %v6077 = vadd.f32 0.0, %v6076
      %v6078 = vpop.f32.mrb[0].mxu0
      %6079 = vmatprep.mubr.bf16.mxu0 0
      %6080 = vmatmul.mubr.bf16.gmra.mrb[0].mxu0 %v6021
      %v6081 = vpop.f32.mrb[0].mxu0
      %v6082 = vadd.f32 0.0, %v6081
      %v6083 = vpop.f32.mrb[0].mxu0
      %v6084 = vpop.f32.mrb[0].mxu0
      %v6085 = vpop.f32.mrb[0].mxu0
      %6086 = vdwg.mxu0
      %v6087 = vadd.f32 %v5717, %v6058
      %v6088 = vadd.f32 %v5718, %v6061
      %v6089 = vadd.f32 %v5719, %v6066
      %v6090 = vadd.f32 %v5720, %v6069
      %v6091 = vadd.f32 %v5721, %v6074
      %v6092 = vadd.f32 %v5722, %v6077
      %v6093 = vadd.f32 %v5723, %v6082
      %v6094 = vadd.f32 %v4399, %v6087
      %v6095 = vadd.f32 %v4400, %v6088
      %v6096 = vadd.f32 %v4401, %v6089
      %v6097 = vadd.f32 %v4402, %v6090
      %v6098 = vadd.f32 %v4403, %v6091
      %v6099 = vadd.f32 %v4404, %v6092
      %v6100 = vadd.f32 %v4405, %v6093
      %s6101 = scalar_lea.vmem %s8, 1
      %v6102 = vld [vmem:[%s6101] sm:$0x1]
      %v6104 = vlaneseq
      %v6105 = vshrl.u32 %v6104, 7
      %v6106 = vsub.s32 0, %v6105
      %v6107 = vrot.slane %v6102, %v6106
      %v6109 = vadd.f32 %v6094, %v6107
      %v6110 = vadd.f32 %v6095, %v6107
      %v6111 = vadd.f32 %v6096, %v6107
      %v6112 = vadd.f32 %v6097, %v6107
      %v6113 = vadd.f32 %v6098, %v6107
      %v6114 = vadd.f32 %v6099, %v6107
      %v6115 = vadd.f32 %v6100, %v6107
      %v6116 = vsel %vm2107, %v6109, 0.0
      %6117 = vadd.xlane.f32.xlu0 %v6116
      %v6118 = vpop.xlane.xlu0 %6117
      %v6119 = vsel %vm2107, %v6110, 0.0
      %6120 = vadd.xlane.f32.xlu0 %v6119
      %v6121 = vpop.xlane.xlu0 %6120
      %v6122 = vsel %vm2107, %v6111, 0.0
      %6123 = vadd.xlane.f32.xlu0 %v6122
      %v6124 = vpop.xlane.xlu0 %6123
      %v6125 = vsel %vm2107, %v6112, 0.0
      %6126 = vadd.xlane.f32.xlu0 %v6125
      %v6127 = vpop.xlane.xlu0 %6126
      %v6128 = vsel %vm2107, %v6113, 0.0
      %6129 = vadd.xlane.f32.xlu0 %v6128
      %v6130 = vpop.xlane.xlu0 %6129
      %v6131 = vsel %vm2107, %v6114, 0.0
      %6132 = vadd.xlane.f32.xlu0 %v6131
      %v6133 = vpop.xlane.xlu0 %6132
      %v6134 = vsel %vm2126, %v6115, 0.0
      %6135 = vadd.xlane.f32.xlu0 %v6134
      %v6136 = vpop.xlane.xlu0 %6135
      %v6137 = vmul.f32 %v6118, %v2130
      %v6138 = vmul.f32 %v6121, %v2130
      %v6139 = vmul.f32 %v6124, %v2130
      %v6140 = vmul.f32 %v6127, %v2130
      %v6141 = vmul.f32 %v6130, %v2130
      %v6142 = vmul.f32 %v6133, %v2130
      %v6143 = vmul.f32 %v6136, %v2130
      %v6144 = vsub.f32 %v6109, %v6137
      %v6145 = vsub.f32 %v6110, %v6138
      %v6146 = vsub.f32 %v6111, %v6139
      %v6147 = vsub.f32 %v6112, %v6140
      %v6148 = vsub.f32 %v6113, %v6141
      %v6149 = vsub.f32 %v6114, %v6142
      %v6150 = vsub.f32 %v6115, %v6143
      %v6151 = vmul.f32 %v6144, %v6144
      %v6152 = vmul.f32 %v6145, %v6145
      %v6153 = vmul.f32 %v6146, %v6146
      %v6154 = vmul.f32 %v6147, %v6147
      %v6155 = vmul.f32 %v6148, %v6148
      %v6156 = vmul.f32 %v6149, %v6149
      %v6157 = vmul.f32 %v6150, %v6150
      %v6158 = vsel %vm2107, %v6151, 0.0
      %6159 = vadd.xlane.f32.xlu0 %v6158
      %v6160 = vpop.xlane.xlu0 %6159
      %v6161 = vsel %vm2107, %v6152, 0.0
      %6162 = vadd.xlane.f32.xlu0 %v6161
      %v6163 = vpop.xlane.xlu0 %6162
      %v6164 = vsel %vm2107, %v6153, 0.0
      %6165 = vadd.xlane.f32.xlu0 %v6164
      %v6166 = vpop.xlane.xlu0 %6165
      %v6167 = vsel %vm2107, %v6154, 0.0
      %6168 = vadd.xlane.f32.xlu0 %v6167
      %v6169 = vpop.xlane.xlu0 %6168
      %v6170 = vsel %vm2107, %v6155, 0.0
      %6171 = vadd.xlane.f32.xlu0 %v6170
      %v6172 = vpop.xlane.xlu0 %6171
      %v6173 = vsel %vm2107, %v6156, 0.0
      %6174 = vadd.xlane.f32.xlu0 %v6173
      %v6175 = vpop.xlane.xlu0 %6174
      %v6176 = vsel %vm2126, %v6157, 0.0
      %6177 = vadd.xlane.f32.xlu0 %v6176
      %v6178 = vpop.xlane.xlu0 %6177
      %v6179 = vmul.f32 %v6160, %v2130
      %v6180 = vmul.f32 %v6163, %v2130
      %v6181 = vmul.f32 %v6166, %v2130
      %v6182 = vmul.f32 %v6169, %v2130
      %v6183 = vmul.f32 %v6172, %v2130
      %v6184 = vmul.f32 %v6175, %v2130
      %v6185 = vmul.f32 %v6178, %v2130
      %v6186 = vadd.f32 %v6179, 1e-05
      %v6187 = vadd.f32 %v6180, 1e-05
      %v6188 = vadd.f32 %v6181, 1e-05
      %v6189 = vadd.f32 %v6182, 1e-05
      %v6190 = vadd.f32 %v6183, 1e-05
      %v6191 = vadd.f32 %v6184, 1e-05
      %v6192 = vadd.f32 %v6185, 1e-05
      %v6193 = vrsqrt.pop %v6186
      %v6194 = vrsqrt.pop %v6187
      %v6195 = vrsqrt.pop %v6188
      %v6196 = vrsqrt.pop %v6189
      %v6197 = vrsqrt.pop %v6190
      %v6198 = vrsqrt.pop %v6191
      %v6199 = vrsqrt.pop %v6192
      %v6200 = vmul.f32 %v6144, %v6193
      %v6201 = vmul.f32 %v6145, %v6194
      %v6202 = vmul.f32 %v6146, %v6195
      %v6203 = vmul.f32 %v6147, %v6196
      %v6204 = vmul.f32 %v6148, %v6197
      %v6205 = vmul.f32 %v6149, %v6198
      %v6206 = vmul.f32 %v6150, %v6199
      %s6207 = scalar_lea.vmem %s9, 128
      %v6208 = vld [vmem:[%s6207] sm:$0xff]
      %v6209 = vld [vmem:[%s6207 + $0x8] sm:$0xff]
      %v6210 = vld [vmem:[%s6207 + $0x10] sm:$0xff]
      %v6211 = vld [vmem:[%s6207 + $0x18] sm:$0xff]
      %v6212 = vld [vmem:[%s6207 + $0x20] sm:$0xff]
      %v6213 = vld [vmem:[%s6207 + $0x28] sm:$0xff]
      %v6214 = vld [vmem:[%s6207 + $0x30] sm:$0xff]
      %v6215 = vld [vmem:[%s6207 + $0x38] sm:$0xff]
      %v6216 = vld [vmem:[%s6207 + $0x40] sm:$0xff]
      %v6217 = vld [vmem:[%s6207 + $0x48] sm:$0xff]
      %v6218 = vld [vmem:[%s6207 + $0x50] sm:$0xff]
      %v6219 = vld [vmem:[%s6207 + $0x58] sm:$0xff]
      %v6220 = vld [vmem:[%s6207 + $0x60] sm:$0xff]
      %v6221 = vld [vmem:[%s6207 + $0x68] sm:$0xff]
      %v6222 = vld [vmem:[%s6207 + $0x70] sm:$0xff]
      %v6223 = vld [vmem:[%s6207 + $0x78] sm:$0xff]
      %v6224 = vpack.c.bf16 %v6201, %v6200
      %v6225 = vpack.c.bf16 %v6203, %v6202
      %v6226 = vpack.c.bf16 %v6205, %v6204
      %v6227 = vpack.c.bf16 %v6206, %v6206
      %v6228 = vpack.c.bf16 %v6210, %v6208
      %v6229 = vpack.c.bf16 %v6211, %v6209
      %v6230 = vpack.c.bf16 %v6214, %v6212
      %v6231 = vpack.c.bf16 %v6215, %v6213
      %v6232 = vpack.c.bf16 %v6218, %v6216
      %v6233 = vpack.c.bf16 %v6219, %v6217
      %v6234 = vpack.c.bf16 %v6222, %v6220
      %v6235 = vpack.c.bf16 %v6223, %v6221
      %s6236 = scalar_lea.vmem %s10, 2
      %v6237 = vld [vmem:[%s6236] sm:$0x3]
      %v6239 = vlaneseq
      %v6240 = vshrl.u32 %v6239, 7
      %v6241 = vsub.s32 0, %v6240
      %v6242 = vrot.slane %v6237, %v6241
      %v6243 = vlaneseq
      %v6244 = vshrl.u32 %v6243, 7
      %v6245 = vsub.s32 1, %v6244
      %v6246 = vrot.slane %v6237, %v6245
      %v6250 = vsel %vm2107, %v6224, 0
      %v6253 = vsel %vm2107, %v6225, 0
      %v6256 = vsel %vm2107, %v6226, 0
      %v6259 = vsel %vm2107, %v6227, 0
      %6261 = vmatprep.subr.bf16.mxu0 %v6229
      %6262 = vmatpush1.bf16.msra.mxu0 %v6228
      %6263 = vmatprep.subr.bf16.mxu0 %v6231
      %6264 = vmatpush1.bf16.msra.mxu0 %v6230
      %6265 = vmatprep.subr.bf16.mxu0 %v6233
      %6266 = vmatpush1.bf16.msra.mxu0 %v6232
      %6267 = vmatprep.subr.bf16.mxu0 %v6235
      %6268 = vmatpush1.bf16.msra.mxu0 %v6234
      %6269 = vmatprep.subr.bf16.mxu0 0
      %6270 = vmatpush1.bf16.msra.mxu0 0
      %6271 = vmatprep.subr.bf16.mxu0 0
      %6272 = vmatpush1.bf16.msra.mxu0 0
      %6273 = vmatprep.subr.bf16.mxu0 0
      %6274 = vmatpush1.bf16.msra.mxu0 0
      %6275 = vmatprep.subr.bf16.mxu0 0
      %6276 = vmatpush1.bf16.msra.mxu0 0
      %6277 = vmatprep.subr.bf16.mxu0 0
      %6278 = vmatpush1.bf16.msra.mxu0 0
      %6279 = vmatprep.subr.bf16.mxu0 0
      %6280 = vmatpush1.bf16.msra.mxu0 0
      %6281 = vmatprep.subr.bf16.mxu0 0
      %6282 = vmatpush1.bf16.msra.mxu0 0
      %6283 = vmatprep.subr.bf16.mxu0 0
      %6284 = vmatpush1.bf16.msra.mxu0 0
      %6285 = vmatprep.subr.bf16.mxu0 0
      %6286 = vmatpush1.bf16.msra.mxu0 0
      %6287 = vmatprep.subr.bf16.mxu0 0
      %6288 = vmatpush1.bf16.msra.mxu0 0
      %6289 = vmatprep.subr.bf16.mxu0 0
      %6290 = vmatpush1.bf16.msra.mxu0 0
      %6291 = vmatprep.subr.bf16.mxu0 0
      %6292 = vmatpush1.bf16.msra.mxu0 0
      %6293 = vmatprep.mubr.bf16.mxu0 0
      %6294 = vmatmul.mubr.bf16.gmra.mrb[0].mxu0 %v6250
      %v6295 = vpop.f32.mrb[0].mxu0
      %v6296 = vadd.f32 %v6242, %v6295
      %v6297 = vpop.f32.mrb[0].mxu0
      %v6298 = vadd.f32 %v6246, %v6297
      %v6299 = vpop.f32.mrb[0].mxu0
      %v6300 = vadd.f32 %v6242, %v6299
      %v6301 = vpop.f32.mrb[0].mxu0
      %v6302 = vadd.f32 %v6246, %v6301
      %6303 = vmatprep.mubr.bf16.mxu0 0
      %6304 = vmatmul.mubr.bf16.gmra.mrb[0].mxu0 %v6253
      %v6305 = vpop.f32.mrb[0].mxu0
      %v6306 = vadd.f32 %v6242, %v6305
      %v6307 = vpop.f32.mrb[0].mxu0
      %v6308 = vadd.f32 %v6246, %v6307
      %v6309 = vpop.f32.mrb[0].mxu0
      %v6310 = vadd.f32 %v6242, %v6309
      %v6311 = vpop.f32.mrb[0].mxu0
      %v6312 = vadd.f32 %v6246, %v6311
      %6313 = vmatprep.mubr.bf16.mxu0 0
      %6314 = vmatmul.mubr.bf16.gmra.mrb[0].mxu0 %v6256
      %v6315 = vpop.f32.mrb[0].mxu0
      %v6316 = vadd.f32 %v6242, %v6315
      %v6317 = vpop.f32.mrb[0].mxu0
      %v6318 = vadd.f32 %v6246, %v6317
      %v6319 = vpop.f32.mrb[0].mxu0
      %v6320 = vadd.f32 %v6242, %v6319
      %v6321 = vpop.f32.mrb[0].mxu0
      %v6322 = vadd.f32 %v6246, %v6321
      %6323 = vmatprep.mubr.bf16.mxu0 0
      %6324 = vmatmul.mubr.bf16.gmra.mrb[0].mxu0 %v6259
      %v6325 = vpop.f32.mrb[0].mxu0
      %v6326 = vadd.f32 %v6242, %v6325
      %v6327 = vpop.f32.mrb[0].mxu0
      %v6328 = vadd.f32 %v6246, %v6327
      %v6329 = vpop.f32.mrb[0].mxu0
      %v6330 = vpop.f32.mrb[0].mxu0
      %6331 = vdwg.mxu0
      %v6332 = vmul.f32 %v6296, 1.702
      %v6333 = vmul.f32 %v6298, 1.702
      %v6334 = vmul.f32 %v6300, 1.702
      %v6335 = vmul.f32 %v6302, 1.702
      %v6336 = vmul.f32 %v6306, 1.702
      %v6337 = vmul.f32 %v6308, 1.702
      %v6338 = vmul.f32 %v6310, 1.702
      %v6339 = vmul.f32 %v6312, 1.702
      %v6340 = vmul.f32 %v6316, 1.702
      %v6341 = vmul.f32 %v6318, 1.702
      %v6342 = vmul.f32 %v6320, 1.702
      %v6343 = vmul.f32 %v6322, 1.702
      %v6344 = vmul.f32 %v6326, 1.702
      %v6345 = vmul.f32 %v6328, 1.702
      %v6346 = vxor.u32 %v6332, 2147483648
      %v6347 = vxor.u32 %v6333, 2147483648
      %v6348 = vxor.u32 %v6334, 2147483648
      %v6349 = vxor.u32 %v6335, 2147483648
      %v6350 = vxor.u32 %v6336, 2147483648
      %v6351 = vxor.u32 %v6337, 2147483648
      %v6352 = vxor.u32 %v6338, 2147483648
      %v6353 = vxor.u32 %v6339, 2147483648
      %v6354 = vxor.u32 %v6340, 2147483648
      %v6355 = vxor.u32 %v6341, 2147483648
      %v6356 = vxor.u32 %v6342, 2147483648
      %v6357 = vxor.u32 %v6343, 2147483648
      %v6358 = vxor.u32 %v6344, 2147483648
      %v6359 = vxor.u32 %v6345, 2147483648
      %v6360 = vmul.f32 %v6346, 1.442695
      %v6361 = vpow.pop %v6360
      %v6362 = vmul.f32 %v6347, 1.442695
      %v6363 = vpow.pop %v6362
      %v6364 = vmul.f32 %v6348, 1.442695
      %v6365 = vpow.pop %v6364
      %v6366 = vmul.f32 %v6349, 1.442695
      %v6367 = vpow.pop %v6366
      %v6368 = vmul.f32 %v6350, 1.442695
      %v6369 = vpow.pop %v6368
      %v6370 = vmul.f32 %v6351, 1.442695
      %v6371 = vpow.pop %v6370
      %v6372 = vmul.f32 %v6352, 1.442695
      %v6373 = vpow.pop %v6372
      %v6374 = vmul.f32 %v6353, 1.442695
      %v6375 = vpow.pop %v6374
      %v6376 = vmul.f32 %v6354, 1.442695
      %v6377 = vpow.pop %v6376
      %v6378 = vmul.f32 %v6355, 1.442695
      %v6379 = vpow.pop %v6378
      %v6380 = vmul.f32 %v6356, 1.442695
      %v6381 = vpow.pop %v6380
      %v6382 = vmul.f32 %v6357, 1.442695
      %v6383 = vpow.pop %v6382
      %v6384 = vmul.f32 %v6358, 1.442695
      %v6385 = vpow.pop %v6384
      %v6386 = vmul.f32 %v6359, 1.442695
      %v6387 = vpow.pop %v6386
      %v6388 = vadd.f32 %v6361, 1.0
      %v6389 = vadd.f32 %v6363, 1.0
      %v6390 = vadd.f32 %v6365, 1.0
      %v6391 = vadd.f32 %v6367, 1.0
      %v6392 = vadd.f32 %v6369, 1.0
      %v6393 = vadd.f32 %v6371, 1.0
      %v6394 = vadd.f32 %v6373, 1.0
      %v6395 = vadd.f32 %v6375, 1.0
      %v6396 = vadd.f32 %v6377, 1.0
      %v6397 = vadd.f32 %v6379, 1.0
      %v6398 = vadd.f32 %v6381, 1.0
      %v6399 = vadd.f32 %v6383, 1.0
      %v6400 = vadd.f32 %v6385, 1.0
      %v6401 = vadd.f32 %v6387, 1.0
      %v6402 = vrcp.pop %v6388
      %v6403 = vmul.f32 1.0, %v6402
      %v6404 = vrcp.pop %v6389
      %v6405 = vmul.f32 1.0, %v6404
      %v6406 = vrcp.pop %v6390
      %v6407 = vmul.f32 1.0, %v6406
      %v6408 = vrcp.pop %v6391
      %v6409 = vmul.f32 1.0, %v6408
      %v6410 = vrcp.pop %v6392
      %v6411 = vmul.f32 1.0, %v6410
      %v6412 = vrcp.pop %v6393
      %v6413 = vmul.f32 1.0, %v6412
      %v6414 = vrcp.pop %v6394
      %v6415 = vmul.f32 1.0, %v6414
      %v6416 = vrcp.pop %v6395
      %v6417 = vmul.f32 1.0, %v6416
      %v6418 = vrcp.pop %v6396
      %v6419 = vmul.f32 1.0, %v6418
      %v6420 = vrcp.pop %v6397
      %v6421 = vmul.f32 1.0, %v6420
      %v6422 = vrcp.pop %v6398
      %v6423 = vmul.f32 1.0, %v6422
      %v6424 = vrcp.pop %v6399
      %v6425 = vmul.f32 1.0, %v6424
      %v6426 = vrcp.pop %v6400
      %v6427 = vmul.f32 1.0, %v6426
      %v6428 = vrcp.pop %v6401
      %v6429 = vmul.f32 1.0, %v6428
      %v6430 = vmul.f32 %v6296, %v6403
      %v6431 = vmul.f32 %v6298, %v6405
      %v6432 = vmul.f32 %v6300, %v6407
      %v6433 = vmul.f32 %v6302, %v6409
      %v6434 = vmul.f32 %v6306, %v6411
      %v6435 = vmul.f32 %v6308, %v6413
      %v6436 = vmul.f32 %v6310, %v6415
      %v6437 = vmul.f32 %v6312, %v6417
      %v6438 = vmul.f32 %v6316, %v6419
      %v6439 = vmul.f32 %v6318, %v6421
      %v6440 = vmul.f32 %v6320, %v6423
      %v6441 = vmul.f32 %v6322, %v6425
      %v6442 = vmul.f32 %v6326, %v6427
      %v6443 = vmul.f32 %v6328, %v6429
      %s6444 = scalar_lea.vmem %s11, 256
      %v6445 = vld [vmem:[%s6444] sm:$0xff]
      %v6446 = vld [vmem:[%s6444 + $0x8] sm:$0xff]
      %v6447 = vld [vmem:[%s6444 + $0x10] sm:$0xff]
      %v6448 = vld [vmem:[%s6444 + $0x18] sm:$0xff]
      %v6449 = vld [vmem:[%s6444 + $0x20] sm:$0xff]
      %v6450 = vld [vmem:[%s6444 + $0x28] sm:$0xff]
      %v6451 = vld [vmem:[%s6444 + $0x30] sm:$0xff]
      %v6452 = vld [vmem:[%s6444 + $0x38] sm:$0xff]
      %v6453 = vld [vmem:[%s6444 + $0x40] sm:$0xff]
      %v6454 = vld [vmem:[%s6444 + $0x48] sm:$0xff]
      %v6455 = vld [vmem:[%s6444 + $0x50] sm:$0xff]
      %v6456 = vld [vmem:[%s6444 + $0x58] sm:$0xff]
      %v6457 = vld [vmem:[%s6444 + $0x60] sm:$0xff]
      %v6458 = vld [vmem:[%s6444 + $0x68] sm:$0xff]
      %v6459 = vld [vmem:[%s6444 + $0x70] sm:$0xff]
      %v6460 = vld [vmem:[%s6444 + $0x78] sm:$0xff]
      %v6461 = vld [vmem:[%s6444 + $0x80] sm:$0xff]
      %v6462 = vld [vmem:[%s6444 + $0x88] sm:$0xff]
      %v6463 = vld [vmem:[%s6444 + $0x90] sm:$0xff]
      %v6464 = vld [vmem:[%s6444 + $0x98] sm:$0xff]
      %v6465 = vld [vmem:[%s6444 + $0xa0] sm:$0xff]
      %v6466 = vld [vmem:[%s6444 + $0xa8] sm:$0xff]
      %v6467 = vld [vmem:[%s6444 + $0xb0] sm:$0xff]
      %v6468 = vld [vmem:[%s6444 + $0xb8] sm:$0xff]
      %v6469 = vld [vmem:[%s6444 + $0xc0] sm:$0xff]
      %v6470 = vld [vmem:[%s6444 + $0xc8] sm:$0xff]
      %v6471 = vld [vmem:[%s6444 + $0xd0] sm:$0xff]
      %v6472 = vld [vmem:[%s6444 + $0xd8] sm:$0xff]
      %v6473 = vld [vmem:[%s6444 + $0xe0] sm:$0xff]
      %v6474 = vld [vmem:[%s6444 + $0xe8] sm:$0xff]
      %v6475 = vld [vmem:[%s6444 + $0xf0] sm:$0xff]
      %v6476 = vld [vmem:[%s6444 + $0xf8] sm:$0xff]
      %v6477 = vpack.c.bf16 %v6432, %v6430
      %v6478 = vpack.c.bf16 %v6433, %v6431
      %v6479 = vpack.c.bf16 %v6436, %v6434
      %v6480 = vpack.c.bf16 %v6437, %v6435
      %v6481 = vpack.c.bf16 %v6440, %v6438
      %v6482 = vpack.c.bf16 %v6441, %v6439
      %v6483 = vpack.c.bf16 %v6442, %v6442
      %v6484 = vpack.c.bf16 %v6443, %v6443
      %v6485 = vpack.c.bf16 %v6446, %v6445
      %v6486 = vpack.c.bf16 %v6448, %v6447
      %v6487 = vpack.c.bf16 %v6450, %v6449
      %v6488 = vpack.c.bf16 %v6452, %v6451
      %v6489 = vpack.c.bf16 %v6454, %v6453
      %v6490 = vpack.c.bf16 %v6456, %v6455
      %v6491 = vpack.c.bf16 %v6458, %v6457
      %v6492 = vpack.c.bf16 %v6460, %v6459
      %v6493 = vpack.c.bf16 %v6462, %v6461
      %v6494 = vpack.c.bf16 %v6464, %v6463
      %v6495 = vpack.c.bf16 %v6466, %v6465
      %v6496 = vpack.c.bf16 %v6468, %v6467
      %v6497 = vpack.c.bf16 %v6470, %v6469
      %v6498 = vpack.c.bf16 %v6472, %v6471
      %v6499 = vpack.c.bf16 %v6474, %v6473
      %v6500 = vpack.c.bf16 %v6476, %v6475
      %6501 = vmatprep.subr.bf16.mxu0 0
      %6502 = vmatpush1.bf16.msra.mxu0 %v6485
      %6503 = vmatprep.subr.bf16.mxu0 0
      %6504 = vmatpush1.bf16.msra.mxu0 %v6486
      %6505 = vmatprep.subr.bf16.mxu0 0
      %6506 = vmatpush1.bf16.msra.mxu0 %v6487
      %6507 = vmatprep.subr.bf16.mxu0 0
      %6508 = vmatpush1.bf16.msra.mxu0 %v6488
      %6509 = vmatprep.subr.bf16.mxu0 0
      %6510 = vmatpush1.bf16.msra.mxu0 %v6489
      %6511 = vmatprep.subr.bf16.mxu0 0
      %6512 = vmatpush1.bf16.msra.mxu0 %v6490
      %6513 = vmatprep.subr.bf16.mxu0 0
      %6514 = vmatpush1.bf16.msra.mxu0 %v6491
      %6515 = vmatprep.subr.bf16.mxu0 0
      %6516 = vmatpush1.bf16.msra.mxu0 %v6492
      %6517 = vmatprep.subr.bf16.mxu0 0
      %6518 = vmatpush1.bf16.msra.mxu0 %v6493
      %6519 = vmatprep.subr.bf16.mxu0 0
      %6520 = vmatpush1.bf16.msra.mxu0 %v6494
      %6521 = vmatprep.subr.bf16.mxu0 0
      %6522 = vmatpush1.bf16.msra.mxu0 %v6495
      %6523 = vmatprep.subr.bf16.mxu0 0
      %6524 = vmatpush1.bf16.msra.mxu0 %v6496
      %6525 = vmatprep.subr.bf16.mxu0 0
      %6526 = vmatpush1.bf16.msra.mxu0 %v6497
      %6527 = vmatprep.subr.bf16.mxu0 0
      %6528 = vmatpush1.bf16.msra.mxu0 %v6498
      %6529 = vmatprep.subr.bf16.mxu0 0
      %6530 = vmatpush1.bf16.msra.mxu0 %v6499
      %6531 = vmatprep.subr.bf16.mxu0 0
      %6532 = vmatpush1.bf16.msra.mxu0 %v6500
      %6533 = vmatprep.mubr.bf16.mxu0 %v6478
      %6534 = vmatmul.mubr.bf16.gmra.mrb[0].mxu0 %v6477
      %v6535 = vpop.f32.mrb[0].mxu0
      %v6536 = vadd.f32 0.0, %v6535
      %v6537 = vpop.f32.mrb[0].mxu0
      %v6538 = vpop.f32.mrb[0].mxu0
      %v6539 = vpop.f32.mrb[0].mxu0
      %6540 = vmatprep.mubr.bf16.mxu0 %v6480
      %6541 = vmatmul.mubr.bf16.gmra.mrb[0].mxu0 %v6479
      %v6542 = vpop.f32.mrb[0].mxu0
      %v6543 = vpop.f32.mrb[0].mxu0
      %v6544 = vpop.f32.mrb[0].mxu0
      %v6545 = vpop.f32.mrb[0].mxu0
      %6546 = vmatprep.mubr.bf16.mxu0 %v6482
      %6547 = vmatmul.mubr.bf16.gmra.mrb[0].mxu0 %v6481
      %v6548 = vpop.f32.mrb[0].mxu0
      %v6549 = vpop.f32.mrb[0].mxu0
      %v6550 = vpop.f32.mrb[0].mxu0
      %v6551 = vpop.f32.mrb[0].mxu0
      %6552 = vmatprep.mubr.bf16.mxu0 %v6484
      %6553 = vmatmul.mubr.bf16.gmra.mrb[0].mxu0 %v6483
      %v6554 = vpop.f32.mrb[0].mxu0
      %v6555 = vpop.f32.mrb[0].mxu0
      %v6556 = vpop.f32.mrb[0].mxu0
      %v6557 = vpop.f32.mrb[0].mxu0
      %6558 = vdwg.mxu0
      %v6559 = vadd.f32 %v6109, %v6536
      %s6560 = scalar_lea.vmem %s12, 1
      %v6561 = vld [vmem:[%s6560] sm:$0x1]
      %v6563 = vlaneseq
      %v6564 = vshrl.u32 %v6563, 7
      %v6565 = vsub.s32 0, %v6564
      %v6566 = vrot.slane %v6561, %v6565
      %v6568 = vadd.f32 %v6559, %v6566
      %vm6569 = vcmask 516096
      %v6570 = vsel %vm6569, %v6568, 0.0
      %6571 = vadd.xlane.f32.xlu0 %v6570
      %v6572 = vpop.xlane.xlu0 %6571
      %v6573 = vmul.f32 %v6572, %v2130
      %v6574 = vsub.f32 %v6568, %v6573
      %v6575 = vmul.f32 %v6574, %v6574
      %v6576 = vsel %vm6569, %v6575, 0.0
      %6577 = vadd.xlane.f32.xlu0 %v6576
      %v6578 = vpop.xlane.xlu0 %6577
      %v6579 = vmul.f32 %v6578, %v2130
      %v6580 = vadd.f32 %v6579, 1e-05
      %v6581 = vrsqrt.pop %v6580
      %v6582 = vmul.f32 %v6574, %v6581
      %v6583 = vld [vmem:[%s13] sm:$0xff]
      %v6584 = vld [vmem:[%s13 + $0x8] sm:$0xff]
      %v6585 = vld [vmem:[%s13 + $0x10] sm:$0xff]
      %v6586 = vld [vmem:[%s13 + $0x18] sm:$0xff]
      %v6587 = vld [vmem:[%s13 + $0x20] sm:$0xff]
      %v6588 = vld [vmem:[%s13 + $0x28] sm:$0xff]
      %v6589 = vld [vmem:[%s13 + $0x30] sm:$0xff]
      %v6590 = vld [vmem:[%s13 + $0x38] sm:$0xff]
      %v6591 = vpack.c.bf16 %v6582, %v6582
      %v6592 = vpack.c.bf16 %v6584, %v6583
      %v6593 = vpack.c.bf16 %v6586, %v6585
      %v6594 = vpack.c.bf16 %v6588, %v6587
      %v6595 = vpack.c.bf16 %v6590, %v6589
      %v6596 = vld [vmem:[%s14] sm:$0x1]
      %v6598 = vsel %vm2107, %v6591, 0
      %6600 = vmatprep.subr.bf16.mxu0 0
      %6601 = vmatpush1.bf16.msra.mxu0 %v6592
      %6602 = vmatprep.subr.bf16.mxu0 0
      %6603 = vmatpush1.bf16.msra.mxu0 %v6593
      %6604 = vmatprep.subr.bf16.mxu0 0
      %6605 = vmatpush1.bf16.msra.mxu0 %v6594
      %6606 = vmatprep.subr.bf16.mxu0 0
      %6607 = vmatpush1.bf16.msra.mxu0 %v6595
      %6608 = vmatprep.subr.bf16.mxu0 0
      %6609 = vmatpush1.bf16.msra.mxu0 0
      %6610 = vmatprep.subr.bf16.mxu0 0
      %6611 = vmatpush1.bf16.msra.mxu0 0
      %6612 = vmatprep.subr.bf16.mxu0 0
      %6613 = vmatpush1.bf16.msra.mxu0 0
      %6614 = vmatprep.subr.bf16.mxu0 0
      %6615 = vmatpush1.bf16.msra.mxu0 0
      %6616 = vmatprep.subr.bf16.mxu0 0
      %6617 = vmatpush1.bf16.msra.mxu0 0
      %6618 = vmatprep.subr.bf16.mxu0 0
      %6619 = vmatpush1.bf16.msra.mxu0 0
      %6620 = vmatprep.subr.bf16.mxu0 0
      %6621 = vmatpush1.bf16.msra.mxu0 0
      %6622 = vmatprep.subr.bf16.mxu0 0
      %6623 = vmatpush1.bf16.msra.mxu0 0
      %6624 = vmatprep.subr.bf16.mxu0 0
      %6625 = vmatpush1.bf16.msra.mxu0 0
      %6626 = vmatprep.subr.bf16.mxu0 0
      %6627 = vmatpush1.bf16.msra.mxu0 0
      %6628 = vmatprep.subr.bf16.mxu0 0
      %6629 = vmatpush1.bf16.msra.mxu0 0
      %6630 = vmatprep.subr.bf16.mxu0 0
      %6631 = vmatpush1.bf16.msra.mxu0 0
      %6632 = vmatprep.mubr.bf16.mxu0 0
      %6633 = vmatmul.mubr.bf16.gmra.mrb[0].mxu0 %v6598
      %v6634 = vpop.f32.mrb[0].mxu0
      %v6635 = vadd.f32 %v6596, %v6634
      %v6636 = vpop.f32.mrb[0].mxu0
      %v6637 = vpop.f32.mrb[0].mxu0
      %v6638 = vpop.f32.mrb[0].mxu0
      %6639 = vdwg.mxu0
      %vm6640 = vcmask 253952
      %6641 = vst.msk [vmem:[%s490] sm:$0x1] %vm6640, %v6635
      %p6642 = scmp.lt.s32.totalorder %s26, 1
      %s6643 = scalar_select %p6642, %s26, 1
      %s6644 = scalar_lea.vmem %s15, %s6643
      // Predicated region
      $region81: #{clip_loss_forward.3} parent=79 // pred_check
        %p6645 = pneg %p364
      $region82: #{clip_loss_forward.3} parent=79 // pred_check_branch
        %6647 = sbr.rel (%p6645) target = $region84
      $region83: #{clip_loss_forward.3} parent=79 // pred_region
        _
      $region84: #{clip_loss_forward.3} parent=79 // pred_fallthru
        _
    $region80: #{clip_loss_forward.3} parent=5 // pred_fallthru
      _
    %p6648 = scmp.le.s32.totalorder 2, %s21
    // Predicated region
    $region85: #{clip_loss_forward.3} parent=5 // pred_check
      %p6649 = pneg %p6648
    $region86: #{clip_loss_forward.3} parent=5 // pred_check_branch
      %6651 = sbr.rel (%p6649) target = $region88
    $region87: #{clip_loss_forward.3} parent=5 // pred_region
      %s6652 = ssub.s32 %s21, 2
      // Predicated region
      $region89: #{clip_loss_forward.3} parent=87 // pred_check
        %p6653 = pneg %p370
      $region90: #{clip_loss_forward.3} parent=87 // pred_check_branch
        %6655 = sbr.rel (%p6653) target = $region92
      $region91: #{clip_loss_forward.3} parent=87 // pred_region
        %p6656 = scmp.lt.s32.totalorder %s27, 1
        %s6657 = scalar_select %p6656, %s27, 1
        %s6658 = scalar_lea.vmem %s15, %s6657
      $region92: #{clip_loss_forward.3} parent=87 // pred_fallthru
        _
    $region88: #{clip_loss_forward.3} parent=5 // pred_fallthru
      _
  $region6: #{clip_loss_forward.3} parent=0 // loop_footer
    %s25 = sadd.s32 1, %s21
  $region7: #{clip_loss_forward.3} parent=0 // loop_footer_branch
    %20 = sbr.rel target = $region3
  $region8: #{clip_loss_forward.3} parent=0 // loop_exit
    _

</llo_original>
